<compile_context>
chip_gen: v7x
topology: tpu7x:2x2x1
jax: 0.10.0
libtpu: 0.0.40
codegen_flags: <defaults>
</compile_context>

<pallas_src>
import math
import numpy as np
import jax
import jax.numpy as jnp
from jax.experimental import pallas as pl
from jax.experimental.pallas import tpu as pltpu

_EPS = 1e-5


# ----------------------------------------------------------------------------- kernel
def _make_kernel(groups, group_planes, in_planes, H):
    gp = group_planes
    gph = gp // 2
    C = in_planes

    def kernel(wq_ref, bq_ref, bo_ref,        # SMEM: (2*OP, C), (2*OP,), (OP,)
               x_ref,                         # VMEM: (C, H, TB)    h on sublane, batch on lane
               qe_ref, ke_ref, ve_ref,        # VMEM: (G*gph,H,H,1), (G*gph,H,H,1), (G*gp,H,H,1)
               out_ref):                      # VMEM: (OP, H, TB)
        xs = [x_ref[c] for c in range(C)]     # C planes of (H, TB)

        def project(ch):
            # 1x1 Conv1d + folded BN/scales as unrolled VPU scalar-FMA over C.
            acc = xs[0] * wq_ref[ch, 0]
            for c in range(1, C):
                acc = acc + xs[c] * wq_ref[ch, c]
            return acc + bq_ref[ch]

        for g in range(groups):
            base = g * 2 * gp
            q = [project(base + c) for c in range(gph)]        # (H_i, TB); carries s_sim[g]
            k = [project(base + gph + c) for c in range(gph)]  # (H_j, TB)
            v = [project(base + gp + c) for c in range(gp)]    # (H_j, TB); carries f_sv*bn_out

            # logits_T[j, i, b]  (softmax axis j on the leading/"rows" axis)
            logits = q[0][None, :, :] * k[0][:, None, :]                     # qk (VPU)
            for c in range(1, gph):
                logits = logits + q[c][None, :, :] * k[c][:, None, :]
            for c in range(gph):
                logits = logits + qe_ref[g * gph + c] * q[c][None, :, :]     # qr term
                logits = logits + ke_ref[g * gph + c] * k[c][:, None, :]     # kr term

            # softmax over j: cheap elementwise combines across row-tiles.
            m = jnp.max(logits, axis=0, keepdims=True)                       # (1, H_i, TB)
            p = jnp.exp(logits - m)
            s = jnp.sum(p, axis=0, keepdims=True)
            sim = p * (1.0 / s)                                              # (H_j, H_i, TB)

            for c in range(gp):
                o = g * gp + c
                sv = jnp.sum(sim * v[c][:, None, :], axis=0)                 # (H_i, TB)
                sve = jnp.sum(sim * ve_ref[o], axis=0)                       # (H_i, TB)
                out_ref[o] = sv + sve + bo_ref[o]                            # direct store

    return kernel


# ------------------------------------------------------------------- params / folding
def init_raw_params(key, in_planes, out_planes, groups, kernel_size):
    """Parameters matching the PyTorch module (eval-mode BN).  BN stats/affine are
    randomized (not identity) so the folding is genuinely exercised by the check."""
    gp = out_planes // groups
    K = kernel_size
    ks = list(jax.random.split(key, 14))

    w_qkv = jax.random.normal(ks[0], (2 * out_planes, in_planes), jnp.float32) * math.sqrt(1.0 / in_planes)
    relative = jax.random.normal(ks[1], (2 * gp, 2 * K - 1), jnp.float32) * math.sqrt(1.0 / gp)

    def bn(n, k0, k1, k2, k3):
        gamma = jax.random.uniform(k0, (n,), jnp.float32, 0.5, 1.5)
        beta = 0.1 * jax.random.normal(k1, (n,), jnp.float32)
        mean = 0.1 * jax.random.normal(k2, (n,), jnp.float32)
        var = jax.random.uniform(k3, (n,), jnp.float32, 0.5, 1.5)
        return gamma, beta, mean, var

    return dict(w_qkv=w_qkv, relative=relative,
                bn_qkv=bn(2 * out_planes, ks[2], ks[3], ks[4], ks[5]),
                bn_sim=bn(3 * groups, ks[6], ks[7], ks[8], ks[9]),
                bn_out=bn(2 * out_planes, ks[10], ks[11], ks[12], ks[13]),
                f_qr=0.1, f_kr=0.1, f_sve=0.1, f_sv=1.0)


def _bn_affine(bn):
    gamma, beta, mean, var = bn
    s = gamma / jnp.sqrt(var + _EPS)
    return s, beta - mean * s


def _embeddings(relative, gp, K):
    gph = gp // 2
    idx = jnp.arange(K)[:, None] - jnp.arange(K)[None, :] + (K - 1)   # [i, j] -> i - j + K - 1
    all_emb = relative[:, idx]                                        # (2*gp, K, K), [c, i, j]
    return all_emb[:gph], all_emb[gph:gp], all_emb[gp:]


def fold_params(raw, *, in_planes, out_planes, groups, kernel_size):
    gp = out_planes // groups
    gph = gp // 2
    K = kernel_size
    OP = out_planes

    s1, b1 = _bn_affine(raw['bn_qkv'])     # (2*OP,)
    s2, _ = _bn_affine(raw['bn_sim'])      # (3*G,)  biases dropped: softmax-invariant
    s3, b3 = _bn_affine(raw['bn_out'])     # (2*OP,)
    f_qr, f_kr, f_sve, f_sv = raw['f_qr'], raw['f_kr'], raw['f_sve'], raw['f_sv']

    s1 = np.asarray(s1); b1 = np.asarray(b1)
    s2 = np.asarray(s2); s3 = np.asarray(s3); b3 = np.asarray(b3)
    assert np.all(np.abs(s2[:groups]) > 1e-8), "bn_similarity qk scale ~0: folding ill-conditioned"

    # per-qkv-channel extra scale folded into the projection:
    #   q channels * s_sim[g]; v channels * f_sv * s_out[2o]; k channels * 1
    extra = np.ones((2 * OP,), np.float32)
    for g in range(groups):
        base = g * 2 * gp
        extra[base:base + gph] = s2[g]
        for c in range(gp):
            extra[base + gp + c] = f_sv * s3[2 * (g * gp + c)]

    wq = np.asarray(raw['w_qkv']) * (s1 * extra)[:, None]            # (2*OP, C)
    bq = (b1 * extra).astype(np.float32)                             # (2*OP,)
    bo = (b3[0::2] + b3[1::2]).astype(np.float32)                    # (OP,)

    q_emb, k_emb, v_emb = (np.asarray(a) for a in _embeddings(raw['relative'], gp, K))

    # constants stored pre-transposed as [j, i] with a trailing size-1 lane dim so the
    # kernel only does lane-broadcasts (no in-kernel relayout of constants).
    QE = np.zeros((groups * gph, K, K, 1), np.float32)
    KE = np.zeros((groups * gph, K, K, 1), np.float32)
    VE = np.zeros((groups * gp, K, K, 1), np.float32)
    for g in range(groups):
        for c in range(gph):
            QE[g * gph + c, :, :, 0] = q_emb[c].T * (f_qr * s2[groups + g] / s2[g])
            KE[g * gph + c, :, :, 0] = k_emb[c] * (f_kr * s2[2 * groups + g])
        for c in range(gp):
            o = g * gp + c
            VE[o, :, :, 0] = v_emb[c].T * (f_sve * s3[2 * o + 1])

    to = lambda a: jnp.asarray(a, jnp.float32)
    return dict(wq=to(wq), bq=to(bq), bo=to(bo), QE=to(QE), KE=to(KE), VE=to(VE))


# ------------------------------------------------------------------------------ wrapper
def _pick_tb(B):
    # Batch tile on the lane axis: prefer 128-multiples and >=2 grid steps (v7x megacore).
    for tb in (512, 256, 128):
        if B % tb == 0 and B // tb >= 2:
            return tb
    for tb in (512, 256, 128):
        if B % tb == 0:
            return tb
    return B


def axial_attention_dynamic(x_nchw, folded, *, in_planes, out_planes, groups, kernel_size):
    N, C, H, W = x_nchw.shape
    assert C == in_planes and H == kernel_size
    gp = out_planes // groups
    gph = gp // 2
    B = N * W
    TB = _pick_tb(B)

    # torch: x.permute(0,3,1,2).view(N*W, C, H); here the column batch b = n*W + w is
    # additionally placed on the minor (lane) axis: x_p[c, h, b] = x[n, c, h, w].
    x_p = jnp.transpose(x_nchw, (1, 2, 0, 3)).reshape(C, H, B).astype(jnp.float32)

    kernel = _make_kernel(groups, gp, C, H)
    smem = pl.BlockSpec(memory_space=pltpu.MemorySpace.SMEM)
    out = pl.pallas_call(
        kernel,
        out_shape=jax.ShapeDtypeStruct((out_planes, H, B), jnp.float32),
        grid=(B // TB,),
        in_specs=[
            smem,                                                           # wq (folded)
            smem,                                                           # bq (folded)
            smem,                                                           # bo (folded)
            pl.BlockSpec((C, H, TB), lambda b: (0, 0, b)),                  # x
            pl.BlockSpec((groups * gph, H, H, 1), lambda b: (0, 0, 0, 0)),  # QE
            pl.BlockSpec((groups * gph, H, H, 1), lambda b: (0, 0, 0, 0)),  # KE
            pl.BlockSpec((groups * gp, H, H, 1), lambda b: (0, 0, 0, 0)),   # VE
        ],
        out_specs=pl.BlockSpec((out_planes, H, TB), lambda b: (0, 0, b)),
        compiler_params=pltpu.CompilerParams(dimension_semantics=("parallel",)),
    )(folded['wq'], folded['bq'], folded['bo'], x_p,
      folded['QE'], folded['KE'], folded['VE'])

    # (OP, H, N*W) -> NCHW (N, OP, H, W)
    return jnp.transpose(out.reshape(out_planes, H, N, W), (2, 0, 1, 3))


# ----------------------------------------------------------------------------- reference
def reference_forward(x_nchw, raw, *, in_planes, out_planes, groups, kernel_size):
    """Pure-JAX transcription of the PyTorch forward (eval-mode BN), un-folded."""
    N, C, H, W = x_nchw.shape
    gp = out_planes // groups
    gph = gp // 2
    K = kernel_size
    B = N * W

    s1, b1 = _bn_affine(raw['bn_qkv'])
    s2, b2 = _bn_affine(raw['bn_sim'])
    s3, b3 = _bn_affine(raw['bn_out'])

    xp = jnp.transpose(x_nchw, (0, 3, 1, 2)).reshape(B, C, H)
    qkv = jnp.einsum('oc,bch->boh', raw['w_qkv'], xp)
    qkv = qkv * s1[None, :, None] + b1[None, :, None]
    qkv = qkv.reshape(B, groups, 2 * gp, H)
    q, k, v = qkv[:, :, :gph], qkv[:, :, gph:gp], qkv[:, :, gp:]

    q_emb, k_emb, v_emb = _embeddings(raw['relative'], gp, K)
    qr = jnp.einsum('bgci,cij->bgij', q, q_emb) * raw['f_qr']
    kr = jnp.swapaxes(jnp.einsum('bgci,cij->bgij', k, k_emb), 2, 3) * raw['f_kr']
    qk = jnp.einsum('bgci,bgcj->bgij', q, k)

    stacked = jnp.concatenate([qk, qr, kr], axis=1)                    # (B, 3G, H, H)
    stacked = stacked * s2[None, :, None, None] + b2[None, :, None, None]
    logits = stacked.reshape(B, 3, groups, H, H).sum(axis=1)
    sim = jax.nn.softmax(logits, axis=3)

    sv = jnp.einsum('bgij,bgcj->bgci', sim, v) * raw['f_sv']
    sve = jnp.einsum('bgij,cij->bgci', sim, v_emb) * raw['f_sve']
    so = jnp.concatenate([sv, sve], axis=-1).reshape(B, 2 * out_planes, H)
    so = so * s3[None, :, None] + b3[None, :, None]
    out = so.reshape(N, W, out_planes, 2, H).sum(axis=-2)              # (N, W, OP, H)
    return jnp.transpose(out, (0, 2, 3, 1))                            # (N, OP, H, W)


if __name__ == "__main__":
    IN_PLANES, OUT_PLANES, GROUPS, K = 8, 8, 2, 16      # group_planes = 4
    N, W = 4, 64                                         # B = 256 -> grid of 2 steps, TB = 128

    key = jax.random.PRNGKey(0)
    kx, kp = jax.random.split(key)
    x = jax.random.normal(kx, (N, IN_PLANES, K, W), jnp.float32)       # NCHW, H == kernel_size

    raw = init_raw_params(kp, IN_PLANES, OUT_PLANES, GROUPS, K)
    folded = fold_params(raw, in_planes=IN_PLANES, out_planes=OUT_PLANES,
                         groups=GROUPS, kernel_size=K)

    out = axial_attention_dynamic(x, folded, in_planes=IN_PLANES, out_planes=OUT_PLANES,
                                  groups=GROUPS, kernel_size=K)
    out = jax.block_until_ready(out)
    assert out.shape == (N, OUT_PLANES, K, W), out.shape

    ref = reference_forward(x, raw, in_planes=IN_PLANES, out_planes=OUT_PLANES,
                            groups=GROUPS, kernel_size=K)
    np.testing.assert_allclose(np.asarray(out), np.asarray(ref), atol=2e-3, rtol=2e-3)

    print("KERNEL_OK")
</pallas_src>

<mosaic_0001>
module attributes {stable_mosaic.version = 11 : i64} {
  func.func @kernel(%arg0: i32, %arg1: memref<16x8xf32, #tpu.memory_space<smem>>, %arg2: memref<16xf32, #tpu.memory_space<smem>>, %arg3: memref<8xf32, #tpu.memory_space<smem>>, %arg4: memref<8x16x128xf32, #tpu.memory_space<vmem>>, %arg5: memref<4x16x16x1xf32, #tpu.memory_space<vmem>>, %arg6: memref<4x16x16x1xf32, #tpu.memory_space<vmem>>, %arg7: memref<8x16x16x1xf32, #tpu.memory_space<vmem>>, %arg8: memref<8x16x128xf32, #tpu.memory_space<vmem>>) attributes {dimension_semantics = [#tpu.dimension_semantics<parallel>], iteration_bounds = array<i64: 2>, scalar_prefetch = 0 : i64, scratch_operands = 0 : i64, tpu.core_type = #tpu.core_type<tc>, window_params = [{transform_indices = @transform_0, window_bounds = array<i64: 16, 8>}, {transform_indices = @transform_1, window_bounds = array<i64: 16>}, {transform_indices = @transform_2, window_bounds = array<i64: 8>}, {transform_indices = @transform_3, window_bounds = array<i64: 8, 16, 128>}, {pipeline_mode = #tpu.pipeline_mode<synchronous>, transform_indices = @transform_4, window_bounds = array<i64: 4, 16, 16, 1>}, {pipeline_mode = #tpu.pipeline_mode<synchronous>, transform_indices = @transform_5, window_bounds = array<i64: 4, 16, 16, 1>}, {pipeline_mode = #tpu.pipeline_mode<synchronous>, transform_indices = @transform_6, window_bounds = array<i64: 8, 16, 16, 1>}, {transform_indices = @transform_7, window_bounds = array<i64: 8, 16, 128>}]} {
    %c0 = arith.constant 0 : index
    %c0_0 = arith.constant 0 : index
    %c0_1 = arith.constant 0 : index
    %0 = vector.load %arg4[%c0, %c0_0, %c0_1] : memref<8x16x128xf32, #tpu.memory_space<vmem>>, vector<1x16x128xf32>
    %1 = vector.shape_cast %0 : vector<1x16x128xf32> to vector<16x128xf32>
    %c1 = arith.constant 1 : index
    %c0_2 = arith.constant 0 : index
    %c0_3 = arith.constant 0 : index
    %2 = vector.load %arg4[%c1, %c0_2, %c0_3] : memref<8x16x128xf32, #tpu.memory_space<vmem>>, vector<1x16x128xf32>
    %3 = vector.shape_cast %2 : vector<1x16x128xf32> to vector<16x128xf32>
    %c2 = arith.constant 2 : index
    %c0_4 = arith.constant 0 : index
    %c0_5 = arith.constant 0 : index
    %4 = vector.load %arg4[%c2, %c0_4, %c0_5] : memref<8x16x128xf32, #tpu.memory_space<vmem>>, vector<1x16x128xf32>
    %5 = vector.shape_cast %4 : vector<1x16x128xf32> to vector<16x128xf32>
    %c3 = arith.constant 3 : index
    %c0_6 = arith.constant 0 : index
    %c0_7 = arith.constant 0 : index
    %6 = vector.load %arg4[%c3, %c0_6, %c0_7] : memref<8x16x128xf32, #tpu.memory_space<vmem>>, vector<1x16x128xf32>
    %7 = vector.shape_cast %6 : vector<1x16x128xf32> to vector<16x128xf32>
    %c4 = arith.constant 4 : index
    %c0_8 = arith.constant 0 : index
    %c0_9 = arith.constant 0 : index
    %8 = vector.load %arg4[%c4, %c0_8, %c0_9] : memref<8x16x128xf32, #tpu.memory_space<vmem>>, vector<1x16x128xf32>
    %9 = vector.shape_cast %8 : vector<1x16x128xf32> to vector<16x128xf32>
    %c5 = arith.constant 5 : index
    %c0_10 = arith.constant 0 : index
    %c0_11 = arith.constant 0 : index
    %10 = vector.load %arg4[%c5, %c0_10, %c0_11] : memref<8x16x128xf32, #tpu.memory_space<vmem>>, vector<1x16x128xf32>
    %11 = vector.shape_cast %10 : vector<1x16x128xf32> to vector<16x128xf32>
    %c6 = arith.constant 6 : index
    %c0_12 = arith.constant 0 : index
    %c0_13 = arith.constant 0 : index
    %12 = vector.load %arg4[%c6, %c0_12, %c0_13] : memref<8x16x128xf32, #tpu.memory_space<vmem>>, vector<1x16x128xf32>
    %13 = vector.shape_cast %12 : vector<1x16x128xf32> to vector<16x128xf32>
    %c7 = arith.constant 7 : index
    %c0_14 = arith.constant 0 : index
    %c0_15 = arith.constant 0 : index
    %14 = vector.load %arg4[%c7, %c0_14, %c0_15] : memref<8x16x128xf32, #tpu.memory_space<vmem>>, vector<1x16x128xf32>
    %15 = vector.shape_cast %14 : vector<1x16x128xf32> to vector<16x128xf32>
    %c0_16 = arith.constant 0 : index
    %c0_17 = arith.constant 0 : index
    %16 = memref.load %arg1[%c0_16, %c0_17] : memref<16x8xf32, #tpu.memory_space<smem>>
    %17 = vector.broadcast %16 : f32 to vector<16x128xf32>
    %18 = arith.mulf %1, %17 : vector<16x128xf32>
    %c0_18 = arith.constant 0 : index
    %c1_19 = arith.constant 1 : index
    %19 = memref.load %arg1[%c0_18, %c1_19] : memref<16x8xf32, #tpu.memory_space<smem>>
    %20 = vector.broadcast %19 : f32 to vector<16x128xf32>
    %21 = arith.mulf %3, %20 : vector<16x128xf32>
    %22 = arith.addf %18, %21 : vector<16x128xf32>
    %c0_20 = arith.constant 0 : index
    %c2_21 = arith.constant 2 : index
    %23 = memref.load %arg1[%c0_20, %c2_21] : memref<16x8xf32, #tpu.memory_space<smem>>
    %24 = vector.broadcast %23 : f32 to vector<16x128xf32>
    %25 = arith.mulf %5, %24 : vector<16x128xf32>
    %26 = arith.addf %22, %25 : vector<16x128xf32>
    %c0_22 = arith.constant 0 : index
    %c3_23 = arith.constant 3 : index
    %27 = memref.load %arg1[%c0_22, %c3_23] : memref<16x8xf32, #tpu.memory_space<smem>>
    %28 = vector.broadcast %27 : f32 to vector<16x128xf32>
    %29 = arith.mulf %7, %28 : vector<16x128xf32>
    %30 = arith.addf %26, %29 : vector<16x128xf32>
    %c0_24 = arith.constant 0 : index
    %c4_25 = arith.constant 4 : index
    %31 = memref.load %arg1[%c0_24, %c4_25] : memref<16x8xf32, #tpu.memory_space<smem>>
    %32 = vector.broadcast %31 : f32 to vector<16x128xf32>
    %33 = arith.mulf %9, %32 : vector<16x128xf32>
    %34 = arith.addf %30, %33 : vector<16x128xf32>
    %c0_26 = arith.constant 0 : index
    %c5_27 = arith.constant 5 : index
    %35 = memref.load %arg1[%c0_26, %c5_27] : memref<16x8xf32, #tpu.memory_space<smem>>
    %36 = vector.broadcast %35 : f32 to vector<16x128xf32>
    %37 = arith.mulf %11, %36 : vector<16x128xf32>
    %38 = arith.addf %34, %37 : vector<16x128xf32>
    %c0_28 = arith.constant 0 : index
    %c6_29 = arith.constant 6 : index
    %39 = memref.load %arg1[%c0_28, %c6_29] : memref<16x8xf32, #tpu.memory_space<smem>>
    %40 = vector.broadcast %39 : f32 to vector<16x128xf32>
    %41 = arith.mulf %13, %40 : vector<16x128xf32>
    %42 = arith.addf %38, %41 : vector<16x128xf32>
    %c0_30 = arith.constant 0 : index
    %c7_31 = arith.constant 7 : index
    %43 = memref.load %arg1[%c0_30, %c7_31] : memref<16x8xf32, #tpu.memory_space<smem>>
    %44 = vector.broadcast %43 : f32 to vector<16x128xf32>
    %45 = arith.mulf %15, %44 : vector<16x128xf32>
    %46 = arith.addf %42, %45 : vector<16x128xf32>
    %c0_32 = arith.constant 0 : index
    %47 = memref.load %arg2[%c0_32] : memref<16xf32, #tpu.memory_space<smem>>
    %48 = vector.broadcast %47 : f32 to vector<16x128xf32>
    %49 = arith.addf %46, %48 : vector<16x128xf32>
    %c1_33 = arith.constant 1 : index
    %c0_34 = arith.constant 0 : index
    %50 = memref.load %arg1[%c1_33, %c0_34] : memref<16x8xf32, #tpu.memory_space<smem>>
    %51 = vector.broadcast %50 : f32 to vector<16x128xf32>
    %52 = arith.mulf %1, %51 : vector<16x128xf32>
    %c1_35 = arith.constant 1 : index
    %c1_36 = arith.constant 1 : index
    %53 = memref.load %arg1[%c1_35, %c1_36] : memref<16x8xf32, #tpu.memory_space<smem>>
    %54 = vector.broadcast %53 : f32 to vector<16x128xf32>
    %55 = arith.mulf %3, %54 : vector<16x128xf32>
    %56 = arith.addf %52, %55 : vector<16x128xf32>
    %c1_37 = arith.constant 1 : index
    %c2_38 = arith.constant 2 : index
    %57 = memref.load %arg1[%c1_37, %c2_38] : memref<16x8xf32, #tpu.memory_space<smem>>
    %58 = vector.broadcast %57 : f32 to vector<16x128xf32>
    %59 = arith.mulf %5, %58 : vector<16x128xf32>
    %60 = arith.addf %56, %59 : vector<16x128xf32>
    %c1_39 = arith.constant 1 : index
    %c3_40 = arith.constant 3 : index
    %61 = memref.load %arg1[%c1_39, %c3_40] : memref<16x8xf32, #tpu.memory_space<smem>>
    %62 = vector.broadcast %61 : f32 to vector<16x128xf32>
    %63 = arith.mulf %7, %62 : vector<16x128xf32>
    %64 = arith.addf %60, %63 : vector<16x128xf32>
    %c1_41 = arith.constant 1 : index
    %c4_42 = arith.constant 4 : index
    %65 = memref.load %arg1[%c1_41, %c4_42] : memref<16x8xf32, #tpu.memory_space<smem>>
    %66 = vector.broadcast %65 : f32 to vector<16x128xf32>
    %67 = arith.mulf %9, %66 : vector<16x128xf32>
    %68 = arith.addf %64, %67 : vector<16x128xf32>
    %c1_43 = arith.constant 1 : index
    %c5_44 = arith.constant 5 : index
    %69 = memref.load %arg1[%c1_43, %c5_44] : memref<16x8xf32, #tpu.memory_space<smem>>
    %70 = vector.broadcast %69 : f32 to vector<16x128xf32>
    %71 = arith.mulf %11, %70 : vector<16x128xf32>
    %72 = arith.addf %68, %71 : vector<16x128xf32>
    %c1_45 = arith.constant 1 : index
    %c6_46 = arith.constant 6 : index
    %73 = memref.load %arg1[%c1_45, %c6_46] : memref<16x8xf32, #tpu.memory_space<smem>>
    %74 = vector.broadcast %73 : f32 to vector<16x128xf32>
    %75 = arith.mulf %13, %74 : vector<16x128xf32>
    %76 = arith.addf %72, %75 : vector<16x128xf32>
    %c1_47 = arith.constant 1 : index
    %c7_48 = arith.constant 7 : index
    %77 = memref.load %arg1[%c1_47, %c7_48] : memref<16x8xf32, #tpu.memory_space<smem>>
    %78 = vector.broadcast %77 : f32 to vector<16x128xf32>
    %79 = arith.mulf %15, %78 : vector<16x128xf32>
    %80 = arith.addf %76, %79 : vector<16x128xf32>
    %c1_49 = arith.constant 1 : index
    %81 = memref.load %arg2[%c1_49] : memref<16xf32, #tpu.memory_space<smem>>
    %82 = vector.broadcast %81 : f32 to vector<16x128xf32>
    %83 = arith.addf %80, %82 : vector<16x128xf32>
    %c2_50 = arith.constant 2 : index
    %c0_51 = arith.constant 0 : index
    %84 = memref.load %arg1[%c2_50, %c0_51] : memref<16x8xf32, #tpu.memory_space<smem>>
    %85 = vector.broadcast %84 : f32 to vector<16x128xf32>
    %86 = arith.mulf %1, %85 : vector<16x128xf32>
    %c2_52 = arith.constant 2 : index
    %c1_53 = arith.constant 1 : index
    %87 = memref.load %arg1[%c2_52, %c1_53] : memref<16x8xf32, #tpu.memory_space<smem>>
    %88 = vector.broadcast %87 : f32 to vector<16x128xf32>
    %89 = arith.mulf %3, %88 : vector<16x128xf32>
    %90 = arith.addf %86, %89 : vector<16x128xf32>
    %c2_54 = arith.constant 2 : index
    %c2_55 = arith.constant 2 : index
    %91 = memref.load %arg1[%c2_54, %c2_55] : memref<16x8xf32, #tpu.memory_space<smem>>
    %92 = vector.broadcast %91 : f32 to vector<16x128xf32>
    %93 = arith.mulf %5, %92 : vector<16x128xf32>
    %94 = arith.addf %90, %93 : vector<16x128xf32>
    %c2_56 = arith.constant 2 : index
    %c3_57 = arith.constant 3 : index
    %95 = memref.load %arg1[%c2_56, %c3_57] : memref<16x8xf32, #tpu.memory_space<smem>>
    %96 = vector.broadcast %95 : f32 to vector<16x128xf32>
    %97 = arith.mulf %7, %96 : vector<16x128xf32>
    %98 = arith.addf %94, %97 : vector<16x128xf32>
    %c2_58 = arith.constant 2 : index
    %c4_59 = arith.constant 4 : index
    %99 = memref.load %arg1[%c2_58, %c4_59] : memref<16x8xf32, #tpu.memory_space<smem>>
    %100 = vector.broadcast %99 : f32 to vector<16x128xf32>
    %101 = arith.mulf %9, %100 : vector<16x128xf32>
    %102 = arith.addf %98, %101 : vector<16x128xf32>
    %c2_60 = arith.constant 2 : index
    %c5_61 = arith.constant 5 : index
    %103 = memref.load %arg1[%c2_60, %c5_61] : memref<16x8xf32, #tpu.memory_space<smem>>
    %104 = vector.broadcast %103 : f32 to vector<16x128xf32>
    %105 = arith.mulf %11, %104 : vector<16x128xf32>
    %106 = arith.addf %102, %105 : vector<16x128xf32>
    %c2_62 = arith.constant 2 : index
    %c6_63 = arith.constant 6 : index
    %107 = memref.load %arg1[%c2_62, %c6_63] : memref<16x8xf32, #tpu.memory_space<smem>>
    %108 = vector.broadcast %107 : f32 to vector<16x128xf32>
    %109 = arith.mulf %13, %108 : vector<16x128xf32>
    %110 = arith.addf %106, %109 : vector<16x128xf32>
    %c2_64 = arith.constant 2 : index
    %c7_65 = arith.constant 7 : index
    %111 = memref.load %arg1[%c2_64, %c7_65] : memref<16x8xf32, #tpu.memory_space<smem>>
    %112 = vector.broadcast %111 : f32 to vector<16x128xf32>
    %113 = arith.mulf %15, %112 : vector<16x128xf32>
    %114 = arith.addf %110, %113 : vector<16x128xf32>
    %c2_66 = arith.constant 2 : index
    %115 = memref.load %arg2[%c2_66] : memref<16xf32, #tpu.memory_space<smem>>
    %116 = vector.broadcast %115 : f32 to vector<16x128xf32>
    %117 = arith.addf %114, %116 : vector<16x128xf32>
    %c3_67 = arith.constant 3 : index
    %c0_68 = arith.constant 0 : index
    %118 = memref.load %arg1[%c3_67, %c0_68] : memref<16x8xf32, #tpu.memory_space<smem>>
    %119 = vector.broadcast %118 : f32 to vector<16x128xf32>
    %120 = arith.mulf %1, %119 : vector<16x128xf32>
    %c3_69 = arith.constant 3 : index
    %c1_70 = arith.constant 1 : index
    %121 = memref.load %arg1[%c3_69, %c1_70] : memref<16x8xf32, #tpu.memory_space<smem>>
    %122 = vector.broadcast %121 : f32 to vector<16x128xf32>
    %123 = arith.mulf %3, %122 : vector<16x128xf32>
    %124 = arith.addf %120, %123 : vector<16x128xf32>
    %c3_71 = arith.constant 3 : index
    %c2_72 = arith.constant 2 : index
    %125 = memref.load %arg1[%c3_71, %c2_72] : memref<16x8xf32, #tpu.memory_space<smem>>
    %126 = vector.broadcast %125 : f32 to vector<16x128xf32>
    %127 = arith.mulf %5, %126 : vector<16x128xf32>
    %128 = arith.addf %124, %127 : vector<16x128xf32>
    %c3_73 = arith.constant 3 : index
    %c3_74 = arith.constant 3 : index
    %129 = memref.load %arg1[%c3_73, %c3_74] : memref<16x8xf32, #tpu.memory_space<smem>>
    %130 = vector.broadcast %129 : f32 to vector<16x128xf32>
    %131 = arith.mulf %7, %130 : vector<16x128xf32>
    %132 = arith.addf %128, %131 : vector<16x128xf32>
    %c3_75 = arith.constant 3 : index
    %c4_76 = arith.constant 4 : index
    %133 = memref.load %arg1[%c3_75, %c4_76] : memref<16x8xf32, #tpu.memory_space<smem>>
    %134 = vector.broadcast %133 : f32 to vector<16x128xf32>
    %135 = arith.mulf %9, %134 : vector<16x128xf32>
    %136 = arith.addf %132, %135 : vector<16x128xf32>
    %c3_77 = arith.constant 3 : index
    %c5_78 = arith.constant 5 : index
    %137 = memref.load %arg1[%c3_77, %c5_78] : memref<16x8xf32, #tpu.memory_space<smem>>
    %138 = vector.broadcast %137 : f32 to vector<16x128xf32>
    %139 = arith.mulf %11, %138 : vector<16x128xf32>
    %140 = arith.addf %136, %139 : vector<16x128xf32>
    %c3_79 = arith.constant 3 : index
    %c6_80 = arith.constant 6 : index
    %141 = memref.load %arg1[%c3_79, %c6_80] : memref<16x8xf32, #tpu.memory_space<smem>>
    %142 = vector.broadcast %141 : f32 to vector<16x128xf32>
    %143 = arith.mulf %13, %142 : vector<16x128xf32>
    %144 = arith.addf %140, %143 : vector<16x128xf32>
    %c3_81 = arith.constant 3 : index
    %c7_82 = arith.constant 7 : index
    %145 = memref.load %arg1[%c3_81, %c7_82] : memref<16x8xf32, #tpu.memory_space<smem>>
    %146 = vector.broadcast %145 : f32 to vector<16x128xf32>
    %147 = arith.mulf %15, %146 : vector<16x128xf32>
    %148 = arith.addf %144, %147 : vector<16x128xf32>
    %c3_83 = arith.constant 3 : index
    %149 = memref.load %arg2[%c3_83] : memref<16xf32, #tpu.memory_space<smem>>
    %150 = vector.broadcast %149 : f32 to vector<16x128xf32>
    %151 = arith.addf %148, %150 : vector<16x128xf32>
    %c4_84 = arith.constant 4 : index
    %c0_85 = arith.constant 0 : index
    %152 = memref.load %arg1[%c4_84, %c0_85] : memref<16x8xf32, #tpu.memory_space<smem>>
    %153 = vector.broadcast %152 : f32 to vector<16x128xf32>
    %154 = arith.mulf %1, %153 : vector<16x128xf32>
    %c4_86 = arith.constant 4 : index
    %c1_87 = arith.constant 1 : index
    %155 = memref.load %arg1[%c4_86, %c1_87] : memref<16x8xf32, #tpu.memory_space<smem>>
    %156 = vector.broadcast %155 : f32 to vector<16x128xf32>
    %157 = arith.mulf %3, %156 : vector<16x128xf32>
    %158 = arith.addf %154, %157 : vector<16x128xf32>
    %c4_88 = arith.constant 4 : index
    %c2_89 = arith.constant 2 : index
    %159 = memref.load %arg1[%c4_88, %c2_89] : memref<16x8xf32, #tpu.memory_space<smem>>
    %160 = vector.broadcast %159 : f32 to vector<16x128xf32>
    %161 = arith.mulf %5, %160 : vector<16x128xf32>
    %162 = arith.addf %158, %161 : vector<16x128xf32>
    %c4_90 = arith.constant 4 : index
    %c3_91 = arith.constant 3 : index
    %163 = memref.load %arg1[%c4_90, %c3_91] : memref<16x8xf32, #tpu.memory_space<smem>>
    %164 = vector.broadcast %163 : f32 to vector<16x128xf32>
    %165 = arith.mulf %7, %164 : vector<16x128xf32>
    %166 = arith.addf %162, %165 : vector<16x128xf32>
    %c4_92 = arith.constant 4 : index
    %c4_93 = arith.constant 4 : index
    %167 = memref.load %arg1[%c4_92, %c4_93] : memref<16x8xf32, #tpu.memory_space<smem>>
    %168 = vector.broadcast %167 : f32 to vector<16x128xf32>
    %169 = arith.mulf %9, %168 : vector<16x128xf32>
    %170 = arith.addf %166, %169 : vector<16x128xf32>
    %c4_94 = arith.constant 4 : index
    %c5_95 = arith.constant 5 : index
    %171 = memref.load %arg1[%c4_94, %c5_95] : memref<16x8xf32, #tpu.memory_space<smem>>
    %172 = vector.broadcast %171 : f32 to vector<16x128xf32>
    %173 = arith.mulf %11, %172 : vector<16x128xf32>
    %174 = arith.addf %170, %173 : vector<16x128xf32>
    %c4_96 = arith.constant 4 : index
    %c6_97 = arith.constant 6 : index
    %175 = memref.load %arg1[%c4_96, %c6_97] : memref<16x8xf32, #tpu.memory_space<smem>>
    %176 = vector.broadcast %175 : f32 to vector<16x128xf32>
    %177 = arith.mulf %13, %176 : vector<16x128xf32>
    %178 = arith.addf %174, %177 : vector<16x128xf32>
    %c4_98 = arith.constant 4 : index
    %c7_99 = arith.constant 7 : index
    %179 = memref.load %arg1[%c4_98, %c7_99] : memref<16x8xf32, #tpu.memory_space<smem>>
    %180 = vector.broadcast %179 : f32 to vector<16x128xf32>
    %181 = arith.mulf %15, %180 : vector<16x128xf32>
    %182 = arith.addf %178, %181 : vector<16x128xf32>
    %c4_100 = arith.constant 4 : index
    %183 = memref.load %arg2[%c4_100] : memref<16xf32, #tpu.memory_space<smem>>
    %184 = vector.broadcast %183 : f32 to vector<16x128xf32>
    %185 = arith.addf %182, %184 : vector<16x128xf32>
    %c5_101 = arith.constant 5 : index
    %c0_102 = arith.constant 0 : index
    %186 = memref.load %arg1[%c5_101, %c0_102] : memref<16x8xf32, #tpu.memory_space<smem>>
    %187 = vector.broadcast %186 : f32 to vector<16x128xf32>
    %188 = arith.mulf %1, %187 : vector<16x128xf32>
    %c5_103 = arith.constant 5 : index
    %c1_104 = arith.constant 1 : index
    %189 = memref.load %arg1[%c5_103, %c1_104] : memref<16x8xf32, #tpu.memory_space<smem>>
    %190 = vector.broadcast %189 : f32 to vector<16x128xf32>
    %191 = arith.mulf %3, %190 : vector<16x128xf32>
    %192 = arith.addf %188, %191 : vector<16x128xf32>
    %c5_105 = arith.constant 5 : index
    %c2_106 = arith.constant 2 : index
    %193 = memref.load %arg1[%c5_105, %c2_106] : memref<16x8xf32, #tpu.memory_space<smem>>
    %194 = vector.broadcast %193 : f32 to vector<16x128xf32>
    %195 = arith.mulf %5, %194 : vector<16x128xf32>
    %196 = arith.addf %192, %195 : vector<16x128xf32>
    %c5_107 = arith.constant 5 : index
    %c3_108 = arith.constant 3 : index
    %197 = memref.load %arg1[%c5_107, %c3_108] : memref<16x8xf32, #tpu.memory_space<smem>>
    %198 = vector.broadcast %197 : f32 to vector<16x128xf32>
    %199 = arith.mulf %7, %198 : vector<16x128xf32>
    %200 = arith.addf %196, %199 : vector<16x128xf32>
    %c5_109 = arith.constant 5 : index
    %c4_110 = arith.constant 4 : index
    %201 = memref.load %arg1[%c5_109, %c4_110] : memref<16x8xf32, #tpu.memory_space<smem>>
    %202 = vector.broadcast %201 : f32 to vector<16x128xf32>
    %203 = arith.mulf %9, %202 : vector<16x128xf32>
    %204 = arith.addf %200, %203 : vector<16x128xf32>
    %c5_111 = arith.constant 5 : index
    %c5_112 = arith.constant 5 : index
    %205 = memref.load %arg1[%c5_111, %c5_112] : memref<16x8xf32, #tpu.memory_space<smem>>
    %206 = vector.broadcast %205 : f32 to vector<16x128xf32>
    %207 = arith.mulf %11, %206 : vector<16x128xf32>
    %208 = arith.addf %204, %207 : vector<16x128xf32>
    %c5_113 = arith.constant 5 : index
    %c6_114 = arith.constant 6 : index
    %209 = memref.load %arg1[%c5_113, %c6_114] : memref<16x8xf32, #tpu.memory_space<smem>>
    %210 = vector.broadcast %209 : f32 to vector<16x128xf32>
    %211 = arith.mulf %13, %210 : vector<16x128xf32>
    %212 = arith.addf %208, %211 : vector<16x128xf32>
    %c5_115 = arith.constant 5 : index
    %c7_116 = arith.constant 7 : index
    %213 = memref.load %arg1[%c5_115, %c7_116] : memref<16x8xf32, #tpu.memory_space<smem>>
    %214 = vector.broadcast %213 : f32 to vector<16x128xf32>
    %215 = arith.mulf %15, %214 : vector<16x128xf32>
    %216 = arith.addf %212, %215 : vector<16x128xf32>
    %c5_117 = arith.constant 5 : index
    %217 = memref.load %arg2[%c5_117] : memref<16xf32, #tpu.memory_space<smem>>
    %218 = vector.broadcast %217 : f32 to vector<16x128xf32>
    %219 = arith.addf %216, %218 : vector<16x128xf32>
    %c6_118 = arith.constant 6 : index
    %c0_119 = arith.constant 0 : index
    %220 = memref.load %arg1[%c6_118, %c0_119] : memref<16x8xf32, #tpu.memory_space<smem>>
    %221 = vector.broadcast %220 : f32 to vector<16x128xf32>
    %222 = arith.mulf %1, %221 : vector<16x128xf32>
    %c6_120 = arith.constant 6 : index
    %c1_121 = arith.constant 1 : index
    %223 = memref.load %arg1[%c6_120, %c1_121] : memref<16x8xf32, #tpu.memory_space<smem>>
    %224 = vector.broadcast %223 : f32 to vector<16x128xf32>
    %225 = arith.mulf %3, %224 : vector<16x128xf32>
    %226 = arith.addf %222, %225 : vector<16x128xf32>
    %c6_122 = arith.constant 6 : index
    %c2_123 = arith.constant 2 : index
    %227 = memref.load %arg1[%c6_122, %c2_123] : memref<16x8xf32, #tpu.memory_space<smem>>
    %228 = vector.broadcast %227 : f32 to vector<16x128xf32>
    %229 = arith.mulf %5, %228 : vector<16x128xf32>
    %230 = arith.addf %226, %229 : vector<16x128xf32>
    %c6_124 = arith.constant 6 : index
    %c3_125 = arith.constant 3 : index
    %231 = memref.load %arg1[%c6_124, %c3_125] : memref<16x8xf32, #tpu.memory_space<smem>>
    %232 = vector.broadcast %231 : f32 to vector<16x128xf32>
    %233 = arith.mulf %7, %232 : vector<16x128xf32>
    %234 = arith.addf %230, %233 : vector<16x128xf32>
    %c6_126 = arith.constant 6 : index
    %c4_127 = arith.constant 4 : index
    %235 = memref.load %arg1[%c6_126, %c4_127] : memref<16x8xf32, #tpu.memory_space<smem>>
    %236 = vector.broadcast %235 : f32 to vector<16x128xf32>
    %237 = arith.mulf %9, %236 : vector<16x128xf32>
    %238 = arith.addf %234, %237 : vector<16x128xf32>
    %c6_128 = arith.constant 6 : index
    %c5_129 = arith.constant 5 : index
    %239 = memref.load %arg1[%c6_128, %c5_129] : memref<16x8xf32, #tpu.memory_space<smem>>
    %240 = vector.broadcast %239 : f32 to vector<16x128xf32>
    %241 = arith.mulf %11, %240 : vector<16x128xf32>
    %242 = arith.addf %238, %241 : vector<16x128xf32>
    %c6_130 = arith.constant 6 : index
    %c6_131 = arith.constant 6 : index
    %243 = memref.load %arg1[%c6_130, %c6_131] : memref<16x8xf32, #tpu.memory_space<smem>>
    %244 = vector.broadcast %243 : f32 to vector<16x128xf32>
    %245 = arith.mulf %13, %244 : vector<16x128xf32>
    %246 = arith.addf %242, %245 : vector<16x128xf32>
    %c6_132 = arith.constant 6 : index
    %c7_133 = arith.constant 7 : index
    %247 = memref.load %arg1[%c6_132, %c7_133] : memref<16x8xf32, #tpu.memory_space<smem>>
    %248 = vector.broadcast %247 : f32 to vector<16x128xf32>
    %249 = arith.mulf %15, %248 : vector<16x128xf32>
    %250 = arith.addf %246, %249 : vector<16x128xf32>
    %c6_134 = arith.constant 6 : index
    %251 = memref.load %arg2[%c6_134] : memref<16xf32, #tpu.memory_space<smem>>
    %252 = vector.broadcast %251 : f32 to vector<16x128xf32>
    %253 = arith.addf %250, %252 : vector<16x128xf32>
    %c7_135 = arith.constant 7 : index
    %c0_136 = arith.constant 0 : index
    %254 = memref.load %arg1[%c7_135, %c0_136] : memref<16x8xf32, #tpu.memory_space<smem>>
    %255 = vector.broadcast %254 : f32 to vector<16x128xf32>
    %256 = arith.mulf %1, %255 : vector<16x128xf32>
    %c7_137 = arith.constant 7 : index
    %c1_138 = arith.constant 1 : index
    %257 = memref.load %arg1[%c7_137, %c1_138] : memref<16x8xf32, #tpu.memory_space<smem>>
    %258 = vector.broadcast %257 : f32 to vector<16x128xf32>
    %259 = arith.mulf %3, %258 : vector<16x128xf32>
    %260 = arith.addf %256, %259 : vector<16x128xf32>
    %c7_139 = arith.constant 7 : index
    %c2_140 = arith.constant 2 : index
    %261 = memref.load %arg1[%c7_139, %c2_140] : memref<16x8xf32, #tpu.memory_space<smem>>
    %262 = vector.broadcast %261 : f32 to vector<16x128xf32>
    %263 = arith.mulf %5, %262 : vector<16x128xf32>
    %264 = arith.addf %260, %263 : vector<16x128xf32>
    %c7_141 = arith.constant 7 : index
    %c3_142 = arith.constant 3 : index
    %265 = memref.load %arg1[%c7_141, %c3_142] : memref<16x8xf32, #tpu.memory_space<smem>>
    %266 = vector.broadcast %265 : f32 to vector<16x128xf32>
    %267 = arith.mulf %7, %266 : vector<16x128xf32>
    %268 = arith.addf %264, %267 : vector<16x128xf32>
    %c7_143 = arith.constant 7 : index
    %c4_144 = arith.constant 4 : index
    %269 = memref.load %arg1[%c7_143, %c4_144] : memref<16x8xf32, #tpu.memory_space<smem>>
    %270 = vector.broadcast %269 : f32 to vector<16x128xf32>
    %271 = arith.mulf %9, %270 : vector<16x128xf32>
    %272 = arith.addf %268, %271 : vector<16x128xf32>
    %c7_145 = arith.constant 7 : index
    %c5_146 = arith.constant 5 : index
    %273 = memref.load %arg1[%c7_145, %c5_146] : memref<16x8xf32, #tpu.memory_space<smem>>
    %274 = vector.broadcast %273 : f32 to vector<16x128xf32>
    %275 = arith.mulf %11, %274 : vector<16x128xf32>
    %276 = arith.addf %272, %275 : vector<16x128xf32>
    %c7_147 = arith.constant 7 : index
    %c6_148 = arith.constant 6 : index
    %277 = memref.load %arg1[%c7_147, %c6_148] : memref<16x8xf32, #tpu.memory_space<smem>>
    %278 = vector.broadcast %277 : f32 to vector<16x128xf32>
    %279 = arith.mulf %13, %278 : vector<16x128xf32>
    %280 = arith.addf %276, %279 : vector<16x128xf32>
    %c7_149 = arith.constant 7 : index
    %c7_150 = arith.constant 7 : index
    %281 = memref.load %arg1[%c7_149, %c7_150] : memref<16x8xf32, #tpu.memory_space<smem>>
    %282 = vector.broadcast %281 : f32 to vector<16x128xf32>
    %283 = arith.mulf %15, %282 : vector<16x128xf32>
    %284 = arith.addf %280, %283 : vector<16x128xf32>
    %c7_151 = arith.constant 7 : index
    %285 = memref.load %arg2[%c7_151] : memref<16xf32, #tpu.memory_space<smem>>
    %286 = vector.broadcast %285 : f32 to vector<16x128xf32>
    %287 = arith.addf %284, %286 : vector<16x128xf32>
    %288 = vector.shape_cast %49 : vector<16x128xf32> to vector<1x16x128xf32>
    %289 = vector.shape_cast %117 : vector<16x128xf32> to vector<16x1x128xf32>
    %290 = vector.broadcast %288 : vector<1x16x128xf32> to vector<16x16x128xf32>
    %291 = vector.broadcast %289 : vector<16x1x128xf32> to vector<16x16x128xf32>
    %292 = arith.mulf %290, %291 : vector<16x16x128xf32>
    %293 = vector.shape_cast %83 : vector<16x128xf32> to vector<1x16x128xf32>
    %294 = vector.shape_cast %151 : vector<16x128xf32> to vector<16x1x128xf32>
    %295 = vector.broadcast %293 : vector<1x16x128xf32> to vector<16x16x128xf32>
    %296 = vector.broadcast %294 : vector<16x1x128xf32> to vector<16x16x128xf32>
    %297 = arith.mulf %295, %296 : vector<16x16x128xf32>
    %298 = arith.addf %292, %297 : vector<16x16x128xf32>
    %c0_152 = arith.constant 0 : index
    %c0_153 = arith.constant 0 : index
    %c0_154 = arith.constant 0 : index
    %c0_155 = arith.constant 0 : index
    %299 = vector.load %arg5[%c0_152, %c0_153, %c0_154, %c0_155] : memref<4x16x16x1xf32, #tpu.memory_space<vmem>>, vector<1x16x16x1xf32>
    %300 = vector.shape_cast %299 : vector<1x16x16x1xf32> to vector<16x16x1xf32>
    %301 = vector.shape_cast %49 : vector<16x128xf32> to vector<1x16x128xf32>
    %302 = vector.broadcast %300 : vector<16x16x1xf32> to vector<16x16x128xf32>
    %303 = vector.broadcast %301 : vector<1x16x128xf32> to vector<16x16x128xf32>
    %304 = arith.mulf %302, %303 : vector<16x16x128xf32>
    %305 = arith.addf %298, %304 : vector<16x16x128xf32>
    %c0_156 = arith.constant 0 : index
    %c0_157 = arith.constant 0 : index
    %c0_158 = arith.constant 0 : index
    %c0_159 = arith.constant 0 : index
    %306 = vector.load %arg6[%c0_156, %c0_157, %c0_158, %c0_159] : memref<4x16x16x1xf32, #tpu.memory_space<vmem>>, vector<1x16x16x1xf32>
    %307 = vector.shape_cast %306 : vector<1x16x16x1xf32> to vector<16x16x1xf32>
    %308 = vector.shape_cast %117 : vector<16x128xf32> to vector<16x1x128xf32>
    %309 = vector.broadcast %307 : vector<16x16x1xf32> to vector<16x16x128xf32>
    %310 = vector.broadcast %308 : vector<16x1x128xf32> to vector<16x16x128xf32>
    %311 = arith.mulf %309, %310 : vector<16x16x128xf32>
    %312 = arith.addf %305, %311 : vector<16x16x128xf32>
    %c1_160 = arith.constant 1 : index
    %c0_161 = arith.constant 0 : index
    %c0_162 = arith.constant 0 : index
    %c0_163 = arith.constant 0 : index
    %313 = vector.load %arg5[%c1_160, %c0_161, %c0_162, %c0_163] : memref<4x16x16x1xf32, #tpu.memory_space<vmem>>, vector<1x16x16x1xf32>
    %314 = vector.shape_cast %313 : vector<1x16x16x1xf32> to vector<16x16x1xf32>
    %315 = vector.shape_cast %83 : vector<16x128xf32> to vector<1x16x128xf32>
    %316 = vector.broadcast %314 : vector<16x16x1xf32> to vector<16x16x128xf32>
    %317 = vector.broadcast %315 : vector<1x16x128xf32> to vector<16x16x128xf32>
    %318 = arith.mulf %316, %317 : vector<16x16x128xf32>
    %319 = arith.addf %312, %318 : vector<16x16x128xf32>
    %c1_164 = arith.constant 1 : index
    %c0_165 = arith.constant 0 : index
    %c0_166 = arith.constant 0 : index
    %c0_167 = arith.constant 0 : index
    %320 = vector.load %arg6[%c1_164, %c0_165, %c0_166, %c0_167] : memref<4x16x16x1xf32, #tpu.memory_space<vmem>>, vector<1x16x16x1xf32>
    %321 = vector.shape_cast %320 : vector<1x16x16x1xf32> to vector<16x16x1xf32>
    %322 = vector.shape_cast %151 : vector<16x128xf32> to vector<16x1x128xf32>
    %323 = vector.broadcast %321 : vector<16x16x1xf32> to vector<16x16x128xf32>
    %324 = vector.broadcast %322 : vector<16x1x128xf32> to vector<16x16x128xf32>
    %325 = arith.mulf %323, %324 : vector<16x16x128xf32>
    %326 = arith.addf %319, %325 : vector<16x16x128xf32>
    %cst = arith.constant dense<0xFF800000> : vector<16x128xf32>
    %327 = vector.multi_reduction <maximumf>, %326, %cst [0] : vector<16x16x128xf32> to vector<16x128xf32>
    %328 = vector.shape_cast %327 : vector<16x128xf32> to vector<1x16x128xf32>
    %329 = vector.broadcast %328 : vector<1x16x128xf32> to vector<16x16x128xf32>
    %330 = arith.subf %326, %329 : vector<16x16x128xf32>
    %331 = math.exp %330 : vector<16x16x128xf32>
    %cst_168 = arith.constant dense<0.000000e+00> : vector<16x128xf32>
    %332 = vector.multi_reduction <add>, %331, %cst_168 [0] : vector<16x16x128xf32> to vector<16x128xf32>
    %333 = vector.shape_cast %332 : vector<16x128xf32> to vector<1x16x128xf32>
    %cst_169 = arith.constant 1.000000e+00 : f32
    %334 = vector.broadcast %cst_169 : f32 to vector<1x16x128xf32>
    %335 = arith.divf %334, %333 : vector<1x16x128xf32>
    %336 = vector.broadcast %335 : vector<1x16x128xf32> to vector<16x16x128xf32>
    %337 = arith.mulf %331, %336 : vector<16x16x128xf32>
    %338 = vector.shape_cast %185 : vector<16x128xf32> to vector<16x1x128xf32>
    %339 = vector.broadcast %338 : vector<16x1x128xf32> to vector<16x16x128xf32>
    %340 = arith.mulf %337, %339 : vector<16x16x128xf32>
    %cst_170 = arith.constant dense<0.000000e+00> : vector<16x128xf32>
    %341 = vector.multi_reduction <add>, %340, %cst_170 [0] : vector<16x16x128xf32> to vector<16x128xf32>
    %c0_171 = arith.constant 0 : index
    %c0_172 = arith.constant 0 : index
    %c0_173 = arith.constant 0 : index
    %c0_174 = arith.constant 0 : index
    %342 = vector.load %arg7[%c0_171, %c0_172, %c0_173, %c0_174] : memref<8x16x16x1xf32, #tpu.memory_space<vmem>>, vector<1x16x16x1xf32>
    %343 = vector.shape_cast %342 : vector<1x16x16x1xf32> to vector<16x16x1xf32>
    %344 = vector.broadcast %343 : vector<16x16x1xf32> to vector<16x16x128xf32>
    %345 = arith.mulf %337, %344 : vector<16x16x128xf32>
    %cst_175 = arith.constant dense<0.000000e+00> : vector<16x128xf32>
    %346 = vector.multi_reduction <add>, %345, %cst_175 [0] : vector<16x16x128xf32> to vector<16x128xf32>
    %347 = arith.addf %341, %346 : vector<16x128xf32>
    %c0_176 = arith.constant 0 : index
    %348 = memref.load %arg3[%c0_176] : memref<8xf32, #tpu.memory_space<smem>>
    %349 = vector.broadcast %348 : f32 to vector<16x128xf32>
    %350 = arith.addf %347, %349 : vector<16x128xf32>
    %c0_177 = arith.constant 0 : index
    %c0_178 = arith.constant 0 : index
    %c0_179 = arith.constant 0 : index
    %351 = vector.load %arg8[%c0_177, %c0_178, %c0_179] : memref<8x16x128xf32, #tpu.memory_space<vmem>>, vector<1x16x128xf32>
    %352 = vector.shape_cast %351 : vector<1x16x128xf32> to vector<16x128xf32>
    %353 = vector.shape_cast %350 : vector<16x128xf32> to vector<1x16x128xf32>
    tpu.vector_store %arg8[%c0_177, %c0_178, %c0_179], %353 {strides = array<i32>} : memref<8x16x128xf32, #tpu.memory_space<vmem>>, vector<1x16x128xf32>,
    %354 = vector.shape_cast %219 : vector<16x128xf32> to vector<16x1x128xf32>
    %355 = vector.broadcast %354 : vector<16x1x128xf32> to vector<16x16x128xf32>
    %356 = arith.mulf %337, %355 : vector<16x16x128xf32>
    %cst_180 = arith.constant dense<0.000000e+00> : vector<16x128xf32>
    %357 = vector.multi_reduction <add>, %356, %cst_180 [0] : vector<16x16x128xf32> to vector<16x128xf32>
    %c1_181 = arith.constant 1 : index
    %c0_182 = arith.constant 0 : index
    %c0_183 = arith.constant 0 : index
    %c0_184 = arith.constant 0 : index
    %358 = vector.load %arg7[%c1_181, %c0_182, %c0_183, %c0_184] : memref<8x16x16x1xf32, #tpu.memory_space<vmem>>, vector<1x16x16x1xf32>
    %359 = vector.shape_cast %358 : vector<1x16x16x1xf32> to vector<16x16x1xf32>
    %360 = vector.broadcast %359 : vector<16x16x1xf32> to vector<16x16x128xf32>
    %361 = arith.mulf %337, %360 : vector<16x16x128xf32>
    %cst_185 = arith.constant dense<0.000000e+00> : vector<16x128xf32>
    %362 = vector.multi_reduction <add>, %361, %cst_185 [0] : vector<16x16x128xf32> to vector<16x128xf32>
    %363 = arith.addf %357, %362 : vector<16x128xf32>
    %c1_186 = arith.constant 1 : index
    %364 = memref.load %arg3[%c1_186] : memref<8xf32, #tpu.memory_space<smem>>
    %365 = vector.broadcast %364 : f32 to vector<16x128xf32>
    %366 = arith.addf %363, %365 : vector<16x128xf32>
    %c1_187 = arith.constant 1 : index
    %c0_188 = arith.constant 0 : index
    %c0_189 = arith.constant 0 : index
    %367 = vector.load %arg8[%c1_187, %c0_188, %c0_189] : memref<8x16x128xf32, #tpu.memory_space<vmem>>, vector<1x16x128xf32>
    %368 = vector.shape_cast %367 : vector<1x16x128xf32> to vector<16x128xf32>
    %369 = vector.shape_cast %366 : vector<16x128xf32> to vector<1x16x128xf32>
    tpu.vector_store %arg8[%c1_187, %c0_188, %c0_189], %369 {strides = array<i32>} : memref<8x16x128xf32, #tpu.memory_space<vmem>>, vector<1x16x128xf32>,
    %370 = vector.shape_cast %253 : vector<16x128xf32> to vector<16x1x128xf32>
    %371 = vector.broadcast %370 : vector<16x1x128xf32> to vector<16x16x128xf32>
    %372 = arith.mulf %337, %371 : vector<16x16x128xf32>
    %cst_190 = arith.constant dense<0.000000e+00> : vector<16x128xf32>
    %373 = vector.multi_reduction <add>, %372, %cst_190 [0] : vector<16x16x128xf32> to vector<16x128xf32>
    %c2_191 = arith.constant 2 : index
    %c0_192 = arith.constant 0 : index
    %c0_193 = arith.constant 0 : index
    %c0_194 = arith.constant 0 : index
    %374 = vector.load %arg7[%c2_191, %c0_192, %c0_193, %c0_194] : memref<8x16x16x1xf32, #tpu.memory_space<vmem>>, vector<1x16x16x1xf32>
    %375 = vector.shape_cast %374 : vector<1x16x16x1xf32> to vector<16x16x1xf32>
    %376 = vector.broadcast %375 : vector<16x16x1xf32> to vector<16x16x128xf32>
    %377 = arith.mulf %337, %376 : vector<16x16x128xf32>
    %cst_195 = arith.constant dense<0.000000e+00> : vector<16x128xf32>
    %378 = vector.multi_reduction <add>, %377, %cst_195 [0] : vector<16x16x128xf32> to vector<16x128xf32>
    %379 = arith.addf %373, %378 : vector<16x128xf32>
    %c2_196 = arith.constant 2 : index
    %380 = memref.load %arg3[%c2_196] : memref<8xf32, #tpu.memory_space<smem>>
    %381 = vector.broadcast %380 : f32 to vector<16x128xf32>
    %382 = arith.addf %379, %381 : vector<16x128xf32>
    %c2_197 = arith.constant 2 : index
    %c0_198 = arith.constant 0 : index
    %c0_199 = arith.constant 0 : index
    %383 = vector.load %arg8[%c2_197, %c0_198, %c0_199] : memref<8x16x128xf32, #tpu.memory_space<vmem>>, vector<1x16x128xf32>
    %384 = vector.shape_cast %383 : vector<1x16x128xf32> to vector<16x128xf32>
    %385 = vector.shape_cast %382 : vector<16x128xf32> to vector<1x16x128xf32>
    tpu.vector_store %arg8[%c2_197, %c0_198, %c0_199], %385 {strides = array<i32>} : memref<8x16x128xf32, #tpu.memory_space<vmem>>, vector<1x16x128xf32>,
    %386 = vector.shape_cast %287 : vector<16x128xf32> to vector<16x1x128xf32>
    %387 = vector.broadcast %386 : vector<16x1x128xf32> to vector<16x16x128xf32>
    %388 = arith.mulf %337, %387 : vector<16x16x128xf32>
    %cst_200 = arith.constant dense<0.000000e+00> : vector<16x128xf32>
    %389 = vector.multi_reduction <add>, %388, %cst_200 [0] : vector<16x16x128xf32> to vector<16x128xf32>
    %c3_201 = arith.constant 3 : index
    %c0_202 = arith.constant 0 : index
    %c0_203 = arith.constant 0 : index
    %c0_204 = arith.constant 0 : index
    %390 = vector.load %arg7[%c3_201, %c0_202, %c0_203, %c0_204] : memref<8x16x16x1xf32, #tpu.memory_space<vmem>>, vector<1x16x16x1xf32>
    %391 = vector.shape_cast %390 : vector<1x16x16x1xf32> to vector<16x16x1xf32>
    %392 = vector.broadcast %391 : vector<16x16x1xf32> to vector<16x16x128xf32>
    %393 = arith.mulf %337, %392 : vector<16x16x128xf32>
    %cst_205 = arith.constant dense<0.000000e+00> : vector<16x128xf32>
    %394 = vector.multi_reduction <add>, %393, %cst_205 [0] : vector<16x16x128xf32> to vector<16x128xf32>
    %395 = arith.addf %389, %394 : vector<16x128xf32>
    %c3_206 = arith.constant 3 : index
    %396 = memref.load %arg3[%c3_206] : memref<8xf32, #tpu.memory_space<smem>>
    %397 = vector.broadcast %396 : f32 to vector<16x128xf32>
    %398 = arith.addf %395, %397 : vector<16x128xf32>
    %c3_207 = arith.constant 3 : index
    %c0_208 = arith.constant 0 : index
    %c0_209 = arith.constant 0 : index
    %399 = vector.load %arg8[%c3_207, %c0_208, %c0_209] : memref<8x16x128xf32, #tpu.memory_space<vmem>>, vector<1x16x128xf32>
    %400 = vector.shape_cast %399 : vector<1x16x128xf32> to vector<16x128xf32>
    %401 = vector.shape_cast %398 : vector<16x128xf32> to vector<1x16x128xf32>
    tpu.vector_store %arg8[%c3_207, %c0_208, %c0_209], %401 {strides = array<i32>} : memref<8x16x128xf32, #tpu.memory_space<vmem>>, vector<1x16x128xf32>,
    %c8 = arith.constant 8 : index
    %c0_210 = arith.constant 0 : index
    %402 = memref.load %arg1[%c8, %c0_210] : memref<16x8xf32, #tpu.memory_space<smem>>
    %403 = vector.broadcast %402 : f32 to vector<16x128xf32>
    %404 = arith.mulf %1, %403 : vector<16x128xf32>
    %c8_211 = arith.constant 8 : index
    %c1_212 = arith.constant 1 : index
    %405 = memref.load %arg1[%c8_211, %c1_212] : memref<16x8xf32, #tpu.memory_space<smem>>
    %406 = vector.broadcast %405 : f32 to vector<16x128xf32>
    %407 = arith.mulf %3, %406 : vector<16x128xf32>
    %408 = arith.addf %404, %407 : vector<16x128xf32>
    %c8_213 = arith.constant 8 : index
    %c2_214 = arith.constant 2 : index
    %409 = memref.load %arg1[%c8_213, %c2_214] : memref<16x8xf32, #tpu.memory_space<smem>>
    %410 = vector.broadcast %409 : f32 to vector<16x128xf32>
    %411 = arith.mulf %5, %410 : vector<16x128xf32>
    %412 = arith.addf %408, %411 : vector<16x128xf32>
    %c8_215 = arith.constant 8 : index
    %c3_216 = arith.constant 3 : index
    %413 = memref.load %arg1[%c8_215, %c3_216] : memref<16x8xf32, #tpu.memory_space<smem>>
    %414 = vector.broadcast %413 : f32 to vector<16x128xf32>
    %415 = arith.mulf %7, %414 : vector<16x128xf32>
    %416 = arith.addf %412, %415 : vector<16x128xf32>
    %c8_217 = arith.constant 8 : index
    %c4_218 = arith.constant 4 : index
    %417 = memref.load %arg1[%c8_217, %c4_218] : memref<16x8xf32, #tpu.memory_space<smem>>
    %418 = vector.broadcast %417 : f32 to vector<16x128xf32>
    %419 = arith.mulf %9, %418 : vector<16x128xf32>
    %420 = arith.addf %416, %419 : vector<16x128xf32>
    %c8_219 = arith.constant 8 : index
    %c5_220 = arith.constant 5 : index
    %421 = memref.load %arg1[%c8_219, %c5_220] : memref<16x8xf32, #tpu.memory_space<smem>>
    %422 = vector.broadcast %421 : f32 to vector<16x128xf32>
    %423 = arith.mulf %11, %422 : vector<16x128xf32>
    %424 = arith.addf %420, %423 : vector<16x128xf32>
    %c8_221 = arith.constant 8 : index
    %c6_222 = arith.constant 6 : index
    %425 = memref.load %arg1[%c8_221, %c6_222] : memref<16x8xf32, #tpu.memory_space<smem>>
    %426 = vector.broadcast %425 : f32 to vector<16x128xf32>
    %427 = arith.mulf %13, %426 : vector<16x128xf32>
    %428 = arith.addf %424, %427 : vector<16x128xf32>
    %c8_223 = arith.constant 8 : index
    %c7_224 = arith.constant 7 : index
    %429 = memref.load %arg1[%c8_223, %c7_224] : memref<16x8xf32, #tpu.memory_space<smem>>
    %430 = vector.broadcast %429 : f32 to vector<16x128xf32>
    %431 = arith.mulf %15, %430 : vector<16x128xf32>
    %432 = arith.addf %428, %431 : vector<16x128xf32>
    %c8_225 = arith.constant 8 : index
    %433 = memref.load %arg2[%c8_225] : memref<16xf32, #tpu.memory_space<smem>>
    %434 = vector.broadcast %433 : f32 to vector<16x128xf32>
    %435 = arith.addf %432, %434 : vector<16x128xf32>
    %c9 = arith.constant 9 : index
    %c0_226 = arith.constant 0 : index
    %436 = memref.load %arg1[%c9, %c0_226] : memref<16x8xf32, #tpu.memory_space<smem>>
    %437 = vector.broadcast %436 : f32 to vector<16x128xf32>
    %438 = arith.mulf %1, %437 : vector<16x128xf32>
    %c9_227 = arith.constant 9 : index
    %c1_228 = arith.constant 1 : index
    %439 = memref.load %arg1[%c9_227, %c1_228] : memref<16x8xf32, #tpu.memory_space<smem>>
    %440 = vector.broadcast %439 : f32 to vector<16x128xf32>
    %441 = arith.mulf %3, %440 : vector<16x128xf32>
    %442 = arith.addf %438, %441 : vector<16x128xf32>
    %c9_229 = arith.constant 9 : index
    %c2_230 = arith.constant 2 : index
    %443 = memref.load %arg1[%c9_229, %c2_230] : memref<16x8xf32, #tpu.memory_space<smem>>
    %444 = vector.broadcast %443 : f32 to vector<16x128xf32>
    %445 = arith.mulf %5, %444 : vector<16x128xf32>
    %446 = arith.addf %442, %445 : vector<16x128xf32>
    %c9_231 = arith.constant 9 : index
    %c3_232 = arith.constant 3 : index
    %447 = memref.load %arg1[%c9_231, %c3_232] : memref<16x8xf32, #tpu.memory_space<smem>>
    %448 = vector.broadcast %447 : f32 to vector<16x128xf32>
    %449 = arith.mulf %7, %448 : vector<16x128xf32>
    %450 = arith.addf %446, %449 : vector<16x128xf32>
    %c9_233 = arith.constant 9 : index
    %c4_234 = arith.constant 4 : index
    %451 = memref.load %arg1[%c9_233, %c4_234] : memref<16x8xf32, #tpu.memory_space<smem>>
    %452 = vector.broadcast %451 : f32 to vector<16x128xf32>
    %453 = arith.mulf %9, %452 : vector<16x128xf32>
    %454 = arith.addf %450, %453 : vector<16x128xf32>
    %c9_235 = arith.constant 9 : index
    %c5_236 = arith.constant 5 : index
    %455 = memref.load %arg1[%c9_235, %c5_236] : memref<16x8xf32, #tpu.memory_space<smem>>
    %456 = vector.broadcast %455 : f32 to vector<16x128xf32>
    %457 = arith.mulf %11, %456 : vector<16x128xf32>
    %458 = arith.addf %454, %457 : vector<16x128xf32>
    %c9_237 = arith.constant 9 : index
    %c6_238 = arith.constant 6 : index
    %459 = memref.load %arg1[%c9_237, %c6_238] : memref<16x8xf32, #tpu.memory_space<smem>>
    %460 = vector.broadcast %459 : f32 to vector<16x128xf32>
    %461 = arith.mulf %13, %460 : vector<16x128xf32>
    %462 = arith.addf %458, %461 : vector<16x128xf32>
    %c9_239 = arith.constant 9 : index
    %c7_240 = arith.constant 7 : index
    %463 = memref.load %arg1[%c9_239, %c7_240] : memref<16x8xf32, #tpu.memory_space<smem>>
    %464 = vector.broadcast %463 : f32 to vector<16x128xf32>
    %465 = arith.mulf %15, %464 : vector<16x128xf32>
    %466 = arith.addf %462, %465 : vector<16x128xf32>
    %c9_241 = arith.constant 9 : index
    %467 = memref.load %arg2[%c9_241] : memref<16xf32, #tpu.memory_space<smem>>
    %468 = vector.broadcast %467 : f32 to vector<16x128xf32>
    %469 = arith.addf %466, %468 : vector<16x128xf32>
    %c10 = arith.constant 10 : index
    %c0_242 = arith.constant 0 : index
    %470 = memref.load %arg1[%c10, %c0_242] : memref<16x8xf32, #tpu.memory_space<smem>>
    %471 = vector.broadcast %470 : f32 to vector<16x128xf32>
    %472 = arith.mulf %1, %471 : vector<16x128xf32>
    %c10_243 = arith.constant 10 : index
    %c1_244 = arith.constant 1 : index
    %473 = memref.load %arg1[%c10_243, %c1_244] : memref<16x8xf32, #tpu.memory_space<smem>>
    %474 = vector.broadcast %473 : f32 to vector<16x128xf32>
    %475 = arith.mulf %3, %474 : vector<16x128xf32>
    %476 = arith.addf %472, %475 : vector<16x128xf32>
    %c10_245 = arith.constant 10 : index
    %c2_246 = arith.constant 2 : index
    %477 = memref.load %arg1[%c10_245, %c2_246] : memref<16x8xf32, #tpu.memory_space<smem>>
    %478 = vector.broadcast %477 : f32 to vector<16x128xf32>
    %479 = arith.mulf %5, %478 : vector<16x128xf32>
    %480 = arith.addf %476, %479 : vector<16x128xf32>
    %c10_247 = arith.constant 10 : index
    %c3_248 = arith.constant 3 : index
    %481 = memref.load %arg1[%c10_247, %c3_248] : memref<16x8xf32, #tpu.memory_space<smem>>
    %482 = vector.broadcast %481 : f32 to vector<16x128xf32>
    %483 = arith.mulf %7, %482 : vector<16x128xf32>
    %484 = arith.addf %480, %483 : vector<16x128xf32>
    %c10_249 = arith.constant 10 : index
    %c4_250 = arith.constant 4 : index
    %485 = memref.load %arg1[%c10_249, %c4_250] : memref<16x8xf32, #tpu.memory_space<smem>>
    %486 = vector.broadcast %485 : f32 to vector<16x128xf32>
    %487 = arith.mulf %9, %486 : vector<16x128xf32>
    %488 = arith.addf %484, %487 : vector<16x128xf32>
    %c10_251 = arith.constant 10 : index
    %c5_252 = arith.constant 5 : index
    %489 = memref.load %arg1[%c10_251, %c5_252] : memref<16x8xf32, #tpu.memory_space<smem>>
    %490 = vector.broadcast %489 : f32 to vector<16x128xf32>
    %491 = arith.mulf %11, %490 : vector<16x128xf32>
    %492 = arith.addf %488, %491 : vector<16x128xf32>
    %c10_253 = arith.constant 10 : index
    %c6_254 = arith.constant 6 : index
    %493 = memref.load %arg1[%c10_253, %c6_254] : memref<16x8xf32, #tpu.memory_space<smem>>
    %494 = vector.broadcast %493 : f32 to vector<16x128xf32>
    %495 = arith.mulf %13, %494 : vector<16x128xf32>
    %496 = arith.addf %492, %495 : vector<16x128xf32>
    %c10_255 = arith.constant 10 : index
    %c7_256 = arith.constant 7 : index
    %497 = memref.load %arg1[%c10_255, %c7_256] : memref<16x8xf32, #tpu.memory_space<smem>>
    %498 = vector.broadcast %497 : f32 to vector<16x128xf32>
    %499 = arith.mulf %15, %498 : vector<16x128xf32>
    %500 = arith.addf %496, %499 : vector<16x128xf32>
    %c10_257 = arith.constant 10 : index
    %501 = memref.load %arg2[%c10_257] : memref<16xf32, #tpu.memory_space<smem>>
    %502 = vector.broadcast %501 : f32 to vector<16x128xf32>
    %503 = arith.addf %500, %502 : vector<16x128xf32>
    %c11 = arith.constant 11 : index
    %c0_258 = arith.constant 0 : index
    %504 = memref.load %arg1[%c11, %c0_258] : memref<16x8xf32, #tpu.memory_space<smem>>
    %505 = vector.broadcast %504 : f32 to vector<16x128xf32>
    %506 = arith.mulf %1, %505 : vector<16x128xf32>
    %c11_259 = arith.constant 11 : index
    %c1_260 = arith.constant 1 : index
    %507 = memref.load %arg1[%c11_259, %c1_260] : memref<16x8xf32, #tpu.memory_space<smem>>
    %508 = vector.broadcast %507 : f32 to vector<16x128xf32>
    %509 = arith.mulf %3, %508 : vector<16x128xf32>
    %510 = arith.addf %506, %509 : vector<16x128xf32>
    %c11_261 = arith.constant 11 : index
    %c2_262 = arith.constant 2 : index
    %511 = memref.load %arg1[%c11_261, %c2_262] : memref<16x8xf32, #tpu.memory_space<smem>>
    %512 = vector.broadcast %511 : f32 to vector<16x128xf32>
    %513 = arith.mulf %5, %512 : vector<16x128xf32>
    %514 = arith.addf %510, %513 : vector<16x128xf32>
    %c11_263 = arith.constant 11 : index
    %c3_264 = arith.constant 3 : index
    %515 = memref.load %arg1[%c11_263, %c3_264] : memref<16x8xf32, #tpu.memory_space<smem>>
    %516 = vector.broadcast %515 : f32 to vector<16x128xf32>
    %517 = arith.mulf %7, %516 : vector<16x128xf32>
    %518 = arith.addf %514, %517 : vector<16x128xf32>
    %c11_265 = arith.constant 11 : index
    %c4_266 = arith.constant 4 : index
    %519 = memref.load %arg1[%c11_265, %c4_266] : memref<16x8xf32, #tpu.memory_space<smem>>
    %520 = vector.broadcast %519 : f32 to vector<16x128xf32>
    %521 = arith.mulf %9, %520 : vector<16x128xf32>
    %522 = arith.addf %518, %521 : vector<16x128xf32>
    %c11_267 = arith.constant 11 : index
    %c5_268 = arith.constant 5 : index
    %523 = memref.load %arg1[%c11_267, %c5_268] : memref<16x8xf32, #tpu.memory_space<smem>>
    %524 = vector.broadcast %523 : f32 to vector<16x128xf32>
    %525 = arith.mulf %11, %524 : vector<16x128xf32>
    %526 = arith.addf %522, %525 : vector<16x128xf32>
    %c11_269 = arith.constant 11 : index
    %c6_270 = arith.constant 6 : index
    %527 = memref.load %arg1[%c11_269, %c6_270] : memref<16x8xf32, #tpu.memory_space<smem>>
    %528 = vector.broadcast %527 : f32 to vector<16x128xf32>
    %529 = arith.mulf %13, %528 : vector<16x128xf32>
    %530 = arith.addf %526, %529 : vector<16x128xf32>
    %c11_271 = arith.constant 11 : index
    %c7_272 = arith.constant 7 : index
    %531 = memref.load %arg1[%c11_271, %c7_272] : memref<16x8xf32, #tpu.memory_space<smem>>
    %532 = vector.broadcast %531 : f32 to vector<16x128xf32>
    %533 = arith.mulf %15, %532 : vector<16x128xf32>
    %534 = arith.addf %530, %533 : vector<16x128xf32>
    %c11_273 = arith.constant 11 : index
    %535 = memref.load %arg2[%c11_273] : memref<16xf32, #tpu.memory_space<smem>>
    %536 = vector.broadcast %535 : f32 to vector<16x128xf32>
    %537 = arith.addf %534, %536 : vector<16x128xf32>
    %c12 = arith.constant 12 : index
    %c0_274 = arith.constant 0 : index
    %538 = memref.load %arg1[%c12, %c0_274] : memref<16x8xf32, #tpu.memory_space<smem>>
    %539 = vector.broadcast %538 : f32 to vector<16x128xf32>
    %540 = arith.mulf %1, %539 : vector<16x128xf32>
    %c12_275 = arith.constant 12 : index
    %c1_276 = arith.constant 1 : index
    %541 = memref.load %arg1[%c12_275, %c1_276] : memref<16x8xf32, #tpu.memory_space<smem>>
    %542 = vector.broadcast %541 : f32 to vector<16x128xf32>
    %543 = arith.mulf %3, %542 : vector<16x128xf32>
    %544 = arith.addf %540, %543 : vector<16x128xf32>
    %c12_277 = arith.constant 12 : index
    %c2_278 = arith.constant 2 : index
    %545 = memref.load %arg1[%c12_277, %c2_278] : memref<16x8xf32, #tpu.memory_space<smem>>
    %546 = vector.broadcast %545 : f32 to vector<16x128xf32>
    %547 = arith.mulf %5, %546 : vector<16x128xf32>
    %548 = arith.addf %544, %547 : vector<16x128xf32>
    %c12_279 = arith.constant 12 : index
    %c3_280 = arith.constant 3 : index
    %549 = memref.load %arg1[%c12_279, %c3_280] : memref<16x8xf32, #tpu.memory_space<smem>>
    %550 = vector.broadcast %549 : f32 to vector<16x128xf32>
    %551 = arith.mulf %7, %550 : vector<16x128xf32>
    %552 = arith.addf %548, %551 : vector<16x128xf32>
    %c12_281 = arith.constant 12 : index
    %c4_282 = arith.constant 4 : index
    %553 = memref.load %arg1[%c12_281, %c4_282] : memref<16x8xf32, #tpu.memory_space<smem>>
    %554 = vector.broadcast %553 : f32 to vector<16x128xf32>
    %555 = arith.mulf %9, %554 : vector<16x128xf32>
    %556 = arith.addf %552, %555 : vector<16x128xf32>
    %c12_283 = arith.constant 12 : index
    %c5_284 = arith.constant 5 : index
    %557 = memref.load %arg1[%c12_283, %c5_284] : memref<16x8xf32, #tpu.memory_space<smem>>
    %558 = vector.broadcast %557 : f32 to vector<16x128xf32>
    %559 = arith.mulf %11, %558 : vector<16x128xf32>
    %560 = arith.addf %556, %559 : vector<16x128xf32>
    %c12_285 = arith.constant 12 : index
    %c6_286 = arith.constant 6 : index
    %561 = memref.load %arg1[%c12_285, %c6_286] : memref<16x8xf32, #tpu.memory_space<smem>>
    %562 = vector.broadcast %561 : f32 to vector<16x128xf32>
    %563 = arith.mulf %13, %562 : vector<16x128xf32>
    %564 = arith.addf %560, %563 : vector<16x128xf32>
    %c12_287 = arith.constant 12 : index
    %c7_288 = arith.constant 7 : index
    %565 = memref.load %arg1[%c12_287, %c7_288] : memref<16x8xf32, #tpu.memory_space<smem>>
    %566 = vector.broadcast %565 : f32 to vector<16x128xf32>
    %567 = arith.mulf %15, %566 : vector<16x128xf32>
    %568 = arith.addf %564, %567 : vector<16x128xf32>
    %c12_289 = arith.constant 12 : index
    %569 = memref.load %arg2[%c12_289] : memref<16xf32, #tpu.memory_space<smem>>
    %570 = vector.broadcast %569 : f32 to vector<16x128xf32>
    %571 = arith.addf %568, %570 : vector<16x128xf32>
    %c13 = arith.constant 13 : index
    %c0_290 = arith.constant 0 : index
    %572 = memref.load %arg1[%c13, %c0_290] : memref<16x8xf32, #tpu.memory_space<smem>>
    %573 = vector.broadcast %572 : f32 to vector<16x128xf32>
    %574 = arith.mulf %1, %573 : vector<16x128xf32>
    %c13_291 = arith.constant 13 : index
    %c1_292 = arith.constant 1 : index
    %575 = memref.load %arg1[%c13_291, %c1_292] : memref<16x8xf32, #tpu.memory_space<smem>>
    %576 = vector.broadcast %575 : f32 to vector<16x128xf32>
    %577 = arith.mulf %3, %576 : vector<16x128xf32>
    %578 = arith.addf %574, %577 : vector<16x128xf32>
    %c13_293 = arith.constant 13 : index
    %c2_294 = arith.constant 2 : index
    %579 = memref.load %arg1[%c13_293, %c2_294] : memref<16x8xf32, #tpu.memory_space<smem>>
    %580 = vector.broadcast %579 : f32 to vector<16x128xf32>
    %581 = arith.mulf %5, %580 : vector<16x128xf32>
    %582 = arith.addf %578, %581 : vector<16x128xf32>
    %c13_295 = arith.constant 13 : index
    %c3_296 = arith.constant 3 : index
    %583 = memref.load %arg1[%c13_295, %c3_296] : memref<16x8xf32, #tpu.memory_space<smem>>
    %584 = vector.broadcast %583 : f32 to vector<16x128xf32>
    %585 = arith.mulf %7, %584 : vector<16x128xf32>
    %586 = arith.addf %582, %585 : vector<16x128xf32>
    %c13_297 = arith.constant 13 : index
    %c4_298 = arith.constant 4 : index
    %587 = memref.load %arg1[%c13_297, %c4_298] : memref<16x8xf32, #tpu.memory_space<smem>>
    %588 = vector.broadcast %587 : f32 to vector<16x128xf32>
    %589 = arith.mulf %9, %588 : vector<16x128xf32>
    %590 = arith.addf %586, %589 : vector<16x128xf32>
    %c13_299 = arith.constant 13 : index
    %c5_300 = arith.constant 5 : index
    %591 = memref.load %arg1[%c13_299, %c5_300] : memref<16x8xf32, #tpu.memory_space<smem>>
    %592 = vector.broadcast %591 : f32 to vector<16x128xf32>
    %593 = arith.mulf %11, %592 : vector<16x128xf32>
    %594 = arith.addf %590, %593 : vector<16x128xf32>
    %c13_301 = arith.constant 13 : index
    %c6_302 = arith.constant 6 : index
    %595 = memref.load %arg1[%c13_301, %c6_302] : memref<16x8xf32, #tpu.memory_space<smem>>
    %596 = vector.broadcast %595 : f32 to vector<16x128xf32>
    %597 = arith.mulf %13, %596 : vector<16x128xf32>
    %598 = arith.addf %594, %597 : vector<16x128xf32>
    %c13_303 = arith.constant 13 : index
    %c7_304 = arith.constant 7 : index
    %599 = memref.load %arg1[%c13_303, %c7_304] : memref<16x8xf32, #tpu.memory_space<smem>>
    %600 = vector.broadcast %599 : f32 to vector<16x128xf32>
    %601 = arith.mulf %15, %600 : vector<16x128xf32>
    %602 = arith.addf %598, %601 : vector<16x128xf32>
    %c13_305 = arith.constant 13 : index
    %603 = memref.load %arg2[%c13_305] : memref<16xf32, #tpu.memory_space<smem>>
    %604 = vector.broadcast %603 : f32 to vector<16x128xf32>
    %605 = arith.addf %602, %604 : vector<16x128xf32>
    %c14 = arith.constant 14 : index
    %c0_306 = arith.constant 0 : index
    %606 = memref.load %arg1[%c14, %c0_306] : memref<16x8xf32, #tpu.memory_space<smem>>
    %607 = vector.broadcast %606 : f32 to vector<16x128xf32>
    %608 = arith.mulf %1, %607 : vector<16x128xf32>
    %c14_307 = arith.constant 14 : index
    %c1_308 = arith.constant 1 : index
    %609 = memref.load %arg1[%c14_307, %c1_308] : memref<16x8xf32, #tpu.memory_space<smem>>
    %610 = vector.broadcast %609 : f32 to vector<16x128xf32>
    %611 = arith.mulf %3, %610 : vector<16x128xf32>
    %612 = arith.addf %608, %611 : vector<16x128xf32>
    %c14_309 = arith.constant 14 : index
    %c2_310 = arith.constant 2 : index
    %613 = memref.load %arg1[%c14_309, %c2_310] : memref<16x8xf32, #tpu.memory_space<smem>>
    %614 = vector.broadcast %613 : f32 to vector<16x128xf32>
    %615 = arith.mulf %5, %614 : vector<16x128xf32>
    %616 = arith.addf %612, %615 : vector<16x128xf32>
    %c14_311 = arith.constant 14 : index
    %c3_312 = arith.constant 3 : index
    %617 = memref.load %arg1[%c14_311, %c3_312] : memref<16x8xf32, #tpu.memory_space<smem>>
    %618 = vector.broadcast %617 : f32 to vector<16x128xf32>
    %619 = arith.mulf %7, %618 : vector<16x128xf32>
    %620 = arith.addf %616, %619 : vector<16x128xf32>
    %c14_313 = arith.constant 14 : index
    %c4_314 = arith.constant 4 : index
    %621 = memref.load %arg1[%c14_313, %c4_314] : memref<16x8xf32, #tpu.memory_space<smem>>
    %622 = vector.broadcast %621 : f32 to vector<16x128xf32>
    %623 = arith.mulf %9, %622 : vector<16x128xf32>
    %624 = arith.addf %620, %623 : vector<16x128xf32>
    %c14_315 = arith.constant 14 : index
    %c5_316 = arith.constant 5 : index
    %625 = memref.load %arg1[%c14_315, %c5_316] : memref<16x8xf32, #tpu.memory_space<smem>>
    %626 = vector.broadcast %625 : f32 to vector<16x128xf32>
    %627 = arith.mulf %11, %626 : vector<16x128xf32>
    %628 = arith.addf %624, %627 : vector<16x128xf32>
    %c14_317 = arith.constant 14 : index
    %c6_318 = arith.constant 6 : index
    %629 = memref.load %arg1[%c14_317, %c6_318] : memref<16x8xf32, #tpu.memory_space<smem>>
    %630 = vector.broadcast %629 : f32 to vector<16x128xf32>
    %631 = arith.mulf %13, %630 : vector<16x128xf32>
    %632 = arith.addf %628, %631 : vector<16x128xf32>
    %c14_319 = arith.constant 14 : index
    %c7_320 = arith.constant 7 : index
    %633 = memref.load %arg1[%c14_319, %c7_320] : memref<16x8xf32, #tpu.memory_space<smem>>
    %634 = vector.broadcast %633 : f32 to vector<16x128xf32>
    %635 = arith.mulf %15, %634 : vector<16x128xf32>
    %636 = arith.addf %632, %635 : vector<16x128xf32>
    %c14_321 = arith.constant 14 : index
    %637 = memref.load %arg2[%c14_321] : memref<16xf32, #tpu.memory_space<smem>>
    %638 = vector.broadcast %637 : f32 to vector<16x128xf32>
    %639 = arith.addf %636, %638 : vector<16x128xf32>
    %c15 = arith.constant 15 : index
    %c0_322 = arith.constant 0 : index
    %640 = memref.load %arg1[%c15, %c0_322] : memref<16x8xf32, #tpu.memory_space<smem>>
    %641 = vector.broadcast %640 : f32 to vector<16x128xf32>
    %642 = arith.mulf %1, %641 : vector<16x128xf32>
    %c15_323 = arith.constant 15 : index
    %c1_324 = arith.constant 1 : index
    %643 = memref.load %arg1[%c15_323, %c1_324] : memref<16x8xf32, #tpu.memory_space<smem>>
    %644 = vector.broadcast %643 : f32 to vector<16x128xf32>
    %645 = arith.mulf %3, %644 : vector<16x128xf32>
    %646 = arith.addf %642, %645 : vector<16x128xf32>
    %c15_325 = arith.constant 15 : index
    %c2_326 = arith.constant 2 : index
    %647 = memref.load %arg1[%c15_325, %c2_326] : memref<16x8xf32, #tpu.memory_space<smem>>
    %648 = vector.broadcast %647 : f32 to vector<16x128xf32>
    %649 = arith.mulf %5, %648 : vector<16x128xf32>
    %650 = arith.addf %646, %649 : vector<16x128xf32>
    %c15_327 = arith.constant 15 : index
    %c3_328 = arith.constant 3 : index
    %651 = memref.load %arg1[%c15_327, %c3_328] : memref<16x8xf32, #tpu.memory_space<smem>>
    %652 = vector.broadcast %651 : f32 to vector<16x128xf32>
    %653 = arith.mulf %7, %652 : vector<16x128xf32>
    %654 = arith.addf %650, %653 : vector<16x128xf32>
    %c15_329 = arith.constant 15 : index
    %c4_330 = arith.constant 4 : index
    %655 = memref.load %arg1[%c15_329, %c4_330] : memref<16x8xf32, #tpu.memory_space<smem>>
    %656 = vector.broadcast %655 : f32 to vector<16x128xf32>
    %657 = arith.mulf %9, %656 : vector<16x128xf32>
    %658 = arith.addf %654, %657 : vector<16x128xf32>
    %c15_331 = arith.constant 15 : index
    %c5_332 = arith.constant 5 : index
    %659 = memref.load %arg1[%c15_331, %c5_332] : memref<16x8xf32, #tpu.memory_space<smem>>
    %660 = vector.broadcast %659 : f32 to vector<16x128xf32>
    %661 = arith.mulf %11, %660 : vector<16x128xf32>
    %662 = arith.addf %658, %661 : vector<16x128xf32>
    %c15_333 = arith.constant 15 : index
    %c6_334 = arith.constant 6 : index
    %663 = memref.load %arg1[%c15_333, %c6_334] : memref<16x8xf32, #tpu.memory_space<smem>>
    %664 = vector.broadcast %663 : f32 to vector<16x128xf32>
    %665 = arith.mulf %13, %664 : vector<16x128xf32>
    %666 = arith.addf %662, %665 : vector<16x128xf32>
    %c15_335 = arith.constant 15 : index
    %c7_336 = arith.constant 7 : index
    %667 = memref.load %arg1[%c15_335, %c7_336] : memref<16x8xf32, #tpu.memory_space<smem>>
    %668 = vector.broadcast %667 : f32 to vector<16x128xf32>
    %669 = arith.mulf %15, %668 : vector<16x128xf32>
    %670 = arith.addf %666, %669 : vector<16x128xf32>
    %c15_337 = arith.constant 15 : index
    %671 = memref.load %arg2[%c15_337] : memref<16xf32, #tpu.memory_space<smem>>
    %672 = vector.broadcast %671 : f32 to vector<16x128xf32>
    %673 = arith.addf %670, %672 : vector<16x128xf32>
    %674 = vector.shape_cast %435 : vector<16x128xf32> to vector<1x16x128xf32>
    %675 = vector.shape_cast %503 : vector<16x128xf32> to vector<16x1x128xf32>
    %676 = vector.broadcast %674 : vector<1x16x128xf32> to vector<16x16x128xf32>
    %677 = vector.broadcast %675 : vector<16x1x128xf32> to vector<16x16x128xf32>
    %678 = arith.mulf %676, %677 : vector<16x16x128xf32>
    %679 = vector.shape_cast %469 : vector<16x128xf32> to vector<1x16x128xf32>
    %680 = vector.shape_cast %537 : vector<16x128xf32> to vector<16x1x128xf32>
    %681 = vector.broadcast %679 : vector<1x16x128xf32> to vector<16x16x128xf32>
    %682 = vector.broadcast %680 : vector<16x1x128xf32> to vector<16x16x128xf32>
    %683 = arith.mulf %681, %682 : vector<16x16x128xf32>
    %684 = arith.addf %678, %683 : vector<16x16x128xf32>
    %c2_338 = arith.constant 2 : index
    %c0_339 = arith.constant 0 : index
    %c0_340 = arith.constant 0 : index
    %c0_341 = arith.constant 0 : index
    %685 = vector.load %arg5[%c2_338, %c0_339, %c0_340, %c0_341] : memref<4x16x16x1xf32, #tpu.memory_space<vmem>>, vector<1x16x16x1xf32>
    %686 = vector.shape_cast %685 : vector<1x16x16x1xf32> to vector<16x16x1xf32>
    %687 = vector.shape_cast %435 : vector<16x128xf32> to vector<1x16x128xf32>
    %688 = vector.broadcast %686 : vector<16x16x1xf32> to vector<16x16x128xf32>
    %689 = vector.broadcast %687 : vector<1x16x128xf32> to vector<16x16x128xf32>
    %690 = arith.mulf %688, %689 : vector<16x16x128xf32>
    %691 = arith.addf %684, %690 : vector<16x16x128xf32>
    %c2_342 = arith.constant 2 : index
    %c0_343 = arith.constant 0 : index
    %c0_344 = arith.constant 0 : index
    %c0_345 = arith.constant 0 : index
    %692 = vector.load %arg6[%c2_342, %c0_343, %c0_344, %c0_345] : memref<4x16x16x1xf32, #tpu.memory_space<vmem>>, vector<1x16x16x1xf32>
    %693 = vector.shape_cast %692 : vector<1x16x16x1xf32> to vector<16x16x1xf32>
    %694 = vector.shape_cast %503 : vector<16x128xf32> to vector<16x1x128xf32>
    %695 = vector.broadcast %693 : vector<16x16x1xf32> to vector<16x16x128xf32>
    %696 = vector.broadcast %694 : vector<16x1x128xf32> to vector<16x16x128xf32>
    %697 = arith.mulf %695, %696 : vector<16x16x128xf32>
    %698 = arith.addf %691, %697 : vector<16x16x128xf32>
    %c3_346 = arith.constant 3 : index
    %c0_347 = arith.constant 0 : index
    %c0_348 = arith.constant 0 : index
    %c0_349 = arith.constant 0 : index
    %699 = vector.load %arg5[%c3_346, %c0_347, %c0_348, %c0_349] : memref<4x16x16x1xf32, #tpu.memory_space<vmem>>, vector<1x16x16x1xf32>
    %700 = vector.shape_cast %699 : vector<1x16x16x1xf32> to vector<16x16x1xf32>
    %701 = vector.shape_cast %469 : vector<16x128xf32> to vector<1x16x128xf32>
    %702 = vector.broadcast %700 : vector<16x16x1xf32> to vector<16x16x128xf32>
    %703 = vector.broadcast %701 : vector<1x16x128xf32> to vector<16x16x128xf32>
    %704 = arith.mulf %702, %703 : vector<16x16x128xf32>
    %705 = arith.addf %698, %704 : vector<16x16x128xf32>
    %c3_350 = arith.constant 3 : index
    %c0_351 = arith.constant 0 : index
    %c0_352 = arith.constant 0 : index
    %c0_353 = arith.constant 0 : index
    %706 = vector.load %arg6[%c3_350, %c0_351, %c0_352, %c0_353] : memref<4x16x16x1xf32, #tpu.memory_space<vmem>>, vector<1x16x16x1xf32>
    %707 = vector.shape_cast %706 : vector<1x16x16x1xf32> to vector<16x16x1xf32>
    %708 = vector.shape_cast %537 : vector<16x128xf32> to vector<16x1x128xf32>
    %709 = vector.broadcast %707 : vector<16x16x1xf32> to vector<16x16x128xf32>
    %710 = vector.broadcast %708 : vector<16x1x128xf32> to vector<16x16x128xf32>
    %711 = arith.mulf %709, %710 : vector<16x16x128xf32>
    %712 = arith.addf %705, %711 : vector<16x16x128xf32>
    %cst_354 = arith.constant dense<0xFF800000> : vector<16x128xf32>
    %713 = vector.multi_reduction <maximumf>, %712, %cst_354 [0] : vector<16x16x128xf32> to vector<16x128xf32>
    %714 = vector.shape_cast %713 : vector<16x128xf32> to vector<1x16x128xf32>
    %715 = vector.broadcast %714 : vector<1x16x128xf32> to vector<16x16x128xf32>
    %716 = arith.subf %712, %715 : vector<16x16x128xf32>
    %717 = math.exp %716 : vector<16x16x128xf32>
    %cst_355 = arith.constant dense<0.000000e+00> : vector<16x128xf32>
    %718 = vector.multi_reduction <add>, %717, %cst_355 [0] : vector<16x16x128xf32> to vector<16x128xf32>
    %719 = vector.shape_cast %718 : vector<16x128xf32> to vector<1x16x128xf32>
    %cst_356 = arith.constant 1.000000e+00 : f32
    %720 = vector.broadcast %cst_356 : f32 to vector<1x16x128xf32>
    %721 = arith.divf %720, %719 : vector<1x16x128xf32>
    %722 = vector.broadcast %721 : vector<1x16x128xf32> to vector<16x16x128xf32>
    %723 = arith.mulf %717, %722 : vector<16x16x128xf32>
    %724 = vector.shape_cast %571 : vector<16x128xf32> to vector<16x1x128xf32>
    %725 = vector.broadcast %724 : vector<16x1x128xf32> to vector<16x16x128xf32>
    %726 = arith.mulf %723, %725 : vector<16x16x128xf32>
    %cst_357 = arith.constant dense<0.000000e+00> : vector<16x128xf32>
    %727 = vector.multi_reduction <add>, %726, %cst_357 [0] : vector<16x16x128xf32> to vector<16x128xf32>
    %c4_358 = arith.constant 4 : index
    %c0_359 = arith.constant 0 : index
    %c0_360 = arith.constant 0 : index
    %c0_361 = arith.constant 0 : index
    %728 = vector.load %arg7[%c4_358, %c0_359, %c0_360, %c0_361] : memref<8x16x16x1xf32, #tpu.memory_space<vmem>>, vector<1x16x16x1xf32>
    %729 = vector.shape_cast %728 : vector<1x16x16x1xf32> to vector<16x16x1xf32>
    %730 = vector.broadcast %729 : vector<16x16x1xf32> to vector<16x16x128xf32>
    %731 = arith.mulf %723, %730 : vector<16x16x128xf32>
    %cst_362 = arith.constant dense<0.000000e+00> : vector<16x128xf32>
    %732 = vector.multi_reduction <add>, %731, %cst_362 [0] : vector<16x16x128xf32> to vector<16x128xf32>
    %733 = arith.addf %727, %732 : vector<16x128xf32>
    %c4_363 = arith.constant 4 : index
    %734 = memref.load %arg3[%c4_363] : memref<8xf32, #tpu.memory_space<smem>>
    %735 = vector.broadcast %734 : f32 to vector<16x128xf32>
    %736 = arith.addf %733, %735 : vector<16x128xf32>
    %c4_364 = arith.constant 4 : index
    %c0_365 = arith.constant 0 : index
    %c0_366 = arith.constant 0 : index
    %737 = vector.load %arg8[%c4_364, %c0_365, %c0_366] : memref<8x16x128xf32, #tpu.memory_space<vmem>>, vector<1x16x128xf32>
    %738 = vector.shape_cast %737 : vector<1x16x128xf32> to vector<16x128xf32>
    %739 = vector.shape_cast %736 : vector<16x128xf32> to vector<1x16x128xf32>
    tpu.vector_store %arg8[%c4_364, %c0_365, %c0_366], %739 {strides = array<i32>} : memref<8x16x128xf32, #tpu.memory_space<vmem>>, vector<1x16x128xf32>,
    %740 = vector.shape_cast %605 : vector<16x128xf32> to vector<16x1x128xf32>
    %741 = vector.broadcast %740 : vector<16x1x128xf32> to vector<16x16x128xf32>
    %742 = arith.mulf %723, %741 : vector<16x16x128xf32>
    %cst_367 = arith.constant dense<0.000000e+00> : vector<16x128xf32>
    %743 = vector.multi_reduction <add>, %742, %cst_367 [0] : vector<16x16x128xf32> to vector<16x128xf32>
    %c5_368 = arith.constant 5 : index
    %c0_369 = arith.constant 0 : index
    %c0_370 = arith.constant 0 : index
    %c0_371 = arith.constant 0 : index
    %744 = vector.load %arg7[%c5_368, %c0_369, %c0_370, %c0_371] : memref<8x16x16x1xf32, #tpu.memory_space<vmem>>, vector<1x16x16x1xf32>
    %745 = vector.shape_cast %744 : vector<1x16x16x1xf32> to vector<16x16x1xf32>
    %746 = vector.broadcast %745 : vector<16x16x1xf32> to vector<16x16x128xf32>
    %747 = arith.mulf %723, %746 : vector<16x16x128xf32>
    %cst_372 = arith.constant dense<0.000000e+00> : vector<16x128xf32>
    %748 = vector.multi_reduction <add>, %747, %cst_372 [0] : vector<16x16x128xf32> to vector<16x128xf32>
    %749 = arith.addf %743, %748 : vector<16x128xf32>
    %c5_373 = arith.constant 5 : index
    %750 = memref.load %arg3[%c5_373] : memref<8xf32, #tpu.memory_space<smem>>
    %751 = vector.broadcast %750 : f32 to vector<16x128xf32>
    %752 = arith.addf %749, %751 : vector<16x128xf32>
    %c5_374 = arith.constant 5 : index
    %c0_375 = arith.constant 0 : index
    %c0_376 = arith.constant 0 : index
    %753 = vector.load %arg8[%c5_374, %c0_375, %c0_376] : memref<8x16x128xf32, #tpu.memory_space<vmem>>, vector<1x16x128xf32>
    %754 = vector.shape_cast %753 : vector<1x16x128xf32> to vector<16x128xf32>
    %755 = vector.shape_cast %752 : vector<16x128xf32> to vector<1x16x128xf32>
    tpu.vector_store %arg8[%c5_374, %c0_375, %c0_376], %755 {strides = array<i32>} : memref<8x16x128xf32, #tpu.memory_space<vmem>>, vector<1x16x128xf32>,
    %756 = vector.shape_cast %639 : vector<16x128xf32> to vector<16x1x128xf32>
    %757 = vector.broadcast %756 : vector<16x1x128xf32> to vector<16x16x128xf32>
    %758 = arith.mulf %723, %757 : vector<16x16x128xf32>
    %cst_377 = arith.constant dense<0.000000e+00> : vector<16x128xf32>
    %759 = vector.multi_reduction <add>, %758, %cst_377 [0] : vector<16x16x128xf32> to vector<16x128xf32>
    %c6_378 = arith.constant 6 : index
    %c0_379 = arith.constant 0 : index
    %c0_380 = arith.constant 0 : index
    %c0_381 = arith.constant 0 : index
    %760 = vector.load %arg7[%c6_378, %c0_379, %c0_380, %c0_381] : memref<8x16x16x1xf32, #tpu.memory_space<vmem>>, vector<1x16x16x1xf32>
    %761 = vector.shape_cast %760 : vector<1x16x16x1xf32> to vector<16x16x1xf32>
    %762 = vector.broadcast %761 : vector<16x16x1xf32> to vector<16x16x128xf32>
    %763 = arith.mulf %723, %762 : vector<16x16x128xf32>
    %cst_382 = arith.constant dense<0.000000e+00> : vector<16x128xf32>
    %764 = vector.multi_reduction <add>, %763, %cst_382 [0] : vector<16x16x128xf32> to vector<16x128xf32>
    %765 = arith.addf %759, %764 : vector<16x128xf32>
    %c6_383 = arith.constant 6 : index
    %766 = memref.load %arg3[%c6_383] : memref<8xf32, #tpu.memory_space<smem>>
    %767 = vector.broadcast %766 : f32 to vector<16x128xf32>
    %768 = arith.addf %765, %767 : vector<16x128xf32>
    %c6_384 = arith.constant 6 : index
    %c0_385 = arith.constant 0 : index
    %c0_386 = arith.constant 0 : index
    %769 = vector.load %arg8[%c6_384, %c0_385, %c0_386] : memref<8x16x128xf32, #tpu.memory_space<vmem>>, vector<1x16x128xf32>
    %770 = vector.shape_cast %769 : vector<1x16x128xf32> to vector<16x128xf32>
    %771 = vector.shape_cast %768 : vector<16x128xf32> to vector<1x16x128xf32>
    tpu.vector_store %arg8[%c6_384, %c0_385, %c0_386], %771 {strides = array<i32>} : memref<8x16x128xf32, #tpu.memory_space<vmem>>, vector<1x16x128xf32>,
    %772 = vector.shape_cast %673 : vector<16x128xf32> to vector<16x1x128xf32>
    %773 = vector.broadcast %772 : vector<16x1x128xf32> to vector<16x16x128xf32>
    %774 = arith.mulf %723, %773 : vector<16x16x128xf32>
    %cst_387 = arith.constant dense<0.000000e+00> : vector<16x128xf32>
    %775 = vector.multi_reduction <add>, %774, %cst_387 [0] : vector<16x16x128xf32> to vector<16x128xf32>
    %c7_388 = arith.constant 7 : index
    %c0_389 = arith.constant 0 : index
    %c0_390 = arith.constant 0 : index
    %c0_391 = arith.constant 0 : index
    %776 = vector.load %arg7[%c7_388, %c0_389, %c0_390, %c0_391] : memref<8x16x16x1xf32, #tpu.memory_space<vmem>>, vector<1x16x16x1xf32>
    %777 = vector.shape_cast %776 : vector<1x16x16x1xf32> to vector<16x16x1xf32>
    %778 = vector.broadcast %777 : vector<16x16x1xf32> to vector<16x16x128xf32>
    %779 = arith.mulf %723, %778 : vector<16x16x128xf32>
    %cst_392 = arith.constant dense<0.000000e+00> : vector<16x128xf32>
    %780 = vector.multi_reduction <add>, %779, %cst_392 [0] : vector<16x16x128xf32> to vector<16x128xf32>
    %781 = arith.addf %775, %780 : vector<16x128xf32>
    %c7_393 = arith.constant 7 : index
    %782 = memref.load %arg3[%c7_393] : memref<8xf32, #tpu.memory_space<smem>>
    %783 = vector.broadcast %782 : f32 to vector<16x128xf32>
    %784 = arith.addf %781, %783 : vector<16x128xf32>
    %c7_394 = arith.constant 7 : index
    %c0_395 = arith.constant 0 : index
    %c0_396 = arith.constant 0 : index
    %785 = vector.load %arg8[%c7_394, %c0_395, %c0_396] : memref<8x16x128xf32, #tpu.memory_space<vmem>>, vector<1x16x128xf32>
    %786 = vector.shape_cast %785 : vector<1x16x128xf32> to vector<16x128xf32>
    %787 = vector.shape_cast %784 : vector<16x128xf32> to vector<1x16x128xf32>
    tpu.vector_store %arg8[%c7_394, %c0_395, %c0_396], %787 {strides = array<i32>} : memref<8x16x128xf32, #tpu.memory_space<vmem>>, vector<1x16x128xf32>,
    return
  }
  func.func @transform_0(%arg0: i32) -> (i32, i32) {
    %c0_i32 = arith.constant 0 : i32
    %c0_i32_0 = arith.constant 0 : i32
    %c0_i32_1 = arith.constant 0 : i32
    return %c0_i32, %c0_i32_0 : i32, i32
  }
  func.func @transform_1(%arg0: i32) -> i32 {
    %c0_i32 = arith.constant 0 : i32
    %c0_i32_0 = arith.constant 0 : i32
    return %c0_i32 : i32
  }
  func.func @transform_2(%arg0: i32) -> i32 {
    %c0_i32 = arith.constant 0 : i32
    %c0_i32_0 = arith.constant 0 : i32
    return %c0_i32 : i32
  }
  func.func @transform_3(%arg0: i32) -> (i32, i32, i32) {
    %c0_i32 = arith.constant 0 : i32
    %c0_i32_0 = arith.constant 0 : i32
    %c0_i32_1 = arith.constant 0 : i32
    return %c0_i32, %c0_i32_0, %arg0 : i32, i32, i32
  }
  func.func @transform_4(%arg0: i32) -> (i32, i32, i32, i32) {
    %c0_i32 = arith.constant 0 : i32
    %c0_i32_0 = arith.constant 0 : i32
    %c0_i32_1 = arith.constant 0 : i32
    %c0_i32_2 = arith.constant 0 : i32
    %c0_i32_3 = arith.constant 0 : i32
    return %c0_i32, %c0_i32_0, %c0_i32_1, %c0_i32_2 : i32, i32, i32, i32
  }
  func.func @transform_5(%arg0: i32) -> (i32, i32, i32, i32) {
    %c0_i32 = arith.constant 0 : i32
    %c0_i32_0 = arith.constant 0 : i32
    %c0_i32_1 = arith.constant 0 : i32
    %c0_i32_2 = arith.constant 0 : i32
    %c0_i32_3 = arith.constant 0 : i32
    return %c0_i32, %c0_i32_0, %c0_i32_1, %c0_i32_2 : i32, i32, i32, i32
  }
  func.func @transform_6(%arg0: i32) -> (i32, i32, i32, i32) {
    %c0_i32 = arith.constant 0 : i32
    %c0_i32_0 = arith.constant 0 : i32
    %c0_i32_1 = arith.constant 0 : i32
    %c0_i32_2 = arith.constant 0 : i32
    %c0_i32_3 = arith.constant 0 : i32
    return %c0_i32, %c0_i32_0, %c0_i32_1, %c0_i32_2 : i32, i32, i32, i32
  }
  func.func @transform_7(%arg0: i32) -> (i32, i32, i32) {
    %c0_i32 = arith.constant 0 : i32
    %c0_i32_0 = arith.constant 0 : i32
    %c0_i32_1 = arith.constant 0 : i32
    return %c0_i32, %c0_i32_0, %arg0 : i32, i32, i32
  }
}

</mosaic_0001>

<llo_original>
// kernel: tpu_custom_call.1
$region0: #{tpu_custom_call.1}
  #allocation0 [shape = 'u32[]', space=smem, size = 0x4, offset = 0x4, fixed_abs, tag = 'smem constant byte address 0x4 - core index']
  #allocation1 [shape = 'u32[144,128]{1,0:T(1,128)}', space=vmem, size = 0x12000, scoped, tag = 'internal scratch']
  %s0 = inlined_call_operand.vmem [shape: f32[16,8], index: 0, kind: input, shape index: {}]
  %s1 = inlined_call_operand.vmem [shape: f32[16], index: 1, kind: input, shape index: {}]
  %s2 = inlined_call_operand.vmem [shape: f32[8], index: 2, kind: input, shape index: {}]
  %s3 = inlined_call_operand.vmem [shape: f32[8,16,256], index: 3, kind: input, shape index: {}]
  %s4 = inlined_call_operand.vmem [shape: f32[4,16,16,1], index: 4, kind: input, shape index: {}]
  %s5 = inlined_call_operand.vmem [shape: f32[4,16,16,1], index: 5, kind: input, shape index: {}]
  %s6 = inlined_call_operand.vmem [shape: f32[8,16,16,1], index: 6, kind: input, shape index: {}]
  %s7 = inlined_call_operand.hbm [shape: f32[8,16,256], index: 7, kind: output, shape index: {}]
  %s8 = sld [smem:[#allocation0]]
  $region111: #{tpu_custom_call.1} parent=0
    _
  %s10 = ssub.s32 1, %s8
  %s11 = scalar_select 0, %s10, %s8
  $region1: #{tpu_custom_call.1} parent=0
    #allocation2 [shape = 'u8[8192]{0}', space=smem, size = 0x2000, scoped, tag = 'input window, operand 0, single buffered']
    #allocation3 [shape = 's32[2]{0}', space=sflag, size = 0x8, scoped, tag = 'scoped memory for tpu_custom_call.1']
    #allocation4 [shape = 's32[2]{0}', space=sflag, size = 0x8, scoped, tag = 'scoped memory for tpu_custom_call.1']
    #allocation5 [shape = 'u8[512]{0}', space=smem, size = 0x200, scoped, tag = 'input window, operand 1, single buffered']
    #allocation6 [shape = 's32[1]{0}', space=sflag, size = 0x4, scoped, tag = 'scoped memory for tpu_custom_call.1']
    #allocation7 [shape = 'u8[512]{0}', space=smem, size = 0x200, scoped, tag = 'input window, operand 2, single buffered']
    #allocation8 [shape = 'u8[131072]{0}', space=vmem, size = 0x20000, scoped, tag = 'input window, operand 3']
    #allocation9 [shape = 'u8[131072]{0}', space=vmem, size = 0x20000, scoped, tag = 'output window, operand 0']
    %12 = vsyncpa [#allocation4], 0
    %13 = vsyncpa [#allocation6], 0
    %14 = vsyncpa [#allocation3], 0
    %s15 = scalar_lea.sflag [#allocation3], 1
    %16 = vsyncpa %s15, 0
    loop: start=0, step=1, limit=4
    $region2: #{tpu_custom_call.1} parent=1 // loop_pre_header
      _
    $region3: #{tpu_custom_call.1} parent=1 // loop_header
      %s18 = sphi 0, %s22
      %p19 = scmp.ge.s32.totalorder %s18, 4
      %s26 = sphi 0, %s26
      %s28 = sphi 0, %s26
      %s29 = sphi 0, %s28
      %s43 = sphi 0, %s29
      %s47 = sphi 0, %s47
      %s49 = sphi 0, %s47
      %s50 = sphi 0, %s49
      %s64 = sphi 0, %s50
      %s68 = sphi 0, %s68
      %s70 = sphi 0, %s68
      %s71 = sphi 0, %s70
      %s85 = sphi 0, %s71
      %s91 = sphi 0, %s93
      %s94 = sphi 0, %s91
      %s95 = sphi 0, %s94
      %s111 = sphi 0, %s95
      %s115 = sphi 0, %s115
      %s117 = sphi 0, %s115
      %s118 = sphi 0, %s117
      %s132 = sphi 0, %s118
      %s136 = sphi 0, %s136
      %s138 = sphi 0, %s136
      %s139 = sphi 0, %s138
      %s153 = sphi 0, %s139
      %s157 = sphi 0, %s157
      %s159 = sphi 0, %s157
      %s160 = sphi 0, %s159
      %s174 = sphi 0, %s160
      %s180 = sphi 0, %s182
      %s183 = sphi 0, %s180
      %s184 = sphi 0, %s183
      %s200 = sphi 0, %s184
    $region4: #{tpu_custom_call.1} parent=1 // loop_header_branch
      %21 = sbr.rel (%p19) target = $region8
    $region5: #{tpu_custom_call.1} parent=1 // loop_body
      %s23 = ssub.s32 %s18, 1
      %s24 = ssub.s32 %s18, 2
      %s25 = sadd.s32 %s18, 1
      %s27 = sadd.s32 %s26, 1
      %p30 = scmp.eq.s32.totalorder %s18, 1
      %p31 = scmp.ne.s32.totalorder %s26, %s28
      %p32 = scmp.eq.s32.totalorder %s18, 0
      %p33 = por %p31, %p32
      %p34 = scmp.ne.s32.totalorder %s26, %s28
      %p35 = scmp.eq.s32.totalorder %s23, 1
      %p36 = por %p34, %p35
      %p37 = scmp.ne.s32.totalorder %s28, %s29
      %p38 = scmp.eq.s32.totalorder %s23, 0
      %p39 = por %p37, %p38
      %p40 = scmp.ne.s32.totalorder %s28, %s29
      %p41 = scmp.eq.s32.totalorder %s24, 1
      %p42 = por %p40, %p41
      %p44 = scmp.ne.s32.totalorder %s29, %s43
      %p45 = scmp.eq.s32.totalorder %s24, 0
      %p46 = por %p44, %p45
      %s48 = sadd.s32 %s47, 1
      %p51 = scmp.eq.s32.totalorder %s18, 1
      %p52 = scmp.ne.s32.totalorder %s47, %s49
      %p53 = scmp.eq.s32.totalorder %s18, 0
      %p54 = por %p52, %p53
      %p55 = scmp.ne.s32.totalorder %s47, %s49
      %p56 = scmp.eq.s32.totalorder %s23, 1
      %p57 = por %p55, %p56
      %p58 = scmp.ne.s32.totalorder %s49, %s50
      %p59 = scmp.eq.s32.totalorder %s23, 0
      %p60 = por %p58, %p59
      %p61 = scmp.ne.s32.totalorder %s49, %s50
      %p62 = scmp.eq.s32.totalorder %s24, 1
      %p63 = por %p61, %p62
      %p65 = scmp.ne.s32.totalorder %s50, %s64
      %p66 = scmp.eq.s32.totalorder %s24, 0
      %p67 = por %p65, %p66
      %s69 = sadd.s32 %s68, 1
      %p72 = scmp.eq.s32.totalorder %s18, 1
      %p73 = scmp.ne.s32.totalorder %s68, %s70
      %p74 = scmp.eq.s32.totalorder %s18, 0
      %p75 = por %p73, %p74
      %p76 = scmp.ne.s32.totalorder %s68, %s70
      %p77 = scmp.eq.s32.totalorder %s23, 1
      %p78 = por %p76, %p77
      %p79 = scmp.ne.s32.totalorder %s70, %s71
      %p80 = scmp.eq.s32.totalorder %s23, 0
      %p81 = por %p79, %p80
      %p82 = scmp.ne.s32.totalorder %s70, %s71
      %p83 = scmp.eq.s32.totalorder %s24, 1
      %p84 = por %p82, %p83
      %p86 = scmp.ne.s32.totalorder %s71, %s85
      %p87 = scmp.eq.s32.totalorder %s24, 0
      %p88 = por %p86, %p87
      %s89 = ssub.s32 %s18, %s25
      %p90 = scmp.eq.s32.totalorder %s89, 0
      %s92 = sadd.s32 %s91, 1
      %s93 = scalar_select %p90, %s91, %s92
      %p96 = pneg %p90
      %p97 = scmp.eq.s32.totalorder %s18, 1
      %p98 = por %p96, %p97
      %p99 = scmp.ne.s32.totalorder %s91, %s94
      %p100 = scmp.eq.s32.totalorder %s18, 0
      %p101 = por %p99, %p100
      %p102 = scmp.ne.s32.totalorder %s91, %s94
      %p103 = scmp.eq.s32.totalorder %s23, 1
      %p104 = por %p102, %p103
      %p105 = scmp.ne.s32.totalorder %s94, %s95
      %p106 = scmp.eq.s32.totalorder %s23, 0
      %p107 = por %p105, %p106
      %p108 = scmp.ne.s32.totalorder %s94, %s95
      %p109 = scmp.eq.s32.totalorder %s24, 1
      %p110 = por %p108, %p109
      %p112 = scmp.ne.s32.totalorder %s95, %s111
      %p113 = scmp.eq.s32.totalorder %s24, 0
      %p114 = por %p112, %p113
      %s116 = sadd.s32 %s115, 1
      %p119 = scmp.eq.s32.totalorder %s18, 1
      %p120 = scmp.ne.s32.totalorder %s115, %s117
      %p121 = scmp.eq.s32.totalorder %s18, 0
      %p122 = por %p120, %p121
      %p123 = scmp.ne.s32.totalorder %s115, %s117
      %p124 = scmp.eq.s32.totalorder %s23, 1
      %p125 = por %p123, %p124
      %p126 = scmp.ne.s32.totalorder %s117, %s118
      %p127 = scmp.eq.s32.totalorder %s23, 0
      %p128 = por %p126, %p127
      %p129 = scmp.ne.s32.totalorder %s117, %s118
      %p130 = scmp.eq.s32.totalorder %s24, 1
      %p131 = por %p129, %p130
      %p133 = scmp.ne.s32.totalorder %s118, %s132
      %p134 = scmp.eq.s32.totalorder %s24, 0
      %p135 = por %p133, %p134
      %s137 = sadd.s32 %s136, 1
      %p140 = scmp.eq.s32.totalorder %s18, 1
      %p141 = scmp.ne.s32.totalorder %s136, %s138
      %p142 = scmp.eq.s32.totalorder %s18, 0
      %p143 = por %p141, %p142
      %p144 = scmp.ne.s32.totalorder %s136, %s138
      %p145 = scmp.eq.s32.totalorder %s23, 1
      %p146 = por %p144, %p145
      %p147 = scmp.ne.s32.totalorder %s138, %s139
      %p148 = scmp.eq.s32.totalorder %s23, 0
      %p149 = por %p147, %p148
      %p150 = scmp.ne.s32.totalorder %s138, %s139
      %p151 = scmp.eq.s32.totalorder %s24, 1
      %p152 = por %p150, %p151
      %p154 = scmp.ne.s32.totalorder %s139, %s153
      %p155 = scmp.eq.s32.totalorder %s24, 0
      %p156 = por %p154, %p155
      %s158 = sadd.s32 %s157, 1
      %p161 = scmp.eq.s32.totalorder %s18, 1
      %p162 = scmp.ne.s32.totalorder %s157, %s159
      %p163 = scmp.eq.s32.totalorder %s18, 0
      %p164 = por %p162, %p163
      %p165 = scmp.ne.s32.totalorder %s157, %s159
      %p166 = scmp.eq.s32.totalorder %s23, 1
      %p167 = por %p165, %p166
      %p168 = scmp.ne.s32.totalorder %s159, %s160
      %p169 = scmp.eq.s32.totalorder %s23, 0
      %p170 = por %p168, %p169
      %p171 = scmp.ne.s32.totalorder %s159, %s160
      %p172 = scmp.eq.s32.totalorder %s24, 1
      %p173 = por %p171, %p172
      %p175 = scmp.ne.s32.totalorder %s160, %s174
      %p176 = scmp.eq.s32.totalorder %s24, 0
      %p177 = por %p175, %p176
      %s178 = ssub.s32 %s18, %s25
      %p179 = scmp.eq.s32.totalorder %s178, 0
      %s181 = sadd.s32 %s180, 1
      %s182 = scalar_select %p179, %s180, %s181
      %p185 = pneg %p179
      %p186 = scmp.eq.s32.totalorder %s18, 1
      %p187 = por %p185, %p186
      %p188 = scmp.ne.s32.totalorder %s180, %s183
      %p189 = scmp.eq.s32.totalorder %s18, 0
      %p190 = por %p188, %p189
      %p191 = scmp.ne.s32.totalorder %s180, %s183
      %p192 = scmp.eq.s32.totalorder %s23, 1
      %p193 = por %p191, %p192
      %p194 = scmp.ne.s32.totalorder %s183, %s184
      %p195 = scmp.eq.s32.totalorder %s23, 0
      %p196 = por %p194, %p195
      %p197 = scmp.ne.s32.totalorder %s183, %s184
      %p198 = scmp.eq.s32.totalorder %s24, 1
      %p199 = por %p197, %p198
      %p201 = scmp.ne.s32.totalorder %s184, %s200
      %p202 = scmp.eq.s32.totalorder %s24, 0
      %p203 = por %p201, %p202
      %p204 = scmp.le.s32.totalorder 1, %s18
      %p205 = scmp.lt.s32.totalorder %s18, 3
      %p206 = pnand %p204, %p205
      %p207 = pneg %p206
      // Predicated region
      $region9: #{tpu_custom_call.1} parent=5 // pred_check
        _
      $region10: #{tpu_custom_call.1} parent=5 // pred_check_branch
        %209 = sbr.rel (%p206) target = $region12
      $region11: #{tpu_custom_call.1} parent=5 // pred_region
        %s210 = ssub.s32 %s18, 1
        // Predicated region
        $region13: #{tpu_custom_call.1} parent=11 // pred_check
          %p211 = pneg %p39
        $region14: #{tpu_custom_call.1} parent=11 // pred_check_branch
          %213 = sbr.rel (%p211) target = $region16
        $region15: #{tpu_custom_call.1} parent=11 // pred_region
          %s215 = ssub.s32 256, 256
          %216 = vsyncadd [#allocation4], %s215
          %s217 = sshll.u32 %s0, 4
          %s218 = int_to_ptr.vmem [resolvable:$true] %s217
          %223 = dma.vmem_to_smem %s218, 256, [#allocation2], [#allocation4], 128, 128, 8
        $region16: #{tpu_custom_call.1} parent=11 // pred_fallthru
          _
        // Predicated region
        $region17: #{tpu_custom_call.1} parent=11 // pred_check
          %p224 = pneg %p60
        $region18: #{tpu_custom_call.1} parent=11 // pred_check_branch
          %226 = sbr.rel (%p224) target = $region20
        $region19: #{tpu_custom_call.1} parent=11 // pred_region
          %s228 = ssub.s32 16, 16
          %229 = vsyncadd [#allocation6], %s228
          %s231 = sshll.u32 %s1, 4
          %s232 = int_to_ptr.vmem [resolvable:$true] %s231
          %234 = dma.vmem_to_smem %s232, 16, [#allocation5], [#allocation6]
        $region20: #{tpu_custom_call.1} parent=11 // pred_fallthru
          _
        // Predicated region
        $region21: #{tpu_custom_call.1} parent=11 // pred_check
          %p235 = pneg %p81
        $region22: #{tpu_custom_call.1} parent=11 // pred_check_branch
          %237 = sbr.rel (%p235) target = $region24
        $region23: #{tpu_custom_call.1} parent=11 // pred_region
          %s239 = ssub.s32 16, 16
          %240 = vsyncadd [#allocation6], %s239
          %s242 = sshll.u32 %s2, 4
          %s243 = int_to_ptr.vmem [resolvable:$true] %s242
          %245 = dma.vmem_to_smem %s243, 16, [#allocation7], [#allocation6]
        $region24: #{tpu_custom_call.1} parent=11 // pred_fallthru
          _
        // Predicated region
        $region25: #{tpu_custom_call.1} parent=11 // pred_check
          %p246 = pneg %p128
        $region26: #{tpu_custom_call.1} parent=11 // pred_check_branch
          %248 = sbr.rel (%p246) target = $region28
        $region27: #{tpu_custom_call.1} parent=11 // pred_region
          _
        $region28: #{tpu_custom_call.1} parent=11 // pred_fallthru
          _
        // Predicated region
        $region29: #{tpu_custom_call.1} parent=11 // pred_check
          %p249 = pneg %p149
        $region30: #{tpu_custom_call.1} parent=11 // pred_check_branch
          %251 = sbr.rel (%p249) target = $region32
        $region31: #{tpu_custom_call.1} parent=11 // pred_region
          _
        $region32: #{tpu_custom_call.1} parent=11 // pred_fallthru
          _
        // Predicated region
        $region33: #{tpu_custom_call.1} parent=11 // pred_check
          %p252 = pneg %p170
        $region34: #{tpu_custom_call.1} parent=11 // pred_check_branch
          %254 = sbr.rel (%p252) target = $region36
        $region35: #{tpu_custom_call.1} parent=11 // pred_region
          _
        $region36: #{tpu_custom_call.1} parent=11 // pred_fallthru
          _
      $region12: #{tpu_custom_call.1} parent=5 // pred_fallthru
        _
      %p255 = scmp.lt.s32.totalorder %s18, 2
      // Predicated region
      $region37: #{tpu_custom_call.1} parent=5 // pred_check
        %p256 = pneg %p255
      $region38: #{tpu_custom_call.1} parent=5 // pred_check_branch
        %258 = sbr.rel (%p256) target = $region40
      $region39: #{tpu_custom_call.1} parent=5 // pred_region
        // Predicated region
        $region41: #{tpu_custom_call.1} parent=39 // pred_check
          %p259 = pneg %p101
        $region42: #{tpu_custom_call.1} parent=39 // pred_check_branch
          %261 = sbr.rel (%p259) target = $region44
        $region43: #{tpu_custom_call.1} parent=39 // pred_region
          %s262 = sand.u32 %s91, 1
          %s263 = sand.u32 %s91, 1
          %s264 = smul.addr %s263, 128
          %s265 = scalar_lea.vmem [#allocation8], %s264
          %s266 = smul.addr %s18, 8
          %s267 = scalar_lea.vmem %s3, %s266
          // Predicated region
          $region45: #{tpu_custom_call.1} parent=43 // pred_check
            _
          $region46: #{tpu_custom_call.1} parent=43 // pred_check_branch
            %269 = sbr.rel (0) target = $region48
          $region47: #{tpu_custom_call.1} parent=43 // pred_region
            // Predicated region
            $region49: #{tpu_custom_call.1} parent=47 // pred_check
              _
            $region50: #{tpu_custom_call.1} parent=47 // pred_check_branch
              %271 = sbr.rel (0) target = $region52
            $region51: #{tpu_custom_call.1} parent=47 // pred_region
              // Predicated region
              $region64: #{tpu_custom_call.1} parent=51 // pred_check
                _
              $region65: #{tpu_custom_call.1} parent=51 // pred_check_branch
                %316 = sbr.rel (0) target = $region67
              $region66: #{tpu_custom_call.1} parent=51 // pred_region
                loop: start=0, step=1, limit=1
                $region68: #{tpu_custom_call.1} parent=66 // loop_pre_header
                  _
                $region69: #{tpu_custom_call.1} parent=66 // loop_header
                  %s318 = sphi 0, %s322
                  %p319 = scmp.ge.s32.totalorder %s318, 1
                  %s323 = sphi %s267, %s267
                  %s324 = sphi %s265, %s265
                $region70: #{tpu_custom_call.1} parent=66 // loop_header_branch
                  %321 = sbr.rel (%p319) target = $region74
                $region71: #{tpu_custom_call.1} parent=66 // loop_body
                  %v325 = vld [vmem:[%s323] sm:$0xff]
                  %326 = vst [vmem:[%s324] sm:$0xff] %v325
                  %v327 = vld [vmem:[%s323 + $0x10] sm:$0xff]
                  %328 = vst [vmem:[%s324 + $0x8] sm:$0xff] %v327
                  %v329 = vld [vmem:[%s323 + $0x20] sm:$0xff]
                  %330 = vst [vmem:[%s324 + $0x10] sm:$0xff] %v329
                  %v331 = vld [vmem:[%s323 + $0x30] sm:$0xff]
                  %332 = vst [vmem:[%s324 + $0x18] sm:$0xff] %v331
                  %v333 = vld [vmem:[%s323 + $0x40] sm:$0xff]
                  %334 = vst [vmem:[%s324 + $0x20] sm:$0xff] %v333
                  %v335 = vld [vmem:[%s323 + $0x50] sm:$0xff]
                  %336 = vst [vmem:[%s324 + $0x28] sm:$0xff] %v335
                  %v337 = vld [vmem:[%s323 + $0x60] sm:$0xff]
                  %338 = vst [vmem:[%s324 + $0x30] sm:$0xff] %v337
                  %v339 = vld [vmem:[%s323 + $0x70] sm:$0xff]
                  %340 = vst [vmem:[%s324 + $0x38] sm:$0xff] %v339
                  %v341 = vld [vmem:[%s323 + $0x80] sm:$0xff]
                  %342 = vst [vmem:[%s324 + $0x40] sm:$0xff] %v341
                  %v343 = vld [vmem:[%s323 + $0x90] sm:$0xff]
                  %344 = vst [vmem:[%s324 + $0x48] sm:$0xff] %v343
                  %v345 = vld [vmem:[%s323 + $0xa0] sm:$0xff]
                  %346 = vst [vmem:[%s324 + $0x50] sm:$0xff] %v345
                  %v347 = vld [vmem:[%s323 + $0xb0] sm:$0xff]
                  %348 = vst [vmem:[%s324 + $0x58] sm:$0xff] %v347
                  %v349 = vld [vmem:[%s323 + $0xc0] sm:$0xff]
                  %350 = vst [vmem:[%s324 + $0x60] sm:$0xff] %v349
                  %v351 = vld [vmem:[%s323 + $0xd0] sm:$0xff]
                  %352 = vst [vmem:[%s324 + $0x68] sm:$0xff] %v351
                  %v353 = vld [vmem:[%s323 + $0xe0] sm:$0xff]
                  %354 = vst [vmem:[%s324 + $0x70] sm:$0xff] %v353
                  %v355 = vld [vmem:[%s323 + $0xf0] sm:$0xff]
                  %356 = vst [vmem:[%s324 + $0x78] sm:$0xff] %v355
                $region72: #{tpu_custom_call.1} parent=66 // loop_footer
                  %s322 = sadd.s32 1, %s318
                $region73: #{tpu_custom_call.1} parent=66 // loop_footer_branch
                  %317 = sbr.rel target = $region69
                $region74: #{tpu_custom_call.1} parent=66 // loop_exit
                  _
              $region67: #{tpu_custom_call.1} parent=51 // pred_fallthru
                _
              // Predicated region
              $region75: #{tpu_custom_call.1} parent=51 // pred_check
                _
              $region76: #{tpu_custom_call.1} parent=51 // pred_check_branch
                %358 = sbr.rel target = $region78
              $region77: #{tpu_custom_call.1} parent=51 // pred_region
                _
              $region78: #{tpu_custom_call.1} parent=51 // pred_fallthru
                _
            $region52: #{tpu_custom_call.1} parent=47 // pred_fallthru
              _
            // Predicated region
            $region53: #{tpu_custom_call.1} parent=47 // pred_check
              _
            $region54: #{tpu_custom_call.1} parent=47 // pred_check_branch
              %273 = sbr.rel target = $region56
            $region55: #{tpu_custom_call.1} parent=47 // pred_region
              loop: start=0, step=1, limit=1
              $region57: #{tpu_custom_call.1} parent=55 // loop_pre_header
                _
              $region58: #{tpu_custom_call.1} parent=55 // loop_header
                %s276 = sphi 0, %s280
                %p277 = scmp.ge.s32.totalorder %s276, 1
                %s281 = sphi %s267, %s267
                %s282 = sphi %s265, %s265
              $region59: #{tpu_custom_call.1} parent=55 // loop_header_branch
                %279 = sbr.rel (%p277) target = $region63
              $region60: #{tpu_custom_call.1} parent=55 // loop_body
                %v283 = vld [vmem:[%s281] sm:$0xff]
                %284 = vst [vmem:[%s282] sm:$0xff] %v283
                %v285 = vld [vmem:[%s281 + $0x10] sm:$0xff]
                %286 = vst [vmem:[%s282 + $0x8] sm:$0xff] %v285
                %v287 = vld [vmem:[%s281 + $0x20] sm:$0xff]
                %288 = vst [vmem:[%s282 + $0x10] sm:$0xff] %v287
                %v289 = vld [vmem:[%s281 + $0x30] sm:$0xff]
                %290 = vst [vmem:[%s282 + $0x18] sm:$0xff] %v289
                %v291 = vld [vmem:[%s281 + $0x40] sm:$0xff]
                %292 = vst [vmem:[%s282 + $0x20] sm:$0xff] %v291
                %v293 = vld [vmem:[%s281 + $0x50] sm:$0xff]
                %294 = vst [vmem:[%s282 + $0x28] sm:$0xff] %v293
                %v295 = vld [vmem:[%s281 + $0x60] sm:$0xff]
                %296 = vst [vmem:[%s282 + $0x30] sm:$0xff] %v295
                %v297 = vld [vmem:[%s281 + $0x70] sm:$0xff]
                %298 = vst [vmem:[%s282 + $0x38] sm:$0xff] %v297
                %v299 = vld [vmem:[%s281 + $0x80] sm:$0xff]
                %300 = vst [vmem:[%s282 + $0x40] sm:$0xff] %v299
                %v301 = vld [vmem:[%s281 + $0x90] sm:$0xff]
                %302 = vst [vmem:[%s282 + $0x48] sm:$0xff] %v301
                %v303 = vld [vmem:[%s281 + $0xa0] sm:$0xff]
                %304 = vst [vmem:[%s282 + $0x50] sm:$0xff] %v303
                %v305 = vld [vmem:[%s281 + $0xb0] sm:$0xff]
                %306 = vst [vmem:[%s282 + $0x58] sm:$0xff] %v305
                %v307 = vld [vmem:[%s281 + $0xc0] sm:$0xff]
                %308 = vst [vmem:[%s282 + $0x60] sm:$0xff] %v307
                %v309 = vld [vmem:[%s281 + $0xd0] sm:$0xff]
                %310 = vst [vmem:[%s282 + $0x68] sm:$0xff] %v309
                %v311 = vld [vmem:[%s281 + $0xe0] sm:$0xff]
                %312 = vst [vmem:[%s282 + $0x70] sm:$0xff] %v311
                %v313 = vld [vmem:[%s281 + $0xf0] sm:$0xff]
                %314 = vst [vmem:[%s282 + $0x78] sm:$0xff] %v313
              $region61: #{tpu_custom_call.1} parent=55 // loop_footer
                %s280 = sadd.s32 1, %s276
              $region62: #{tpu_custom_call.1} parent=55 // loop_footer_branch
                %275 = sbr.rel target = $region58
              $region63: #{tpu_custom_call.1} parent=55 // loop_exit
                _
            $region56: #{tpu_custom_call.1} parent=47 // pred_fallthru
              _
          $region48: #{tpu_custom_call.1} parent=43 // pred_fallthru
            _
          %359 = vnop
        $region44: #{tpu_custom_call.1} parent=39 // pred_fallthru
          _
      $region40: #{tpu_custom_call.1} parent=5 // pred_fallthru
        _
      %p360 = scmp.le.s32.totalorder 1, %s18
      %p361 = scmp.lt.s32.totalorder %s18, 3
      %p362 = pnand %p360, %p361
      %p363 = pneg %p362
      // Predicated region
      $region79: #{tpu_custom_call.1} parent=5 // pred_check
        _
      $region80: #{tpu_custom_call.1} parent=5 // pred_check_branch
        %365 = sbr.rel (%p362) target = $region82
      $region81: #{tpu_custom_call.1} parent=5 // pred_region
        %s366 = ssub.s32 %s18, 1
        // Predicated region
        $region83: #{tpu_custom_call.1} parent=81 // pred_check
          %p367 = pneg %p39
        $region84: #{tpu_custom_call.1} parent=81 // pred_check_branch
          %369 = sbr.rel (%p367) target = $region86
        $region85: #{tpu_custom_call.1} parent=81 // pred_region
          %370 = dma.done [#allocation4], 256
        $region86: #{tpu_custom_call.1} parent=81 // pred_fallthru
          _
        // Predicated region
        $region87: #{tpu_custom_call.1} parent=81 // pred_check
          %p371 = pneg %p60
        $region88: #{tpu_custom_call.1} parent=81 // pred_check_branch
          %373 = sbr.rel (%p371) target = $region90
        $region89: #{tpu_custom_call.1} parent=81 // pred_region
          %374 = dma.done [#allocation6], 16
        $region90: #{tpu_custom_call.1} parent=81 // pred_fallthru
          _
        // Predicated region
        $region91: #{tpu_custom_call.1} parent=81 // pred_check
          %p375 = pneg %p81
        $region92: #{tpu_custom_call.1} parent=81 // pred_check_branch
          %377 = sbr.rel (%p375) target = $region94
        $region93: #{tpu_custom_call.1} parent=81 // pred_region
          %378 = dma.done [#allocation6], 16
        $region94: #{tpu_custom_call.1} parent=81 // pred_fallthru
          _
        %s379 = sand.u32 %s94, 1
        %s380 = sand.u32 %s94, 1
        %s381 = smul.addr %s380, 128
        %s382 = scalar_lea.vmem [#allocation8], %s381
        // Predicated region
        $region95: #{tpu_custom_call.1} parent=81 // pred_check
          %p383 = pneg %p107
        $region96: #{tpu_custom_call.1} parent=81 // pred_check_branch
          %385 = sbr.rel (%p383) target = $region98
        $region97: #{tpu_custom_call.1} parent=81 // pred_region
          _
        $region98: #{tpu_custom_call.1} parent=81 // pred_fallthru
          _
        %386 = sfence
        %p387 = pneg %p39
        %p388 = pneg %p36
        %p389 = pneg %p60
        %p390 = pneg %p57
        %p391 = pneg %p81
        %p392 = pneg %p78
        %s393 = sand.u32 %s94, 1
        %s394 = sand.u32 %s94, 1
        %s395 = smul.addr %s394, 128
        %s396 = scalar_lea.vmem [#allocation8], %s395
        %p397 = pneg %p107
        %p398 = pneg %p104
        %p399 = pneg %p128
        %p400 = pneg %p125
        %p401 = pneg %p149
        %p402 = pneg %p146
        %p403 = pneg %p170
        %p404 = pneg %p167
        %p405 = pneg %p196
        %p406 = pneg %p193
        %s407 = sand.u32 %s183, 1
        %s408 = scalar_lea.sflag [#allocation3], %s407
        %s409 = sand.u32 %s183, 1
        %s410 = smul.addr %s409, 128
        %s411 = scalar_lea.vmem [#allocation9], %s410
        %v412 = vld [vmem:[%s382] sm:$0xff]
        %v413 = vld [vmem:[%s382 + $0x8] sm:$0xff]
        %s414 = scalar_lea.vmem %s382, 16 [#allocation8]
        %v415 = vld [vmem:[%s414] sm:$0xff]
        %v416 = vld [vmem:[%s414 + $0x8] sm:$0xff]
        %s417 = scalar_lea.vmem %s382, 32 [#allocation8]
        %v418 = vld [vmem:[%s417] sm:$0xff]
        %v419 = vld [vmem:[%s417 + $0x8] sm:$0xff]
        %s420 = scalar_lea.vmem %s382, 48 [#allocation8]
        %v421 = vld [vmem:[%s420] sm:$0xff]
        %v422 = vld [vmem:[%s420 + $0x8] sm:$0xff]
        %s423 = scalar_lea.vmem %s382, 64 [#allocation8]
        %v424 = vld [vmem:[%s423] sm:$0xff]
        %v425 = vld [vmem:[%s423 + $0x8] sm:$0xff]
        %s426 = scalar_lea.vmem %s382, 80 [#allocation8]
        %v427 = vld [vmem:[%s426] sm:$0xff]
        %v428 = vld [vmem:[%s426 + $0x8] sm:$0xff]
        %s429 = scalar_lea.vmem %s382, 96 [#allocation8]
        %v430 = vld [vmem:[%s429] sm:$0xff]
        %v431 = vld [vmem:[%s429 + $0x8] sm:$0xff]
        %s432 = scalar_lea.vmem %s382, 112 [#allocation8]
        %v433 = vld [vmem:[%s432] sm:$0xff]
        %v434 = vld [vmem:[%s432 + $0x8] sm:$0xff]
        %s435 = sld [smem:[#allocation2]]
        %v436 = vstv %s435
        %v437 = vmul.f32 %v412, %v436
        %v438 = vmul.f32 %v413, %v436
        %s439 = sld [smem:[#allocation2 + $0x1]]
        %v440 = vstv %s439
        %v441 = vmul.f32 %v415, %v440
        %v442 = vmul.f32 %v416, %v440
        %v443 = vadd.f32 %v437, %v441
        %v444 = vadd.f32 %v438, %v442
        %s445 = sld [smem:[#allocation2 + $0x2]]
        %v446 = vstv %s445
        %v447 = vmul.f32 %v418, %v446
        %v448 = vmul.f32 %v419, %v446
        %v449 = vadd.f32 %v443, %v447
        %v450 = vadd.f32 %v444, %v448
        %s451 = sld [smem:[#allocation2 + $0x3]]
        %v452 = vstv %s451
        %v453 = vmul.f32 %v421, %v452
        %v454 = vmul.f32 %v422, %v452
        %v455 = vadd.f32 %v449, %v453
        %v456 = vadd.f32 %v450, %v454
        %s457 = sld [smem:[#allocation2 + $0x4]]
        %v458 = vstv %s457
        %v459 = vmul.f32 %v424, %v458
        %v460 = vmul.f32 %v425, %v458
        %v461 = vadd.f32 %v455, %v459
        %v462 = vadd.f32 %v456, %v460
        %s463 = sld [smem:[#allocation2 + $0x5]]
        %v464 = vstv %s463
        %v465 = vmul.f32 %v427, %v464
        %v466 = vmul.f32 %v428, %v464
        %v467 = vadd.f32 %v461, %v465
        %v468 = vadd.f32 %v462, %v466
        %s469 = sld [smem:[#allocation2 + $0x6]]
        %v470 = vstv %s469
        %v471 = vmul.f32 %v430, %v470
        %v472 = vmul.f32 %v431, %v470
        %v473 = vadd.f32 %v467, %v471
        %v474 = vadd.f32 %v468, %v472
        %s475 = sld [smem:[#allocation2 + $0x7]]
        %v476 = vstv %s475
        %v477 = vmul.f32 %v433, %v476
        %v478 = vmul.f32 %v434, %v476
        %v479 = vadd.f32 %v473, %v477
        %v480 = vadd.f32 %v474, %v478
        %s481 = sld [smem:[#allocation5]]
        %v482 = vstv %s481
        %v483 = vadd.f32 %v479, %v482
        %v484 = vadd.f32 %v480, %v482
        %s485 = sld [smem:[#allocation2 + $0x80]]
        %v486 = vstv %s485
        %v487 = vmul.f32 %v412, %v486
        %v488 = vmul.f32 %v413, %v486
        %s489 = sld [smem:[#allocation2 + $0x81]]
        %v490 = vstv %s489
        %v491 = vmul.f32 %v415, %v490
        %v492 = vmul.f32 %v416, %v490
        %v493 = vadd.f32 %v487, %v491
        %v494 = vadd.f32 %v488, %v492
        %s495 = sld [smem:[#allocation2 + $0x82]]
        %v496 = vstv %s495
        %v497 = vmul.f32 %v418, %v496
        %v498 = vmul.f32 %v419, %v496
        %v499 = vadd.f32 %v493, %v497
        %v500 = vadd.f32 %v494, %v498
        %s501 = sld [smem:[#allocation2 + $0x83]]
        %v502 = vstv %s501
        %v503 = vmul.f32 %v421, %v502
        %v504 = vmul.f32 %v422, %v502
        %v505 = vadd.f32 %v499, %v503
        %v506 = vadd.f32 %v500, %v504
        %s507 = sld [smem:[#allocation2 + $0x84]]
        %v508 = vstv %s507
        %v509 = vmul.f32 %v424, %v508
        %v510 = vmul.f32 %v425, %v508
        %v511 = vadd.f32 %v505, %v509
        %v512 = vadd.f32 %v506, %v510
        %s513 = sld [smem:[#allocation2 + $0x85]]
        %v514 = vstv %s513
        %v515 = vmul.f32 %v427, %v514
        %v516 = vmul.f32 %v428, %v514
        %v517 = vadd.f32 %v511, %v515
        %v518 = vadd.f32 %v512, %v516
        %s519 = sld [smem:[#allocation2 + $0x86]]
        %v520 = vstv %s519
        %v521 = vmul.f32 %v430, %v520
        %v522 = vmul.f32 %v431, %v520
        %v523 = vadd.f32 %v517, %v521
        %v524 = vadd.f32 %v518, %v522
        %s525 = sld [smem:[#allocation2 + $0x87]]
        %v526 = vstv %s525
        %v527 = vmul.f32 %v433, %v526
        %v528 = vmul.f32 %v434, %v526
        %v529 = vadd.f32 %v523, %v527
        %v530 = vadd.f32 %v524, %v528
        %s531 = sld [smem:[#allocation5 + $0x1]]
        %v532 = vstv %s531
        %v533 = vadd.f32 %v529, %v532
        %v534 = vadd.f32 %v530, %v532
        %s535 = sld [smem:[#allocation2 + $0x100]]
        %v536 = vstv %s535
        %v537 = vmul.f32 %v412, %v536
        %v538 = vmul.f32 %v413, %v536
        %s539 = sld [smem:[#allocation2 + $0x101]]
        %v540 = vstv %s539
        %v541 = vmul.f32 %v415, %v540
        %v542 = vmul.f32 %v416, %v540
        %v543 = vadd.f32 %v537, %v541
        %v544 = vadd.f32 %v538, %v542
        %s545 = sld [smem:[#allocation2 + $0x102]]
        %v546 = vstv %s545
        %v547 = vmul.f32 %v418, %v546
        %v548 = vmul.f32 %v419, %v546
        %v549 = vadd.f32 %v543, %v547
        %v550 = vadd.f32 %v544, %v548
        %s551 = sld [smem:[#allocation2 + $0x103]]
        %v552 = vstv %s551
        %v553 = vmul.f32 %v421, %v552
        %v554 = vmul.f32 %v422, %v552
        %v555 = vadd.f32 %v549, %v553
        %v556 = vadd.f32 %v550, %v554
        %s557 = sld [smem:[#allocation2 + $0x104]]
        %v558 = vstv %s557
        %v559 = vmul.f32 %v424, %v558
        %v560 = vmul.f32 %v425, %v558
        %v561 = vadd.f32 %v555, %v559
        %v562 = vadd.f32 %v556, %v560
        %s563 = sld [smem:[#allocation2 + $0x105]]
        %v564 = vstv %s563
        %v565 = vmul.f32 %v427, %v564
        %v566 = vmul.f32 %v428, %v564
        %v567 = vadd.f32 %v561, %v565
        %v568 = vadd.f32 %v562, %v566
        %s569 = sld [smem:[#allocation2 + $0x106]]
        %v570 = vstv %s569
        %v571 = vmul.f32 %v430, %v570
        %v572 = vmul.f32 %v431, %v570
        %v573 = vadd.f32 %v567, %v571
        %v574 = vadd.f32 %v568, %v572
        %s575 = sld [smem:[#allocation2 + $0x107]]
        %v576 = vstv %s575
        %v577 = vmul.f32 %v433, %v576
        %v578 = vmul.f32 %v434, %v576
        %v579 = vadd.f32 %v573, %v577
        %v580 = vadd.f32 %v574, %v578
        %s581 = sld [smem:[#allocation5 + $0x2]]
        %v582 = vstv %s581
        %v583 = vadd.f32 %v579, %v582
        %v584 = vadd.f32 %v580, %v582
        %s585 = sld [smem:[#allocation2 + $0x180]]
        %v586 = vstv %s585
        %v587 = vmul.f32 %v412, %v586
        %v588 = vmul.f32 %v413, %v586
        %s589 = sld [smem:[#allocation2 + $0x181]]
        %v590 = vstv %s589
        %v591 = vmul.f32 %v415, %v590
        %v592 = vmul.f32 %v416, %v590
        %v593 = vadd.f32 %v587, %v591
        %v594 = vadd.f32 %v588, %v592
        %s595 = sld [smem:[#allocation2 + $0x182]]
        %v596 = vstv %s595
        %v597 = vmul.f32 %v418, %v596
        %v598 = vmul.f32 %v419, %v596
        %v599 = vadd.f32 %v593, %v597
        %v600 = vadd.f32 %v594, %v598
        %s601 = sld [smem:[#allocation2 + $0x183]]
        %v602 = vstv %s601
        %v603 = vmul.f32 %v421, %v602
        %v604 = vmul.f32 %v422, %v602
        %v605 = vadd.f32 %v599, %v603
        %v606 = vadd.f32 %v600, %v604
        %s607 = sld [smem:[#allocation2 + $0x184]]
        %v608 = vstv %s607
        %v609 = vmul.f32 %v424, %v608
        %v610 = vmul.f32 %v425, %v608
        %v611 = vadd.f32 %v605, %v609
        %v612 = vadd.f32 %v606, %v610
        %s613 = sld [smem:[#allocation2 + $0x185]]
        %v614 = vstv %s613
        %v615 = vmul.f32 %v427, %v614
        %v616 = vmul.f32 %v428, %v614
        %v617 = vadd.f32 %v611, %v615
        %v618 = vadd.f32 %v612, %v616
        %s619 = sld [smem:[#allocation2 + $0x186]]
        %v620 = vstv %s619
        %v621 = vmul.f32 %v430, %v620
        %v622 = vmul.f32 %v431, %v620
        %v623 = vadd.f32 %v617, %v621
        %v624 = vadd.f32 %v618, %v622
        %s625 = sld [smem:[#allocation2 + $0x187]]
        %v626 = vstv %s625
        %v627 = vmul.f32 %v433, %v626
        %v628 = vmul.f32 %v434, %v626
        %v629 = vadd.f32 %v623, %v627
        %v630 = vadd.f32 %v624, %v628
        %s631 = sld [smem:[#allocation5 + $0x3]]
        %v632 = vstv %s631
        %v633 = vadd.f32 %v629, %v632
        %v634 = vadd.f32 %v630, %v632
        %s635 = sld [smem:[#allocation2 + $0x200]]
        %v636 = vstv %s635
        %v637 = vmul.f32 %v412, %v636
        %v638 = vmul.f32 %v413, %v636
        %s639 = sld [smem:[#allocation2 + $0x201]]
        %v640 = vstv %s639
        %v641 = vmul.f32 %v415, %v640
        %v642 = vmul.f32 %v416, %v640
        %v643 = vadd.f32 %v637, %v641
        %v644 = vadd.f32 %v638, %v642
        %s645 = sld [smem:[#allocation2 + $0x202]]
        %v646 = vstv %s645
        %v647 = vmul.f32 %v418, %v646
        %v648 = vmul.f32 %v419, %v646
        %v649 = vadd.f32 %v643, %v647
        %v650 = vadd.f32 %v644, %v648
        %s651 = sld [smem:[#allocation2 + $0x203]]
        %v652 = vstv %s651
        %v653 = vmul.f32 %v421, %v652
        %v654 = vmul.f32 %v422, %v652
        %v655 = vadd.f32 %v649, %v653
        %v656 = vadd.f32 %v650, %v654
        %s657 = sld [smem:[#allocation2 + $0x204]]
        %v658 = vstv %s657
        %v659 = vmul.f32 %v424, %v658
        %v660 = vmul.f32 %v425, %v658
        %v661 = vadd.f32 %v655, %v659
        %v662 = vadd.f32 %v656, %v660
        %s663 = sld [smem:[#allocation2 + $0x205]]
        %v664 = vstv %s663
        %v665 = vmul.f32 %v427, %v664
        %v666 = vmul.f32 %v428, %v664
        %v667 = vadd.f32 %v661, %v665
        %v668 = vadd.f32 %v662, %v666
        %s669 = sld [smem:[#allocation2 + $0x206]]
        %v670 = vstv %s669
        %v671 = vmul.f32 %v430, %v670
        %v672 = vmul.f32 %v431, %v670
        %v673 = vadd.f32 %v667, %v671
        %v674 = vadd.f32 %v668, %v672
        %s675 = sld [smem:[#allocation2 + $0x207]]
        %v676 = vstv %s675
        %v677 = vmul.f32 %v433, %v676
        %v678 = vmul.f32 %v434, %v676
        %v679 = vadd.f32 %v673, %v677
        %v680 = vadd.f32 %v674, %v678
        %s681 = sld [smem:[#allocation5 + $0x4]]
        %v682 = vstv %s681
        %v683 = vadd.f32 %v679, %v682
        %v684 = vadd.f32 %v680, %v682
        %s685 = sld [smem:[#allocation2 + $0x280]]
        %v686 = vstv %s685
        %v687 = vmul.f32 %v412, %v686
        %v688 = vmul.f32 %v413, %v686
        %s689 = sld [smem:[#allocation2 + $0x281]]
        %v690 = vstv %s689
        %v691 = vmul.f32 %v415, %v690
        %v692 = vmul.f32 %v416, %v690
        %v693 = vadd.f32 %v687, %v691
        %v694 = vadd.f32 %v688, %v692
        %s695 = sld [smem:[#allocation2 + $0x282]]
        %v696 = vstv %s695
        %v697 = vmul.f32 %v418, %v696
        %v698 = vmul.f32 %v419, %v696
        %v699 = vadd.f32 %v693, %v697
        %v700 = vadd.f32 %v694, %v698
        %s701 = sld [smem:[#allocation2 + $0x283]]
        %v702 = vstv %s701
        %v703 = vmul.f32 %v421, %v702
        %v704 = vmul.f32 %v422, %v702
        %v705 = vadd.f32 %v699, %v703
        %v706 = vadd.f32 %v700, %v704
        %s707 = sld [smem:[#allocation2 + $0x284]]
        %v708 = vstv %s707
        %v709 = vmul.f32 %v424, %v708
        %v710 = vmul.f32 %v425, %v708
        %v711 = vadd.f32 %v705, %v709
        %v712 = vadd.f32 %v706, %v710
        %s713 = sld [smem:[#allocation2 + $0x285]]
        %v714 = vstv %s713
        %v715 = vmul.f32 %v427, %v714
        %v716 = vmul.f32 %v428, %v714
        %v717 = vadd.f32 %v711, %v715
        %v718 = vadd.f32 %v712, %v716
        %s719 = sld [smem:[#allocation2 + $0x286]]
        %v720 = vstv %s719
        %v721 = vmul.f32 %v430, %v720
        %v722 = vmul.f32 %v431, %v720
        %v723 = vadd.f32 %v717, %v721
        %v724 = vadd.f32 %v718, %v722
        %s725 = sld [smem:[#allocation2 + $0x287]]
        %v726 = vstv %s725
        %v727 = vmul.f32 %v433, %v726
        %v728 = vmul.f32 %v434, %v726
        %v729 = vadd.f32 %v723, %v727
        %v730 = vadd.f32 %v724, %v728
        %s731 = sld [smem:[#allocation5 + $0x5]]
        %v732 = vstv %s731
        %v733 = vadd.f32 %v729, %v732
        %v734 = vadd.f32 %v730, %v732
        %s735 = sld [smem:[#allocation2 + $0x300]]
        %v736 = vstv %s735
        %v737 = vmul.f32 %v412, %v736
        %v738 = vmul.f32 %v413, %v736
        %s739 = sld [smem:[#allocation2 + $0x301]]
        %v740 = vstv %s739
        %v741 = vmul.f32 %v415, %v740
        %v742 = vmul.f32 %v416, %v740
        %v743 = vadd.f32 %v737, %v741
        %v744 = vadd.f32 %v738, %v742
        %s745 = sld [smem:[#allocation2 + $0x302]]
        %v746 = vstv %s745
        %v747 = vmul.f32 %v418, %v746
        %v748 = vmul.f32 %v419, %v746
        %v749 = vadd.f32 %v743, %v747
        %v750 = vadd.f32 %v744, %v748
        %s751 = sld [smem:[#allocation2 + $0x303]]
        %v752 = vstv %s751
        %v753 = vmul.f32 %v421, %v752
        %v754 = vmul.f32 %v422, %v752
        %v755 = vadd.f32 %v749, %v753
        %v756 = vadd.f32 %v750, %v754
        %s757 = sld [smem:[#allocation2 + $0x304]]
        %v758 = vstv %s757
        %v759 = vmul.f32 %v424, %v758
        %v760 = vmul.f32 %v425, %v758
        %v761 = vadd.f32 %v755, %v759
        %v762 = vadd.f32 %v756, %v760
        %s763 = sld [smem:[#allocation2 + $0x305]]
        %v764 = vstv %s763
        %v765 = vmul.f32 %v427, %v764
        %v766 = vmul.f32 %v428, %v764
        %v767 = vadd.f32 %v761, %v765
        %v768 = vadd.f32 %v762, %v766
        %s769 = sld [smem:[#allocation2 + $0x306]]
        %v770 = vstv %s769
        %v771 = vmul.f32 %v430, %v770
        %v772 = vmul.f32 %v431, %v770
        %v773 = vadd.f32 %v767, %v771
        %v774 = vadd.f32 %v768, %v772
        %s775 = sld [smem:[#allocation2 + $0x307]]
        %v776 = vstv %s775
        %v777 = vmul.f32 %v433, %v776
        %v778 = vmul.f32 %v434, %v776
        %v779 = vadd.f32 %v773, %v777
        %v780 = vadd.f32 %v774, %v778
        %s781 = sld [smem:[#allocation5 + $0x6]]
        %v782 = vstv %s781
        %v783 = vadd.f32 %v779, %v782
        %v784 = vadd.f32 %v780, %v782
        %s785 = sld [smem:[#allocation2 + $0x380]]
        %v786 = vstv %s785
        %v787 = vmul.f32 %v412, %v786
        %v788 = vmul.f32 %v413, %v786
        %s789 = sld [smem:[#allocation2 + $0x381]]
        %v790 = vstv %s789
        %v791 = vmul.f32 %v415, %v790
        %v792 = vmul.f32 %v416, %v790
        %v793 = vadd.f32 %v787, %v791
        %v794 = vadd.f32 %v788, %v792
        %s795 = sld [smem:[#allocation2 + $0x382]]
        %v796 = vstv %s795
        %v797 = vmul.f32 %v418, %v796
        %v798 = vmul.f32 %v419, %v796
        %v799 = vadd.f32 %v793, %v797
        %v800 = vadd.f32 %v794, %v798
        %s801 = sld [smem:[#allocation2 + $0x383]]
        %v802 = vstv %s801
        %v803 = vmul.f32 %v421, %v802
        %v804 = vmul.f32 %v422, %v802
        %v805 = vadd.f32 %v799, %v803
        %v806 = vadd.f32 %v800, %v804
        %s807 = sld [smem:[#allocation2 + $0x384]]
        %v808 = vstv %s807
        %v809 = vmul.f32 %v424, %v808
        %v810 = vmul.f32 %v425, %v808
        %v811 = vadd.f32 %v805, %v809
        %v812 = vadd.f32 %v806, %v810
        %s813 = sld [smem:[#allocation2 + $0x385]]
        %v814 = vstv %s813
        %v815 = vmul.f32 %v427, %v814
        %v816 = vmul.f32 %v428, %v814
        %v817 = vadd.f32 %v811, %v815
        %v818 = vadd.f32 %v812, %v816
        %s819 = sld [smem:[#allocation2 + $0x386]]
        %v820 = vstv %s819
        %v821 = vmul.f32 %v430, %v820
        %v822 = vmul.f32 %v431, %v820
        %v823 = vadd.f32 %v817, %v821
        %v824 = vadd.f32 %v818, %v822
        %s825 = sld [smem:[#allocation2 + $0x387]]
        %v826 = vstv %s825
        %v827 = vmul.f32 %v433, %v826
        %v828 = vmul.f32 %v434, %v826
        %v829 = vadd.f32 %v823, %v827
        %v830 = vadd.f32 %v824, %v828
        %s831 = sld [smem:[#allocation5 + $0x7]]
        %v832 = vstv %s831
        %v833 = vadd.f32 %v829, %v832
        %v834 = vadd.f32 %v830, %v832
        %v837 = vcombine.high %v583, %v583
        %v839 = vunpack.c.l.s4 1966171168
        %v840 = vunpack.c.0.s8 %v839
        %v841 = vlaneseq
        %v842 = vshrl.u32 %v841, 7
        %v843 = vsub.s32 %v840, %v842
        %v844 = vrot.slane %v583, %v843
        %v846 = vunpack.c.l.s4 1966171168
        %v847 = vunpack.c.0.s8 %v846
        %v848 = vlaneseq
        %v849 = vshrl.u32 %v848, 7
        %v850 = vsub.s32 %v847, %v849
        %v851 = vrot.slane %v837, %v850
        %v852 = vcombine.high %v844, %v844
        %v853 = vcombine.high %v851, %v851
        %v855 = vunpack.c.l.s4 1966171168
        %v856 = vunpack.c.0.s8 %v855
        %v857 = vlaneseq
        %v858 = vshrl.u32 %v857, 7
        %v859 = vsub.s32 %v856, %v858
        %v860 = vrot.slane %v844, %v859
        %v862 = vunpack.c.l.s4 1966171168
        %v863 = vunpack.c.0.s8 %v862
        %v864 = vlaneseq
        %v865 = vshrl.u32 %v864, 7
        %v866 = vsub.s32 %v863, %v865
        %v867 = vrot.slane %v851, %v866
        %v869 = vunpack.c.l.s4 1966171168
        %v870 = vunpack.c.0.s8 %v869
        %v871 = vlaneseq
        %v872 = vshrl.u32 %v871, 7
        %v873 = vsub.s32 %v870, %v872
        %v874 = vrot.slane %v852, %v873
        %v876 = vunpack.c.l.s4 1966171168
        %v877 = vunpack.c.0.s8 %v876
        %v878 = vlaneseq
        %v879 = vshrl.u32 %v878, 7
        %v880 = vsub.s32 %v877, %v879
        %v881 = vrot.slane %v853, %v880
        %v882 = vcombine.high %v860, %v860
        %v883 = vcombine.high %v867, %v867
        %v884 = vcombine.high %v874, %v874
        %v885 = vcombine.high %v881, %v881
        %v886 = vcombine.high %v584, %v584
        %v888 = vunpack.c.l.s4 1966171168
        %v889 = vunpack.c.0.s8 %v888
        %v890 = vlaneseq
        %v891 = vshrl.u32 %v890, 7
        %v892 = vsub.s32 %v889, %v891
        %v893 = vrot.slane %v584, %v892
        %v895 = vunpack.c.l.s4 1966171168
        %v896 = vunpack.c.0.s8 %v895
        %v897 = vlaneseq
        %v898 = vshrl.u32 %v897, 7
        %v899 = vsub.s32 %v896, %v898
        %v900 = vrot.slane %v886, %v899
        %v901 = vcombine.high %v893, %v893
        %v902 = vcombine.high %v900, %v900
        %v904 = vunpack.c.l.s4 1966171168
        %v905 = vunpack.c.0.s8 %v904
        %v906 = vlaneseq
        %v907 = vshrl.u32 %v906, 7
        %v908 = vsub.s32 %v905, %v907
        %v909 = vrot.slane %v893, %v908
        %v911 = vunpack.c.l.s4 1966171168
        %v912 = vunpack.c.0.s8 %v911
        %v913 = vlaneseq
        %v914 = vshrl.u32 %v913, 7
        %v915 = vsub.s32 %v912, %v914
        %v916 = vrot.slane %v900, %v915
        %v918 = vunpack.c.l.s4 1966171168
        %v919 = vunpack.c.0.s8 %v918
        %v920 = vlaneseq
        %v921 = vshrl.u32 %v920, 7
        %v922 = vsub.s32 %v919, %v921
        %v923 = vrot.slane %v901, %v922
        %v925 = vunpack.c.l.s4 1966171168
        %v926 = vunpack.c.0.s8 %v925
        %v927 = vlaneseq
        %v928 = vshrl.u32 %v927, 7
        %v929 = vsub.s32 %v926, %v928
        %v930 = vrot.slane %v902, %v929
        %v931 = vcombine.high %v909, %v909
        %v932 = vcombine.high %v916, %v916
        %v933 = vcombine.high %v923, %v923
        %v934 = vcombine.high %v930, %v930
        %v935 = vlaneseq
        %v936 = vshrl.u32 %v935, 7
        %v937 = vsub.s32 0, %v936
        %v938 = vrot.slane %v860, %v937
        %v939 = vlaneseq
        %v940 = vshrl.u32 %v939, 7
        %v941 = vsub.s32 0, %v940
        %v942 = vrot.slane %v874, %v941
        %v943 = vlaneseq
        %v944 = vshrl.u32 %v943, 7
        %v945 = vsub.s32 0, %v944
        %v946 = vrot.slane %v882, %v945
        %v947 = vlaneseq
        %v948 = vshrl.u32 %v947, 7
        %v949 = vsub.s32 0, %v948
        %v950 = vrot.slane %v884, %v949
        %v951 = vlaneseq
        %v952 = vshrl.u32 %v951, 7
        %v953 = vsub.s32 0, %v952
        %v954 = vrot.slane %v867, %v953
        %v955 = vlaneseq
        %v956 = vshrl.u32 %v955, 7
        %v957 = vsub.s32 0, %v956
        %v958 = vrot.slane %v881, %v957
        %v959 = vlaneseq
        %v960 = vshrl.u32 %v959, 7
        %v961 = vsub.s32 0, %v960
        %v962 = vrot.slane %v883, %v961
        %v963 = vlaneseq
        %v964 = vshrl.u32 %v963, 7
        %v965 = vsub.s32 0, %v964
        %v966 = vrot.slane %v885, %v965
        %v967 = vlaneseq
        %v968 = vshrl.u32 %v967, 7
        %v969 = vsub.s32 0, %v968
        %v970 = vrot.slane %v909, %v969
        %v971 = vlaneseq
        %v972 = vshrl.u32 %v971, 7
        %v973 = vsub.s32 0, %v972
        %v974 = vrot.slane %v923, %v973
        %v975 = vlaneseq
        %v976 = vshrl.u32 %v975, 7
        %v977 = vsub.s32 0, %v976
        %v978 = vrot.slane %v931, %v977
        %v979 = vlaneseq
        %v980 = vshrl.u32 %v979, 7
        %v981 = vsub.s32 0, %v980
        %v982 = vrot.slane %v933, %v981
        %v983 = vlaneseq
        %v984 = vshrl.u32 %v983, 7
        %v985 = vsub.s32 0, %v984
        %v986 = vrot.slane %v916, %v985
        %v987 = vlaneseq
        %v988 = vshrl.u32 %v987, 7
        %v989 = vsub.s32 0, %v988
        %v990 = vrot.slane %v930, %v989
        %v991 = vlaneseq
        %v992 = vshrl.u32 %v991, 7
        %v993 = vsub.s32 0, %v992
        %v994 = vrot.slane %v932, %v993
        %v995 = vlaneseq
        %v996 = vshrl.u32 %v995, 7
        %v997 = vsub.s32 0, %v996
        %v998 = vrot.slane %v934, %v997
        %v1015 = vmul.f32 %v483, %v938
        %v1016 = vmul.f32 %v484, %v938
        %v1017 = vmul.f32 %v483, %v942
        %v1018 = vmul.f32 %v484, %v942
        %v1019 = vmul.f32 %v483, %v946
        %v1020 = vmul.f32 %v484, %v946
        %v1021 = vmul.f32 %v483, %v950
        %v1022 = vmul.f32 %v484, %v950
        %v1023 = vmul.f32 %v483, %v954
        %v1024 = vmul.f32 %v484, %v954
        %v1025 = vmul.f32 %v483, %v958
        %v1026 = vmul.f32 %v484, %v958
        %v1027 = vmul.f32 %v483, %v962
        %v1028 = vmul.f32 %v484, %v962
        %v1029 = vmul.f32 %v483, %v966
        %v1030 = vmul.f32 %v484, %v966
        %v1031 = vmul.f32 %v483, %v970
        %v1032 = vmul.f32 %v484, %v970
        %v1033 = vmul.f32 %v483, %v974
        %v1034 = vmul.f32 %v484, %v974
        %v1035 = vmul.f32 %v483, %v978
        %v1036 = vmul.f32 %v484, %v978
        %v1037 = vmul.f32 %v483, %v982
        %v1038 = vmul.f32 %v484, %v982
        %v1039 = vmul.f32 %v483, %v986
        %v1040 = vmul.f32 %v484, %v986
        %v1041 = vmul.f32 %v483, %v990
        %v1042 = vmul.f32 %v484, %v990
        %v1043 = vmul.f32 %v483, %v994
        %v1044 = vmul.f32 %v484, %v994
        %v1045 = vmul.f32 %v483, %v998
        %v1046 = vmul.f32 %v484, %v998
        %v1049 = vcombine.high %v633, %v633
        %v1051 = vunpack.c.l.s4 1966171168
        %v1052 = vunpack.c.0.s8 %v1051
        %v1053 = vlaneseq
        %v1054 = vshrl.u32 %v1053, 7
        %v1055 = vsub.s32 %v1052, %v1054
        %v1056 = vrot.slane %v633, %v1055
        %v1058 = vunpack.c.l.s4 1966171168
        %v1059 = vunpack.c.0.s8 %v1058
        %v1060 = vlaneseq
        %v1061 = vshrl.u32 %v1060, 7
        %v1062 = vsub.s32 %v1059, %v1061
        %v1063 = vrot.slane %v1049, %v1062
        %v1064 = vcombine.high %v1056, %v1056
        %v1065 = vcombine.high %v1063, %v1063
        %v1067 = vunpack.c.l.s4 1966171168
        %v1068 = vunpack.c.0.s8 %v1067
        %v1069 = vlaneseq
        %v1070 = vshrl.u32 %v1069, 7
        %v1071 = vsub.s32 %v1068, %v1070
        %v1072 = vrot.slane %v1056, %v1071
        %v1074 = vunpack.c.l.s4 1966171168
        %v1075 = vunpack.c.0.s8 %v1074
        %v1076 = vlaneseq
        %v1077 = vshrl.u32 %v1076, 7
        %v1078 = vsub.s32 %v1075, %v1077
        %v1079 = vrot.slane %v1063, %v1078
        %v1081 = vunpack.c.l.s4 1966171168
        %v1082 = vunpack.c.0.s8 %v1081
        %v1083 = vlaneseq
        %v1084 = vshrl.u32 %v1083, 7
        %v1085 = vsub.s32 %v1082, %v1084
        %v1086 = vrot.slane %v1064, %v1085
        %v1088 = vunpack.c.l.s4 1966171168
        %v1089 = vunpack.c.0.s8 %v1088
        %v1090 = vlaneseq
        %v1091 = vshrl.u32 %v1090, 7
        %v1092 = vsub.s32 %v1089, %v1091
        %v1093 = vrot.slane %v1065, %v1092
        %v1094 = vcombine.high %v1072, %v1072
        %v1095 = vcombine.high %v1079, %v1079
        %v1096 = vcombine.high %v1086, %v1086
        %v1097 = vcombine.high %v1093, %v1093
        %v1098 = vcombine.high %v634, %v634
        %v1100 = vunpack.c.l.s4 1966171168
        %v1101 = vunpack.c.0.s8 %v1100
        %v1102 = vlaneseq
        %v1103 = vshrl.u32 %v1102, 7
        %v1104 = vsub.s32 %v1101, %v1103
        %v1105 = vrot.slane %v634, %v1104
        %v1107 = vunpack.c.l.s4 1966171168
        %v1108 = vunpack.c.0.s8 %v1107
        %v1109 = vlaneseq
        %v1110 = vshrl.u32 %v1109, 7
        %v1111 = vsub.s32 %v1108, %v1110
        %v1112 = vrot.slane %v1098, %v1111
        %v1113 = vcombine.high %v1105, %v1105
        %v1114 = vcombine.high %v1112, %v1112
        %v1116 = vunpack.c.l.s4 1966171168
        %v1117 = vunpack.c.0.s8 %v1116
        %v1118 = vlaneseq
        %v1119 = vshrl.u32 %v1118, 7
        %v1120 = vsub.s32 %v1117, %v1119
        %v1121 = vrot.slane %v1105, %v1120
        %v1123 = vunpack.c.l.s4 1966171168
        %v1124 = vunpack.c.0.s8 %v1123
        %v1125 = vlaneseq
        %v1126 = vshrl.u32 %v1125, 7
        %v1127 = vsub.s32 %v1124, %v1126
        %v1128 = vrot.slane %v1112, %v1127
        %v1130 = vunpack.c.l.s4 1966171168
        %v1131 = vunpack.c.0.s8 %v1130
        %v1132 = vlaneseq
        %v1133 = vshrl.u32 %v1132, 7
        %v1134 = vsub.s32 %v1131, %v1133
        %v1135 = vrot.slane %v1113, %v1134
        %v1137 = vunpack.c.l.s4 1966171168
        %v1138 = vunpack.c.0.s8 %v1137
        %v1139 = vlaneseq
        %v1140 = vshrl.u32 %v1139, 7
        %v1141 = vsub.s32 %v1138, %v1140
        %v1142 = vrot.slane %v1114, %v1141
        %v1143 = vcombine.high %v1121, %v1121
        %v1144 = vcombine.high %v1128, %v1128
        %v1145 = vcombine.high %v1135, %v1135
        %v1146 = vcombine.high %v1142, %v1142
        %v1147 = vlaneseq
        %v1148 = vshrl.u32 %v1147, 7
        %v1149 = vsub.s32 0, %v1148
        %v1150 = vrot.slane %v1072, %v1149
        %v1151 = vlaneseq
        %v1152 = vshrl.u32 %v1151, 7
        %v1153 = vsub.s32 0, %v1152
        %v1154 = vrot.slane %v1086, %v1153
        %v1155 = vlaneseq
        %v1156 = vshrl.u32 %v1155, 7
        %v1157 = vsub.s32 0, %v1156
        %v1158 = vrot.slane %v1094, %v1157
        %v1159 = vlaneseq
        %v1160 = vshrl.u32 %v1159, 7
        %v1161 = vsub.s32 0, %v1160
        %v1162 = vrot.slane %v1096, %v1161
        %v1163 = vlaneseq
        %v1164 = vshrl.u32 %v1163, 7
        %v1165 = vsub.s32 0, %v1164
        %v1166 = vrot.slane %v1079, %v1165
        %v1167 = vlaneseq
        %v1168 = vshrl.u32 %v1167, 7
        %v1169 = vsub.s32 0, %v1168
        %v1170 = vrot.slane %v1093, %v1169
        %v1171 = vlaneseq
        %v1172 = vshrl.u32 %v1171, 7
        %v1173 = vsub.s32 0, %v1172
        %v1174 = vrot.slane %v1095, %v1173
        %v1175 = vlaneseq
        %v1176 = vshrl.u32 %v1175, 7
        %v1177 = vsub.s32 0, %v1176
        %v1178 = vrot.slane %v1097, %v1177
        %v1179 = vlaneseq
        %v1180 = vshrl.u32 %v1179, 7
        %v1181 = vsub.s32 0, %v1180
        %v1182 = vrot.slane %v1121, %v1181
        %v1183 = vlaneseq
        %v1184 = vshrl.u32 %v1183, 7
        %v1185 = vsub.s32 0, %v1184
        %v1186 = vrot.slane %v1135, %v1185
        %v1187 = vlaneseq
        %v1188 = vshrl.u32 %v1187, 7
        %v1189 = vsub.s32 0, %v1188
        %v1190 = vrot.slane %v1143, %v1189
        %v1191 = vlaneseq
        %v1192 = vshrl.u32 %v1191, 7
        %v1193 = vsub.s32 0, %v1192
        %v1194 = vrot.slane %v1145, %v1193
        %v1195 = vlaneseq
        %v1196 = vshrl.u32 %v1195, 7
        %v1197 = vsub.s32 0, %v1196
        %v1198 = vrot.slane %v1128, %v1197
        %v1199 = vlaneseq
        %v1200 = vshrl.u32 %v1199, 7
        %v1201 = vsub.s32 0, %v1200
        %v1202 = vrot.slane %v1142, %v1201
        %v1203 = vlaneseq
        %v1204 = vshrl.u32 %v1203, 7
        %v1205 = vsub.s32 0, %v1204
        %v1206 = vrot.slane %v1144, %v1205
        %v1207 = vlaneseq
        %v1208 = vshrl.u32 %v1207, 7
        %v1209 = vsub.s32 0, %v1208
        %v1210 = vrot.slane %v1146, %v1209
        %v1227 = vmul.f32 %v533, %v1150
        %v1228 = vmul.f32 %v534, %v1150
        %v1229 = vmul.f32 %v533, %v1154
        %v1230 = vmul.f32 %v534, %v1154
        %v1231 = vmul.f32 %v533, %v1158
        %v1232 = vmul.f32 %v534, %v1158
        %v1233 = vmul.f32 %v533, %v1162
        %v1234 = vmul.f32 %v534, %v1162
        %v1235 = vmul.f32 %v533, %v1166
        %v1236 = vmul.f32 %v534, %v1166
        %v1237 = vmul.f32 %v533, %v1170
        %v1238 = vmul.f32 %v534, %v1170
        %v1239 = vmul.f32 %v533, %v1174
        %v1240 = vmul.f32 %v534, %v1174
        %v1241 = vmul.f32 %v533, %v1178
        %v1242 = vmul.f32 %v534, %v1178
        %v1243 = vmul.f32 %v533, %v1182
        %v1244 = vmul.f32 %v534, %v1182
        %v1245 = vmul.f32 %v533, %v1186
        %v1246 = vmul.f32 %v534, %v1186
        %v1247 = vmul.f32 %v533, %v1190
        %v1248 = vmul.f32 %v534, %v1190
        %v1249 = vmul.f32 %v533, %v1194
        %v1250 = vmul.f32 %v534, %v1194
        %v1251 = vmul.f32 %v533, %v1198
        %v1252 = vmul.f32 %v534, %v1198
        %v1253 = vmul.f32 %v533, %v1202
        %v1254 = vmul.f32 %v534, %v1202
        %v1255 = vmul.f32 %v533, %v1206
        %v1256 = vmul.f32 %v534, %v1206
        %v1257 = vmul.f32 %v533, %v1210
        %v1258 = vmul.f32 %v534, %v1210
        %v1259 = vadd.f32 %v1015, %v1227
        %v1260 = vadd.f32 %v1016, %v1228
        %v1261 = vadd.f32 %v1017, %v1229
        %v1262 = vadd.f32 %v1018, %v1230
        %v1263 = vadd.f32 %v1019, %v1231
        %v1264 = vadd.f32 %v1020, %v1232
        %v1265 = vadd.f32 %v1021, %v1233
        %v1266 = vadd.f32 %v1022, %v1234
        %v1267 = vadd.f32 %v1023, %v1235
        %v1268 = vadd.f32 %v1024, %v1236
        %v1269 = vadd.f32 %v1025, %v1237
        %v1270 = vadd.f32 %v1026, %v1238
        %v1271 = vadd.f32 %v1027, %v1239
        %v1272 = vadd.f32 %v1028, %v1240
        %v1273 = vadd.f32 %v1029, %v1241
        %v1274 = vadd.f32 %v1030, %v1242
        %v1275 = vadd.f32 %v1031, %v1243
        %v1276 = vadd.f32 %v1032, %v1244
        %v1277 = vadd.f32 %v1033, %v1245
        %v1278 = vadd.f32 %v1034, %v1246
        %v1279 = vadd.f32 %v1035, %v1247
        %v1280 = vadd.f32 %v1036, %v1248
        %v1281 = vadd.f32 %v1037, %v1249
        %v1282 = vadd.f32 %v1038, %v1250
        %v1283 = vadd.f32 %v1039, %v1251
        %v1284 = vadd.f32 %v1040, %v1252
        %v1285 = vadd.f32 %v1041, %v1253
        %v1286 = vadd.f32 %v1042, %v1254
        %v1287 = vadd.f32 %v1043, %v1255
        %v1288 = vadd.f32 %v1044, %v1256
        %v1289 = vadd.f32 %v1045, %v1257
        %v1290 = vadd.f32 %v1046, %v1258
        %v1291 = vld [vmem:[%s4] sm:$0xff]
        %v1292 = vld [vmem:[%s4 + $0x8] sm:$0xff]
        %v1293 = vld [vmem:[%s4 + $0x10] sm:$0xff]
        %v1294 = vld [vmem:[%s4 + $0x18] sm:$0xff]
        %v1295 = vld [vmem:[%s4 + $0x20] sm:$0xff]
        %v1296 = vld [vmem:[%s4 + $0x28] sm:$0xff]
        %v1297 = vld [vmem:[%s4 + $0x30] sm:$0xff]
        %v1298 = vld [vmem:[%s4 + $0x38] sm:$0xff]
        %v1299 = vld [vmem:[%s4 + $0x40] sm:$0xff]
        %v1300 = vld [vmem:[%s4 + $0x48] sm:$0xff]
        %v1301 = vld [vmem:[%s4 + $0x50] sm:$0xff]
        %v1302 = vld [vmem:[%s4 + $0x58] sm:$0xff]
        %v1303 = vld [vmem:[%s4 + $0x60] sm:$0xff]
        %v1304 = vld [vmem:[%s4 + $0x68] sm:$0xff]
        %v1305 = vld [vmem:[%s4 + $0x70] sm:$0xff]
        %v1306 = vld [vmem:[%s4 + $0x78] sm:$0xff]
        %v1307 = vld [vmem:[%s4 + $0x80] sm:$0xff]
        %v1308 = vld [vmem:[%s4 + $0x88] sm:$0xff]
        %v1309 = vld [vmem:[%s4 + $0x90] sm:$0xff]
        %v1310 = vld [vmem:[%s4 + $0x98] sm:$0xff]
        %v1311 = vld [vmem:[%s4 + $0xa0] sm:$0xff]
        %v1312 = vld [vmem:[%s4 + $0xa8] sm:$0xff]
        %v1313 = vld [vmem:[%s4 + $0xb0] sm:$0xff]
        %v1314 = vld [vmem:[%s4 + $0xb8] sm:$0xff]
        %v1315 = vld [vmem:[%s4 + $0xc0] sm:$0xff]
        %v1316 = vld [vmem:[%s4 + $0xc8] sm:$0xff]
        %v1317 = vld [vmem:[%s4 + $0xd0] sm:$0xff]
        %v1318 = vld [vmem:[%s4 + $0xd8] sm:$0xff]
        %v1319 = vld [vmem:[%s4 + $0xe0] sm:$0xff]
        %v1320 = vld [vmem:[%s4 + $0xe8] sm:$0xff]
        %v1321 = vld [vmem:[%s4 + $0xf0] sm:$0xff]
        %v1322 = vld [vmem:[%s4 + $0xf8] sm:$0xff]
        %1324 = vset.pattern.permute.xlu0 0
        %1325 = vperm.xlu0 %1324, %v1291
        %v1326 = vpop.permute.xlu0 %1325
        %1329 = vset.pattern.permute.xlu0 0
        %1330 = vperm.xlu0 %1329, %v1292
        %v1331 = vpop.permute.xlu0 %1330
        %1334 = vset.pattern.permute.xlu0 0
        %1335 = vperm.xlu0 %1334, %v1293
        %v1336 = vpop.permute.xlu0 %1335
        %1339 = vset.pattern.permute.xlu0 0
        %1340 = vperm.xlu0 %1339, %v1294
        %v1341 = vpop.permute.xlu0 %1340
        %1344 = vset.pattern.permute.xlu0 0
        %1345 = vperm.xlu0 %1344, %v1295
        %v1346 = vpop.permute.xlu0 %1345
        %1349 = vset.pattern.permute.xlu0 0
        %1350 = vperm.xlu0 %1349, %v1296
        %v1351 = vpop.permute.xlu0 %1350
        %1354 = vset.pattern.permute.xlu0 0
        %1355 = vperm.xlu0 %1354, %v1297
        %v1356 = vpop.permute.xlu0 %1355
        %1359 = vset.pattern.permute.xlu0 0
        %1360 = vperm.xlu0 %1359, %v1298
        %v1361 = vpop.permute.xlu0 %1360
        %1364 = vset.pattern.permute.xlu0 0
        %1365 = vperm.xlu0 %1364, %v1299
        %v1366 = vpop.permute.xlu0 %1365
        %1369 = vset.pattern.permute.xlu0 0
        %1370 = vperm.xlu0 %1369, %v1300
        %v1371 = vpop.permute.xlu0 %1370
        %1374 = vset.pattern.permute.xlu0 0
        %1375 = vperm.xlu0 %1374, %v1301
        %v1376 = vpop.permute.xlu0 %1375
        %1379 = vset.pattern.permute.xlu0 0
        %1380 = vperm.xlu0 %1379, %v1302
        %v1381 = vpop.permute.xlu0 %1380
        %1384 = vset.pattern.permute.xlu0 0
        %1385 = vperm.xlu0 %1384, %v1303
        %v1386 = vpop.permute.xlu0 %1385
        %1389 = vset.pattern.permute.xlu0 0
        %1390 = vperm.xlu0 %1389, %v1304
        %v1391 = vpop.permute.xlu0 %1390
        %1394 = vset.pattern.permute.xlu0 0
        %1395 = vperm.xlu0 %1394, %v1305
        %v1396 = vpop.permute.xlu0 %1395
        %1399 = vset.pattern.permute.xlu0 0
        %1400 = vperm.xlu0 %1399, %v1306
        %v1401 = vpop.permute.xlu0 %1400
        %1404 = vset.pattern.permute.xlu0 0
        %1405 = vperm.xlu0 %1404, %v1307
        %v1406 = vpop.permute.xlu0 %1405
        %1409 = vset.pattern.permute.xlu0 0
        %1410 = vperm.xlu0 %1409, %v1308
        %v1411 = vpop.permute.xlu0 %1410
        %1414 = vset.pattern.permute.xlu0 0
        %1415 = vperm.xlu0 %1414, %v1309
        %v1416 = vpop.permute.xlu0 %1415
        %1419 = vset.pattern.permute.xlu0 0
        %1420 = vperm.xlu0 %1419, %v1310
        %v1421 = vpop.permute.xlu0 %1420
        %1424 = vset.pattern.permute.xlu0 0
        %1425 = vperm.xlu0 %1424, %v1311
        %v1426 = vpop.permute.xlu0 %1425
        %1429 = vset.pattern.permute.xlu0 0
        %1430 = vperm.xlu0 %1429, %v1312
        %v1431 = vpop.permute.xlu0 %1430
        %1434 = vset.pattern.permute.xlu0 0
        %1435 = vperm.xlu0 %1434, %v1313
        %v1436 = vpop.permute.xlu0 %1435
        %1439 = vset.pattern.permute.xlu0 0
        %1440 = vperm.xlu0 %1439, %v1314
        %v1441 = vpop.permute.xlu0 %1440
        %1444 = vset.pattern.permute.xlu0 0
        %1445 = vperm.xlu0 %1444, %v1315
        %v1446 = vpop.permute.xlu0 %1445
        %1449 = vset.pattern.permute.xlu0 0
        %1450 = vperm.xlu0 %1449, %v1316
        %v1451 = vpop.permute.xlu0 %1450
        %1454 = vset.pattern.permute.xlu0 0
        %1455 = vperm.xlu0 %1454, %v1317
        %v1456 = vpop.permute.xlu0 %1455
        %1459 = vset.pattern.permute.xlu0 0
        %1460 = vperm.xlu0 %1459, %v1318
        %v1461 = vpop.permute.xlu0 %1460
        %1464 = vset.pattern.permute.xlu0 0
        %1465 = vperm.xlu0 %1464, %v1319
        %v1466 = vpop.permute.xlu0 %1465
        %1469 = vset.pattern.permute.xlu0 0
        %1470 = vperm.xlu0 %1469, %v1320
        %v1471 = vpop.permute.xlu0 %1470
        %1474 = vset.pattern.permute.xlu0 0
        %1475 = vperm.xlu0 %1474, %v1321
        %v1476 = vpop.permute.xlu0 %1475
        %1479 = vset.pattern.permute.xlu0 0
        %1480 = vperm.xlu0 %1479, %v1322
        %v1481 = vpop.permute.xlu0 %1480
        %v1483 = vmul.f32 %v1326, %v483
        %v1484 = vmul.f32 %v1331, %v484
        %v1485 = vmul.f32 %v1336, %v483
        %v1486 = vmul.f32 %v1341, %v484
        %v1487 = vmul.f32 %v1346, %v483
        %v1488 = vmul.f32 %v1351, %v484
        %v1489 = vmul.f32 %v1356, %v483
        %v1490 = vmul.f32 %v1361, %v484
        %v1491 = vmul.f32 %v1366, %v483
        %v1492 = vmul.f32 %v1371, %v484
        %v1493 = vmul.f32 %v1376, %v483
        %v1494 = vmul.f32 %v1381, %v484
        %v1495 = vmul.f32 %v1386, %v483
        %v1496 = vmul.f32 %v1391, %v484
        %v1497 = vmul.f32 %v1396, %v483
        %v1498 = vmul.f32 %v1401, %v484
        %v1499 = vmul.f32 %v1406, %v483
        %v1500 = vmul.f32 %v1411, %v484
        %v1501 = vmul.f32 %v1416, %v483
        %v1502 = vmul.f32 %v1421, %v484
        %v1503 = vmul.f32 %v1426, %v483
        %v1504 = vmul.f32 %v1431, %v484
        %v1505 = vmul.f32 %v1436, %v483
        %v1506 = vmul.f32 %v1441, %v484
        %v1507 = vmul.f32 %v1446, %v483
        %v1508 = vmul.f32 %v1451, %v484
        %v1509 = vmul.f32 %v1456, %v483
        %v1510 = vmul.f32 %v1461, %v484
        %v1511 = vmul.f32 %v1466, %v483
        %v1512 = vmul.f32 %v1471, %v484
        %v1513 = vmul.f32 %v1476, %v483
        %v1514 = vmul.f32 %v1481, %v484
        %v1515 = vadd.f32 %v1259, %v1483
        %v1516 = vadd.f32 %v1260, %v1484
        %v1517 = vadd.f32 %v1261, %v1485
        %v1518 = vadd.f32 %v1262, %v1486
        %v1519 = vadd.f32 %v1263, %v1487
        %v1520 = vadd.f32 %v1264, %v1488
        %v1521 = vadd.f32 %v1265, %v1489
        %v1522 = vadd.f32 %v1266, %v1490
        %v1523 = vadd.f32 %v1267, %v1491
        %v1524 = vadd.f32 %v1268, %v1492
        %v1525 = vadd.f32 %v1269, %v1493
        %v1526 = vadd.f32 %v1270, %v1494
        %v1527 = vadd.f32 %v1271, %v1495
        %v1528 = vadd.f32 %v1272, %v1496
        %v1529 = vadd.f32 %v1273, %v1497
        %v1530 = vadd.f32 %v1274, %v1498
        %v1531 = vadd.f32 %v1275, %v1499
        %v1532 = vadd.f32 %v1276, %v1500
        %v1533 = vadd.f32 %v1277, %v1501
        %v1534 = vadd.f32 %v1278, %v1502
        %v1535 = vadd.f32 %v1279, %v1503
        %v1536 = vadd.f32 %v1280, %v1504
        %v1537 = vadd.f32 %v1281, %v1505
        %v1538 = vadd.f32 %v1282, %v1506
        %v1539 = vadd.f32 %v1283, %v1507
        %v1540 = vadd.f32 %v1284, %v1508
        %v1541 = vadd.f32 %v1285, %v1509
        %v1542 = vadd.f32 %v1286, %v1510
        %v1543 = vadd.f32 %v1287, %v1511
        %v1544 = vadd.f32 %v1288, %v1512
        %v1545 = vadd.f32 %v1289, %v1513
        %v1546 = vadd.f32 %v1290, %v1514
        %v1547 = vld [vmem:[%s5] sm:$0xff]
        %v1548 = vld [vmem:[%s5 + $0x8] sm:$0xff]
        %v1549 = vld [vmem:[%s5 + $0x10] sm:$0xff]
        %v1550 = vld [vmem:[%s5 + $0x18] sm:$0xff]
        %v1551 = vld [vmem:[%s5 + $0x20] sm:$0xff]
        %v1552 = vld [vmem:[%s5 + $0x28] sm:$0xff]
        %v1553 = vld [vmem:[%s5 + $0x30] sm:$0xff]
        %v1554 = vld [vmem:[%s5 + $0x38] sm:$0xff]
        %v1555 = vld [vmem:[%s5 + $0x40] sm:$0xff]
        %v1556 = vld [vmem:[%s5 + $0x48] sm:$0xff]
        %v1557 = vld [vmem:[%s5 + $0x50] sm:$0xff]
        %v1558 = vld [vmem:[%s5 + $0x58] sm:$0xff]
        %v1559 = vld [vmem:[%s5 + $0x60] sm:$0xff]
        %v1560 = vld [vmem:[%s5 + $0x68] sm:$0xff]
        %v1561 = vld [vmem:[%s5 + $0x70] sm:$0xff]
        %v1562 = vld [vmem:[%s5 + $0x78] sm:$0xff]
        %v1563 = vld [vmem:[%s5 + $0x80] sm:$0xff]
        %v1564 = vld [vmem:[%s5 + $0x88] sm:$0xff]
        %v1565 = vld [vmem:[%s5 + $0x90] sm:$0xff]
        %v1566 = vld [vmem:[%s5 + $0x98] sm:$0xff]
        %v1567 = vld [vmem:[%s5 + $0xa0] sm:$0xff]
        %v1568 = vld [vmem:[%s5 + $0xa8] sm:$0xff]
        %v1569 = vld [vmem:[%s5 + $0xb0] sm:$0xff]
        %v1570 = vld [vmem:[%s5 + $0xb8] sm:$0xff]
        %v1571 = vld [vmem:[%s5 + $0xc0] sm:$0xff]
        %v1572 = vld [vmem:[%s5 + $0xc8] sm:$0xff]
        %v1573 = vld [vmem:[%s5 + $0xd0] sm:$0xff]
        %v1574 = vld [vmem:[%s5 + $0xd8] sm:$0xff]
        %v1575 = vld [vmem:[%s5 + $0xe0] sm:$0xff]
        %v1576 = vld [vmem:[%s5 + $0xe8] sm:$0xff]
        %v1577 = vld [vmem:[%s5 + $0xf0] sm:$0xff]
        %v1578 = vld [vmem:[%s5 + $0xf8] sm:$0xff]
        %1580 = vset.pattern.permute.xlu0 0
        %1581 = vperm.xlu0 %1580, %v1547
        %v1582 = vpop.permute.xlu0 %1581
        %1585 = vset.pattern.permute.xlu0 0
        %1586 = vperm.xlu0 %1585, %v1548
        %v1587 = vpop.permute.xlu0 %1586
        %1590 = vset.pattern.permute.xlu0 0
        %1591 = vperm.xlu0 %1590, %v1549
        %v1592 = vpop.permute.xlu0 %1591
        %1595 = vset.pattern.permute.xlu0 0
        %1596 = vperm.xlu0 %1595, %v1550
        %v1597 = vpop.permute.xlu0 %1596
        %1600 = vset.pattern.permute.xlu0 0
        %1601 = vperm.xlu0 %1600, %v1551
        %v1602 = vpop.permute.xlu0 %1601
        %1605 = vset.pattern.permute.xlu0 0
        %1606 = vperm.xlu0 %1605, %v1552
        %v1607 = vpop.permute.xlu0 %1606
        %1610 = vset.pattern.permute.xlu0 0
        %1611 = vperm.xlu0 %1610, %v1553
        %v1612 = vpop.permute.xlu0 %1611
        %1615 = vset.pattern.permute.xlu0 0
        %1616 = vperm.xlu0 %1615, %v1554
        %v1617 = vpop.permute.xlu0 %1616
        %1620 = vset.pattern.permute.xlu0 0
        %1621 = vperm.xlu0 %1620, %v1555
        %v1622 = vpop.permute.xlu0 %1621
        %1625 = vset.pattern.permute.xlu0 0
        %1626 = vperm.xlu0 %1625, %v1556
        %v1627 = vpop.permute.xlu0 %1626
        %1630 = vset.pattern.permute.xlu0 0
        %1631 = vperm.xlu0 %1630, %v1557
        %v1632 = vpop.permute.xlu0 %1631
        %1635 = vset.pattern.permute.xlu0 0
        %1636 = vperm.xlu0 %1635, %v1558
        %v1637 = vpop.permute.xlu0 %1636
        %1640 = vset.pattern.permute.xlu0 0
        %1641 = vperm.xlu0 %1640, %v1559
        %v1642 = vpop.permute.xlu0 %1641
        %1645 = vset.pattern.permute.xlu0 0
        %1646 = vperm.xlu0 %1645, %v1560
        %v1647 = vpop.permute.xlu0 %1646
        %1650 = vset.pattern.permute.xlu0 0
        %1651 = vperm.xlu0 %1650, %v1561
        %v1652 = vpop.permute.xlu0 %1651
        %1655 = vset.pattern.permute.xlu0 0
        %1656 = vperm.xlu0 %1655, %v1562
        %v1657 = vpop.permute.xlu0 %1656
        %1660 = vset.pattern.permute.xlu0 0
        %1661 = vperm.xlu0 %1660, %v1563
        %v1662 = vpop.permute.xlu0 %1661
        %1665 = vset.pattern.permute.xlu0 0
        %1666 = vperm.xlu0 %1665, %v1564
        %v1667 = vpop.permute.xlu0 %1666
        %1670 = vset.pattern.permute.xlu0 0
        %1671 = vperm.xlu0 %1670, %v1565
        %v1672 = vpop.permute.xlu0 %1671
        %1675 = vset.pattern.permute.xlu0 0
        %1676 = vperm.xlu0 %1675, %v1566
        %v1677 = vpop.permute.xlu0 %1676
        %1680 = vset.pattern.permute.xlu0 0
        %1681 = vperm.xlu0 %1680, %v1567
        %v1682 = vpop.permute.xlu0 %1681
        %1685 = vset.pattern.permute.xlu0 0
        %1686 = vperm.xlu0 %1685, %v1568
        %v1687 = vpop.permute.xlu0 %1686
        %1690 = vset.pattern.permute.xlu0 0
        %1691 = vperm.xlu0 %1690, %v1569
        %v1692 = vpop.permute.xlu0 %1691
        %1695 = vset.pattern.permute.xlu0 0
        %1696 = vperm.xlu0 %1695, %v1570
        %v1697 = vpop.permute.xlu0 %1696
        %1700 = vset.pattern.permute.xlu0 0
        %1701 = vperm.xlu0 %1700, %v1571
        %v1702 = vpop.permute.xlu0 %1701
        %1705 = vset.pattern.permute.xlu0 0
        %1706 = vperm.xlu0 %1705, %v1572
        %v1707 = vpop.permute.xlu0 %1706
        %1710 = vset.pattern.permute.xlu0 0
        %1711 = vperm.xlu0 %1710, %v1573
        %v1712 = vpop.permute.xlu0 %1711
        %1715 = vset.pattern.permute.xlu0 0
        %1716 = vperm.xlu0 %1715, %v1574
        %v1717 = vpop.permute.xlu0 %1716
        %1720 = vset.pattern.permute.xlu0 0
        %1721 = vperm.xlu0 %1720, %v1575
        %v1722 = vpop.permute.xlu0 %1721
        %1725 = vset.pattern.permute.xlu0 0
        %1726 = vperm.xlu0 %1725, %v1576
        %v1727 = vpop.permute.xlu0 %1726
        %1730 = vset.pattern.permute.xlu0 0
        %1731 = vperm.xlu0 %1730, %v1577
        %v1732 = vpop.permute.xlu0 %1731
        %1735 = vset.pattern.permute.xlu0 0
        %1736 = vperm.xlu0 %1735, %v1578
        %v1737 = vpop.permute.xlu0 %1736
        %v1739 = vmul.f32 %v1582, %v938
        %v1740 = vmul.f32 %v1587, %v938
        %v1741 = vmul.f32 %v1592, %v942
        %v1742 = vmul.f32 %v1597, %v942
        %v1743 = vmul.f32 %v1602, %v946
        %v1744 = vmul.f32 %v1607, %v946
        %v1745 = vmul.f32 %v1612, %v950
        %v1746 = vmul.f32 %v1617, %v950
        %v1747 = vmul.f32 %v1622, %v954
        %v1748 = vmul.f32 %v1627, %v954
        %v1749 = vmul.f32 %v1632, %v958
        %v1750 = vmul.f32 %v1637, %v958
        %v1751 = vmul.f32 %v1642, %v962
        %v1752 = vmul.f32 %v1647, %v962
        %v1753 = vmul.f32 %v1652, %v966
        %v1754 = vmul.f32 %v1657, %v966
        %v1755 = vmul.f32 %v1662, %v970
        %v1756 = vmul.f32 %v1667, %v970
        %v1757 = vmul.f32 %v1672, %v974
        %v1758 = vmul.f32 %v1677, %v974
        %v1759 = vmul.f32 %v1682, %v978
        %v1760 = vmul.f32 %v1687, %v978
        %v1761 = vmul.f32 %v1692, %v982
        %v1762 = vmul.f32 %v1697, %v982
        %v1763 = vmul.f32 %v1702, %v986
        %v1764 = vmul.f32 %v1707, %v986
        %v1765 = vmul.f32 %v1712, %v990
        %v1766 = vmul.f32 %v1717, %v990
        %v1767 = vmul.f32 %v1722, %v994
        %v1768 = vmul.f32 %v1727, %v994
        %v1769 = vmul.f32 %v1732, %v998
        %v1770 = vmul.f32 %v1737, %v998
        %v1771 = vadd.f32 %v1515, %v1739
        %v1772 = vadd.f32 %v1516, %v1740
        %v1773 = vadd.f32 %v1517, %v1741
        %v1774 = vadd.f32 %v1518, %v1742
        %v1775 = vadd.f32 %v1519, %v1743
        %v1776 = vadd.f32 %v1520, %v1744
        %v1777 = vadd.f32 %v1521, %v1745
        %v1778 = vadd.f32 %v1522, %v1746
        %v1779 = vadd.f32 %v1523, %v1747
        %v1780 = vadd.f32 %v1524, %v1748
        %v1781 = vadd.f32 %v1525, %v1749
        %v1782 = vadd.f32 %v1526, %v1750
        %v1783 = vadd.f32 %v1527, %v1751
        %v1784 = vadd.f32 %v1528, %v1752
        %v1785 = vadd.f32 %v1529, %v1753
        %v1786 = vadd.f32 %v1530, %v1754
        %v1787 = vadd.f32 %v1531, %v1755
        %v1788 = vadd.f32 %v1532, %v1756
        %v1789 = vadd.f32 %v1533, %v1757
        %v1790 = vadd.f32 %v1534, %v1758
        %v1791 = vadd.f32 %v1535, %v1759
        %v1792 = vadd.f32 %v1536, %v1760
        %v1793 = vadd.f32 %v1537, %v1761
        %v1794 = vadd.f32 %v1538, %v1762
        %v1795 = vadd.f32 %v1539, %v1763
        %v1796 = vadd.f32 %v1540, %v1764
        %v1797 = vadd.f32 %v1541, %v1765
        %v1798 = vadd.f32 %v1542, %v1766
        %v1799 = vadd.f32 %v1543, %v1767
        %v1800 = vadd.f32 %v1544, %v1768
        %v1801 = vadd.f32 %v1545, %v1769
        %v1802 = vadd.f32 %v1546, %v1770
        %s1803 = scalar_lea.vmem %s4, 256
        %v1804 = vld [vmem:[%s1803] sm:$0xff]
        %v1805 = vld [vmem:[%s1803 + $0x8] sm:$0xff]
        %v1806 = vld [vmem:[%s1803 + $0x10] sm:$0xff]
        %v1807 = vld [vmem:[%s1803 + $0x18] sm:$0xff]
        %v1808 = vld [vmem:[%s1803 + $0x20] sm:$0xff]
        %v1809 = vld [vmem:[%s1803 + $0x28] sm:$0xff]
        %v1810 = vld [vmem:[%s1803 + $0x30] sm:$0xff]
        %v1811 = vld [vmem:[%s1803 + $0x38] sm:$0xff]
        %v1812 = vld [vmem:[%s1803 + $0x40] sm:$0xff]
        %v1813 = vld [vmem:[%s1803 + $0x48] sm:$0xff]
        %v1814 = vld [vmem:[%s1803 + $0x50] sm:$0xff]
        %v1815 = vld [vmem:[%s1803 + $0x58] sm:$0xff]
        %v1816 = vld [vmem:[%s1803 + $0x60] sm:$0xff]
        %v1817 = vld [vmem:[%s1803 + $0x68] sm:$0xff]
        %v1818 = vld [vmem:[%s1803 + $0x70] sm:$0xff]
        %v1819 = vld [vmem:[%s1803 + $0x78] sm:$0xff]
        %v1820 = vld [vmem:[%s1803 + $0x80] sm:$0xff]
        %v1821 = vld [vmem:[%s1803 + $0x88] sm:$0xff]
        %v1822 = vld [vmem:[%s1803 + $0x90] sm:$0xff]
        %v1823 = vld [vmem:[%s1803 + $0x98] sm:$0xff]
        %v1824 = vld [vmem:[%s1803 + $0xa0] sm:$0xff]
        %v1825 = vld [vmem:[%s1803 + $0xa8] sm:$0xff]
        %v1826 = vld [vmem:[%s1803 + $0xb0] sm:$0xff]
        %v1827 = vld [vmem:[%s1803 + $0xb8] sm:$0xff]
        %v1828 = vld [vmem:[%s1803 + $0xc0] sm:$0xff]
        %v1829 = vld [vmem:[%s1803 + $0xc8] sm:$0xff]
        %v1830 = vld [vmem:[%s1803 + $0xd0] sm:$0xff]
        %v1831 = vld [vmem:[%s1803 + $0xd8] sm:$0xff]
        %v1832 = vld [vmem:[%s1803 + $0xe0] sm:$0xff]
        %v1833 = vld [vmem:[%s1803 + $0xe8] sm:$0xff]
        %v1834 = vld [vmem:[%s1803 + $0xf0] sm:$0xff]
        %v1835 = vld [vmem:[%s1803 + $0xf8] sm:$0xff]
        %1837 = vset.pattern.permute.xlu0 0
        %1838 = vperm.xlu0 %1837, %v1804
        %v1839 = vpop.permute.xlu0 %1838
        %1842 = vset.pattern.permute.xlu0 0
        %1843 = vperm.xlu0 %1842, %v1805
        %v1844 = vpop.permute.xlu0 %1843
        %1847 = vset.pattern.permute.xlu0 0
        %1848 = vperm.xlu0 %1847, %v1806
        %v1849 = vpop.permute.xlu0 %1848
        %1852 = vset.pattern.permute.xlu0 0
        %1853 = vperm.xlu0 %1852, %v1807
        %v1854 = vpop.permute.xlu0 %1853
        %1857 = vset.pattern.permute.xlu0 0
        %1858 = vperm.xlu0 %1857, %v1808
        %v1859 = vpop.permute.xlu0 %1858
        %1862 = vset.pattern.permute.xlu0 0
        %1863 = vperm.xlu0 %1862, %v1809
        %v1864 = vpop.permute.xlu0 %1863
        %1867 = vset.pattern.permute.xlu0 0
        %1868 = vperm.xlu0 %1867, %v1810
        %v1869 = vpop.permute.xlu0 %1868
        %1872 = vset.pattern.permute.xlu0 0
        %1873 = vperm.xlu0 %1872, %v1811
        %v1874 = vpop.permute.xlu0 %1873
        %1877 = vset.pattern.permute.xlu0 0
        %1878 = vperm.xlu0 %1877, %v1812
        %v1879 = vpop.permute.xlu0 %1878
        %1882 = vset.pattern.permute.xlu0 0
        %1883 = vperm.xlu0 %1882, %v1813
        %v1884 = vpop.permute.xlu0 %1883
        %1887 = vset.pattern.permute.xlu0 0
        %1888 = vperm.xlu0 %1887, %v1814
        %v1889 = vpop.permute.xlu0 %1888
        %1892 = vset.pattern.permute.xlu0 0
        %1893 = vperm.xlu0 %1892, %v1815
        %v1894 = vpop.permute.xlu0 %1893
        %1897 = vset.pattern.permute.xlu0 0
        %1898 = vperm.xlu0 %1897, %v1816
        %v1899 = vpop.permute.xlu0 %1898
        %1902 = vset.pattern.permute.xlu0 0
        %1903 = vperm.xlu0 %1902, %v1817
        %v1904 = vpop.permute.xlu0 %1903
        %1907 = vset.pattern.permute.xlu0 0
        %1908 = vperm.xlu0 %1907, %v1818
        %v1909 = vpop.permute.xlu0 %1908
        %1912 = vset.pattern.permute.xlu0 0
        %1913 = vperm.xlu0 %1912, %v1819
        %v1914 = vpop.permute.xlu0 %1913
        %1917 = vset.pattern.permute.xlu0 0
        %1918 = vperm.xlu0 %1917, %v1820
        %v1919 = vpop.permute.xlu0 %1918
        %1922 = vset.pattern.permute.xlu0 0
        %1923 = vperm.xlu0 %1922, %v1821
        %v1924 = vpop.permute.xlu0 %1923
        %1927 = vset.pattern.permute.xlu0 0
        %1928 = vperm.xlu0 %1927, %v1822
        %v1929 = vpop.permute.xlu0 %1928
        %1932 = vset.pattern.permute.xlu0 0
        %1933 = vperm.xlu0 %1932, %v1823
        %v1934 = vpop.permute.xlu0 %1933
        %1937 = vset.pattern.permute.xlu0 0
        %1938 = vperm.xlu0 %1937, %v1824
        %v1939 = vpop.permute.xlu0 %1938
        %1942 = vset.pattern.permute.xlu0 0
        %1943 = vperm.xlu0 %1942, %v1825
        %v1944 = vpop.permute.xlu0 %1943
        %1947 = vset.pattern.permute.xlu0 0
        %1948 = vperm.xlu0 %1947, %v1826
        %v1949 = vpop.permute.xlu0 %1948
        %1952 = vset.pattern.permute.xlu0 0
        %1953 = vperm.xlu0 %1952, %v1827
        %v1954 = vpop.permute.xlu0 %1953
        %1957 = vset.pattern.permute.xlu0 0
        %1958 = vperm.xlu0 %1957, %v1828
        %v1959 = vpop.permute.xlu0 %1958
        %1962 = vset.pattern.permute.xlu0 0
        %1963 = vperm.xlu0 %1962, %v1829
        %v1964 = vpop.permute.xlu0 %1963
        %1967 = vset.pattern.permute.xlu0 0
        %1968 = vperm.xlu0 %1967, %v1830
        %v1969 = vpop.permute.xlu0 %1968
        %1972 = vset.pattern.permute.xlu0 0
        %1973 = vperm.xlu0 %1972, %v1831
        %v1974 = vpop.permute.xlu0 %1973
        %1977 = vset.pattern.permute.xlu0 0
        %1978 = vperm.xlu0 %1977, %v1832
        %v1979 = vpop.permute.xlu0 %1978
        %1982 = vset.pattern.permute.xlu0 0
        %1983 = vperm.xlu0 %1982, %v1833
        %v1984 = vpop.permute.xlu0 %1983
        %1987 = vset.pattern.permute.xlu0 0
        %1988 = vperm.xlu0 %1987, %v1834
        %v1989 = vpop.permute.xlu0 %1988
        %1992 = vset.pattern.permute.xlu0 0
        %1993 = vperm.xlu0 %1992, %v1835
        %v1994 = vpop.permute.xlu0 %1993
        %v1996 = vmul.f32 %v1839, %v533
        %v1997 = vmul.f32 %v1844, %v534
        %v1998 = vmul.f32 %v1849, %v533
        %v1999 = vmul.f32 %v1854, %v534
        %v2000 = vmul.f32 %v1859, %v533
        %v2001 = vmul.f32 %v1864, %v534
        %v2002 = vmul.f32 %v1869, %v533
        %v2003 = vmul.f32 %v1874, %v534
        %v2004 = vmul.f32 %v1879, %v533
        %v2005 = vmul.f32 %v1884, %v534
        %v2006 = vmul.f32 %v1889, %v533
        %v2007 = vmul.f32 %v1894, %v534
        %v2008 = vmul.f32 %v1899, %v533
        %v2009 = vmul.f32 %v1904, %v534
        %v2010 = vmul.f32 %v1909, %v533
        %v2011 = vmul.f32 %v1914, %v534
        %v2012 = vmul.f32 %v1919, %v533
        %v2013 = vmul.f32 %v1924, %v534
        %v2014 = vmul.f32 %v1929, %v533
        %v2015 = vmul.f32 %v1934, %v534
        %v2016 = vmul.f32 %v1939, %v533
        %v2017 = vmul.f32 %v1944, %v534
        %v2018 = vmul.f32 %v1949, %v533
        %v2019 = vmul.f32 %v1954, %v534
        %v2020 = vmul.f32 %v1959, %v533
        %v2021 = vmul.f32 %v1964, %v534
        %v2022 = vmul.f32 %v1969, %v533
        %v2023 = vmul.f32 %v1974, %v534
        %v2024 = vmul.f32 %v1979, %v533
        %v2025 = vmul.f32 %v1984, %v534
        %v2026 = vmul.f32 %v1989, %v533
        %v2027 = vmul.f32 %v1994, %v534
        %v2028 = vadd.f32 %v1771, %v1996
        %v2029 = vadd.f32 %v1772, %v1997
        %v2030 = vadd.f32 %v1773, %v1998
        %v2031 = vadd.f32 %v1774, %v1999
        %v2032 = vadd.f32 %v1775, %v2000
        %v2033 = vadd.f32 %v1776, %v2001
        %v2034 = vadd.f32 %v1777, %v2002
        %v2035 = vadd.f32 %v1778, %v2003
        %v2036 = vadd.f32 %v1779, %v2004
        %v2037 = vadd.f32 %v1780, %v2005
        %v2038 = vadd.f32 %v1781, %v2006
        %v2039 = vadd.f32 %v1782, %v2007
        %v2040 = vadd.f32 %v1783, %v2008
        %v2041 = vadd.f32 %v1784, %v2009
        %v2042 = vadd.f32 %v1785, %v2010
        %v2043 = vadd.f32 %v1786, %v2011
        %v2044 = vadd.f32 %v1787, %v2012
        %v2045 = vadd.f32 %v1788, %v2013
        %v2046 = vadd.f32 %v1789, %v2014
        %v2047 = vadd.f32 %v1790, %v2015
        %v2048 = vadd.f32 %v1791, %v2016
        %v2049 = vadd.f32 %v1792, %v2017
        %v2050 = vadd.f32 %v1793, %v2018
        %v2051 = vadd.f32 %v1794, %v2019
        %v2052 = vadd.f32 %v1795, %v2020
        %v2053 = vadd.f32 %v1796, %v2021
        %v2054 = vadd.f32 %v1797, %v2022
        %v2055 = vadd.f32 %v1798, %v2023
        %v2056 = vadd.f32 %v1799, %v2024
        %v2057 = vadd.f32 %v1800, %v2025
        %v2058 = vadd.f32 %v1801, %v2026
        %v2059 = vadd.f32 %v1802, %v2027
        %s2060 = scalar_lea.vmem %s5, 256
        %v2061 = vld [vmem:[%s2060] sm:$0xff]
        %v2062 = vld [vmem:[%s2060 + $0x8] sm:$0xff]
        %v2063 = vld [vmem:[%s2060 + $0x10] sm:$0xff]
        %v2064 = vld [vmem:[%s2060 + $0x18] sm:$0xff]
        %v2065 = vld [vmem:[%s2060 + $0x20] sm:$0xff]
        %v2066 = vld [vmem:[%s2060 + $0x28] sm:$0xff]
        %v2067 = vld [vmem:[%s2060 + $0x30] sm:$0xff]
        %v2068 = vld [vmem:[%s2060 + $0x38] sm:$0xff]
        %v2069 = vld [vmem:[%s2060 + $0x40] sm:$0xff]
        %v2070 = vld [vmem:[%s2060 + $0x48] sm:$0xff]
        %v2071 = vld [vmem:[%s2060 + $0x50] sm:$0xff]
        %v2072 = vld [vmem:[%s2060 + $0x58] sm:$0xff]
        %v2073 = vld [vmem:[%s2060 + $0x60] sm:$0xff]
        %v2074 = vld [vmem:[%s2060 + $0x68] sm:$0xff]
        %v2075 = vld [vmem:[%s2060 + $0x70] sm:$0xff]
        %v2076 = vld [vmem:[%s2060 + $0x78] sm:$0xff]
        %v2077 = vld [vmem:[%s2060 + $0x80] sm:$0xff]
        %v2078 = vld [vmem:[%s2060 + $0x88] sm:$0xff]
        %v2079 = vld [vmem:[%s2060 + $0x90] sm:$0xff]
        %v2080 = vld [vmem:[%s2060 + $0x98] sm:$0xff]
        %v2081 = vld [vmem:[%s2060 + $0xa0] sm:$0xff]
        %v2082 = vld [vmem:[%s2060 + $0xa8] sm:$0xff]
        %v2083 = vld [vmem:[%s2060 + $0xb0] sm:$0xff]
        %v2084 = vld [vmem:[%s2060 + $0xb8] sm:$0xff]
        %v2085 = vld [vmem:[%s2060 + $0xc0] sm:$0xff]
        %v2086 = vld [vmem:[%s2060 + $0xc8] sm:$0xff]
        %v2087 = vld [vmem:[%s2060 + $0xd0] sm:$0xff]
        %v2088 = vld [vmem:[%s2060 + $0xd8] sm:$0xff]
        %v2089 = vld [vmem:[%s2060 + $0xe0] sm:$0xff]
        %v2090 = vld [vmem:[%s2060 + $0xe8] sm:$0xff]
        %v2091 = vld [vmem:[%s2060 + $0xf0] sm:$0xff]
        %v2092 = vld [vmem:[%s2060 + $0xf8] sm:$0xff]
        %2094 = vset.pattern.permute.xlu0 0
        %2095 = vperm.xlu0 %2094, %v2061
        %v2096 = vpop.permute.xlu0 %2095
        %2099 = vset.pattern.permute.xlu0 0
        %2100 = vperm.xlu0 %2099, %v2062
        %v2101 = vpop.permute.xlu0 %2100
        %2104 = vset.pattern.permute.xlu0 0
        %2105 = vperm.xlu0 %2104, %v2063
        %v2106 = vpop.permute.xlu0 %2105
        %2109 = vset.pattern.permute.xlu0 0
        %2110 = vperm.xlu0 %2109, %v2064
        %v2111 = vpop.permute.xlu0 %2110
        %2114 = vset.pattern.permute.xlu0 0
        %2115 = vperm.xlu0 %2114, %v2065
        %v2116 = vpop.permute.xlu0 %2115
        %2119 = vset.pattern.permute.xlu0 0
        %2120 = vperm.xlu0 %2119, %v2066
        %v2121 = vpop.permute.xlu0 %2120
        %2124 = vset.pattern.permute.xlu0 0
        %2125 = vperm.xlu0 %2124, %v2067
        %v2126 = vpop.permute.xlu0 %2125
        %2129 = vset.pattern.permute.xlu0 0
        %2130 = vperm.xlu0 %2129, %v2068
        %v2131 = vpop.permute.xlu0 %2130
        %2134 = vset.pattern.permute.xlu0 0
        %2135 = vperm.xlu0 %2134, %v2069
        %v2136 = vpop.permute.xlu0 %2135
        %2139 = vset.pattern.permute.xlu0 0
        %2140 = vperm.xlu0 %2139, %v2070
        %v2141 = vpop.permute.xlu0 %2140
        %2144 = vset.pattern.permute.xlu0 0
        %2145 = vperm.xlu0 %2144, %v2071
        %v2146 = vpop.permute.xlu0 %2145
        %2149 = vset.pattern.permute.xlu0 0
        %2150 = vperm.xlu0 %2149, %v2072
        %v2151 = vpop.permute.xlu0 %2150
        %2154 = vset.pattern.permute.xlu0 0
        %2155 = vperm.xlu0 %2154, %v2073
        %v2156 = vpop.permute.xlu0 %2155
        %2159 = vset.pattern.permute.xlu0 0
        %2160 = vperm.xlu0 %2159, %v2074
        %v2161 = vpop.permute.xlu0 %2160
        %2164 = vset.pattern.permute.xlu0 0
        %2165 = vperm.xlu0 %2164, %v2075
        %v2166 = vpop.permute.xlu0 %2165
        %2169 = vset.pattern.permute.xlu0 0
        %2170 = vperm.xlu0 %2169, %v2076
        %v2171 = vpop.permute.xlu0 %2170
        %2174 = vset.pattern.permute.xlu0 0
        %2175 = vperm.xlu0 %2174, %v2077
        %v2176 = vpop.permute.xlu0 %2175
        %2179 = vset.pattern.permute.xlu0 0
        %2180 = vperm.xlu0 %2179, %v2078
        %v2181 = vpop.permute.xlu0 %2180
        %2184 = vset.pattern.permute.xlu0 0
        %2185 = vperm.xlu0 %2184, %v2079
        %v2186 = vpop.permute.xlu0 %2185
        %2189 = vset.pattern.permute.xlu0 0
        %2190 = vperm.xlu0 %2189, %v2080
        %v2191 = vpop.permute.xlu0 %2190
        %2194 = vset.pattern.permute.xlu0 0
        %2195 = vperm.xlu0 %2194, %v2081
        %v2196 = vpop.permute.xlu0 %2195
        %2199 = vset.pattern.permute.xlu0 0
        %2200 = vperm.xlu0 %2199, %v2082
        %v2201 = vpop.permute.xlu0 %2200
        %2204 = vset.pattern.permute.xlu0 0
        %2205 = vperm.xlu0 %2204, %v2083
        %v2206 = vpop.permute.xlu0 %2205
        %2209 = vset.pattern.permute.xlu0 0
        %2210 = vperm.xlu0 %2209, %v2084
        %v2211 = vpop.permute.xlu0 %2210
        %2214 = vset.pattern.permute.xlu0 0
        %2215 = vperm.xlu0 %2214, %v2085
        %v2216 = vpop.permute.xlu0 %2215
        %2219 = vset.pattern.permute.xlu0 0
        %2220 = vperm.xlu0 %2219, %v2086
        %v2221 = vpop.permute.xlu0 %2220
        %2224 = vset.pattern.permute.xlu0 0
        %2225 = vperm.xlu0 %2224, %v2087
        %v2226 = vpop.permute.xlu0 %2225
        %2229 = vset.pattern.permute.xlu0 0
        %2230 = vperm.xlu0 %2229, %v2088
        %v2231 = vpop.permute.xlu0 %2230
        %2234 = vset.pattern.permute.xlu0 0
        %2235 = vperm.xlu0 %2234, %v2089
        %v2236 = vpop.permute.xlu0 %2235
        %2239 = vset.pattern.permute.xlu0 0
        %2240 = vperm.xlu0 %2239, %v2090
        %v2241 = vpop.permute.xlu0 %2240
        %2244 = vset.pattern.permute.xlu0 0
        %2245 = vperm.xlu0 %2244, %v2091
        %v2246 = vpop.permute.xlu0 %2245
        %2249 = vset.pattern.permute.xlu0 0
        %2250 = vperm.xlu0 %2249, %v2092
        %v2251 = vpop.permute.xlu0 %2250
        %v2253 = vmul.f32 %v2096, %v1150
        %v2254 = vmul.f32 %v2101, %v1150
        %v2255 = vmul.f32 %v2106, %v1154
        %v2256 = vmul.f32 %v2111, %v1154
        %v2257 = vmul.f32 %v2116, %v1158
        %v2258 = vmul.f32 %v2121, %v1158
        %v2259 = vmul.f32 %v2126, %v1162
        %v2260 = vmul.f32 %v2131, %v1162
        %v2261 = vmul.f32 %v2136, %v1166
        %v2262 = vmul.f32 %v2141, %v1166
        %v2263 = vmul.f32 %v2146, %v1170
        %v2264 = vmul.f32 %v2151, %v1170
        %v2265 = vmul.f32 %v2156, %v1174
        %v2266 = vmul.f32 %v2161, %v1174
        %v2267 = vmul.f32 %v2166, %v1178
        %v2268 = vmul.f32 %v2171, %v1178
        %v2269 = vmul.f32 %v2176, %v1182
        %v2270 = vmul.f32 %v2181, %v1182
        %v2271 = vmul.f32 %v2186, %v1186
        %v2272 = vmul.f32 %v2191, %v1186
        %v2273 = vmul.f32 %v2196, %v1190
        %v2274 = vmul.f32 %v2201, %v1190
        %v2275 = vmul.f32 %v2206, %v1194
        %v2276 = vmul.f32 %v2211, %v1194
        %v2277 = vmul.f32 %v2216, %v1198
        %v2278 = vmul.f32 %v2221, %v1198
        %v2279 = vmul.f32 %v2226, %v1202
        %v2280 = vmul.f32 %v2231, %v1202
        %v2281 = vmul.f32 %v2236, %v1206
        %v2282 = vmul.f32 %v2241, %v1206
        %v2283 = vmul.f32 %v2246, %v1210
        %v2284 = vmul.f32 %v2251, %v1210
        %v2285 = vadd.f32 %v2028, %v2253
        %v2286 = vadd.f32 %v2029, %v2254
        %v2287 = vadd.f32 %v2030, %v2255
        %v2288 = vadd.f32 %v2031, %v2256
        %v2289 = vadd.f32 %v2032, %v2257
        %v2290 = vadd.f32 %v2033, %v2258
        %v2291 = vadd.f32 %v2034, %v2259
        %v2292 = vadd.f32 %v2035, %v2260
        %v2293 = vadd.f32 %v2036, %v2261
        %v2294 = vadd.f32 %v2037, %v2262
        %v2295 = vadd.f32 %v2038, %v2263
        %v2296 = vadd.f32 %v2039, %v2264
        %v2297 = vadd.f32 %v2040, %v2265
        %v2298 = vadd.f32 %v2041, %v2266
        %v2299 = vadd.f32 %v2042, %v2267
        %v2300 = vadd.f32 %v2043, %v2268
        %v2301 = vadd.f32 %v2044, %v2269
        %v2302 = vadd.f32 %v2045, %v2270
        %v2303 = vadd.f32 %v2046, %v2271
        %v2304 = vadd.f32 %v2047, %v2272
        %v2305 = vadd.f32 %v2048, %v2273
        %v2306 = vadd.f32 %v2049, %v2274
        %v2307 = vadd.f32 %v2050, %v2275
        %v2308 = vadd.f32 %v2051, %v2276
        %v2309 = vadd.f32 %v2052, %v2277
        %v2310 = vadd.f32 %v2053, %v2278
        %v2311 = vadd.f32 %v2054, %v2279
        %v2312 = vadd.f32 %v2055, %v2280
        %v2313 = vadd.f32 %v2056, %v2281
        %v2314 = vadd.f32 %v2057, %v2282
        %v2315 = vadd.f32 %v2058, %v2283
        %v2316 = vadd.f32 %v2059, %v2284
        %v2317 = vmax.f32 %v2285, %v2289
        %v2318 = vmax.f32 %v2287, %v2291
        %v2319 = vmax.f32 %v2317, %v2293
        %v2320 = vmax.f32 %v2318, %v2295
        %v2321 = vmax.f32 %v2319, %v2297
        %v2322 = vmax.f32 %v2320, %v2299
        %v2323 = vmax.f32 %v2321, %v2301
        %v2324 = vmax.f32 %v2322, %v2303
        %v2325 = vmax.f32 %v2323, %v2305
        %v2326 = vmax.f32 %v2324, %v2307
        %v2327 = vmax.f32 %v2325, %v2309
        %v2328 = vmax.f32 %v2326, %v2311
        %v2329 = vmax.f32 %v2327, %v2313
        %v2330 = vmax.f32 %v2328, %v2315
        %v2331 = vmax.f32 %v2329, %v2330
        %v2332 = vmax.f32 %v2286, %v2290
        %v2333 = vmax.f32 %v2288, %v2292
        %v2334 = vmax.f32 %v2332, %v2294
        %v2335 = vmax.f32 %v2333, %v2296
        %v2336 = vmax.f32 %v2334, %v2298
        %v2337 = vmax.f32 %v2335, %v2300
        %v2338 = vmax.f32 %v2336, %v2302
        %v2339 = vmax.f32 %v2337, %v2304
        %v2340 = vmax.f32 %v2338, %v2306
        %v2341 = vmax.f32 %v2339, %v2308
        %v2342 = vmax.f32 %v2340, %v2310
        %v2343 = vmax.f32 %v2341, %v2312
        %v2344 = vmax.f32 %v2342, %v2314
        %v2345 = vmax.f32 %v2343, %v2316
        %v2346 = vmax.f32 %v2344, %v2345
        %v2347 = vsub.f32 %v2285, %v2331
        %v2348 = vsub.f32 %v2286, %v2346
        %v2349 = vsub.f32 %v2287, %v2331
        %v2350 = vsub.f32 %v2288, %v2346
        %v2351 = vsub.f32 %v2289, %v2331
        %v2352 = vsub.f32 %v2290, %v2346
        %v2353 = vsub.f32 %v2291, %v2331
        %v2354 = vsub.f32 %v2292, %v2346
        %v2355 = vsub.f32 %v2293, %v2331
        %v2356 = vsub.f32 %v2294, %v2346
        %v2357 = vsub.f32 %v2295, %v2331
        %v2358 = vsub.f32 %v2296, %v2346
        %v2359 = vsub.f32 %v2297, %v2331
        %v2360 = vsub.f32 %v2298, %v2346
        %v2361 = vsub.f32 %v2299, %v2331
        %v2362 = vsub.f32 %v2300, %v2346
        %v2363 = vsub.f32 %v2301, %v2331
        %v2364 = vsub.f32 %v2302, %v2346
        %v2365 = vsub.f32 %v2303, %v2331
        %v2366 = vsub.f32 %v2304, %v2346
        %v2367 = vsub.f32 %v2305, %v2331
        %v2368 = vsub.f32 %v2306, %v2346
        %v2369 = vsub.f32 %v2307, %v2331
        %v2370 = vsub.f32 %v2308, %v2346
        %v2371 = vsub.f32 %v2309, %v2331
        %v2372 = vsub.f32 %v2310, %v2346
        %v2373 = vsub.f32 %v2311, %v2331
        %v2374 = vsub.f32 %v2312, %v2346
        %v2375 = vsub.f32 %v2313, %v2331
        %v2376 = vsub.f32 %v2314, %v2346
        %v2377 = vsub.f32 %v2315, %v2331
        %v2378 = vsub.f32 %v2316, %v2346
        %v2379 = vmul.f32 %v2347, 1.442695
        %v2380 = vpow.pop %v2379
        %v2381 = vmul.f32 %v2348, 1.442695
        %v2382 = vpow.pop %v2381
        %v2383 = vmul.f32 %v2349, 1.442695
        %v2384 = vpow.pop %v2383
        %v2385 = vmul.f32 %v2350, 1.442695
        %v2386 = vpow.pop %v2385
        %v2387 = vmul.f32 %v2351, 1.442695
        %v2388 = vpow.pop %v2387
        %v2389 = vmul.f32 %v2352, 1.442695
        %v2390 = vpow.pop %v2389
        %v2391 = vmul.f32 %v2353, 1.442695
        %v2392 = vpow.pop %v2391
        %v2393 = vmul.f32 %v2354, 1.442695
        %v2394 = vpow.pop %v2393
        %v2395 = vmul.f32 %v2355, 1.442695
        %v2396 = vpow.pop %v2395
        %v2397 = vmul.f32 %v2356, 1.442695
        %v2398 = vpow.pop %v2397
        %v2399 = vmul.f32 %v2357, 1.442695
        %v2400 = vpow.pop %v2399
        %v2401 = vmul.f32 %v2358, 1.442695
        %v2402 = vpow.pop %v2401
        %v2403 = vmul.f32 %v2359, 1.442695
        %v2404 = vpow.pop %v2403
        %v2405 = vmul.f32 %v2360, 1.442695
        %v2406 = vpow.pop %v2405
        %v2407 = vmul.f32 %v2361, 1.442695
        %v2408 = vpow.pop %v2407
        %v2409 = vmul.f32 %v2362, 1.442695
        %v2410 = vpow.pop %v2409
        %v2411 = vmul.f32 %v2363, 1.442695
        %v2412 = vpow.pop %v2411
        %v2413 = vmul.f32 %v2364, 1.442695
        %v2414 = vpow.pop %v2413
        %v2415 = vmul.f32 %v2365, 1.442695
        %v2416 = vpow.pop %v2415
        %v2417 = vmul.f32 %v2366, 1.442695
        %v2418 = vpow.pop %v2417
        %v2419 = vmul.f32 %v2367, 1.442695
        %v2420 = vpow.pop %v2419
        %v2421 = vmul.f32 %v2368, 1.442695
        %v2422 = vpow.pop %v2421
        %v2423 = vmul.f32 %v2369, 1.442695
        %v2424 = vpow.pop %v2423
        %v2425 = vmul.f32 %v2370, 1.442695
        %v2426 = vpow.pop %v2425
        %v2427 = vmul.f32 %v2371, 1.442695
        %v2428 = vpow.pop %v2427
        %v2429 = vmul.f32 %v2372, 1.442695
        %v2430 = vpow.pop %v2429
        %v2431 = vmul.f32 %v2373, 1.442695
        %v2432 = vpow.pop %v2431
        %v2433 = vmul.f32 %v2374, 1.442695
        %v2434 = vpow.pop %v2433
        %v2435 = vmul.f32 %v2375, 1.442695
        %v2436 = vpow.pop %v2435
        %v2437 = vmul.f32 %v2376, 1.442695
        %v2438 = vpow.pop %v2437
        %v2439 = vmul.f32 %v2377, 1.442695
        %v2440 = vpow.pop %v2439
        %v2441 = vmul.f32 %v2378, 1.442695
        %v2442 = vpow.pop %v2441
        %v2443 = vadd.f32 %v2380, %v2384
        %v2444 = vadd.f32 %v2443, %v2388
        %v2445 = vadd.f32 %v2444, %v2392
        %v2446 = vadd.f32 %v2445, %v2396
        %v2447 = vadd.f32 %v2446, %v2400
        %v2448 = vadd.f32 %v2447, %v2404
        %v2449 = vadd.f32 %v2448, %v2408
        %v2450 = vadd.f32 %v2449, %v2412
        %v2451 = vadd.f32 %v2450, %v2416
        %v2452 = vadd.f32 %v2451, %v2420
        %v2453 = vadd.f32 %v2452, %v2424
        %v2454 = vadd.f32 %v2453, %v2428
        %v2455 = vadd.f32 %v2454, %v2432
        %v2456 = vadd.f32 %v2455, %v2436
        %v2457 = vadd.f32 %v2456, %v2440
        %v2458 = vadd.f32 %v2382, %v2386
        %v2459 = vadd.f32 %v2458, %v2390
        %v2460 = vadd.f32 %v2459, %v2394
        %v2461 = vadd.f32 %v2460, %v2398
        %v2462 = vadd.f32 %v2461, %v2402
        %v2463 = vadd.f32 %v2462, %v2406
        %v2464 = vadd.f32 %v2463, %v2410
        %v2465 = vadd.f32 %v2464, %v2414
        %v2466 = vadd.f32 %v2465, %v2418
        %v2467 = vadd.f32 %v2466, %v2422
        %v2468 = vadd.f32 %v2467, %v2426
        %v2469 = vadd.f32 %v2468, %v2430
        %v2470 = vadd.f32 %v2469, %v2434
        %v2471 = vadd.f32 %v2470, %v2438
        %v2472 = vadd.f32 %v2471, %v2442
        %v2473 = vrcp.pop %v2457
        %v2474 = vmul.f32 1.0, %v2473
        %v2475 = vrcp.pop %v2472
        %v2476 = vmul.f32 1.0, %v2475
        %v2477 = vmul.f32 %v2380, %v2474
        %v2478 = vmul.f32 %v2382, %v2476
        %v2479 = vmul.f32 %v2384, %v2474
        %v2480 = vmul.f32 %v2386, %v2476
        %v2481 = vmul.f32 %v2388, %v2474
        %v2482 = vmul.f32 %v2390, %v2476
        %v2483 = vmul.f32 %v2392, %v2474
        %v2484 = vmul.f32 %v2394, %v2476
        %v2485 = vmul.f32 %v2396, %v2474
        %v2486 = vmul.f32 %v2398, %v2476
        %v2487 = vmul.f32 %v2400, %v2474
        %v2488 = vmul.f32 %v2402, %v2476
        %v2489 = vmul.f32 %v2404, %v2474
        %v2490 = vmul.f32 %v2406, %v2476
        %v2491 = vmul.f32 %v2408, %v2474
        %v2492 = vmul.f32 %v2410, %v2476
        %v2493 = vmul.f32 %v2412, %v2474
        %v2494 = vmul.f32 %v2414, %v2476
        %v2495 = vmul.f32 %v2416, %v2474
        %v2496 = vmul.f32 %v2418, %v2476
        %v2497 = vmul.f32 %v2420, %v2474
        %v2498 = vmul.f32 %v2422, %v2476
        %v2499 = vmul.f32 %v2424, %v2474
        %v2500 = vmul.f32 %v2426, %v2476
        %v2501 = vmul.f32 %v2428, %v2474
        %v2502 = vmul.f32 %v2430, %v2476
        %v2503 = vmul.f32 %v2432, %v2474
        %v2504 = vmul.f32 %v2434, %v2476
        %v2505 = vmul.f32 %v2436, %v2474
        %v2506 = vmul.f32 %v2438, %v2476
        %v2507 = vmul.f32 %v2440, %v2474
        %v2508 = vmul.f32 %v2442, %v2476
        %v2511 = vcombine.high %v683, %v683
        %v2513 = vunpack.c.l.s4 1966171168
        %v2514 = vunpack.c.0.s8 %v2513
        %v2515 = vlaneseq
        %v2516 = vshrl.u32 %v2515, 7
        %v2517 = vsub.s32 %v2514, %v2516
        %v2518 = vrot.slane %v683, %v2517
        %v2520 = vunpack.c.l.s4 1966171168
        %v2521 = vunpack.c.0.s8 %v2520
        %v2522 = vlaneseq
        %v2523 = vshrl.u32 %v2522, 7
        %v2524 = vsub.s32 %v2521, %v2523
        %v2525 = vrot.slane %v2511, %v2524
        %v2526 = vcombine.high %v2518, %v2518
        %v2527 = vcombine.high %v2525, %v2525
        %v2529 = vunpack.c.l.s4 1966171168
        %v2530 = vunpack.c.0.s8 %v2529
        %v2531 = vlaneseq
        %v2532 = vshrl.u32 %v2531, 7
        %v2533 = vsub.s32 %v2530, %v2532
        %v2534 = vrot.slane %v2518, %v2533
        %v2536 = vunpack.c.l.s4 1966171168
        %v2537 = vunpack.c.0.s8 %v2536
        %v2538 = vlaneseq
        %v2539 = vshrl.u32 %v2538, 7
        %v2540 = vsub.s32 %v2537, %v2539
        %v2541 = vrot.slane %v2525, %v2540
        %v2543 = vunpack.c.l.s4 1966171168
        %v2544 = vunpack.c.0.s8 %v2543
        %v2545 = vlaneseq
        %v2546 = vshrl.u32 %v2545, 7
        %v2547 = vsub.s32 %v2544, %v2546
        %v2548 = vrot.slane %v2526, %v2547
        %v2550 = vunpack.c.l.s4 1966171168
        %v2551 = vunpack.c.0.s8 %v2550
        %v2552 = vlaneseq
        %v2553 = vshrl.u32 %v2552, 7
        %v2554 = vsub.s32 %v2551, %v2553
        %v2555 = vrot.slane %v2527, %v2554
        %v2556 = vcombine.high %v2534, %v2534
        %v2557 = vcombine.high %v2541, %v2541
        %v2558 = vcombine.high %v2548, %v2548
        %v2559 = vcombine.high %v2555, %v2555
        %v2560 = vcombine.high %v684, %v684
        %v2562 = vunpack.c.l.s4 1966171168
        %v2563 = vunpack.c.0.s8 %v2562
        %v2564 = vlaneseq
        %v2565 = vshrl.u32 %v2564, 7
        %v2566 = vsub.s32 %v2563, %v2565
        %v2567 = vrot.slane %v684, %v2566
        %v2569 = vunpack.c.l.s4 1966171168
        %v2570 = vunpack.c.0.s8 %v2569
        %v2571 = vlaneseq
        %v2572 = vshrl.u32 %v2571, 7
        %v2573 = vsub.s32 %v2570, %v2572
        %v2574 = vrot.slane %v2560, %v2573
        %v2575 = vcombine.high %v2567, %v2567
        %v2576 = vcombine.high %v2574, %v2574
        %v2578 = vunpack.c.l.s4 1966171168
        %v2579 = vunpack.c.0.s8 %v2578
        %v2580 = vlaneseq
        %v2581 = vshrl.u32 %v2580, 7
        %v2582 = vsub.s32 %v2579, %v2581
        %v2583 = vrot.slane %v2567, %v2582
        %v2585 = vunpack.c.l.s4 1966171168
        %v2586 = vunpack.c.0.s8 %v2585
        %v2587 = vlaneseq
        %v2588 = vshrl.u32 %v2587, 7
        %v2589 = vsub.s32 %v2586, %v2588
        %v2590 = vrot.slane %v2574, %v2589
        %v2592 = vunpack.c.l.s4 1966171168
        %v2593 = vunpack.c.0.s8 %v2592
        %v2594 = vlaneseq
        %v2595 = vshrl.u32 %v2594, 7
        %v2596 = vsub.s32 %v2593, %v2595
        %v2597 = vrot.slane %v2575, %v2596
        %v2599 = vunpack.c.l.s4 1966171168
        %v2600 = vunpack.c.0.s8 %v2599
        %v2601 = vlaneseq
        %v2602 = vshrl.u32 %v2601, 7
        %v2603 = vsub.s32 %v2600, %v2602
        %v2604 = vrot.slane %v2576, %v2603
        %v2605 = vcombine.high %v2583, %v2583
        %v2606 = vcombine.high %v2590, %v2590
        %v2607 = vcombine.high %v2597, %v2597
        %v2608 = vcombine.high %v2604, %v2604
        %v2609 = vlaneseq
        %v2610 = vshrl.u32 %v2609, 7
        %v2611 = vsub.s32 0, %v2610
        %v2612 = vrot.slane %v2534, %v2611
        %v2613 = vlaneseq
        %v2614 = vshrl.u32 %v2613, 7
        %v2615 = vsub.s32 0, %v2614
        %v2616 = vrot.slane %v2548, %v2615
        %v2617 = vlaneseq
        %v2618 = vshrl.u32 %v2617, 7
        %v2619 = vsub.s32 0, %v2618
        %v2620 = vrot.slane %v2556, %v2619
        %v2621 = vlaneseq
        %v2622 = vshrl.u32 %v2621, 7
        %v2623 = vsub.s32 0, %v2622
        %v2624 = vrot.slane %v2558, %v2623
        %v2625 = vlaneseq
        %v2626 = vshrl.u32 %v2625, 7
        %v2627 = vsub.s32 0, %v2626
        %v2628 = vrot.slane %v2541, %v2627
        %v2629 = vlaneseq
        %v2630 = vshrl.u32 %v2629, 7
        %v2631 = vsub.s32 0, %v2630
        %v2632 = vrot.slane %v2555, %v2631
        %v2633 = vlaneseq
        %v2634 = vshrl.u32 %v2633, 7
        %v2635 = vsub.s32 0, %v2634
        %v2636 = vrot.slane %v2557, %v2635
        %v2637 = vlaneseq
        %v2638 = vshrl.u32 %v2637, 7
        %v2639 = vsub.s32 0, %v2638
        %v2640 = vrot.slane %v2559, %v2639
        %v2641 = vlaneseq
        %v2642 = vshrl.u32 %v2641, 7
        %v2643 = vsub.s32 0, %v2642
        %v2644 = vrot.slane %v2583, %v2643
        %v2645 = vlaneseq
        %v2646 = vshrl.u32 %v2645, 7
        %v2647 = vsub.s32 0, %v2646
        %v2648 = vrot.slane %v2597, %v2647
        %v2649 = vlaneseq
        %v2650 = vshrl.u32 %v2649, 7
        %v2651 = vsub.s32 0, %v2650
        %v2652 = vrot.slane %v2605, %v2651
        %v2653 = vlaneseq
        %v2654 = vshrl.u32 %v2653, 7
        %v2655 = vsub.s32 0, %v2654
        %v2656 = vrot.slane %v2607, %v2655
        %v2657 = vlaneseq
        %v2658 = vshrl.u32 %v2657, 7
        %v2659 = vsub.s32 0, %v2658
        %v2660 = vrot.slane %v2590, %v2659
        %v2661 = vlaneseq
        %v2662 = vshrl.u32 %v2661, 7
        %v2663 = vsub.s32 0, %v2662
        %v2664 = vrot.slane %v2604, %v2663
        %v2665 = vlaneseq
        %v2666 = vshrl.u32 %v2665, 7
        %v2667 = vsub.s32 0, %v2666
        %v2668 = vrot.slane %v2606, %v2667
        %v2669 = vlaneseq
        %v2670 = vshrl.u32 %v2669, 7
        %v2671 = vsub.s32 0, %v2670
        %v2672 = vrot.slane %v2608, %v2671
        %v2689 = vmul.f32 %v2477, %v2612
        %v2690 = vmul.f32 %v2478, %v2612
        %v2691 = vmul.f32 %v2479, %v2616
        %v2692 = vmul.f32 %v2480, %v2616
        %v2693 = vmul.f32 %v2481, %v2620
        %v2694 = vmul.f32 %v2482, %v2620
        %v2695 = vmul.f32 %v2483, %v2624
        %v2696 = vmul.f32 %v2484, %v2624
        %v2697 = vmul.f32 %v2485, %v2628
        %v2698 = vmul.f32 %v2486, %v2628
        %v2699 = vmul.f32 %v2487, %v2632
        %v2700 = vmul.f32 %v2488, %v2632
        %v2701 = vmul.f32 %v2489, %v2636
        %v2702 = vmul.f32 %v2490, %v2636
        %v2703 = vmul.f32 %v2491, %v2640
        %v2704 = vmul.f32 %v2492, %v2640
        %v2705 = vmul.f32 %v2493, %v2644
        %v2706 = vmul.f32 %v2494, %v2644
        %v2707 = vmul.f32 %v2495, %v2648
        %v2708 = vmul.f32 %v2496, %v2648
        %v2709 = vmul.f32 %v2497, %v2652
        %v2710 = vmul.f32 %v2498, %v2652
        %v2711 = vmul.f32 %v2499, %v2656
        %v2712 = vmul.f32 %v2500, %v2656
        %v2713 = vmul.f32 %v2501, %v2660
        %v2714 = vmul.f32 %v2502, %v2660
        %v2715 = vmul.f32 %v2503, %v2664
        %v2716 = vmul.f32 %v2504, %v2664
        %v2717 = vmul.f32 %v2505, %v2668
        %v2718 = vmul.f32 %v2506, %v2668
        %v2719 = vmul.f32 %v2507, %v2672
        %v2720 = vmul.f32 %v2508, %v2672
        %v2721 = vadd.f32 %v2689, %v2691
        %v2722 = vadd.f32 %v2721, %v2693
        %v2723 = vadd.f32 %v2722, %v2695
        %v2724 = vadd.f32 %v2723, %v2697
        %v2725 = vadd.f32 %v2724, %v2699
        %v2726 = vadd.f32 %v2725, %v2701
        %v2727 = vadd.f32 %v2726, %v2703
        %v2728 = vadd.f32 %v2727, %v2705
        %v2729 = vadd.f32 %v2728, %v2707
        %v2730 = vadd.f32 %v2729, %v2709
        %v2731 = vadd.f32 %v2730, %v2711
        %v2732 = vadd.f32 %v2731, %v2713
        %v2733 = vadd.f32 %v2732, %v2715
        %v2734 = vadd.f32 %v2733, %v2717
        %v2735 = vadd.f32 %v2734, %v2719
        %v2736 = vadd.f32 %v2690, %v2692
        %v2737 = vadd.f32 %v2736, %v2694
        %v2738 = vadd.f32 %v2737, %v2696
        %v2739 = vadd.f32 %v2738, %v2698
        %v2740 = vadd.f32 %v2739, %v2700
        %v2741 = vadd.f32 %v2740, %v2702
        %v2742 = vadd.f32 %v2741, %v2704
        %v2743 = vadd.f32 %v2742, %v2706
        %v2744 = vadd.f32 %v2743, %v2708
        %v2745 = vadd.f32 %v2744, %v2710
        %v2746 = vadd.f32 %v2745, %v2712
        %v2747 = vadd.f32 %v2746, %v2714
        %v2748 = vadd.f32 %v2747, %v2716
        %v2749 = vadd.f32 %v2748, %v2718
        %v2750 = vadd.f32 %v2749, %v2720
        %v2751 = vld [vmem:[%s6] sm:$0xff]
        %v2752 = vld [vmem:[%s6 + $0x8] sm:$0xff]
        %v2753 = vld [vmem:[%s6 + $0x10] sm:$0xff]
        %v2754 = vld [vmem:[%s6 + $0x18] sm:$0xff]
        %v2755 = vld [vmem:[%s6 + $0x20] sm:$0xff]
        %v2756 = vld [vmem:[%s6 + $0x28] sm:$0xff]
        %v2757 = vld [vmem:[%s6 + $0x30] sm:$0xff]
        %v2758 = vld [vmem:[%s6 + $0x38] sm:$0xff]
        %v2759 = vld [vmem:[%s6 + $0x40] sm:$0xff]
        %v2760 = vld [vmem:[%s6 + $0x48] sm:$0xff]
        %v2761 = vld [vmem:[%s6 + $0x50] sm:$0xff]
        %v2762 = vld [vmem:[%s6 + $0x58] sm:$0xff]
        %v2763 = vld [vmem:[%s6 + $0x60] sm:$0xff]
        %v2764 = vld [vmem:[%s6 + $0x68] sm:$0xff]
        %v2765 = vld [vmem:[%s6 + $0x70] sm:$0xff]
        %v2766 = vld [vmem:[%s6 + $0x78] sm:$0xff]
        %v2767 = vld [vmem:[%s6 + $0x80] sm:$0xff]
        %v2768 = vld [vmem:[%s6 + $0x88] sm:$0xff]
        %v2769 = vld [vmem:[%s6 + $0x90] sm:$0xff]
        %v2770 = vld [vmem:[%s6 + $0x98] sm:$0xff]
        %v2771 = vld [vmem:[%s6 + $0xa0] sm:$0xff]
        %v2772 = vld [vmem:[%s6 + $0xa8] sm:$0xff]
        %v2773 = vld [vmem:[%s6 + $0xb0] sm:$0xff]
        %v2774 = vld [vmem:[%s6 + $0xb8] sm:$0xff]
        %v2775 = vld [vmem:[%s6 + $0xc0] sm:$0xff]
        %v2776 = vld [vmem:[%s6 + $0xc8] sm:$0xff]
        %v2777 = vld [vmem:[%s6 + $0xd0] sm:$0xff]
        %v2778 = vld [vmem:[%s6 + $0xd8] sm:$0xff]
        %v2779 = vld [vmem:[%s6 + $0xe0] sm:$0xff]
        %v2780 = vld [vmem:[%s6 + $0xe8] sm:$0xff]
        %v2781 = vld [vmem:[%s6 + $0xf0] sm:$0xff]
        %v2782 = vld [vmem:[%s6 + $0xf8] sm:$0xff]
        %2784 = vset.pattern.permute.xlu0 0
        %2785 = vperm.xlu0 %2784, %v2751
        %v2786 = vpop.permute.xlu0 %2785
        %2789 = vset.pattern.permute.xlu0 0
        %2790 = vperm.xlu0 %2789, %v2752
        %v2791 = vpop.permute.xlu0 %2790
        %2794 = vset.pattern.permute.xlu0 0
        %2795 = vperm.xlu0 %2794, %v2753
        %v2796 = vpop.permute.xlu0 %2795
        %2799 = vset.pattern.permute.xlu0 0
        %2800 = vperm.xlu0 %2799, %v2754
        %v2801 = vpop.permute.xlu0 %2800
        %2804 = vset.pattern.permute.xlu0 0
        %2805 = vperm.xlu0 %2804, %v2755
        %v2806 = vpop.permute.xlu0 %2805
        %2809 = vset.pattern.permute.xlu0 0
        %2810 = vperm.xlu0 %2809, %v2756
        %v2811 = vpop.permute.xlu0 %2810
        %2814 = vset.pattern.permute.xlu0 0
        %2815 = vperm.xlu0 %2814, %v2757
        %v2816 = vpop.permute.xlu0 %2815
        %2819 = vset.pattern.permute.xlu0 0
        %2820 = vperm.xlu0 %2819, %v2758
        %v2821 = vpop.permute.xlu0 %2820
        %2824 = vset.pattern.permute.xlu0 0
        %2825 = vperm.xlu0 %2824, %v2759
        %v2826 = vpop.permute.xlu0 %2825
        %2829 = vset.pattern.permute.xlu0 0
        %2830 = vperm.xlu0 %2829, %v2760
        %v2831 = vpop.permute.xlu0 %2830
        %2834 = vset.pattern.permute.xlu0 0
        %2835 = vperm.xlu0 %2834, %v2761
        %v2836 = vpop.permute.xlu0 %2835
        %2839 = vset.pattern.permute.xlu0 0
        %2840 = vperm.xlu0 %2839, %v2762
        %v2841 = vpop.permute.xlu0 %2840
        %2844 = vset.pattern.permute.xlu0 0
        %2845 = vperm.xlu0 %2844, %v2763
        %v2846 = vpop.permute.xlu0 %2845
        %2849 = vset.pattern.permute.xlu0 0
        %2850 = vperm.xlu0 %2849, %v2764
        %v2851 = vpop.permute.xlu0 %2850
        %2854 = vset.pattern.permute.xlu0 0
        %2855 = vperm.xlu0 %2854, %v2765
        %v2856 = vpop.permute.xlu0 %2855
        %2859 = vset.pattern.permute.xlu0 0
        %2860 = vperm.xlu0 %2859, %v2766
        %v2861 = vpop.permute.xlu0 %2860
        %2864 = vset.pattern.permute.xlu0 0
        %2865 = vperm.xlu0 %2864, %v2767
        %v2866 = vpop.permute.xlu0 %2865
        %2869 = vset.pattern.permute.xlu0 0
        %2870 = vperm.xlu0 %2869, %v2768
        %v2871 = vpop.permute.xlu0 %2870
        %2874 = vset.pattern.permute.xlu0 0
        %2875 = vperm.xlu0 %2874, %v2769
        %v2876 = vpop.permute.xlu0 %2875
        %2879 = vset.pattern.permute.xlu0 0
        %2880 = vperm.xlu0 %2879, %v2770
        %v2881 = vpop.permute.xlu0 %2880
        %2884 = vset.pattern.permute.xlu0 0
        %2885 = vperm.xlu0 %2884, %v2771
        %v2886 = vpop.permute.xlu0 %2885
        %2889 = vset.pattern.permute.xlu0 0
        %2890 = vperm.xlu0 %2889, %v2772
        %v2891 = vpop.permute.xlu0 %2890
        %2894 = vset.pattern.permute.xlu0 0
        %2895 = vperm.xlu0 %2894, %v2773
        %v2896 = vpop.permute.xlu0 %2895
        %2899 = vset.pattern.permute.xlu0 0
        %2900 = vperm.xlu0 %2899, %v2774
        %v2901 = vpop.permute.xlu0 %2900
        %2904 = vset.pattern.permute.xlu0 0
        %2905 = vperm.xlu0 %2904, %v2775
        %v2906 = vpop.permute.xlu0 %2905
        %2909 = vset.pattern.permute.xlu0 0
        %2910 = vperm.xlu0 %2909, %v2776
        %v2911 = vpop.permute.xlu0 %2910
        %2914 = vset.pattern.permute.xlu0 0
        %2915 = vperm.xlu0 %2914, %v2777
        %v2916 = vpop.permute.xlu0 %2915
        %2919 = vset.pattern.permute.xlu0 0
        %2920 = vperm.xlu0 %2919, %v2778
        %v2921 = vpop.permute.xlu0 %2920
        %2924 = vset.pattern.permute.xlu0 0
        %2925 = vperm.xlu0 %2924, %v2779
        %v2926 = vpop.permute.xlu0 %2925
        %2929 = vset.pattern.permute.xlu0 0
        %2930 = vperm.xlu0 %2929, %v2780
        %v2931 = vpop.permute.xlu0 %2930
        %2934 = vset.pattern.permute.xlu0 0
        %2935 = vperm.xlu0 %2934, %v2781
        %v2936 = vpop.permute.xlu0 %2935
        %2939 = vset.pattern.permute.xlu0 0
        %2940 = vperm.xlu0 %2939, %v2782
        %v2941 = vpop.permute.xlu0 %2940
        %v2943 = vmul.f32 %v2477, %v2786
        %v2944 = vmul.f32 %v2478, %v2791
        %v2945 = vmul.f32 %v2479, %v2796
        %v2946 = vmul.f32 %v2480, %v2801
        %v2947 = vmul.f32 %v2481, %v2806
        %v2948 = vmul.f32 %v2482, %v2811
        %v2949 = vmul.f32 %v2483, %v2816
        %v2950 = vmul.f32 %v2484, %v2821
        %v2951 = vmul.f32 %v2485, %v2826
        %v2952 = vmul.f32 %v2486, %v2831
        %v2953 = vmul.f32 %v2487, %v2836
        %v2954 = vmul.f32 %v2488, %v2841
        %v2955 = vmul.f32 %v2489, %v2846
        %v2956 = vmul.f32 %v2490, %v2851
        %v2957 = vmul.f32 %v2491, %v2856
        %v2958 = vmul.f32 %v2492, %v2861
        %v2959 = vmul.f32 %v2493, %v2866
        %v2960 = vmul.f32 %v2494, %v2871
        %v2961 = vmul.f32 %v2495, %v2876
        %v2962 = vmul.f32 %v2496, %v2881
        %v2963 = vmul.f32 %v2497, %v2886
        %v2964 = vmul.f32 %v2498, %v2891
        %v2965 = vmul.f32 %v2499, %v2896
        %v2966 = vmul.f32 %v2500, %v2901
        %v2967 = vmul.f32 %v2501, %v2906
        %v2968 = vmul.f32 %v2502, %v2911
        %v2969 = vmul.f32 %v2503, %v2916
        %v2970 = vmul.f32 %v2504, %v2921
        %v2971 = vmul.f32 %v2505, %v2926
        %v2972 = vmul.f32 %v2506, %v2931
        %v2973 = vmul.f32 %v2507, %v2936
        %v2974 = vmul.f32 %v2508, %v2941
        %v2975 = vadd.f32 %v2943, %v2945
        %v2976 = vadd.f32 %v2975, %v2947
        %v2977 = vadd.f32 %v2976, %v2949
        %v2978 = vadd.f32 %v2977, %v2951
        %v2979 = vadd.f32 %v2978, %v2953
        %v2980 = vadd.f32 %v2979, %v2955
        %v2981 = vadd.f32 %v2980, %v2957
        %v2982 = vadd.f32 %v2981, %v2959
        %v2983 = vadd.f32 %v2982, %v2961
        %v2984 = vadd.f32 %v2983, %v2963
        %v2985 = vadd.f32 %v2984, %v2965
        %v2986 = vadd.f32 %v2985, %v2967
        %v2987 = vadd.f32 %v2986, %v2969
        %v2988 = vadd.f32 %v2987, %v2971
        %v2989 = vadd.f32 %v2988, %v2973
        %v2990 = vadd.f32 %v2944, %v2946
        %v2991 = vadd.f32 %v2990, %v2948
        %v2992 = vadd.f32 %v2991, %v2950
        %v2993 = vadd.f32 %v2992, %v2952
        %v2994 = vadd.f32 %v2993, %v2954
        %v2995 = vadd.f32 %v2994, %v2956
        %v2996 = vadd.f32 %v2995, %v2958
        %v2997 = vadd.f32 %v2996, %v2960
        %v2998 = vadd.f32 %v2997, %v2962
        %v2999 = vadd.f32 %v2998, %v2964
        %v3000 = vadd.f32 %v2999, %v2966
        %v3001 = vadd.f32 %v3000, %v2968
        %v3002 = vadd.f32 %v3001, %v2970
        %v3003 = vadd.f32 %v3002, %v2972
        %v3004 = vadd.f32 %v3003, %v2974
        %v3005 = vadd.f32 %v2735, %v2989
        %v3006 = vadd.f32 %v2750, %v3004
        %s3007 = sld [smem:[#allocation7]]
        %v3008 = vstv %s3007
        %v3009 = vadd.f32 %v3005, %v3008
        %v3010 = vadd.f32 %v3006, %v3008
        %3011 = vst [vmem:[%s411] sm:$0xff] %v3009
        %3012 = vst [vmem:[%s411 + $0x8] sm:$0xff] %v3010
        %v3015 = vcombine.high %v733, %v733
        %v3017 = vunpack.c.l.s4 1966171168
        %v3018 = vunpack.c.0.s8 %v3017
        %v3019 = vlaneseq
        %v3020 = vshrl.u32 %v3019, 7
        %v3021 = vsub.s32 %v3018, %v3020
        %v3022 = vrot.slane %v733, %v3021
        %v3024 = vunpack.c.l.s4 1966171168
        %v3025 = vunpack.c.0.s8 %v3024
        %v3026 = vlaneseq
        %v3027 = vshrl.u32 %v3026, 7
        %v3028 = vsub.s32 %v3025, %v3027
        %v3029 = vrot.slane %v3015, %v3028
        %v3030 = vcombine.high %v3022, %v3022
        %v3031 = vcombine.high %v3029, %v3029
        %v3033 = vunpack.c.l.s4 1966171168
        %v3034 = vunpack.c.0.s8 %v3033
        %v3035 = vlaneseq
        %v3036 = vshrl.u32 %v3035, 7
        %v3037 = vsub.s32 %v3034, %v3036
        %v3038 = vrot.slane %v3022, %v3037
        %v3040 = vunpack.c.l.s4 1966171168
        %v3041 = vunpack.c.0.s8 %v3040
        %v3042 = vlaneseq
        %v3043 = vshrl.u32 %v3042, 7
        %v3044 = vsub.s32 %v3041, %v3043
        %v3045 = vrot.slane %v3029, %v3044
        %v3047 = vunpack.c.l.s4 1966171168
        %v3048 = vunpack.c.0.s8 %v3047
        %v3049 = vlaneseq
        %v3050 = vshrl.u32 %v3049, 7
        %v3051 = vsub.s32 %v3048, %v3050
        %v3052 = vrot.slane %v3030, %v3051
        %v3054 = vunpack.c.l.s4 1966171168
        %v3055 = vunpack.c.0.s8 %v3054
        %v3056 = vlaneseq
        %v3057 = vshrl.u32 %v3056, 7
        %v3058 = vsub.s32 %v3055, %v3057
        %v3059 = vrot.slane %v3031, %v3058
        %v3060 = vcombine.high %v3038, %v3038
        %v3061 = vcombine.high %v3045, %v3045
        %v3062 = vcombine.high %v3052, %v3052
        %v3063 = vcombine.high %v3059, %v3059
        %v3064 = vcombine.high %v734, %v734
        %v3066 = vunpack.c.l.s4 1966171168
        %v3067 = vunpack.c.0.s8 %v3066
        %v3068 = vlaneseq
        %v3069 = vshrl.u32 %v3068, 7
        %v3070 = vsub.s32 %v3067, %v3069
        %v3071 = vrot.slane %v734, %v3070
        %v3073 = vunpack.c.l.s4 1966171168
        %v3074 = vunpack.c.0.s8 %v3073
        %v3075 = vlaneseq
        %v3076 = vshrl.u32 %v3075, 7
        %v3077 = vsub.s32 %v3074, %v3076
        %v3078 = vrot.slane %v3064, %v3077
        %v3079 = vcombine.high %v3071, %v3071
        %v3080 = vcombine.high %v3078, %v3078
        %v3082 = vunpack.c.l.s4 1966171168
        %v3083 = vunpack.c.0.s8 %v3082
        %v3084 = vlaneseq
        %v3085 = vshrl.u32 %v3084, 7
        %v3086 = vsub.s32 %v3083, %v3085
        %v3087 = vrot.slane %v3071, %v3086
        %v3089 = vunpack.c.l.s4 1966171168
        %v3090 = vunpack.c.0.s8 %v3089
        %v3091 = vlaneseq
        %v3092 = vshrl.u32 %v3091, 7
        %v3093 = vsub.s32 %v3090, %v3092
        %v3094 = vrot.slane %v3078, %v3093
        %v3096 = vunpack.c.l.s4 1966171168
        %v3097 = vunpack.c.0.s8 %v3096
        %v3098 = vlaneseq
        %v3099 = vshrl.u32 %v3098, 7
        %v3100 = vsub.s32 %v3097, %v3099
        %v3101 = vrot.slane %v3079, %v3100
        %v3103 = vunpack.c.l.s4 1966171168
        %v3104 = vunpack.c.0.s8 %v3103
        %v3105 = vlaneseq
        %v3106 = vshrl.u32 %v3105, 7
        %v3107 = vsub.s32 %v3104, %v3106
        %v3108 = vrot.slane %v3080, %v3107
        %v3109 = vcombine.high %v3087, %v3087
        %v3110 = vcombine.high %v3094, %v3094
        %v3111 = vcombine.high %v3101, %v3101
        %v3112 = vcombine.high %v3108, %v3108
        %v3113 = vlaneseq
        %v3114 = vshrl.u32 %v3113, 7
        %v3115 = vsub.s32 0, %v3114
        %v3116 = vrot.slane %v3038, %v3115
        %v3117 = vlaneseq
        %v3118 = vshrl.u32 %v3117, 7
        %v3119 = vsub.s32 0, %v3118
        %v3120 = vrot.slane %v3052, %v3119
        %v3121 = vlaneseq
        %v3122 = vshrl.u32 %v3121, 7
        %v3123 = vsub.s32 0, %v3122
        %v3124 = vrot.slane %v3060, %v3123
        %v3125 = vlaneseq
        %v3126 = vshrl.u32 %v3125, 7
        %v3127 = vsub.s32 0, %v3126
        %v3128 = vrot.slane %v3062, %v3127
        %v3129 = vlaneseq
        %v3130 = vshrl.u32 %v3129, 7
        %v3131 = vsub.s32 0, %v3130
        %v3132 = vrot.slane %v3045, %v3131
        %v3133 = vlaneseq
        %v3134 = vshrl.u32 %v3133, 7
        %v3135 = vsub.s32 0, %v3134
        %v3136 = vrot.slane %v3059, %v3135
        %v3137 = vlaneseq
        %v3138 = vshrl.u32 %v3137, 7
        %v3139 = vsub.s32 0, %v3138
        %v3140 = vrot.slane %v3061, %v3139
        %v3141 = vlaneseq
        %v3142 = vshrl.u32 %v3141, 7
        %v3143 = vsub.s32 0, %v3142
        %v3144 = vrot.slane %v3063, %v3143
        %v3145 = vlaneseq
        %v3146 = vshrl.u32 %v3145, 7
        %v3147 = vsub.s32 0, %v3146
        %v3148 = vrot.slane %v3087, %v3147
        %v3149 = vlaneseq
        %v3150 = vshrl.u32 %v3149, 7
        %v3151 = vsub.s32 0, %v3150
        %v3152 = vrot.slane %v3101, %v3151
        %v3153 = vlaneseq
        %v3154 = vshrl.u32 %v3153, 7
        %v3155 = vsub.s32 0, %v3154
        %v3156 = vrot.slane %v3109, %v3155
        %v3157 = vlaneseq
        %v3158 = vshrl.u32 %v3157, 7
        %v3159 = vsub.s32 0, %v3158
        %v3160 = vrot.slane %v3111, %v3159
        %v3161 = vlaneseq
        %v3162 = vshrl.u32 %v3161, 7
        %v3163 = vsub.s32 0, %v3162
        %v3164 = vrot.slane %v3094, %v3163
        %v3165 = vlaneseq
        %v3166 = vshrl.u32 %v3165, 7
        %v3167 = vsub.s32 0, %v3166
        %v3168 = vrot.slane %v3108, %v3167
        %v3169 = vlaneseq
        %v3170 = vshrl.u32 %v3169, 7
        %v3171 = vsub.s32 0, %v3170
        %v3172 = vrot.slane %v3110, %v3171
        %v3173 = vlaneseq
        %v3174 = vshrl.u32 %v3173, 7
        %v3175 = vsub.s32 0, %v3174
        %v3176 = vrot.slane %v3112, %v3175
        %v3193 = vmul.f32 %v2477, %v3116
        %v3194 = vmul.f32 %v2478, %v3116
        %v3195 = vmul.f32 %v2479, %v3120
        %v3196 = vmul.f32 %v2480, %v3120
        %v3197 = vmul.f32 %v2481, %v3124
        %v3198 = vmul.f32 %v2482, %v3124
        %v3199 = vmul.f32 %v2483, %v3128
        %v3200 = vmul.f32 %v2484, %v3128
        %v3201 = vmul.f32 %v2485, %v3132
        %v3202 = vmul.f32 %v2486, %v3132
        %v3203 = vmul.f32 %v2487, %v3136
        %v3204 = vmul.f32 %v2488, %v3136
        %v3205 = vmul.f32 %v2489, %v3140
        %v3206 = vmul.f32 %v2490, %v3140
        %v3207 = vmul.f32 %v2491, %v3144
        %v3208 = vmul.f32 %v2492, %v3144
        %v3209 = vmul.f32 %v2493, %v3148
        %v3210 = vmul.f32 %v2494, %v3148
        %v3211 = vmul.f32 %v2495, %v3152
        %v3212 = vmul.f32 %v2496, %v3152
        %v3213 = vmul.f32 %v2497, %v3156
        %v3214 = vmul.f32 %v2498, %v3156
        %v3215 = vmul.f32 %v2499, %v3160
        %v3216 = vmul.f32 %v2500, %v3160
        %v3217 = vmul.f32 %v2501, %v3164
        %v3218 = vmul.f32 %v2502, %v3164
        %v3219 = vmul.f32 %v2503, %v3168
        %v3220 = vmul.f32 %v2504, %v3168
        %v3221 = vmul.f32 %v2505, %v3172
        %v3222 = vmul.f32 %v2506, %v3172
        %v3223 = vmul.f32 %v2507, %v3176
        %v3224 = vmul.f32 %v2508, %v3176
        %v3225 = vadd.f32 %v3193, %v3195
        %v3226 = vadd.f32 %v3225, %v3197
        %v3227 = vadd.f32 %v3226, %v3199
        %v3228 = vadd.f32 %v3227, %v3201
        %v3229 = vadd.f32 %v3228, %v3203
        %v3230 = vadd.f32 %v3229, %v3205
        %v3231 = vadd.f32 %v3230, %v3207
        %v3232 = vadd.f32 %v3231, %v3209
        %v3233 = vadd.f32 %v3232, %v3211
        %v3234 = vadd.f32 %v3233, %v3213
        %v3235 = vadd.f32 %v3234, %v3215
        %v3236 = vadd.f32 %v3235, %v3217
        %v3237 = vadd.f32 %v3236, %v3219
        %v3238 = vadd.f32 %v3237, %v3221
        %v3239 = vadd.f32 %v3238, %v3223
        %v3240 = vadd.f32 %v3194, %v3196
        %v3241 = vadd.f32 %v3240, %v3198
        %v3242 = vadd.f32 %v3241, %v3200
        %v3243 = vadd.f32 %v3242, %v3202
        %v3244 = vadd.f32 %v3243, %v3204
        %v3245 = vadd.f32 %v3244, %v3206
        %v3246 = vadd.f32 %v3245, %v3208
        %v3247 = vadd.f32 %v3246, %v3210
        %v3248 = vadd.f32 %v3247, %v3212
        %v3249 = vadd.f32 %v3248, %v3214
        %v3250 = vadd.f32 %v3249, %v3216
        %v3251 = vadd.f32 %v3250, %v3218
        %v3252 = vadd.f32 %v3251, %v3220
        %v3253 = vadd.f32 %v3252, %v3222
        %v3254 = vadd.f32 %v3253, %v3224
        %s3255 = scalar_lea.vmem %s6, 256
        %v3256 = vld [vmem:[%s3255] sm:$0xff]
        %v3257 = vld [vmem:[%s3255 + $0x8] sm:$0xff]
        %v3258 = vld [vmem:[%s3255 + $0x10] sm:$0xff]
        %v3259 = vld [vmem:[%s3255 + $0x18] sm:$0xff]
        %v3260 = vld [vmem:[%s3255 + $0x20] sm:$0xff]
        %v3261 = vld [vmem:[%s3255 + $0x28] sm:$0xff]
        %v3262 = vld [vmem:[%s3255 + $0x30] sm:$0xff]
        %v3263 = vld [vmem:[%s3255 + $0x38] sm:$0xff]
        %v3264 = vld [vmem:[%s3255 + $0x40] sm:$0xff]
        %v3265 = vld [vmem:[%s3255 + $0x48] sm:$0xff]
        %v3266 = vld [vmem:[%s3255 + $0x50] sm:$0xff]
        %v3267 = vld [vmem:[%s3255 + $0x58] sm:$0xff]
        %v3268 = vld [vmem:[%s3255 + $0x60] sm:$0xff]
        %v3269 = vld [vmem:[%s3255 + $0x68] sm:$0xff]
        %v3270 = vld [vmem:[%s3255 + $0x70] sm:$0xff]
        %v3271 = vld [vmem:[%s3255 + $0x78] sm:$0xff]
        %v3272 = vld [vmem:[%s3255 + $0x80] sm:$0xff]
        %v3273 = vld [vmem:[%s3255 + $0x88] sm:$0xff]
        %v3274 = vld [vmem:[%s3255 + $0x90] sm:$0xff]
        %v3275 = vld [vmem:[%s3255 + $0x98] sm:$0xff]
        %v3276 = vld [vmem:[%s3255 + $0xa0] sm:$0xff]
        %v3277 = vld [vmem:[%s3255 + $0xa8] sm:$0xff]
        %v3278 = vld [vmem:[%s3255 + $0xb0] sm:$0xff]
        %v3279 = vld [vmem:[%s3255 + $0xb8] sm:$0xff]
        %v3280 = vld [vmem:[%s3255 + $0xc0] sm:$0xff]
        %v3281 = vld [vmem:[%s3255 + $0xc8] sm:$0xff]
        %v3282 = vld [vmem:[%s3255 + $0xd0] sm:$0xff]
        %v3283 = vld [vmem:[%s3255 + $0xd8] sm:$0xff]
        %v3284 = vld [vmem:[%s3255 + $0xe0] sm:$0xff]
        %v3285 = vld [vmem:[%s3255 + $0xe8] sm:$0xff]
        %v3286 = vld [vmem:[%s3255 + $0xf0] sm:$0xff]
        %v3287 = vld [vmem:[%s3255 + $0xf8] sm:$0xff]
        %3289 = vset.pattern.permute.xlu0 0
        %3290 = vperm.xlu0 %3289, %v3256
        %v3291 = vpop.permute.xlu0 %3290
        %3294 = vset.pattern.permute.xlu0 0
        %3295 = vperm.xlu0 %3294, %v3257
        %v3296 = vpop.permute.xlu0 %3295
        %3299 = vset.pattern.permute.xlu0 0
        %3300 = vperm.xlu0 %3299, %v3258
        %v3301 = vpop.permute.xlu0 %3300
        %3304 = vset.pattern.permute.xlu0 0
        %3305 = vperm.xlu0 %3304, %v3259
        %v3306 = vpop.permute.xlu0 %3305
        %3309 = vset.pattern.permute.xlu0 0
        %3310 = vperm.xlu0 %3309, %v3260
        %v3311 = vpop.permute.xlu0 %3310
        %3314 = vset.pattern.permute.xlu0 0
        %3315 = vperm.xlu0 %3314, %v3261
        %v3316 = vpop.permute.xlu0 %3315
        %3319 = vset.pattern.permute.xlu0 0
        %3320 = vperm.xlu0 %3319, %v3262
        %v3321 = vpop.permute.xlu0 %3320
        %3324 = vset.pattern.permute.xlu0 0
        %3325 = vperm.xlu0 %3324, %v3263
        %v3326 = vpop.permute.xlu0 %3325
        %3329 = vset.pattern.permute.xlu0 0
        %3330 = vperm.xlu0 %3329, %v3264
        %v3331 = vpop.permute.xlu0 %3330
        %3334 = vset.pattern.permute.xlu0 0
        %3335 = vperm.xlu0 %3334, %v3265
        %v3336 = vpop.permute.xlu0 %3335
        %3339 = vset.pattern.permute.xlu0 0
        %3340 = vperm.xlu0 %3339, %v3266
        %v3341 = vpop.permute.xlu0 %3340
        %3344 = vset.pattern.permute.xlu0 0
        %3345 = vperm.xlu0 %3344, %v3267
        %v3346 = vpop.permute.xlu0 %3345
        %3349 = vset.pattern.permute.xlu0 0
        %3350 = vperm.xlu0 %3349, %v3268
        %v3351 = vpop.permute.xlu0 %3350
        %3354 = vset.pattern.permute.xlu0 0
        %3355 = vperm.xlu0 %3354, %v3269
        %v3356 = vpop.permute.xlu0 %3355
        %3359 = vset.pattern.permute.xlu0 0
        %3360 = vperm.xlu0 %3359, %v3270
        %v3361 = vpop.permute.xlu0 %3360
        %3364 = vset.pattern.permute.xlu0 0
        %3365 = vperm.xlu0 %3364, %v3271
        %v3366 = vpop.permute.xlu0 %3365
        %3369 = vset.pattern.permute.xlu0 0
        %3370 = vperm.xlu0 %3369, %v3272
        %v3371 = vpop.permute.xlu0 %3370
        %3374 = vset.pattern.permute.xlu0 0
        %3375 = vperm.xlu0 %3374, %v3273
        %v3376 = vpop.permute.xlu0 %3375
        %3379 = vset.pattern.permute.xlu0 0
        %3380 = vperm.xlu0 %3379, %v3274
        %v3381 = vpop.permute.xlu0 %3380
        %3384 = vset.pattern.permute.xlu0 0
        %3385 = vperm.xlu0 %3384, %v3275
        %v3386 = vpop.permute.xlu0 %3385
        %3389 = vset.pattern.permute.xlu0 0
        %3390 = vperm.xlu0 %3389, %v3276
        %v3391 = vpop.permute.xlu0 %3390
        %3394 = vset.pattern.permute.xlu0 0
        %3395 = vperm.xlu0 %3394, %v3277
        %v3396 = vpop.permute.xlu0 %3395
        %3399 = vset.pattern.permute.xlu0 0
        %3400 = vperm.xlu0 %3399, %v3278
        %v3401 = vpop.permute.xlu0 %3400
        %3404 = vset.pattern.permute.xlu0 0
        %3405 = vperm.xlu0 %3404, %v3279
        %v3406 = vpop.permute.xlu0 %3405
        %3409 = vset.pattern.permute.xlu0 0
        %3410 = vperm.xlu0 %3409, %v3280
        %v3411 = vpop.permute.xlu0 %3410
        %3414 = vset.pattern.permute.xlu0 0
        %3415 = vperm.xlu0 %3414, %v3281
        %v3416 = vpop.permute.xlu0 %3415
        %3419 = vset.pattern.permute.xlu0 0
        %3420 = vperm.xlu0 %3419, %v3282
        %v3421 = vpop.permute.xlu0 %3420
        %3424 = vset.pattern.permute.xlu0 0
        %3425 = vperm.xlu0 %3424, %v3283
        %v3426 = vpop.permute.xlu0 %3425
        %3429 = vset.pattern.permute.xlu0 0
        %3430 = vperm.xlu0 %3429, %v3284
        %v3431 = vpop.permute.xlu0 %3430
        %3434 = vset.pattern.permute.xlu0 0
        %3435 = vperm.xlu0 %3434, %v3285
        %v3436 = vpop.permute.xlu0 %3435
        %3439 = vset.pattern.permute.xlu0 0
        %3440 = vperm.xlu0 %3439, %v3286
        %v3441 = vpop.permute.xlu0 %3440
        %3444 = vset.pattern.permute.xlu0 0
        %3445 = vperm.xlu0 %3444, %v3287
        %v3446 = vpop.permute.xlu0 %3445
        %v3448 = vmul.f32 %v2477, %v3291
        %v3449 = vmul.f32 %v2478, %v3296
        %v3450 = vmul.f32 %v2479, %v3301
        %v3451 = vmul.f32 %v2480, %v3306
        %v3452 = vmul.f32 %v2481, %v3311
        %v3453 = vmul.f32 %v2482, %v3316
        %v3454 = vmul.f32 %v2483, %v3321
        %v3455 = vmul.f32 %v2484, %v3326
        %v3456 = vmul.f32 %v2485, %v3331
        %v3457 = vmul.f32 %v2486, %v3336
        %v3458 = vmul.f32 %v2487, %v3341
        %v3459 = vmul.f32 %v2488, %v3346
        %v3460 = vmul.f32 %v2489, %v3351
        %v3461 = vmul.f32 %v2490, %v3356
        %v3462 = vmul.f32 %v2491, %v3361
        %v3463 = vmul.f32 %v2492, %v3366
        %v3464 = vmul.f32 %v2493, %v3371
        %v3465 = vmul.f32 %v2494, %v3376
        %v3466 = vmul.f32 %v2495, %v3381
        %v3467 = vmul.f32 %v2496, %v3386
        %v3468 = vmul.f32 %v2497, %v3391
        %v3469 = vmul.f32 %v2498, %v3396
        %v3470 = vmul.f32 %v2499, %v3401
        %v3471 = vmul.f32 %v2500, %v3406
        %v3472 = vmul.f32 %v2501, %v3411
        %v3473 = vmul.f32 %v2502, %v3416
        %v3474 = vmul.f32 %v2503, %v3421
        %v3475 = vmul.f32 %v2504, %v3426
        %v3476 = vmul.f32 %v2505, %v3431
        %v3477 = vmul.f32 %v2506, %v3436
        %v3478 = vmul.f32 %v2507, %v3441
        %v3479 = vmul.f32 %v2508, %v3446
        %v3480 = vadd.f32 %v3448, %v3450
        %v3481 = vadd.f32 %v3480, %v3452
        %v3482 = vadd.f32 %v3481, %v3454
        %v3483 = vadd.f32 %v3482, %v3456
        %v3484 = vadd.f32 %v3483, %v3458
        %v3485 = vadd.f32 %v3484, %v3460
        %v3486 = vadd.f32 %v3485, %v3462
        %v3487 = vadd.f32 %v3486, %v3464
        %v3488 = vadd.f32 %v3487, %v3466
        %v3489 = vadd.f32 %v3488, %v3468
        %v3490 = vadd.f32 %v3489, %v3470
        %v3491 = vadd.f32 %v3490, %v3472
        %v3492 = vadd.f32 %v3491, %v3474
        %v3493 = vadd.f32 %v3492, %v3476
        %v3494 = vadd.f32 %v3493, %v3478
        %v3495 = vadd.f32 %v3449, %v3451
        %v3496 = vadd.f32 %v3495, %v3453
        %v3497 = vadd.f32 %v3496, %v3455
        %v3498 = vadd.f32 %v3497, %v3457
        %v3499 = vadd.f32 %v3498, %v3459
        %v3500 = vadd.f32 %v3499, %v3461
        %v3501 = vadd.f32 %v3500, %v3463
        %v3502 = vadd.f32 %v3501, %v3465
        %v3503 = vadd.f32 %v3502, %v3467
        %v3504 = vadd.f32 %v3503, %v3469
        %v3505 = vadd.f32 %v3504, %v3471
        %v3506 = vadd.f32 %v3505, %v3473
        %v3507 = vadd.f32 %v3506, %v3475
        %v3508 = vadd.f32 %v3507, %v3477
        %v3509 = vadd.f32 %v3508, %v3479
        %v3510 = vadd.f32 %v3239, %v3494
        %v3511 = vadd.f32 %v3254, %v3509
        %s3512 = sld [smem:[#allocation7 + $0x1]]
        %v3513 = vstv %s3512
        %v3514 = vadd.f32 %v3510, %v3513
        %v3515 = vadd.f32 %v3511, %v3513
        %s3516 = scalar_lea.vmem %s411, 16 [#allocation9]
        %3517 = vst [vmem:[%s3516] sm:$0xff] %v3514
        %3518 = vst [vmem:[%s3516 + $0x8] sm:$0xff] %v3515
        %v3521 = vcombine.high %v783, %v783
        %v3523 = vunpack.c.l.s4 1966171168
        %v3524 = vunpack.c.0.s8 %v3523
        %v3525 = vlaneseq
        %v3526 = vshrl.u32 %v3525, 7
        %v3527 = vsub.s32 %v3524, %v3526
        %v3528 = vrot.slane %v783, %v3527
        %v3530 = vunpack.c.l.s4 1966171168
        %v3531 = vunpack.c.0.s8 %v3530
        %v3532 = vlaneseq
        %v3533 = vshrl.u32 %v3532, 7
        %v3534 = vsub.s32 %v3531, %v3533
        %v3535 = vrot.slane %v3521, %v3534
        %v3536 = vcombine.high %v3528, %v3528
        %v3537 = vcombine.high %v3535, %v3535
        %v3539 = vunpack.c.l.s4 1966171168
        %v3540 = vunpack.c.0.s8 %v3539
        %v3541 = vlaneseq
        %v3542 = vshrl.u32 %v3541, 7
        %v3543 = vsub.s32 %v3540, %v3542
        %v3544 = vrot.slane %v3528, %v3543
        %v3546 = vunpack.c.l.s4 1966171168
        %v3547 = vunpack.c.0.s8 %v3546
        %v3548 = vlaneseq
        %v3549 = vshrl.u32 %v3548, 7
        %v3550 = vsub.s32 %v3547, %v3549
        %v3551 = vrot.slane %v3535, %v3550
        %v3553 = vunpack.c.l.s4 1966171168
        %v3554 = vunpack.c.0.s8 %v3553
        %v3555 = vlaneseq
        %v3556 = vshrl.u32 %v3555, 7
        %v3557 = vsub.s32 %v3554, %v3556
        %v3558 = vrot.slane %v3536, %v3557
        %v3560 = vunpack.c.l.s4 1966171168
        %v3561 = vunpack.c.0.s8 %v3560
        %v3562 = vlaneseq
        %v3563 = vshrl.u32 %v3562, 7
        %v3564 = vsub.s32 %v3561, %v3563
        %v3565 = vrot.slane %v3537, %v3564
        %v3566 = vcombine.high %v3544, %v3544
        %v3567 = vcombine.high %v3551, %v3551
        %v3568 = vcombine.high %v3558, %v3558
        %v3569 = vcombine.high %v3565, %v3565
        %v3570 = vcombine.high %v784, %v784
        %v3572 = vunpack.c.l.s4 1966171168
        %v3573 = vunpack.c.0.s8 %v3572
        %v3574 = vlaneseq
        %v3575 = vshrl.u32 %v3574, 7
        %v3576 = vsub.s32 %v3573, %v3575
        %v3577 = vrot.slane %v784, %v3576
        %v3579 = vunpack.c.l.s4 1966171168
        %v3580 = vunpack.c.0.s8 %v3579
        %v3581 = vlaneseq
        %v3582 = vshrl.u32 %v3581, 7
        %v3583 = vsub.s32 %v3580, %v3582
        %v3584 = vrot.slane %v3570, %v3583
        %v3585 = vcombine.high %v3577, %v3577
        %v3586 = vcombine.high %v3584, %v3584
        %v3588 = vunpack.c.l.s4 1966171168
        %v3589 = vunpack.c.0.s8 %v3588
        %v3590 = vlaneseq
        %v3591 = vshrl.u32 %v3590, 7
        %v3592 = vsub.s32 %v3589, %v3591
        %v3593 = vrot.slane %v3577, %v3592
        %v3595 = vunpack.c.l.s4 1966171168
        %v3596 = vunpack.c.0.s8 %v3595
        %v3597 = vlaneseq
        %v3598 = vshrl.u32 %v3597, 7
        %v3599 = vsub.s32 %v3596, %v3598
        %v3600 = vrot.slane %v3584, %v3599
        %v3602 = vunpack.c.l.s4 1966171168
        %v3603 = vunpack.c.0.s8 %v3602
        %v3604 = vlaneseq
        %v3605 = vshrl.u32 %v3604, 7
        %v3606 = vsub.s32 %v3603, %v3605
        %v3607 = vrot.slane %v3585, %v3606
        %v3609 = vunpack.c.l.s4 1966171168
        %v3610 = vunpack.c.0.s8 %v3609
        %v3611 = vlaneseq
        %v3612 = vshrl.u32 %v3611, 7
        %v3613 = vsub.s32 %v3610, %v3612
        %v3614 = vrot.slane %v3586, %v3613
        %v3615 = vcombine.high %v3593, %v3593
        %v3616 = vcombine.high %v3600, %v3600
        %v3617 = vcombine.high %v3607, %v3607
        %v3618 = vcombine.high %v3614, %v3614
        %v3619 = vlaneseq
        %v3620 = vshrl.u32 %v3619, 7
        %v3621 = vsub.s32 0, %v3620
        %v3622 = vrot.slane %v3544, %v3621
        %v3623 = vlaneseq
        %v3624 = vshrl.u32 %v3623, 7
        %v3625 = vsub.s32 0, %v3624
        %v3626 = vrot.slane %v3558, %v3625
        %v3627 = vlaneseq
        %v3628 = vshrl.u32 %v3627, 7
        %v3629 = vsub.s32 0, %v3628
        %v3630 = vrot.slane %v3566, %v3629
        %v3631 = vlaneseq
        %v3632 = vshrl.u32 %v3631, 7
        %v3633 = vsub.s32 0, %v3632
        %v3634 = vrot.slane %v3568, %v3633
        %v3635 = vlaneseq
        %v3636 = vshrl.u32 %v3635, 7
        %v3637 = vsub.s32 0, %v3636
        %v3638 = vrot.slane %v3551, %v3637
        %v3639 = vlaneseq
        %v3640 = vshrl.u32 %v3639, 7
        %v3641 = vsub.s32 0, %v3640
        %v3642 = vrot.slane %v3565, %v3641
        %v3643 = vlaneseq
        %v3644 = vshrl.u32 %v3643, 7
        %v3645 = vsub.s32 0, %v3644
        %v3646 = vrot.slane %v3567, %v3645
        %v3647 = vlaneseq
        %v3648 = vshrl.u32 %v3647, 7
        %v3649 = vsub.s32 0, %v3648
        %v3650 = vrot.slane %v3569, %v3649
        %v3651 = vlaneseq
        %v3652 = vshrl.u32 %v3651, 7
        %v3653 = vsub.s32 0, %v3652
        %v3654 = vrot.slane %v3593, %v3653
        %v3655 = vlaneseq
        %v3656 = vshrl.u32 %v3655, 7
        %v3657 = vsub.s32 0, %v3656
        %v3658 = vrot.slane %v3607, %v3657
        %v3659 = vlaneseq
        %v3660 = vshrl.u32 %v3659, 7
        %v3661 = vsub.s32 0, %v3660
        %v3662 = vrot.slane %v3615, %v3661
        %v3663 = vlaneseq
        %v3664 = vshrl.u32 %v3663, 7
        %v3665 = vsub.s32 0, %v3664
        %v3666 = vrot.slane %v3617, %v3665
        %v3667 = vlaneseq
        %v3668 = vshrl.u32 %v3667, 7
        %v3669 = vsub.s32 0, %v3668
        %v3670 = vrot.slane %v3600, %v3669
        %v3671 = vlaneseq
        %v3672 = vshrl.u32 %v3671, 7
        %v3673 = vsub.s32 0, %v3672
        %v3674 = vrot.slane %v3614, %v3673
        %v3675 = vlaneseq
        %v3676 = vshrl.u32 %v3675, 7
        %v3677 = vsub.s32 0, %v3676
        %v3678 = vrot.slane %v3616, %v3677
        %v3679 = vlaneseq
        %v3680 = vshrl.u32 %v3679, 7
        %v3681 = vsub.s32 0, %v3680
        %v3682 = vrot.slane %v3618, %v3681
        %v3699 = vmul.f32 %v2477, %v3622
        %v3700 = vmul.f32 %v2478, %v3622
        %v3701 = vmul.f32 %v2479, %v3626
        %v3702 = vmul.f32 %v2480, %v3626
        %v3703 = vmul.f32 %v2481, %v3630
        %v3704 = vmul.f32 %v2482, %v3630
        %v3705 = vmul.f32 %v2483, %v3634
        %v3706 = vmul.f32 %v2484, %v3634
        %v3707 = vmul.f32 %v2485, %v3638
        %v3708 = vmul.f32 %v2486, %v3638
        %v3709 = vmul.f32 %v2487, %v3642
        %v3710 = vmul.f32 %v2488, %v3642
        %v3711 = vmul.f32 %v2489, %v3646
        %v3712 = vmul.f32 %v2490, %v3646
        %v3713 = vmul.f32 %v2491, %v3650
        %v3714 = vmul.f32 %v2492, %v3650
        %v3715 = vmul.f32 %v2493, %v3654
        %v3716 = vmul.f32 %v2494, %v3654
        %v3717 = vmul.f32 %v2495, %v3658
        %v3718 = vmul.f32 %v2496, %v3658
        %v3719 = vmul.f32 %v2497, %v3662
        %v3720 = vmul.f32 %v2498, %v3662
        %v3721 = vmul.f32 %v2499, %v3666
        %v3722 = vmul.f32 %v2500, %v3666
        %v3723 = vmul.f32 %v2501, %v3670
        %v3724 = vmul.f32 %v2502, %v3670
        %v3725 = vmul.f32 %v2503, %v3674
        %v3726 = vmul.f32 %v2504, %v3674
        %v3727 = vmul.f32 %v2505, %v3678
        %v3728 = vmul.f32 %v2506, %v3678
        %v3729 = vmul.f32 %v2507, %v3682
        %v3730 = vmul.f32 %v2508, %v3682
        %v3731 = vadd.f32 %v3699, %v3701
        %v3732 = vadd.f32 %v3731, %v3703
        %v3733 = vadd.f32 %v3732, %v3705
        %v3734 = vadd.f32 %v3733, %v3707
        %v3735 = vadd.f32 %v3734, %v3709
        %v3736 = vadd.f32 %v3735, %v3711
        %v3737 = vadd.f32 %v3736, %v3713
        %v3738 = vadd.f32 %v3737, %v3715
        %v3739 = vadd.f32 %v3738, %v3717
        %v3740 = vadd.f32 %v3739, %v3719
        %v3741 = vadd.f32 %v3740, %v3721
        %v3742 = vadd.f32 %v3741, %v3723
        %v3743 = vadd.f32 %v3742, %v3725
        %v3744 = vadd.f32 %v3743, %v3727
        %v3745 = vadd.f32 %v3744, %v3729
        %v3746 = vadd.f32 %v3700, %v3702
        %v3747 = vadd.f32 %v3746, %v3704
        %v3748 = vadd.f32 %v3747, %v3706
        %v3749 = vadd.f32 %v3748, %v3708
        %v3750 = vadd.f32 %v3749, %v3710
        %v3751 = vadd.f32 %v3750, %v3712
        %v3752 = vadd.f32 %v3751, %v3714
        %v3753 = vadd.f32 %v3752, %v3716
        %v3754 = vadd.f32 %v3753, %v3718
        %v3755 = vadd.f32 %v3754, %v3720
        %v3756 = vadd.f32 %v3755, %v3722
        %v3757 = vadd.f32 %v3756, %v3724
        %v3758 = vadd.f32 %v3757, %v3726
        %v3759 = vadd.f32 %v3758, %v3728
        %v3760 = vadd.f32 %v3759, %v3730
        %s3761 = scalar_lea.vmem %s6, 512
        %v3762 = vld [vmem:[%s3761] sm:$0xff]
        %v3763 = vld [vmem:[%s3761 + $0x8] sm:$0xff]
        %v3764 = vld [vmem:[%s3761 + $0x10] sm:$0xff]
        %v3765 = vld [vmem:[%s3761 + $0x18] sm:$0xff]
        %v3766 = vld [vmem:[%s3761 + $0x20] sm:$0xff]
        %v3767 = vld [vmem:[%s3761 + $0x28] sm:$0xff]
        %v3768 = vld [vmem:[%s3761 + $0x30] sm:$0xff]
        %v3769 = vld [vmem:[%s3761 + $0x38] sm:$0xff]
        %v3770 = vld [vmem:[%s3761 + $0x40] sm:$0xff]
        %v3771 = vld [vmem:[%s3761 + $0x48] sm:$0xff]
        %v3772 = vld [vmem:[%s3761 + $0x50] sm:$0xff]
        %v3773 = vld [vmem:[%s3761 + $0x58] sm:$0xff]
        %v3774 = vld [vmem:[%s3761 + $0x60] sm:$0xff]
        %v3775 = vld [vmem:[%s3761 + $0x68] sm:$0xff]
        %v3776 = vld [vmem:[%s3761 + $0x70] sm:$0xff]
        %v3777 = vld [vmem:[%s3761 + $0x78] sm:$0xff]
        %v3778 = vld [vmem:[%s3761 + $0x80] sm:$0xff]
        %v3779 = vld [vmem:[%s3761 + $0x88] sm:$0xff]
        %v3780 = vld [vmem:[%s3761 + $0x90] sm:$0xff]
        %v3781 = vld [vmem:[%s3761 + $0x98] sm:$0xff]
        %v3782 = vld [vmem:[%s3761 + $0xa0] sm:$0xff]
        %v3783 = vld [vmem:[%s3761 + $0xa8] sm:$0xff]
        %v3784 = vld [vmem:[%s3761 + $0xb0] sm:$0xff]
        %v3785 = vld [vmem:[%s3761 + $0xb8] sm:$0xff]
        %v3786 = vld [vmem:[%s3761 + $0xc0] sm:$0xff]
        %v3787 = vld [vmem:[%s3761 + $0xc8] sm:$0xff]
        %v3788 = vld [vmem:[%s3761 + $0xd0] sm:$0xff]
        %v3789 = vld [vmem:[%s3761 + $0xd8] sm:$0xff]
        %v3790 = vld [vmem:[%s3761 + $0xe0] sm:$0xff]
        %v3791 = vld [vmem:[%s3761 + $0xe8] sm:$0xff]
        %v3792 = vld [vmem:[%s3761 + $0xf0] sm:$0xff]
        %v3793 = vld [vmem:[%s3761 + $0xf8] sm:$0xff]
        %3795 = vset.pattern.permute.xlu0 0
        %3796 = vperm.xlu0 %3795, %v3762
        %v3797 = vpop.permute.xlu0 %3796
        %3800 = vset.pattern.permute.xlu0 0
        %3801 = vperm.xlu0 %3800, %v3763
        %v3802 = vpop.permute.xlu0 %3801
        %3805 = vset.pattern.permute.xlu0 0
        %3806 = vperm.xlu0 %3805, %v3764
        %v3807 = vpop.permute.xlu0 %3806
        %3810 = vset.pattern.permute.xlu0 0
        %3811 = vperm.xlu0 %3810, %v3765
        %v3812 = vpop.permute.xlu0 %3811
        %3815 = vset.pattern.permute.xlu0 0
        %3816 = vperm.xlu0 %3815, %v3766
        %v3817 = vpop.permute.xlu0 %3816
        %3820 = vset.pattern.permute.xlu0 0
        %3821 = vperm.xlu0 %3820, %v3767
        %v3822 = vpop.permute.xlu0 %3821
        %3825 = vset.pattern.permute.xlu0 0
        %3826 = vperm.xlu0 %3825, %v3768
        %v3827 = vpop.permute.xlu0 %3826
        %3830 = vset.pattern.permute.xlu0 0
        %3831 = vperm.xlu0 %3830, %v3769
        %v3832 = vpop.permute.xlu0 %3831
        %3835 = vset.pattern.permute.xlu0 0
        %3836 = vperm.xlu0 %3835, %v3770
        %v3837 = vpop.permute.xlu0 %3836
        %3840 = vset.pattern.permute.xlu0 0
        %3841 = vperm.xlu0 %3840, %v3771
        %v3842 = vpop.permute.xlu0 %3841
        %3845 = vset.pattern.permute.xlu0 0
        %3846 = vperm.xlu0 %3845, %v3772
        %v3847 = vpop.permute.xlu0 %3846
        %3850 = vset.pattern.permute.xlu0 0
        %3851 = vperm.xlu0 %3850, %v3773
        %v3852 = vpop.permute.xlu0 %3851
        %3855 = vset.pattern.permute.xlu0 0
        %3856 = vperm.xlu0 %3855, %v3774
        %v3857 = vpop.permute.xlu0 %3856
        %3860 = vset.pattern.permute.xlu0 0
        %3861 = vperm.xlu0 %3860, %v3775
        %v3862 = vpop.permute.xlu0 %3861
        %3865 = vset.pattern.permute.xlu0 0
        %3866 = vperm.xlu0 %3865, %v3776
        %v3867 = vpop.permute.xlu0 %3866
        %3870 = vset.pattern.permute.xlu0 0
        %3871 = vperm.xlu0 %3870, %v3777
        %v3872 = vpop.permute.xlu0 %3871
        %3875 = vset.pattern.permute.xlu0 0
        %3876 = vperm.xlu0 %3875, %v3778
        %v3877 = vpop.permute.xlu0 %3876
        %3880 = vset.pattern.permute.xlu0 0
        %3881 = vperm.xlu0 %3880, %v3779
        %v3882 = vpop.permute.xlu0 %3881
        %3885 = vset.pattern.permute.xlu0 0
        %3886 = vperm.xlu0 %3885, %v3780
        %v3887 = vpop.permute.xlu0 %3886
        %3890 = vset.pattern.permute.xlu0 0
        %3891 = vperm.xlu0 %3890, %v3781
        %v3892 = vpop.permute.xlu0 %3891
        %3895 = vset.pattern.permute.xlu0 0
        %3896 = vperm.xlu0 %3895, %v3782
        %v3897 = vpop.permute.xlu0 %3896
        %3900 = vset.pattern.permute.xlu0 0
        %3901 = vperm.xlu0 %3900, %v3783
        %v3902 = vpop.permute.xlu0 %3901
        %3905 = vset.pattern.permute.xlu0 0
        %3906 = vperm.xlu0 %3905, %v3784
        %v3907 = vpop.permute.xlu0 %3906
        %3910 = vset.pattern.permute.xlu0 0
        %3911 = vperm.xlu0 %3910, %v3785
        %v3912 = vpop.permute.xlu0 %3911
        %3915 = vset.pattern.permute.xlu0 0
        %3916 = vperm.xlu0 %3915, %v3786
        %v3917 = vpop.permute.xlu0 %3916
        %3920 = vset.pattern.permute.xlu0 0
        %3921 = vperm.xlu0 %3920, %v3787
        %v3922 = vpop.permute.xlu0 %3921
        %3925 = vset.pattern.permute.xlu0 0
        %3926 = vperm.xlu0 %3925, %v3788
        %v3927 = vpop.permute.xlu0 %3926
        %3930 = vset.pattern.permute.xlu0 0
        %3931 = vperm.xlu0 %3930, %v3789
        %v3932 = vpop.permute.xlu0 %3931
        %3935 = vset.pattern.permute.xlu0 0
        %3936 = vperm.xlu0 %3935, %v3790
        %v3937 = vpop.permute.xlu0 %3936
        %3940 = vset.pattern.permute.xlu0 0
        %3941 = vperm.xlu0 %3940, %v3791
        %v3942 = vpop.permute.xlu0 %3941
        %3945 = vset.pattern.permute.xlu0 0
        %3946 = vperm.xlu0 %3945, %v3792
        %v3947 = vpop.permute.xlu0 %3946
        %3950 = vset.pattern.permute.xlu0 0
        %3951 = vperm.xlu0 %3950, %v3793
        %v3952 = vpop.permute.xlu0 %3951
        %v3954 = vmul.f32 %v2477, %v3797
        %v3955 = vmul.f32 %v2478, %v3802
        %v3956 = vmul.f32 %v2479, %v3807
        %v3957 = vmul.f32 %v2480, %v3812
        %v3958 = vmul.f32 %v2481, %v3817
        %v3959 = vmul.f32 %v2482, %v3822
        %v3960 = vmul.f32 %v2483, %v3827
        %v3961 = vmul.f32 %v2484, %v3832
        %v3962 = vmul.f32 %v2485, %v3837
        %v3963 = vmul.f32 %v2486, %v3842
        %v3964 = vmul.f32 %v2487, %v3847
        %v3965 = vmul.f32 %v2488, %v3852
        %v3966 = vmul.f32 %v2489, %v3857
        %v3967 = vmul.f32 %v2490, %v3862
        %v3968 = vmul.f32 %v2491, %v3867
        %v3969 = vmul.f32 %v2492, %v3872
        %v3970 = vmul.f32 %v2493, %v3877
        %v3971 = vmul.f32 %v2494, %v3882
        %v3972 = vmul.f32 %v2495, %v3887
        %v3973 = vmul.f32 %v2496, %v3892
        %v3974 = vmul.f32 %v2497, %v3897
        %v3975 = vmul.f32 %v2498, %v3902
        %v3976 = vmul.f32 %v2499, %v3907
        %v3977 = vmul.f32 %v2500, %v3912
        %v3978 = vmul.f32 %v2501, %v3917
        %v3979 = vmul.f32 %v2502, %v3922
        %v3980 = vmul.f32 %v2503, %v3927
        %v3981 = vmul.f32 %v2504, %v3932
        %v3982 = vmul.f32 %v2505, %v3937
        %v3983 = vmul.f32 %v2506, %v3942
        %v3984 = vmul.f32 %v2507, %v3947
        %v3985 = vmul.f32 %v2508, %v3952
        %v3986 = vadd.f32 %v3954, %v3956
        %v3987 = vadd.f32 %v3986, %v3958
        %v3988 = vadd.f32 %v3987, %v3960
        %v3989 = vadd.f32 %v3988, %v3962
        %v3990 = vadd.f32 %v3989, %v3964
        %v3991 = vadd.f32 %v3990, %v3966
        %v3992 = vadd.f32 %v3991, %v3968
        %v3993 = vadd.f32 %v3992, %v3970
        %v3994 = vadd.f32 %v3993, %v3972
        %v3995 = vadd.f32 %v3994, %v3974
        %v3996 = vadd.f32 %v3995, %v3976
        %v3997 = vadd.f32 %v3996, %v3978
        %v3998 = vadd.f32 %v3997, %v3980
        %v3999 = vadd.f32 %v3998, %v3982
        %v4000 = vadd.f32 %v3999, %v3984
        %v4001 = vadd.f32 %v3955, %v3957
        %v4002 = vadd.f32 %v4001, %v3959
        %v4003 = vadd.f32 %v4002, %v3961
        %v4004 = vadd.f32 %v4003, %v3963
        %v4005 = vadd.f32 %v4004, %v3965
        %v4006 = vadd.f32 %v4005, %v3967
        %v4007 = vadd.f32 %v4006, %v3969
        %v4008 = vadd.f32 %v4007, %v3971
        %v4009 = vadd.f32 %v4008, %v3973
        %v4010 = vadd.f32 %v4009, %v3975
        %v4011 = vadd.f32 %v4010, %v3977
        %v4012 = vadd.f32 %v4011, %v3979
        %v4013 = vadd.f32 %v4012, %v3981
        %v4014 = vadd.f32 %v4013, %v3983
        %v4015 = vadd.f32 %v4014, %v3985
        %v4016 = vadd.f32 %v3745, %v4000
        %v4017 = vadd.f32 %v3760, %v4015
        %s4018 = sld [smem:[#allocation7 + $0x2]]
        %v4019 = vstv %s4018
        %v4020 = vadd.f32 %v4016, %v4019
        %v4021 = vadd.f32 %v4017, %v4019
        %s4022 = scalar_lea.vmem %s411, 32 [#allocation9]
        %4023 = vst [vmem:[%s4022] sm:$0xff] %v4020
        %4024 = vst [vmem:[%s4022 + $0x8] sm:$0xff] %v4021
        %v4027 = vcombine.high %v833, %v833
        %v4029 = vunpack.c.l.s4 1966171168
        %v4030 = vunpack.c.0.s8 %v4029
        %v4031 = vlaneseq
        %v4032 = vshrl.u32 %v4031, 7
        %v4033 = vsub.s32 %v4030, %v4032
        %v4034 = vrot.slane %v833, %v4033
        %v4036 = vunpack.c.l.s4 1966171168
        %v4037 = vunpack.c.0.s8 %v4036
        %v4038 = vlaneseq
        %v4039 = vshrl.u32 %v4038, 7
        %v4040 = vsub.s32 %v4037, %v4039
        %v4041 = vrot.slane %v4027, %v4040
        %v4042 = vcombine.high %v4034, %v4034
        %v4043 = vcombine.high %v4041, %v4041
        %v4045 = vunpack.c.l.s4 1966171168
        %v4046 = vunpack.c.0.s8 %v4045
        %v4047 = vlaneseq
        %v4048 = vshrl.u32 %v4047, 7
        %v4049 = vsub.s32 %v4046, %v4048
        %v4050 = vrot.slane %v4034, %v4049
        %v4052 = vunpack.c.l.s4 1966171168
        %v4053 = vunpack.c.0.s8 %v4052
        %v4054 = vlaneseq
        %v4055 = vshrl.u32 %v4054, 7
        %v4056 = vsub.s32 %v4053, %v4055
        %v4057 = vrot.slane %v4041, %v4056
        %v4059 = vunpack.c.l.s4 1966171168
        %v4060 = vunpack.c.0.s8 %v4059
        %v4061 = vlaneseq
        %v4062 = vshrl.u32 %v4061, 7
        %v4063 = vsub.s32 %v4060, %v4062
        %v4064 = vrot.slane %v4042, %v4063
        %v4066 = vunpack.c.l.s4 1966171168
        %v4067 = vunpack.c.0.s8 %v4066
        %v4068 = vlaneseq
        %v4069 = vshrl.u32 %v4068, 7
        %v4070 = vsub.s32 %v4067, %v4069
        %v4071 = vrot.slane %v4043, %v4070
        %v4072 = vcombine.high %v4050, %v4050
        %v4073 = vcombine.high %v4057, %v4057
        %v4074 = vcombine.high %v4064, %v4064
        %v4075 = vcombine.high %v4071, %v4071
        %v4076 = vcombine.high %v834, %v834
        %v4078 = vunpack.c.l.s4 1966171168
        %v4079 = vunpack.c.0.s8 %v4078
        %v4080 = vlaneseq
        %v4081 = vshrl.u32 %v4080, 7
        %v4082 = vsub.s32 %v4079, %v4081
        %v4083 = vrot.slane %v834, %v4082
        %v4085 = vunpack.c.l.s4 1966171168
        %v4086 = vunpack.c.0.s8 %v4085
        %v4087 = vlaneseq
        %v4088 = vshrl.u32 %v4087, 7
        %v4089 = vsub.s32 %v4086, %v4088
        %v4090 = vrot.slane %v4076, %v4089
        %v4091 = vcombine.high %v4083, %v4083
        %v4092 = vcombine.high %v4090, %v4090
        %v4094 = vunpack.c.l.s4 1966171168
        %v4095 = vunpack.c.0.s8 %v4094
        %v4096 = vlaneseq
        %v4097 = vshrl.u32 %v4096, 7
        %v4098 = vsub.s32 %v4095, %v4097
        %v4099 = vrot.slane %v4083, %v4098
        %v4101 = vunpack.c.l.s4 1966171168
        %v4102 = vunpack.c.0.s8 %v4101
        %v4103 = vlaneseq
        %v4104 = vshrl.u32 %v4103, 7
        %v4105 = vsub.s32 %v4102, %v4104
        %v4106 = vrot.slane %v4090, %v4105
        %v4108 = vunpack.c.l.s4 1966171168
        %v4109 = vunpack.c.0.s8 %v4108
        %v4110 = vlaneseq
        %v4111 = vshrl.u32 %v4110, 7
        %v4112 = vsub.s32 %v4109, %v4111
        %v4113 = vrot.slane %v4091, %v4112
        %v4115 = vunpack.c.l.s4 1966171168
        %v4116 = vunpack.c.0.s8 %v4115
        %v4117 = vlaneseq
        %v4118 = vshrl.u32 %v4117, 7
        %v4119 = vsub.s32 %v4116, %v4118
        %v4120 = vrot.slane %v4092, %v4119
        %v4121 = vcombine.high %v4099, %v4099
        %v4122 = vcombine.high %v4106, %v4106
        %v4123 = vcombine.high %v4113, %v4113
        %v4124 = vcombine.high %v4120, %v4120
        %v4125 = vlaneseq
        %v4126 = vshrl.u32 %v4125, 7
        %v4127 = vsub.s32 0, %v4126
        %v4128 = vrot.slane %v4050, %v4127
        %v4129 = vlaneseq
        %v4130 = vshrl.u32 %v4129, 7
        %v4131 = vsub.s32 0, %v4130
        %v4132 = vrot.slane %v4064, %v4131
        %v4133 = vlaneseq
        %v4134 = vshrl.u32 %v4133, 7
        %v4135 = vsub.s32 0, %v4134
        %v4136 = vrot.slane %v4072, %v4135
        %v4137 = vlaneseq
        %v4138 = vshrl.u32 %v4137, 7
        %v4139 = vsub.s32 0, %v4138
        %v4140 = vrot.slane %v4074, %v4139
        %v4141 = vlaneseq
        %v4142 = vshrl.u32 %v4141, 7
        %v4143 = vsub.s32 0, %v4142
        %v4144 = vrot.slane %v4057, %v4143
        %v4145 = vlaneseq
        %v4146 = vshrl.u32 %v4145, 7
        %v4147 = vsub.s32 0, %v4146
        %v4148 = vrot.slane %v4071, %v4147
        %v4149 = vlaneseq
        %v4150 = vshrl.u32 %v4149, 7
        %v4151 = vsub.s32 0, %v4150
        %v4152 = vrot.slane %v4073, %v4151
        %v4153 = vlaneseq
        %v4154 = vshrl.u32 %v4153, 7
        %v4155 = vsub.s32 0, %v4154
        %v4156 = vrot.slane %v4075, %v4155
        %v4157 = vlaneseq
        %v4158 = vshrl.u32 %v4157, 7
        %v4159 = vsub.s32 0, %v4158
        %v4160 = vrot.slane %v4099, %v4159
        %v4161 = vlaneseq
        %v4162 = vshrl.u32 %v4161, 7
        %v4163 = vsub.s32 0, %v4162
        %v4164 = vrot.slane %v4113, %v4163
        %v4165 = vlaneseq
        %v4166 = vshrl.u32 %v4165, 7
        %v4167 = vsub.s32 0, %v4166
        %v4168 = vrot.slane %v4121, %v4167
        %v4169 = vlaneseq
        %v4170 = vshrl.u32 %v4169, 7
        %v4171 = vsub.s32 0, %v4170
        %v4172 = vrot.slane %v4123, %v4171
        %v4173 = vlaneseq
        %v4174 = vshrl.u32 %v4173, 7
        %v4175 = vsub.s32 0, %v4174
        %v4176 = vrot.slane %v4106, %v4175
        %v4177 = vlaneseq
        %v4178 = vshrl.u32 %v4177, 7
        %v4179 = vsub.s32 0, %v4178
        %v4180 = vrot.slane %v4120, %v4179
        %v4181 = vlaneseq
        %v4182 = vshrl.u32 %v4181, 7
        %v4183 = vsub.s32 0, %v4182
        %v4184 = vrot.slane %v4122, %v4183
        %v4185 = vlaneseq
        %v4186 = vshrl.u32 %v4185, 7
        %v4187 = vsub.s32 0, %v4186
        %v4188 = vrot.slane %v4124, %v4187
        %v4205 = vmul.f32 %v2477, %v4128
        %v4206 = vmul.f32 %v2478, %v4128
        %v4207 = vmul.f32 %v2479, %v4132
        %v4208 = vmul.f32 %v2480, %v4132
        %v4209 = vmul.f32 %v2481, %v4136
        %v4210 = vmul.f32 %v2482, %v4136
        %v4211 = vmul.f32 %v2483, %v4140
        %v4212 = vmul.f32 %v2484, %v4140
        %v4213 = vmul.f32 %v2485, %v4144
        %v4214 = vmul.f32 %v2486, %v4144
        %v4215 = vmul.f32 %v2487, %v4148
        %v4216 = vmul.f32 %v2488, %v4148
        %v4217 = vmul.f32 %v2489, %v4152
        %v4218 = vmul.f32 %v2490, %v4152
        %v4219 = vmul.f32 %v2491, %v4156
        %v4220 = vmul.f32 %v2492, %v4156
        %v4221 = vmul.f32 %v2493, %v4160
        %v4222 = vmul.f32 %v2494, %v4160
        %v4223 = vmul.f32 %v2495, %v4164
        %v4224 = vmul.f32 %v2496, %v4164
        %v4225 = vmul.f32 %v2497, %v4168
        %v4226 = vmul.f32 %v2498, %v4168
        %v4227 = vmul.f32 %v2499, %v4172
        %v4228 = vmul.f32 %v2500, %v4172
        %v4229 = vmul.f32 %v2501, %v4176
        %v4230 = vmul.f32 %v2502, %v4176
        %v4231 = vmul.f32 %v2503, %v4180
        %v4232 = vmul.f32 %v2504, %v4180
        %v4233 = vmul.f32 %v2505, %v4184
        %v4234 = vmul.f32 %v2506, %v4184
        %v4235 = vmul.f32 %v2507, %v4188
        %v4236 = vmul.f32 %v2508, %v4188
        %v4237 = vadd.f32 %v4205, %v4207
        %v4238 = vadd.f32 %v4237, %v4209
        %v4239 = vadd.f32 %v4238, %v4211
        %v4240 = vadd.f32 %v4239, %v4213
        %v4241 = vadd.f32 %v4240, %v4215
        %v4242 = vadd.f32 %v4241, %v4217
        %v4243 = vadd.f32 %v4242, %v4219
        %v4244 = vadd.f32 %v4243, %v4221
        %v4245 = vadd.f32 %v4244, %v4223
        %v4246 = vadd.f32 %v4245, %v4225
        %v4247 = vadd.f32 %v4246, %v4227
        %v4248 = vadd.f32 %v4247, %v4229
        %v4249 = vadd.f32 %v4248, %v4231
        %v4250 = vadd.f32 %v4249, %v4233
        %v4251 = vadd.f32 %v4250, %v4235
        %v4252 = vadd.f32 %v4206, %v4208
        %v4253 = vadd.f32 %v4252, %v4210
        %v4254 = vadd.f32 %v4253, %v4212
        %v4255 = vadd.f32 %v4254, %v4214
        %v4256 = vadd.f32 %v4255, %v4216
        %v4257 = vadd.f32 %v4256, %v4218
        %v4258 = vadd.f32 %v4257, %v4220
        %v4259 = vadd.f32 %v4258, %v4222
        %v4260 = vadd.f32 %v4259, %v4224
        %v4261 = vadd.f32 %v4260, %v4226
        %v4262 = vadd.f32 %v4261, %v4228
        %v4263 = vadd.f32 %v4262, %v4230
        %v4264 = vadd.f32 %v4263, %v4232
        %v4265 = vadd.f32 %v4264, %v4234
        %v4266 = vadd.f32 %v4265, %v4236
        %s4267 = scalar_lea.vmem %s6, 768
        %v4268 = vld [vmem:[%s4267] sm:$0xff]
        %v4269 = vld [vmem:[%s4267 + $0x8] sm:$0xff]
        %v4270 = vld [vmem:[%s4267 + $0x10] sm:$0xff]
        %v4271 = vld [vmem:[%s4267 + $0x18] sm:$0xff]
        %v4272 = vld [vmem:[%s4267 + $0x20] sm:$0xff]
        %v4273 = vld [vmem:[%s4267 + $0x28] sm:$0xff]
        %v4274 = vld [vmem:[%s4267 + $0x30] sm:$0xff]
        %v4275 = vld [vmem:[%s4267 + $0x38] sm:$0xff]
        %v4276 = vld [vmem:[%s4267 + $0x40] sm:$0xff]
        %v4277 = vld [vmem:[%s4267 + $0x48] sm:$0xff]
        %v4278 = vld [vmem:[%s4267 + $0x50] sm:$0xff]
        %v4279 = vld [vmem:[%s4267 + $0x58] sm:$0xff]
        %v4280 = vld [vmem:[%s4267 + $0x60] sm:$0xff]
        %v4281 = vld [vmem:[%s4267 + $0x68] sm:$0xff]
        %v4282 = vld [vmem:[%s4267 + $0x70] sm:$0xff]
        %v4283 = vld [vmem:[%s4267 + $0x78] sm:$0xff]
        %v4284 = vld [vmem:[%s4267 + $0x80] sm:$0xff]
        %v4285 = vld [vmem:[%s4267 + $0x88] sm:$0xff]
        %v4286 = vld [vmem:[%s4267 + $0x90] sm:$0xff]
        %v4287 = vld [vmem:[%s4267 + $0x98] sm:$0xff]
        %v4288 = vld [vmem:[%s4267 + $0xa0] sm:$0xff]
        %v4289 = vld [vmem:[%s4267 + $0xa8] sm:$0xff]
        %v4290 = vld [vmem:[%s4267 + $0xb0] sm:$0xff]
        %v4291 = vld [vmem:[%s4267 + $0xb8] sm:$0xff]
        %v4292 = vld [vmem:[%s4267 + $0xc0] sm:$0xff]
        %v4293 = vld [vmem:[%s4267 + $0xc8] sm:$0xff]
        %v4294 = vld [vmem:[%s4267 + $0xd0] sm:$0xff]
        %v4295 = vld [vmem:[%s4267 + $0xd8] sm:$0xff]
        %v4296 = vld [vmem:[%s4267 + $0xe0] sm:$0xff]
        %v4297 = vld [vmem:[%s4267 + $0xe8] sm:$0xff]
        %v4298 = vld [vmem:[%s4267 + $0xf0] sm:$0xff]
        %v4299 = vld [vmem:[%s4267 + $0xf8] sm:$0xff]
        %4301 = vset.pattern.permute.xlu0 0
        %4302 = vperm.xlu0 %4301, %v4268
        %v4303 = vpop.permute.xlu0 %4302
        %4306 = vset.pattern.permute.xlu0 0
        %4307 = vperm.xlu0 %4306, %v4269
        %v4308 = vpop.permute.xlu0 %4307
        %4311 = vset.pattern.permute.xlu0 0
        %4312 = vperm.xlu0 %4311, %v4270
        %v4313 = vpop.permute.xlu0 %4312
        %4316 = vset.pattern.permute.xlu0 0
        %4317 = vperm.xlu0 %4316, %v4271
        %v4318 = vpop.permute.xlu0 %4317
        %4321 = vset.pattern.permute.xlu0 0
        %4322 = vperm.xlu0 %4321, %v4272
        %v4323 = vpop.permute.xlu0 %4322
        %4326 = vset.pattern.permute.xlu0 0
        %4327 = vperm.xlu0 %4326, %v4273
        %v4328 = vpop.permute.xlu0 %4327
        %4331 = vset.pattern.permute.xlu0 0
        %4332 = vperm.xlu0 %4331, %v4274
        %v4333 = vpop.permute.xlu0 %4332
        %4336 = vset.pattern.permute.xlu0 0
        %4337 = vperm.xlu0 %4336, %v4275
        %v4338 = vpop.permute.xlu0 %4337
        %4341 = vset.pattern.permute.xlu0 0
        %4342 = vperm.xlu0 %4341, %v4276
        %v4343 = vpop.permute.xlu0 %4342
        %4346 = vset.pattern.permute.xlu0 0
        %4347 = vperm.xlu0 %4346, %v4277
        %v4348 = vpop.permute.xlu0 %4347
        %4351 = vset.pattern.permute.xlu0 0
        %4352 = vperm.xlu0 %4351, %v4278
        %v4353 = vpop.permute.xlu0 %4352
        %4356 = vset.pattern.permute.xlu0 0
        %4357 = vperm.xlu0 %4356, %v4279
        %v4358 = vpop.permute.xlu0 %4357
        %4361 = vset.pattern.permute.xlu0 0
        %4362 = vperm.xlu0 %4361, %v4280
        %v4363 = vpop.permute.xlu0 %4362
        %4366 = vset.pattern.permute.xlu0 0
        %4367 = vperm.xlu0 %4366, %v4281
        %v4368 = vpop.permute.xlu0 %4367
        %4371 = vset.pattern.permute.xlu0 0
        %4372 = vperm.xlu0 %4371, %v4282
        %v4373 = vpop.permute.xlu0 %4372
        %4376 = vset.pattern.permute.xlu0 0
        %4377 = vperm.xlu0 %4376, %v4283
        %v4378 = vpop.permute.xlu0 %4377
        %4381 = vset.pattern.permute.xlu0 0
        %4382 = vperm.xlu0 %4381, %v4284
        %v4383 = vpop.permute.xlu0 %4382
        %4386 = vset.pattern.permute.xlu0 0
        %4387 = vperm.xlu0 %4386, %v4285
        %v4388 = vpop.permute.xlu0 %4387
        %4391 = vset.pattern.permute.xlu0 0
        %4392 = vperm.xlu0 %4391, %v4286
        %v4393 = vpop.permute.xlu0 %4392
        %4396 = vset.pattern.permute.xlu0 0
        %4397 = vperm.xlu0 %4396, %v4287
        %v4398 = vpop.permute.xlu0 %4397
        %4401 = vset.pattern.permute.xlu0 0
        %4402 = vperm.xlu0 %4401, %v4288
        %v4403 = vpop.permute.xlu0 %4402
        %4406 = vset.pattern.permute.xlu0 0
        %4407 = vperm.xlu0 %4406, %v4289
        %v4408 = vpop.permute.xlu0 %4407
        %4411 = vset.pattern.permute.xlu0 0
        %4412 = vperm.xlu0 %4411, %v4290
        %v4413 = vpop.permute.xlu0 %4412
        %4416 = vset.pattern.permute.xlu0 0
        %4417 = vperm.xlu0 %4416, %v4291
        %v4418 = vpop.permute.xlu0 %4417
        %4421 = vset.pattern.permute.xlu0 0
        %4422 = vperm.xlu0 %4421, %v4292
        %v4423 = vpop.permute.xlu0 %4422
        %4426 = vset.pattern.permute.xlu0 0
        %4427 = vperm.xlu0 %4426, %v4293
        %v4428 = vpop.permute.xlu0 %4427
        %4431 = vset.pattern.permute.xlu0 0
        %4432 = vperm.xlu0 %4431, %v4294
        %v4433 = vpop.permute.xlu0 %4432
        %4436 = vset.pattern.permute.xlu0 0
        %4437 = vperm.xlu0 %4436, %v4295
        %v4438 = vpop.permute.xlu0 %4437
        %4441 = vset.pattern.permute.xlu0 0
        %4442 = vperm.xlu0 %4441, %v4296
        %v4443 = vpop.permute.xlu0 %4442
        %4446 = vset.pattern.permute.xlu0 0
        %4447 = vperm.xlu0 %4446, %v4297
        %v4448 = vpop.permute.xlu0 %4447
        %4451 = vset.pattern.permute.xlu0 0
        %4452 = vperm.xlu0 %4451, %v4298
        %v4453 = vpop.permute.xlu0 %4452
        %4456 = vset.pattern.permute.xlu0 0
        %4457 = vperm.xlu0 %4456, %v4299
        %v4458 = vpop.permute.xlu0 %4457
        %v4460 = vmul.f32 %v2477, %v4303
        %v4461 = vmul.f32 %v2478, %v4308
        %v4462 = vmul.f32 %v2479, %v4313
        %v4463 = vmul.f32 %v2480, %v4318
        %v4464 = vmul.f32 %v2481, %v4323
        %v4465 = vmul.f32 %v2482, %v4328
        %v4466 = vmul.f32 %v2483, %v4333
        %v4467 = vmul.f32 %v2484, %v4338
        %v4468 = vmul.f32 %v2485, %v4343
        %v4469 = vmul.f32 %v2486, %v4348
        %v4470 = vmul.f32 %v2487, %v4353
        %v4471 = vmul.f32 %v2488, %v4358
        %v4472 = vmul.f32 %v2489, %v4363
        %v4473 = vmul.f32 %v2490, %v4368
        %v4474 = vmul.f32 %v2491, %v4373
        %v4475 = vmul.f32 %v2492, %v4378
        %v4476 = vmul.f32 %v2493, %v4383
        %v4477 = vmul.f32 %v2494, %v4388
        %v4478 = vmul.f32 %v2495, %v4393
        %v4479 = vmul.f32 %v2496, %v4398
        %v4480 = vmul.f32 %v2497, %v4403
        %v4481 = vmul.f32 %v2498, %v4408
        %v4482 = vmul.f32 %v2499, %v4413
        %v4483 = vmul.f32 %v2500, %v4418
        %v4484 = vmul.f32 %v2501, %v4423
        %v4485 = vmul.f32 %v2502, %v4428
        %v4486 = vmul.f32 %v2503, %v4433
        %v4487 = vmul.f32 %v2504, %v4438
        %v4488 = vmul.f32 %v2505, %v4443
        %v4489 = vmul.f32 %v2506, %v4448
        %v4490 = vmul.f32 %v2507, %v4453
        %v4491 = vmul.f32 %v2508, %v4458
        %v4492 = vadd.f32 %v4460, %v4462
        %v4493 = vadd.f32 %v4492, %v4464
        %v4494 = vadd.f32 %v4493, %v4466
        %v4495 = vadd.f32 %v4494, %v4468
        %v4496 = vadd.f32 %v4495, %v4470
        %v4497 = vadd.f32 %v4496, %v4472
        %v4498 = vadd.f32 %v4497, %v4474
        %v4499 = vadd.f32 %v4498, %v4476
        %v4500 = vadd.f32 %v4499, %v4478
        %v4501 = vadd.f32 %v4500, %v4480
        %v4502 = vadd.f32 %v4501, %v4482
        %v4503 = vadd.f32 %v4502, %v4484
        %v4504 = vadd.f32 %v4503, %v4486
        %v4505 = vadd.f32 %v4504, %v4488
        %v4506 = vadd.f32 %v4505, %v4490
        %v4507 = vadd.f32 %v4461, %v4463
        %v4508 = vadd.f32 %v4507, %v4465
        %v4509 = vadd.f32 %v4508, %v4467
        %v4510 = vadd.f32 %v4509, %v4469
        %v4511 = vadd.f32 %v4510, %v4471
        %v4512 = vadd.f32 %v4511, %v4473
        %v4513 = vadd.f32 %v4512, %v4475
        %v4514 = vadd.f32 %v4513, %v4477
        %v4515 = vadd.f32 %v4514, %v4479
        %v4516 = vadd.f32 %v4515, %v4481
        %v4517 = vadd.f32 %v4516, %v4483
        %v4518 = vadd.f32 %v4517, %v4485
        %v4519 = vadd.f32 %v4518, %v4487
        %v4520 = vadd.f32 %v4519, %v4489
        %v4521 = vadd.f32 %v4520, %v4491
        %v4522 = vadd.f32 %v4251, %v4506
        %v4523 = vadd.f32 %v4266, %v4521
        %s4524 = sld [smem:[#allocation7 + $0x3]]
        %v4525 = vstv %s4524
        %v4526 = vadd.f32 %v4522, %v4525
        %v4527 = vadd.f32 %v4523, %v4525
        %s4528 = scalar_lea.vmem %s411, 48 [#allocation9]
        %4529 = vst [vmem:[%s4528] sm:$0xff] %v4526
        %4530 = vst [vmem:[%s4528 + $0x8] sm:$0xff] %v4527
        %s4531 = sld [smem:[#allocation2 + $0x400]]
        %v4532 = vstv %s4531
        %v4533 = vmul.f32 %v412, %v4532
        %v4534 = vmul.f32 %v413, %v4532
        %s4535 = sld [smem:[#allocation2 + $0x401]]
        %v4536 = vstv %s4535
        %v4537 = vmul.f32 %v415, %v4536
        %v4538 = vmul.f32 %v416, %v4536
        %v4539 = vadd.f32 %v4533, %v4537
        %v4540 = vadd.f32 %v4534, %v4538
        %s4541 = sld [smem:[#allocation2 + $0x402]]
        %v4542 = vstv %s4541
        %v4543 = vmul.f32 %v418, %v4542
        %v4544 = vmul.f32 %v419, %v4542
        %v4545 = vadd.f32 %v4539, %v4543
        %v4546 = vadd.f32 %v4540, %v4544
        %s4547 = sld [smem:[#allocation2 + $0x403]]
        %v4548 = vstv %s4547
        %v4549 = vmul.f32 %v421, %v4548
        %v4550 = vmul.f32 %v422, %v4548
        %v4551 = vadd.f32 %v4545, %v4549
        %v4552 = vadd.f32 %v4546, %v4550
        %s4553 = sld [smem:[#allocation2 + $0x404]]
        %v4554 = vstv %s4553
        %v4555 = vmul.f32 %v424, %v4554
        %v4556 = vmul.f32 %v425, %v4554
        %v4557 = vadd.f32 %v4551, %v4555
        %v4558 = vadd.f32 %v4552, %v4556
        %s4559 = sld [smem:[#allocation2 + $0x405]]
        %v4560 = vstv %s4559
        %v4561 = vmul.f32 %v427, %v4560
        %v4562 = vmul.f32 %v428, %v4560
        %v4563 = vadd.f32 %v4557, %v4561
        %v4564 = vadd.f32 %v4558, %v4562
        %s4565 = sld [smem:[#allocation2 + $0x406]]
        %v4566 = vstv %s4565
        %v4567 = vmul.f32 %v430, %v4566
        %v4568 = vmul.f32 %v431, %v4566
        %v4569 = vadd.f32 %v4563, %v4567
        %v4570 = vadd.f32 %v4564, %v4568
        %s4571 = sld [smem:[#allocation2 + $0x407]]
        %v4572 = vstv %s4571
        %v4573 = vmul.f32 %v433, %v4572
        %v4574 = vmul.f32 %v434, %v4572
        %v4575 = vadd.f32 %v4569, %v4573
        %v4576 = vadd.f32 %v4570, %v4574
        %s4577 = sld [smem:[#allocation5 + $0x8]]
        %v4578 = vstv %s4577
        %v4579 = vadd.f32 %v4575, %v4578
        %v4580 = vadd.f32 %v4576, %v4578
        %s4581 = sld [smem:[#allocation2 + $0x480]]
        %v4582 = vstv %s4581
        %v4583 = vmul.f32 %v412, %v4582
        %v4584 = vmul.f32 %v413, %v4582
        %s4585 = sld [smem:[#allocation2 + $0x481]]
        %v4586 = vstv %s4585
        %v4587 = vmul.f32 %v415, %v4586
        %v4588 = vmul.f32 %v416, %v4586
        %v4589 = vadd.f32 %v4583, %v4587
        %v4590 = vadd.f32 %v4584, %v4588
        %s4591 = sld [smem:[#allocation2 + $0x482]]
        %v4592 = vstv %s4591
        %v4593 = vmul.f32 %v418, %v4592
        %v4594 = vmul.f32 %v419, %v4592
        %v4595 = vadd.f32 %v4589, %v4593
        %v4596 = vadd.f32 %v4590, %v4594
        %s4597 = sld [smem:[#allocation2 + $0x483]]
        %v4598 = vstv %s4597
        %v4599 = vmul.f32 %v421, %v4598
        %v4600 = vmul.f32 %v422, %v4598
        %v4601 = vadd.f32 %v4595, %v4599
        %v4602 = vadd.f32 %v4596, %v4600
        %s4603 = sld [smem:[#allocation2 + $0x484]]
        %v4604 = vstv %s4603
        %v4605 = vmul.f32 %v424, %v4604
        %v4606 = vmul.f32 %v425, %v4604
        %v4607 = vadd.f32 %v4601, %v4605
        %v4608 = vadd.f32 %v4602, %v4606
        %s4609 = sld [smem:[#allocation2 + $0x485]]
        %v4610 = vstv %s4609
        %v4611 = vmul.f32 %v427, %v4610
        %v4612 = vmul.f32 %v428, %v4610
        %v4613 = vadd.f32 %v4607, %v4611
        %v4614 = vadd.f32 %v4608, %v4612
        %s4615 = sld [smem:[#allocation2 + $0x486]]
        %v4616 = vstv %s4615
        %v4617 = vmul.f32 %v430, %v4616
        %v4618 = vmul.f32 %v431, %v4616
        %v4619 = vadd.f32 %v4613, %v4617
        %v4620 = vadd.f32 %v4614, %v4618
        %s4621 = sld [smem:[#allocation2 + $0x487]]
        %v4622 = vstv %s4621
        %v4623 = vmul.f32 %v433, %v4622
        %v4624 = vmul.f32 %v434, %v4622
        %v4625 = vadd.f32 %v4619, %v4623
        %v4626 = vadd.f32 %v4620, %v4624
        %s4627 = sld [smem:[#allocation5 + $0x9]]
        %v4628 = vstv %s4627
        %v4629 = vadd.f32 %v4625, %v4628
        %v4630 = vadd.f32 %v4626, %v4628
        %s4631 = sld [smem:[#allocation2 + $0x500]]
        %v4632 = vstv %s4631
        %v4633 = vmul.f32 %v412, %v4632
        %v4634 = vmul.f32 %v413, %v4632
        %s4635 = sld [smem:[#allocation2 + $0x501]]
        %v4636 = vstv %s4635
        %v4637 = vmul.f32 %v415, %v4636
        %v4638 = vmul.f32 %v416, %v4636
        %v4639 = vadd.f32 %v4633, %v4637
        %v4640 = vadd.f32 %v4634, %v4638
        %s4641 = sld [smem:[#allocation2 + $0x502]]
        %v4642 = vstv %s4641
        %v4643 = vmul.f32 %v418, %v4642
        %v4644 = vmul.f32 %v419, %v4642
        %v4645 = vadd.f32 %v4639, %v4643
        %v4646 = vadd.f32 %v4640, %v4644
        %s4647 = sld [smem:[#allocation2 + $0x503]]
        %v4648 = vstv %s4647
        %v4649 = vmul.f32 %v421, %v4648
        %v4650 = vmul.f32 %v422, %v4648
        %v4651 = vadd.f32 %v4645, %v4649
        %v4652 = vadd.f32 %v4646, %v4650
        %s4653 = sld [smem:[#allocation2 + $0x504]]
        %v4654 = vstv %s4653
        %v4655 = vmul.f32 %v424, %v4654
        %v4656 = vmul.f32 %v425, %v4654
        %v4657 = vadd.f32 %v4651, %v4655
        %v4658 = vadd.f32 %v4652, %v4656
        %s4659 = sld [smem:[#allocation2 + $0x505]]
        %v4660 = vstv %s4659
        %v4661 = vmul.f32 %v427, %v4660
        %v4662 = vmul.f32 %v428, %v4660
        %v4663 = vadd.f32 %v4657, %v4661
        %v4664 = vadd.f32 %v4658, %v4662
        %s4665 = sld [smem:[#allocation2 + $0x506]]
        %v4666 = vstv %s4665
        %v4667 = vmul.f32 %v430, %v4666
        %v4668 = vmul.f32 %v431, %v4666
        %v4669 = vadd.f32 %v4663, %v4667
        %v4670 = vadd.f32 %v4664, %v4668
        %s4671 = sld [smem:[#allocation2 + $0x507]]
        %v4672 = vstv %s4671
        %v4673 = vmul.f32 %v433, %v4672
        %v4674 = vmul.f32 %v434, %v4672
        %v4675 = vadd.f32 %v4669, %v4673
        %v4676 = vadd.f32 %v4670, %v4674
        %s4677 = sld [smem:[#allocation5 + $0xa]]
        %v4678 = vstv %s4677
        %v4679 = vadd.f32 %v4675, %v4678
        %v4680 = vadd.f32 %v4676, %v4678
        %s4681 = sld [smem:[#allocation2 + $0x580]]
        %v4682 = vstv %s4681
        %v4683 = vmul.f32 %v412, %v4682
        %v4684 = vmul.f32 %v413, %v4682
        %s4685 = sld [smem:[#allocation2 + $0x581]]
        %v4686 = vstv %s4685
        %v4687 = vmul.f32 %v415, %v4686
        %v4688 = vmul.f32 %v416, %v4686
        %v4689 = vadd.f32 %v4683, %v4687
        %v4690 = vadd.f32 %v4684, %v4688
        %s4691 = sld [smem:[#allocation2 + $0x582]]
        %v4692 = vstv %s4691
        %v4693 = vmul.f32 %v418, %v4692
        %v4694 = vmul.f32 %v419, %v4692
        %v4695 = vadd.f32 %v4689, %v4693
        %v4696 = vadd.f32 %v4690, %v4694
        %s4697 = sld [smem:[#allocation2 + $0x583]]
        %v4698 = vstv %s4697
        %v4699 = vmul.f32 %v421, %v4698
        %v4700 = vmul.f32 %v422, %v4698
        %v4701 = vadd.f32 %v4695, %v4699
        %v4702 = vadd.f32 %v4696, %v4700
        %s4703 = sld [smem:[#allocation2 + $0x584]]
        %v4704 = vstv %s4703
        %v4705 = vmul.f32 %v424, %v4704
        %v4706 = vmul.f32 %v425, %v4704
        %v4707 = vadd.f32 %v4701, %v4705
        %v4708 = vadd.f32 %v4702, %v4706
        %s4709 = sld [smem:[#allocation2 + $0x585]]
        %v4710 = vstv %s4709
        %v4711 = vmul.f32 %v427, %v4710
        %v4712 = vmul.f32 %v428, %v4710
        %v4713 = vadd.f32 %v4707, %v4711
        %v4714 = vadd.f32 %v4708, %v4712
        %s4715 = sld [smem:[#allocation2 + $0x586]]
        %v4716 = vstv %s4715
        %v4717 = vmul.f32 %v430, %v4716
        %v4718 = vmul.f32 %v431, %v4716
        %v4719 = vadd.f32 %v4713, %v4717
        %v4720 = vadd.f32 %v4714, %v4718
        %s4721 = sld [smem:[#allocation2 + $0x587]]
        %v4722 = vstv %s4721
        %v4723 = vmul.f32 %v433, %v4722
        %v4724 = vmul.f32 %v434, %v4722
        %v4725 = vadd.f32 %v4719, %v4723
        %v4726 = vadd.f32 %v4720, %v4724
        %s4727 = sld [smem:[#allocation5 + $0xb]]
        %v4728 = vstv %s4727
        %v4729 = vadd.f32 %v4725, %v4728
        %v4730 = vadd.f32 %v4726, %v4728
        %s4731 = sld [smem:[#allocation2 + $0x600]]
        %v4732 = vstv %s4731
        %v4733 = vmul.f32 %v412, %v4732
        %v4734 = vmul.f32 %v413, %v4732
        %s4735 = sld [smem:[#allocation2 + $0x601]]
        %v4736 = vstv %s4735
        %v4737 = vmul.f32 %v415, %v4736
        %v4738 = vmul.f32 %v416, %v4736
        %v4739 = vadd.f32 %v4733, %v4737
        %v4740 = vadd.f32 %v4734, %v4738
        %s4741 = sld [smem:[#allocation2 + $0x602]]
        %v4742 = vstv %s4741
        %v4743 = vmul.f32 %v418, %v4742
        %v4744 = vmul.f32 %v419, %v4742
        %v4745 = vadd.f32 %v4739, %v4743
        %v4746 = vadd.f32 %v4740, %v4744
        %s4747 = sld [smem:[#allocation2 + $0x603]]
        %v4748 = vstv %s4747
        %v4749 = vmul.f32 %v421, %v4748
        %v4750 = vmul.f32 %v422, %v4748
        %v4751 = vadd.f32 %v4745, %v4749
        %v4752 = vadd.f32 %v4746, %v4750
        %s4753 = sld [smem:[#allocation2 + $0x604]]
        %v4754 = vstv %s4753
        %v4755 = vmul.f32 %v424, %v4754
        %v4756 = vmul.f32 %v425, %v4754
        %v4757 = vadd.f32 %v4751, %v4755
        %v4758 = vadd.f32 %v4752, %v4756
        %s4759 = sld [smem:[#allocation2 + $0x605]]
        %v4760 = vstv %s4759
        %v4761 = vmul.f32 %v427, %v4760
        %v4762 = vmul.f32 %v428, %v4760
        %v4763 = vadd.f32 %v4757, %v4761
        %v4764 = vadd.f32 %v4758, %v4762
        %s4765 = sld [smem:[#allocation2 + $0x606]]
        %v4766 = vstv %s4765
        %v4767 = vmul.f32 %v430, %v4766
        %v4768 = vmul.f32 %v431, %v4766
        %v4769 = vadd.f32 %v4763, %v4767
        %v4770 = vadd.f32 %v4764, %v4768
        %s4771 = sld [smem:[#allocation2 + $0x607]]
        %v4772 = vstv %s4771
        %v4773 = vmul.f32 %v433, %v4772
        %v4774 = vmul.f32 %v434, %v4772
        %v4775 = vadd.f32 %v4769, %v4773
        %v4776 = vadd.f32 %v4770, %v4774
        %s4777 = sld [smem:[#allocation5 + $0xc]]
        %v4778 = vstv %s4777
        %v4779 = vadd.f32 %v4775, %v4778
        %v4780 = vadd.f32 %v4776, %v4778
        %s4781 = sld [smem:[#allocation2 + $0x680]]
        %v4782 = vstv %s4781
        %v4783 = vmul.f32 %v412, %v4782
        %v4784 = vmul.f32 %v413, %v4782
        %s4785 = sld [smem:[#allocation2 + $0x681]]
        %v4786 = vstv %s4785
        %v4787 = vmul.f32 %v415, %v4786
        %v4788 = vmul.f32 %v416, %v4786
        %v4789 = vadd.f32 %v4783, %v4787
        %v4790 = vadd.f32 %v4784, %v4788
        %s4791 = sld [smem:[#allocation2 + $0x682]]
        %v4792 = vstv %s4791
        %v4793 = vmul.f32 %v418, %v4792
        %v4794 = vmul.f32 %v419, %v4792
        %v4795 = vadd.f32 %v4789, %v4793
        %v4796 = vadd.f32 %v4790, %v4794
        %s4797 = sld [smem:[#allocation2 + $0x683]]
        %v4798 = vstv %s4797
        %v4799 = vmul.f32 %v421, %v4798
        %v4800 = vmul.f32 %v422, %v4798
        %v4801 = vadd.f32 %v4795, %v4799
        %v4802 = vadd.f32 %v4796, %v4800
        %s4803 = sld [smem:[#allocation2 + $0x684]]
        %v4804 = vstv %s4803
        %v4805 = vmul.f32 %v424, %v4804
        %v4806 = vmul.f32 %v425, %v4804
        %v4807 = vadd.f32 %v4801, %v4805
        %v4808 = vadd.f32 %v4802, %v4806
        %s4809 = sld [smem:[#allocation2 + $0x685]]
        %v4810 = vstv %s4809
        %v4811 = vmul.f32 %v427, %v4810
        %v4812 = vmul.f32 %v428, %v4810
        %v4813 = vadd.f32 %v4807, %v4811
        %v4814 = vadd.f32 %v4808, %v4812
        %s4815 = sld [smem:[#allocation2 + $0x686]]
        %v4816 = vstv %s4815
        %v4817 = vmul.f32 %v430, %v4816
        %v4818 = vmul.f32 %v431, %v4816
        %v4819 = vadd.f32 %v4813, %v4817
        %v4820 = vadd.f32 %v4814, %v4818
        %s4821 = sld [smem:[#allocation2 + $0x687]]
        %v4822 = vstv %s4821
        %v4823 = vmul.f32 %v433, %v4822
        %v4824 = vmul.f32 %v434, %v4822
        %v4825 = vadd.f32 %v4819, %v4823
        %v4826 = vadd.f32 %v4820, %v4824
        %s4827 = sld [smem:[#allocation5 + $0xd]]
        %v4828 = vstv %s4827
        %v4829 = vadd.f32 %v4825, %v4828
        %v4830 = vadd.f32 %v4826, %v4828
        %s4831 = sld [smem:[#allocation2 + $0x700]]
        %v4832 = vstv %s4831
        %v4833 = vmul.f32 %v412, %v4832
        %v4834 = vmul.f32 %v413, %v4832
        %s4835 = sld [smem:[#allocation2 + $0x701]]
        %v4836 = vstv %s4835
        %v4837 = vmul.f32 %v415, %v4836
        %v4838 = vmul.f32 %v416, %v4836
        %v4839 = vadd.f32 %v4833, %v4837
        %v4840 = vadd.f32 %v4834, %v4838
        %s4841 = sld [smem:[#allocation2 + $0x702]]
        %v4842 = vstv %s4841
        %v4843 = vmul.f32 %v418, %v4842
        %v4844 = vmul.f32 %v419, %v4842
        %v4845 = vadd.f32 %v4839, %v4843
        %v4846 = vadd.f32 %v4840, %v4844
        %s4847 = sld [smem:[#allocation2 + $0x703]]
        %v4848 = vstv %s4847
        %v4849 = vmul.f32 %v421, %v4848
        %v4850 = vmul.f32 %v422, %v4848
        %v4851 = vadd.f32 %v4845, %v4849
        %v4852 = vadd.f32 %v4846, %v4850
        %s4853 = sld [smem:[#allocation2 + $0x704]]
        %v4854 = vstv %s4853
        %v4855 = vmul.f32 %v424, %v4854
        %v4856 = vmul.f32 %v425, %v4854
        %v4857 = vadd.f32 %v4851, %v4855
        %v4858 = vadd.f32 %v4852, %v4856
        %s4859 = sld [smem:[#allocation2 + $0x705]]
        %v4860 = vstv %s4859
        %v4861 = vmul.f32 %v427, %v4860
        %v4862 = vmul.f32 %v428, %v4860
        %v4863 = vadd.f32 %v4857, %v4861
        %v4864 = vadd.f32 %v4858, %v4862
        %s4865 = sld [smem:[#allocation2 + $0x706]]
        %v4866 = vstv %s4865
        %v4867 = vmul.f32 %v430, %v4866
        %v4868 = vmul.f32 %v431, %v4866
        %v4869 = vadd.f32 %v4863, %v4867
        %v4870 = vadd.f32 %v4864, %v4868
        %s4871 = sld [smem:[#allocation2 + $0x707]]
        %v4872 = vstv %s4871
        %v4873 = vmul.f32 %v433, %v4872
        %v4874 = vmul.f32 %v434, %v4872
        %v4875 = vadd.f32 %v4869, %v4873
        %v4876 = vadd.f32 %v4870, %v4874
        %s4877 = sld [smem:[#allocation5 + $0xe]]
        %v4878 = vstv %s4877
        %v4879 = vadd.f32 %v4875, %v4878
        %v4880 = vadd.f32 %v4876, %v4878
        %s4881 = sld [smem:[#allocation2 + $0x780]]
        %v4882 = vstv %s4881
        %v4883 = vmul.f32 %v412, %v4882
        %v4884 = vmul.f32 %v413, %v4882
        %s4885 = sld [smem:[#allocation2 + $0x781]]
        %v4886 = vstv %s4885
        %v4887 = vmul.f32 %v415, %v4886
        %v4888 = vmul.f32 %v416, %v4886
        %v4889 = vadd.f32 %v4883, %v4887
        %v4890 = vadd.f32 %v4884, %v4888
        %s4891 = sld [smem:[#allocation2 + $0x782]]
        %v4892 = vstv %s4891
        %v4893 = vmul.f32 %v418, %v4892
        %v4894 = vmul.f32 %v419, %v4892
        %v4895 = vadd.f32 %v4889, %v4893
        %v4896 = vadd.f32 %v4890, %v4894
        %s4897 = sld [smem:[#allocation2 + $0x783]]
        %v4898 = vstv %s4897
        %v4899 = vmul.f32 %v421, %v4898
        %v4900 = vmul.f32 %v422, %v4898
        %v4901 = vadd.f32 %v4895, %v4899
        %v4902 = vadd.f32 %v4896, %v4900
        %s4903 = sld [smem:[#allocation2 + $0x784]]
        %v4904 = vstv %s4903
        %v4905 = vmul.f32 %v424, %v4904
        %v4906 = vmul.f32 %v425, %v4904
        %v4907 = vadd.f32 %v4901, %v4905
        %v4908 = vadd.f32 %v4902, %v4906
        %s4909 = sld [smem:[#allocation2 + $0x785]]
        %v4910 = vstv %s4909
        %v4911 = vmul.f32 %v427, %v4910
        %v4912 = vmul.f32 %v428, %v4910
        %v4913 = vadd.f32 %v4907, %v4911
        %v4914 = vadd.f32 %v4908, %v4912
        %s4915 = sld [smem:[#allocation2 + $0x786]]
        %v4916 = vstv %s4915
        %v4917 = vmul.f32 %v430, %v4916
        %v4918 = vmul.f32 %v431, %v4916
        %v4919 = vadd.f32 %v4913, %v4917
        %v4920 = vadd.f32 %v4914, %v4918
        %s4921 = sld [smem:[#allocation2 + $0x787]]
        %v4922 = vstv %s4921
        %v4923 = vmul.f32 %v433, %v4922
        %v4924 = vmul.f32 %v434, %v4922
        %v4925 = vadd.f32 %v4919, %v4923
        %v4926 = vadd.f32 %v4920, %v4924
        %s4927 = sld [smem:[#allocation5 + $0xf]]
        %v4928 = vstv %s4927
        %v4929 = vadd.f32 %v4925, %v4928
        %v4930 = vadd.f32 %v4926, %v4928
        %v4933 = vcombine.high %v4679, %v4679
        %v4935 = vunpack.c.l.s4 1966171168
        %v4936 = vunpack.c.0.s8 %v4935
        %v4937 = vlaneseq
        %v4938 = vshrl.u32 %v4937, 7
        %v4939 = vsub.s32 %v4936, %v4938
        %v4940 = vrot.slane %v4679, %v4939
        %v4942 = vunpack.c.l.s4 1966171168
        %v4943 = vunpack.c.0.s8 %v4942
        %v4944 = vlaneseq
        %v4945 = vshrl.u32 %v4944, 7
        %v4946 = vsub.s32 %v4943, %v4945
        %v4947 = vrot.slane %v4933, %v4946
        %v4948 = vcombine.high %v4940, %v4940
        %v4949 = vcombine.high %v4947, %v4947
        %v4951 = vunpack.c.l.s4 1966171168
        %v4952 = vunpack.c.0.s8 %v4951
        %v4953 = vlaneseq
        %v4954 = vshrl.u32 %v4953, 7
        %v4955 = vsub.s32 %v4952, %v4954
        %v4956 = vrot.slane %v4940, %v4955
        %v4958 = vunpack.c.l.s4 1966171168
        %v4959 = vunpack.c.0.s8 %v4958
        %v4960 = vlaneseq
        %v4961 = vshrl.u32 %v4960, 7
        %v4962 = vsub.s32 %v4959, %v4961
        %v4963 = vrot.slane %v4947, %v4962
        %v4965 = vunpack.c.l.s4 1966171168
        %v4966 = vunpack.c.0.s8 %v4965
        %v4967 = vlaneseq
        %v4968 = vshrl.u32 %v4967, 7
        %v4969 = vsub.s32 %v4966, %v4968
        %v4970 = vrot.slane %v4948, %v4969
        %v4972 = vunpack.c.l.s4 1966171168
        %v4973 = vunpack.c.0.s8 %v4972
        %v4974 = vlaneseq
        %v4975 = vshrl.u32 %v4974, 7
        %v4976 = vsub.s32 %v4973, %v4975
        %v4977 = vrot.slane %v4949, %v4976
        %v4978 = vcombine.high %v4956, %v4956
        %v4979 = vcombine.high %v4963, %v4963
        %v4980 = vcombine.high %v4970, %v4970
        %v4981 = vcombine.high %v4977, %v4977
        %v4982 = vcombine.high %v4680, %v4680
        %v4984 = vunpack.c.l.s4 1966171168
        %v4985 = vunpack.c.0.s8 %v4984
        %v4986 = vlaneseq
        %v4987 = vshrl.u32 %v4986, 7
        %v4988 = vsub.s32 %v4985, %v4987
        %v4989 = vrot.slane %v4680, %v4988
        %v4991 = vunpack.c.l.s4 1966171168
        %v4992 = vunpack.c.0.s8 %v4991
        %v4993 = vlaneseq
        %v4994 = vshrl.u32 %v4993, 7
        %v4995 = vsub.s32 %v4992, %v4994
        %v4996 = vrot.slane %v4982, %v4995
        %v4997 = vcombine.high %v4989, %v4989
        %v4998 = vcombine.high %v4996, %v4996
        %v5000 = vunpack.c.l.s4 1966171168
        %v5001 = vunpack.c.0.s8 %v5000
        %v5002 = vlaneseq
        %v5003 = vshrl.u32 %v5002, 7
        %v5004 = vsub.s32 %v5001, %v5003
        %v5005 = vrot.slane %v4989, %v5004
        %v5007 = vunpack.c.l.s4 1966171168
        %v5008 = vunpack.c.0.s8 %v5007
        %v5009 = vlaneseq
        %v5010 = vshrl.u32 %v5009, 7
        %v5011 = vsub.s32 %v5008, %v5010
        %v5012 = vrot.slane %v4996, %v5011
        %v5014 = vunpack.c.l.s4 1966171168
        %v5015 = vunpack.c.0.s8 %v5014
        %v5016 = vlaneseq
        %v5017 = vshrl.u32 %v5016, 7
        %v5018 = vsub.s32 %v5015, %v5017
        %v5019 = vrot.slane %v4997, %v5018
        %v5021 = vunpack.c.l.s4 1966171168
        %v5022 = vunpack.c.0.s8 %v5021
        %v5023 = vlaneseq
        %v5024 = vshrl.u32 %v5023, 7
        %v5025 = vsub.s32 %v5022, %v5024
        %v5026 = vrot.slane %v4998, %v5025
        %v5027 = vcombine.high %v5005, %v5005
        %v5028 = vcombine.high %v5012, %v5012
        %v5029 = vcombine.high %v5019, %v5019
        %v5030 = vcombine.high %v5026, %v5026
        %v5031 = vlaneseq
        %v5032 = vshrl.u32 %v5031, 7
        %v5033 = vsub.s32 0, %v5032
        %v5034 = vrot.slane %v4956, %v5033
        %v5035 = vlaneseq
        %v5036 = vshrl.u32 %v5035, 7
        %v5037 = vsub.s32 0, %v5036
        %v5038 = vrot.slane %v4970, %v5037
        %v5039 = vlaneseq
        %v5040 = vshrl.u32 %v5039, 7
        %v5041 = vsub.s32 0, %v5040
        %v5042 = vrot.slane %v4978, %v5041
        %v5043 = vlaneseq
        %v5044 = vshrl.u32 %v5043, 7
        %v5045 = vsub.s32 0, %v5044
        %v5046 = vrot.slane %v4980, %v5045
        %v5047 = vlaneseq
        %v5048 = vshrl.u32 %v5047, 7
        %v5049 = vsub.s32 0, %v5048
        %v5050 = vrot.slane %v4963, %v5049
        %v5051 = vlaneseq
        %v5052 = vshrl.u32 %v5051, 7
        %v5053 = vsub.s32 0, %v5052
        %v5054 = vrot.slane %v4977, %v5053
        %v5055 = vlaneseq
        %v5056 = vshrl.u32 %v5055, 7
        %v5057 = vsub.s32 0, %v5056
        %v5058 = vrot.slane %v4979, %v5057
        %v5059 = vlaneseq
        %v5060 = vshrl.u32 %v5059, 7
        %v5061 = vsub.s32 0, %v5060
        %v5062 = vrot.slane %v4981, %v5061
        %v5063 = vlaneseq
        %v5064 = vshrl.u32 %v5063, 7
        %v5065 = vsub.s32 0, %v5064
        %v5066 = vrot.slane %v5005, %v5065
        %v5067 = vlaneseq
        %v5068 = vshrl.u32 %v5067, 7
        %v5069 = vsub.s32 0, %v5068
        %v5070 = vrot.slane %v5019, %v5069
        %v5071 = vlaneseq
        %v5072 = vshrl.u32 %v5071, 7
        %v5073 = vsub.s32 0, %v5072
        %v5074 = vrot.slane %v5027, %v5073
        %v5075 = vlaneseq
        %v5076 = vshrl.u32 %v5075, 7
        %v5077 = vsub.s32 0, %v5076
        %v5078 = vrot.slane %v5029, %v5077
        %v5079 = vlaneseq
        %v5080 = vshrl.u32 %v5079, 7
        %v5081 = vsub.s32 0, %v5080
        %v5082 = vrot.slane %v5012, %v5081
        %v5083 = vlaneseq
        %v5084 = vshrl.u32 %v5083, 7
        %v5085 = vsub.s32 0, %v5084
        %v5086 = vrot.slane %v5026, %v5085
        %v5087 = vlaneseq
        %v5088 = vshrl.u32 %v5087, 7
        %v5089 = vsub.s32 0, %v5088
        %v5090 = vrot.slane %v5028, %v5089
        %v5091 = vlaneseq
        %v5092 = vshrl.u32 %v5091, 7
        %v5093 = vsub.s32 0, %v5092
        %v5094 = vrot.slane %v5030, %v5093
        %v5111 = vmul.f32 %v4579, %v5034
        %v5112 = vmul.f32 %v4580, %v5034
        %v5113 = vmul.f32 %v4579, %v5038
        %v5114 = vmul.f32 %v4580, %v5038
        %v5115 = vmul.f32 %v4579, %v5042
        %v5116 = vmul.f32 %v4580, %v5042
        %v5117 = vmul.f32 %v4579, %v5046
        %v5118 = vmul.f32 %v4580, %v5046
        %v5119 = vmul.f32 %v4579, %v5050
        %v5120 = vmul.f32 %v4580, %v5050
        %v5121 = vmul.f32 %v4579, %v5054
        %v5122 = vmul.f32 %v4580, %v5054
        %v5123 = vmul.f32 %v4579, %v5058
        %v5124 = vmul.f32 %v4580, %v5058
        %v5125 = vmul.f32 %v4579, %v5062
        %v5126 = vmul.f32 %v4580, %v5062
        %v5127 = vmul.f32 %v4579, %v5066
        %v5128 = vmul.f32 %v4580, %v5066
        %v5129 = vmul.f32 %v4579, %v5070
        %v5130 = vmul.f32 %v4580, %v5070
        %v5131 = vmul.f32 %v4579, %v5074
        %v5132 = vmul.f32 %v4580, %v5074
        %v5133 = vmul.f32 %v4579, %v5078
        %v5134 = vmul.f32 %v4580, %v5078
        %v5135 = vmul.f32 %v4579, %v5082
        %v5136 = vmul.f32 %v4580, %v5082
        %v5137 = vmul.f32 %v4579, %v5086
        %v5138 = vmul.f32 %v4580, %v5086
        %v5139 = vmul.f32 %v4579, %v5090
        %v5140 = vmul.f32 %v4580, %v5090
        %v5141 = vmul.f32 %v4579, %v5094
        %v5142 = vmul.f32 %v4580, %v5094
        %v5145 = vcombine.high %v4729, %v4729
        %v5147 = vunpack.c.l.s4 1966171168
        %v5148 = vunpack.c.0.s8 %v5147
        %v5149 = vlaneseq
        %v5150 = vshrl.u32 %v5149, 7
        %v5151 = vsub.s32 %v5148, %v5150
        %v5152 = vrot.slane %v4729, %v5151
        %v5154 = vunpack.c.l.s4 1966171168
        %v5155 = vunpack.c.0.s8 %v5154
        %v5156 = vlaneseq
        %v5157 = vshrl.u32 %v5156, 7
        %v5158 = vsub.s32 %v5155, %v5157
        %v5159 = vrot.slane %v5145, %v5158
        %v5160 = vcombine.high %v5152, %v5152
        %v5161 = vcombine.high %v5159, %v5159
        %v5163 = vunpack.c.l.s4 1966171168
        %v5164 = vunpack.c.0.s8 %v5163
        %v5165 = vlaneseq
        %v5166 = vshrl.u32 %v5165, 7
        %v5167 = vsub.s32 %v5164, %v5166
        %v5168 = vrot.slane %v5152, %v5167
        %v5170 = vunpack.c.l.s4 1966171168
        %v5171 = vunpack.c.0.s8 %v5170
        %v5172 = vlaneseq
        %v5173 = vshrl.u32 %v5172, 7
        %v5174 = vsub.s32 %v5171, %v5173
        %v5175 = vrot.slane %v5159, %v5174
        %v5177 = vunpack.c.l.s4 1966171168
        %v5178 = vunpack.c.0.s8 %v5177
        %v5179 = vlaneseq
        %v5180 = vshrl.u32 %v5179, 7
        %v5181 = vsub.s32 %v5178, %v5180
        %v5182 = vrot.slane %v5160, %v5181
        %v5184 = vunpack.c.l.s4 1966171168
        %v5185 = vunpack.c.0.s8 %v5184
        %v5186 = vlaneseq
        %v5187 = vshrl.u32 %v5186, 7
        %v5188 = vsub.s32 %v5185, %v5187
        %v5189 = vrot.slane %v5161, %v5188
        %v5190 = vcombine.high %v5168, %v5168
        %v5191 = vcombine.high %v5175, %v5175
        %v5192 = vcombine.high %v5182, %v5182
        %v5193 = vcombine.high %v5189, %v5189
        %v5194 = vcombine.high %v4730, %v4730
        %v5196 = vunpack.c.l.s4 1966171168
        %v5197 = vunpack.c.0.s8 %v5196
        %v5198 = vlaneseq
        %v5199 = vshrl.u32 %v5198, 7
        %v5200 = vsub.s32 %v5197, %v5199
        %v5201 = vrot.slane %v4730, %v5200
        %v5203 = vunpack.c.l.s4 1966171168
        %v5204 = vunpack.c.0.s8 %v5203
        %v5205 = vlaneseq
        %v5206 = vshrl.u32 %v5205, 7
        %v5207 = vsub.s32 %v5204, %v5206
        %v5208 = vrot.slane %v5194, %v5207
        %v5209 = vcombine.high %v5201, %v5201
        %v5210 = vcombine.high %v5208, %v5208
        %v5212 = vunpack.c.l.s4 1966171168
        %v5213 = vunpack.c.0.s8 %v5212
        %v5214 = vlaneseq
        %v5215 = vshrl.u32 %v5214, 7
        %v5216 = vsub.s32 %v5213, %v5215
        %v5217 = vrot.slane %v5201, %v5216
        %v5219 = vunpack.c.l.s4 1966171168
        %v5220 = vunpack.c.0.s8 %v5219
        %v5221 = vlaneseq
        %v5222 = vshrl.u32 %v5221, 7
        %v5223 = vsub.s32 %v5220, %v5222
        %v5224 = vrot.slane %v5208, %v5223
        %v5226 = vunpack.c.l.s4 1966171168
        %v5227 = vunpack.c.0.s8 %v5226
        %v5228 = vlaneseq
        %v5229 = vshrl.u32 %v5228, 7
        %v5230 = vsub.s32 %v5227, %v5229
        %v5231 = vrot.slane %v5209, %v5230
        %v5233 = vunpack.c.l.s4 1966171168
        %v5234 = vunpack.c.0.s8 %v5233
        %v5235 = vlaneseq
        %v5236 = vshrl.u32 %v5235, 7
        %v5237 = vsub.s32 %v5234, %v5236
        %v5238 = vrot.slane %v5210, %v5237
        %v5239 = vcombine.high %v5217, %v5217
        %v5240 = vcombine.high %v5224, %v5224
        %v5241 = vcombine.high %v5231, %v5231
        %v5242 = vcombine.high %v5238, %v5238
        %v5243 = vlaneseq
        %v5244 = vshrl.u32 %v5243, 7
        %v5245 = vsub.s32 0, %v5244
        %v5246 = vrot.slane %v5168, %v5245
        %v5247 = vlaneseq
        %v5248 = vshrl.u32 %v5247, 7
        %v5249 = vsub.s32 0, %v5248
        %v5250 = vrot.slane %v5182, %v5249
        %v5251 = vlaneseq
        %v5252 = vshrl.u32 %v5251, 7
        %v5253 = vsub.s32 0, %v5252
        %v5254 = vrot.slane %v5190, %v5253
        %v5255 = vlaneseq
        %v5256 = vshrl.u32 %v5255, 7
        %v5257 = vsub.s32 0, %v5256
        %v5258 = vrot.slane %v5192, %v5257
        %v5259 = vlaneseq
        %v5260 = vshrl.u32 %v5259, 7
        %v5261 = vsub.s32 0, %v5260
        %v5262 = vrot.slane %v5175, %v5261
        %v5263 = vlaneseq
        %v5264 = vshrl.u32 %v5263, 7
        %v5265 = vsub.s32 0, %v5264
        %v5266 = vrot.slane %v5189, %v5265
        %v5267 = vlaneseq
        %v5268 = vshrl.u32 %v5267, 7
        %v5269 = vsub.s32 0, %v5268
        %v5270 = vrot.slane %v5191, %v5269
        %v5271 = vlaneseq
        %v5272 = vshrl.u32 %v5271, 7
        %v5273 = vsub.s32 0, %v5272
        %v5274 = vrot.slane %v5193, %v5273
        %v5275 = vlaneseq
        %v5276 = vshrl.u32 %v5275, 7
        %v5277 = vsub.s32 0, %v5276
        %v5278 = vrot.slane %v5217, %v5277
        %v5279 = vlaneseq
        %v5280 = vshrl.u32 %v5279, 7
        %v5281 = vsub.s32 0, %v5280
        %v5282 = vrot.slane %v5231, %v5281
        %v5283 = vlaneseq
        %v5284 = vshrl.u32 %v5283, 7
        %v5285 = vsub.s32 0, %v5284
        %v5286 = vrot.slane %v5239, %v5285
        %v5287 = vlaneseq
        %v5288 = vshrl.u32 %v5287, 7
        %v5289 = vsub.s32 0, %v5288
        %v5290 = vrot.slane %v5241, %v5289
        %v5291 = vlaneseq
        %v5292 = vshrl.u32 %v5291, 7
        %v5293 = vsub.s32 0, %v5292
        %v5294 = vrot.slane %v5224, %v5293
        %v5295 = vlaneseq
        %v5296 = vshrl.u32 %v5295, 7
        %v5297 = vsub.s32 0, %v5296
        %v5298 = vrot.slane %v5238, %v5297
        %v5299 = vlaneseq
        %v5300 = vshrl.u32 %v5299, 7
        %v5301 = vsub.s32 0, %v5300
        %v5302 = vrot.slane %v5240, %v5301
        %v5303 = vlaneseq
        %v5304 = vshrl.u32 %v5303, 7
        %v5305 = vsub.s32 0, %v5304
        %v5306 = vrot.slane %v5242, %v5305
        %v5323 = vmul.f32 %v4629, %v5246
        %v5324 = vmul.f32 %v4630, %v5246
        %v5325 = vmul.f32 %v4629, %v5250
        %v5326 = vmul.f32 %v4630, %v5250
        %v5327 = vmul.f32 %v4629, %v5254
        %v5328 = vmul.f32 %v4630, %v5254
        %v5329 = vmul.f32 %v4629, %v5258
        %v5330 = vmul.f32 %v4630, %v5258
        %v5331 = vmul.f32 %v4629, %v5262
        %v5332 = vmul.f32 %v4630, %v5262
        %v5333 = vmul.f32 %v4629, %v5266
        %v5334 = vmul.f32 %v4630, %v5266
        %v5335 = vmul.f32 %v4629, %v5270
        %v5336 = vmul.f32 %v4630, %v5270
        %v5337 = vmul.f32 %v4629, %v5274
        %v5338 = vmul.f32 %v4630, %v5274
        %v5339 = vmul.f32 %v4629, %v5278
        %v5340 = vmul.f32 %v4630, %v5278
        %v5341 = vmul.f32 %v4629, %v5282
        %v5342 = vmul.f32 %v4630, %v5282
        %v5343 = vmul.f32 %v4629, %v5286
        %v5344 = vmul.f32 %v4630, %v5286
        %v5345 = vmul.f32 %v4629, %v5290
        %v5346 = vmul.f32 %v4630, %v5290
        %v5347 = vmul.f32 %v4629, %v5294
        %v5348 = vmul.f32 %v4630, %v5294
        %v5349 = vmul.f32 %v4629, %v5298
        %v5350 = vmul.f32 %v4630, %v5298
        %v5351 = vmul.f32 %v4629, %v5302
        %v5352 = vmul.f32 %v4630, %v5302
        %v5353 = vmul.f32 %v4629, %v5306
        %v5354 = vmul.f32 %v4630, %v5306
        %v5355 = vadd.f32 %v5111, %v5323
        %v5356 = vadd.f32 %v5112, %v5324
        %v5357 = vadd.f32 %v5113, %v5325
        %v5358 = vadd.f32 %v5114, %v5326
        %v5359 = vadd.f32 %v5115, %v5327
        %v5360 = vadd.f32 %v5116, %v5328
        %v5361 = vadd.f32 %v5117, %v5329
        %v5362 = vadd.f32 %v5118, %v5330
        %v5363 = vadd.f32 %v5119, %v5331
        %v5364 = vadd.f32 %v5120, %v5332
        %v5365 = vadd.f32 %v5121, %v5333
        %v5366 = vadd.f32 %v5122, %v5334
        %v5367 = vadd.f32 %v5123, %v5335
        %v5368 = vadd.f32 %v5124, %v5336
        %v5369 = vadd.f32 %v5125, %v5337
        %v5370 = vadd.f32 %v5126, %v5338
        %v5371 = vadd.f32 %v5127, %v5339
        %v5372 = vadd.f32 %v5128, %v5340
        %v5373 = vadd.f32 %v5129, %v5341
        %v5374 = vadd.f32 %v5130, %v5342
        %v5375 = vadd.f32 %v5131, %v5343
        %v5376 = vadd.f32 %v5132, %v5344
        %v5377 = vadd.f32 %v5133, %v5345
        %v5378 = vadd.f32 %v5134, %v5346
        %v5379 = vadd.f32 %v5135, %v5347
        %v5380 = vadd.f32 %v5136, %v5348
        %v5381 = vadd.f32 %v5137, %v5349
        %v5382 = vadd.f32 %v5138, %v5350
        %v5383 = vadd.f32 %v5139, %v5351
        %v5384 = vadd.f32 %v5140, %v5352
        %v5385 = vadd.f32 %v5141, %v5353
        %v5386 = vadd.f32 %v5142, %v5354
        %s5387 = scalar_lea.vmem %s4, 512
        %v5388 = vld [vmem:[%s5387] sm:$0xff]
        %v5389 = vld [vmem:[%s5387 + $0x8] sm:$0xff]
        %v5390 = vld [vmem:[%s5387 + $0x10] sm:$0xff]
        %v5391 = vld [vmem:[%s5387 + $0x18] sm:$0xff]
        %v5392 = vld [vmem:[%s5387 + $0x20] sm:$0xff]
        %v5393 = vld [vmem:[%s5387 + $0x28] sm:$0xff]
        %v5394 = vld [vmem:[%s5387 + $0x30] sm:$0xff]
        %v5395 = vld [vmem:[%s5387 + $0x38] sm:$0xff]
        %v5396 = vld [vmem:[%s5387 + $0x40] sm:$0xff]
        %v5397 = vld [vmem:[%s5387 + $0x48] sm:$0xff]
        %v5398 = vld [vmem:[%s5387 + $0x50] sm:$0xff]
        %v5399 = vld [vmem:[%s5387 + $0x58] sm:$0xff]
        %v5400 = vld [vmem:[%s5387 + $0x60] sm:$0xff]
        %v5401 = vld [vmem:[%s5387 + $0x68] sm:$0xff]
        %v5402 = vld [vmem:[%s5387 + $0x70] sm:$0xff]
        %v5403 = vld [vmem:[%s5387 + $0x78] sm:$0xff]
        %v5404 = vld [vmem:[%s5387 + $0x80] sm:$0xff]
        %v5405 = vld [vmem:[%s5387 + $0x88] sm:$0xff]
        %v5406 = vld [vmem:[%s5387 + $0x90] sm:$0xff]
        %v5407 = vld [vmem:[%s5387 + $0x98] sm:$0xff]
        %v5408 = vld [vmem:[%s5387 + $0xa0] sm:$0xff]
        %v5409 = vld [vmem:[%s5387 + $0xa8] sm:$0xff]
        %v5410 = vld [vmem:[%s5387 + $0xb0] sm:$0xff]
        %v5411 = vld [vmem:[%s5387 + $0xb8] sm:$0xff]
        %v5412 = vld [vmem:[%s5387 + $0xc0] sm:$0xff]
        %v5413 = vld [vmem:[%s5387 + $0xc8] sm:$0xff]
        %v5414 = vld [vmem:[%s5387 + $0xd0] sm:$0xff]
        %v5415 = vld [vmem:[%s5387 + $0xd8] sm:$0xff]
        %v5416 = vld [vmem:[%s5387 + $0xe0] sm:$0xff]
        %v5417 = vld [vmem:[%s5387 + $0xe8] sm:$0xff]
        %v5418 = vld [vmem:[%s5387 + $0xf0] sm:$0xff]
        %v5419 = vld [vmem:[%s5387 + $0xf8] sm:$0xff]
        %5421 = vset.pattern.permute.xlu0 0
        %5422 = vperm.xlu0 %5421, %v5388
        %v5423 = vpop.permute.xlu0 %5422
        %5426 = vset.pattern.permute.xlu0 0
        %5427 = vperm.xlu0 %5426, %v5389
        %v5428 = vpop.permute.xlu0 %5427
        %5431 = vset.pattern.permute.xlu0 0
        %5432 = vperm.xlu0 %5431, %v5390
        %v5433 = vpop.permute.xlu0 %5432
        %5436 = vset.pattern.permute.xlu0 0
        %5437 = vperm.xlu0 %5436, %v5391
        %v5438 = vpop.permute.xlu0 %5437
        %5441 = vset.pattern.permute.xlu0 0
        %5442 = vperm.xlu0 %5441, %v5392
        %v5443 = vpop.permute.xlu0 %5442
        %5446 = vset.pattern.permute.xlu0 0
        %5447 = vperm.xlu0 %5446, %v5393
        %v5448 = vpop.permute.xlu0 %5447
        %5451 = vset.pattern.permute.xlu0 0
        %5452 = vperm.xlu0 %5451, %v5394
        %v5453 = vpop.permute.xlu0 %5452
        %5456 = vset.pattern.permute.xlu0 0
        %5457 = vperm.xlu0 %5456, %v5395
        %v5458 = vpop.permute.xlu0 %5457
        %5461 = vset.pattern.permute.xlu0 0
        %5462 = vperm.xlu0 %5461, %v5396
        %v5463 = vpop.permute.xlu0 %5462
        %5466 = vset.pattern.permute.xlu0 0
        %5467 = vperm.xlu0 %5466, %v5397
        %v5468 = vpop.permute.xlu0 %5467
        %5471 = vset.pattern.permute.xlu0 0
        %5472 = vperm.xlu0 %5471, %v5398
        %v5473 = vpop.permute.xlu0 %5472
        %5476 = vset.pattern.permute.xlu0 0
        %5477 = vperm.xlu0 %5476, %v5399
        %v5478 = vpop.permute.xlu0 %5477
        %5481 = vset.pattern.permute.xlu0 0
        %5482 = vperm.xlu0 %5481, %v5400
        %v5483 = vpop.permute.xlu0 %5482
        %5486 = vset.pattern.permute.xlu0 0
        %5487 = vperm.xlu0 %5486, %v5401
        %v5488 = vpop.permute.xlu0 %5487
        %5491 = vset.pattern.permute.xlu0 0
        %5492 = vperm.xlu0 %5491, %v5402
        %v5493 = vpop.permute.xlu0 %5492
        %5496 = vset.pattern.permute.xlu0 0
        %5497 = vperm.xlu0 %5496, %v5403
        %v5498 = vpop.permute.xlu0 %5497
        %5501 = vset.pattern.permute.xlu0 0
        %5502 = vperm.xlu0 %5501, %v5404
        %v5503 = vpop.permute.xlu0 %5502
        %5506 = vset.pattern.permute.xlu0 0
        %5507 = vperm.xlu0 %5506, %v5405
        %v5508 = vpop.permute.xlu0 %5507
        %5511 = vset.pattern.permute.xlu0 0
        %5512 = vperm.xlu0 %5511, %v5406
        %v5513 = vpop.permute.xlu0 %5512
        %5516 = vset.pattern.permute.xlu0 0
        %5517 = vperm.xlu0 %5516, %v5407
        %v5518 = vpop.permute.xlu0 %5517
        %5521 = vset.pattern.permute.xlu0 0
        %5522 = vperm.xlu0 %5521, %v5408
        %v5523 = vpop.permute.xlu0 %5522
        %5526 = vset.pattern.permute.xlu0 0
        %5527 = vperm.xlu0 %5526, %v5409
        %v5528 = vpop.permute.xlu0 %5527
        %5531 = vset.pattern.permute.xlu0 0
        %5532 = vperm.xlu0 %5531, %v5410
        %v5533 = vpop.permute.xlu0 %5532
        %5536 = vset.pattern.permute.xlu0 0
        %5537 = vperm.xlu0 %5536, %v5411
        %v5538 = vpop.permute.xlu0 %5537
        %5541 = vset.pattern.permute.xlu0 0
        %5542 = vperm.xlu0 %5541, %v5412
        %v5543 = vpop.permute.xlu0 %5542
        %5546 = vset.pattern.permute.xlu0 0
        %5547 = vperm.xlu0 %5546, %v5413
        %v5548 = vpop.permute.xlu0 %5547
        %5551 = vset.pattern.permute.xlu0 0
        %5552 = vperm.xlu0 %5551, %v5414
        %v5553 = vpop.permute.xlu0 %5552
        %5556 = vset.pattern.permute.xlu0 0
        %5557 = vperm.xlu0 %5556, %v5415
        %v5558 = vpop.permute.xlu0 %5557
        %5561 = vset.pattern.permute.xlu0 0
        %5562 = vperm.xlu0 %5561, %v5416
        %v5563 = vpop.permute.xlu0 %5562
        %5566 = vset.pattern.permute.xlu0 0
        %5567 = vperm.xlu0 %5566, %v5417
        %v5568 = vpop.permute.xlu0 %5567
        %5571 = vset.pattern.permute.xlu0 0
        %5572 = vperm.xlu0 %5571, %v5418
        %v5573 = vpop.permute.xlu0 %5572
        %5576 = vset.pattern.permute.xlu0 0
        %5577 = vperm.xlu0 %5576, %v5419
        %v5578 = vpop.permute.xlu0 %5577
        %v5580 = vmul.f32 %v5423, %v4579
        %v5581 = vmul.f32 %v5428, %v4580
        %v5582 = vmul.f32 %v5433, %v4579
        %v5583 = vmul.f32 %v5438, %v4580
        %v5584 = vmul.f32 %v5443, %v4579
        %v5585 = vmul.f32 %v5448, %v4580
        %v5586 = vmul.f32 %v5453, %v4579
        %v5587 = vmul.f32 %v5458, %v4580
        %v5588 = vmul.f32 %v5463, %v4579
        %v5589 = vmul.f32 %v5468, %v4580
        %v5590 = vmul.f32 %v5473, %v4579
        %v5591 = vmul.f32 %v5478, %v4580
        %v5592 = vmul.f32 %v5483, %v4579
        %v5593 = vmul.f32 %v5488, %v4580
        %v5594 = vmul.f32 %v5493, %v4579
        %v5595 = vmul.f32 %v5498, %v4580
        %v5596 = vmul.f32 %v5503, %v4579
        %v5597 = vmul.f32 %v5508, %v4580
        %v5598 = vmul.f32 %v5513, %v4579
        %v5599 = vmul.f32 %v5518, %v4580
        %v5600 = vmul.f32 %v5523, %v4579
        %v5601 = vmul.f32 %v5528, %v4580
        %v5602 = vmul.f32 %v5533, %v4579
        %v5603 = vmul.f32 %v5538, %v4580
        %v5604 = vmul.f32 %v5543, %v4579
        %v5605 = vmul.f32 %v5548, %v4580
        %v5606 = vmul.f32 %v5553, %v4579
        %v5607 = vmul.f32 %v5558, %v4580
        %v5608 = vmul.f32 %v5563, %v4579
        %v5609 = vmul.f32 %v5568, %v4580
        %v5610 = vmul.f32 %v5573, %v4579
        %v5611 = vmul.f32 %v5578, %v4580
        %v5612 = vadd.f32 %v5355, %v5580
        %v5613 = vadd.f32 %v5356, %v5581
        %v5614 = vadd.f32 %v5357, %v5582
        %v5615 = vadd.f32 %v5358, %v5583
        %v5616 = vadd.f32 %v5359, %v5584
        %v5617 = vadd.f32 %v5360, %v5585
        %v5618 = vadd.f32 %v5361, %v5586
        %v5619 = vadd.f32 %v5362, %v5587
        %v5620 = vadd.f32 %v5363, %v5588
        %v5621 = vadd.f32 %v5364, %v5589
        %v5622 = vadd.f32 %v5365, %v5590
        %v5623 = vadd.f32 %v5366, %v5591
        %v5624 = vadd.f32 %v5367, %v5592
        %v5625 = vadd.f32 %v5368, %v5593
        %v5626 = vadd.f32 %v5369, %v5594
        %v5627 = vadd.f32 %v5370, %v5595
        %v5628 = vadd.f32 %v5371, %v5596
        %v5629 = vadd.f32 %v5372, %v5597
        %v5630 = vadd.f32 %v5373, %v5598
        %v5631 = vadd.f32 %v5374, %v5599
        %v5632 = vadd.f32 %v5375, %v5600
        %v5633 = vadd.f32 %v5376, %v5601
        %v5634 = vadd.f32 %v5377, %v5602
        %v5635 = vadd.f32 %v5378, %v5603
        %v5636 = vadd.f32 %v5379, %v5604
        %v5637 = vadd.f32 %v5380, %v5605
        %v5638 = vadd.f32 %v5381, %v5606
        %v5639 = vadd.f32 %v5382, %v5607
        %v5640 = vadd.f32 %v5383, %v5608
        %v5641 = vadd.f32 %v5384, %v5609
        %v5642 = vadd.f32 %v5385, %v5610
        %v5643 = vadd.f32 %v5386, %v5611
        %s5644 = scalar_lea.vmem %s5, 512
        %v5645 = vld [vmem:[%s5644] sm:$0xff]
        %v5646 = vld [vmem:[%s5644 + $0x8] sm:$0xff]
        %v5647 = vld [vmem:[%s5644 + $0x10] sm:$0xff]
        %v5648 = vld [vmem:[%s5644 + $0x18] sm:$0xff]
        %v5649 = vld [vmem:[%s5644 + $0x20] sm:$0xff]
        %v5650 = vld [vmem:[%s5644 + $0x28] sm:$0xff]
        %v5651 = vld [vmem:[%s5644 + $0x30] sm:$0xff]
        %v5652 = vld [vmem:[%s5644 + $0x38] sm:$0xff]
        %v5653 = vld [vmem:[%s5644 + $0x40] sm:$0xff]
        %v5654 = vld [vmem:[%s5644 + $0x48] sm:$0xff]
        %v5655 = vld [vmem:[%s5644 + $0x50] sm:$0xff]
        %v5656 = vld [vmem:[%s5644 + $0x58] sm:$0xff]
        %v5657 = vld [vmem:[%s5644 + $0x60] sm:$0xff]
        %v5658 = vld [vmem:[%s5644 + $0x68] sm:$0xff]
        %v5659 = vld [vmem:[%s5644 + $0x70] sm:$0xff]
        %v5660 = vld [vmem:[%s5644 + $0x78] sm:$0xff]
        %v5661 = vld [vmem:[%s5644 + $0x80] sm:$0xff]
        %v5662 = vld [vmem:[%s5644 + $0x88] sm:$0xff]
        %v5663 = vld [vmem:[%s5644 + $0x90] sm:$0xff]
        %v5664 = vld [vmem:[%s5644 + $0x98] sm:$0xff]
        %v5665 = vld [vmem:[%s5644 + $0xa0] sm:$0xff]
        %v5666 = vld [vmem:[%s5644 + $0xa8] sm:$0xff]
        %v5667 = vld [vmem:[%s5644 + $0xb0] sm:$0xff]
        %v5668 = vld [vmem:[%s5644 + $0xb8] sm:$0xff]
        %v5669 = vld [vmem:[%s5644 + $0xc0] sm:$0xff]
        %v5670 = vld [vmem:[%s5644 + $0xc8] sm:$0xff]
        %v5671 = vld [vmem:[%s5644 + $0xd0] sm:$0xff]
        %v5672 = vld [vmem:[%s5644 + $0xd8] sm:$0xff]
        %v5673 = vld [vmem:[%s5644 + $0xe0] sm:$0xff]
        %v5674 = vld [vmem:[%s5644 + $0xe8] sm:$0xff]
        %v5675 = vld [vmem:[%s5644 + $0xf0] sm:$0xff]
        %v5676 = vld [vmem:[%s5644 + $0xf8] sm:$0xff]
        %5678 = vset.pattern.permute.xlu0 0
        %5679 = vperm.xlu0 %5678, %v5645
        %v5680 = vpop.permute.xlu0 %5679
        %5683 = vset.pattern.permute.xlu0 0
        %5684 = vperm.xlu0 %5683, %v5646
        %v5685 = vpop.permute.xlu0 %5684
        %5688 = vset.pattern.permute.xlu0 0
        %5689 = vperm.xlu0 %5688, %v5647
        %v5690 = vpop.permute.xlu0 %5689
        %5693 = vset.pattern.permute.xlu0 0
        %5694 = vperm.xlu0 %5693, %v5648
        %v5695 = vpop.permute.xlu0 %5694
        %5698 = vset.pattern.permute.xlu0 0
        %5699 = vperm.xlu0 %5698, %v5649
        %v5700 = vpop.permute.xlu0 %5699
        %5703 = vset.pattern.permute.xlu0 0
        %5704 = vperm.xlu0 %5703, %v5650
        %v5705 = vpop.permute.xlu0 %5704
        %5708 = vset.pattern.permute.xlu0 0
        %5709 = vperm.xlu0 %5708, %v5651
        %v5710 = vpop.permute.xlu0 %5709
        %5713 = vset.pattern.permute.xlu0 0
        %5714 = vperm.xlu0 %5713, %v5652
        %v5715 = vpop.permute.xlu0 %5714
        %5718 = vset.pattern.permute.xlu0 0
        %5719 = vperm.xlu0 %5718, %v5653
        %v5720 = vpop.permute.xlu0 %5719
        %5723 = vset.pattern.permute.xlu0 0
        %5724 = vperm.xlu0 %5723, %v5654
        %v5725 = vpop.permute.xlu0 %5724
        %5728 = vset.pattern.permute.xlu0 0
        %5729 = vperm.xlu0 %5728, %v5655
        %v5730 = vpop.permute.xlu0 %5729
        %5733 = vset.pattern.permute.xlu0 0
        %5734 = vperm.xlu0 %5733, %v5656
        %v5735 = vpop.permute.xlu0 %5734
        %5738 = vset.pattern.permute.xlu0 0
        %5739 = vperm.xlu0 %5738, %v5657
        %v5740 = vpop.permute.xlu0 %5739
        %5743 = vset.pattern.permute.xlu0 0
        %5744 = vperm.xlu0 %5743, %v5658
        %v5745 = vpop.permute.xlu0 %5744
        %5748 = vset.pattern.permute.xlu0 0
        %5749 = vperm.xlu0 %5748, %v5659
        %v5750 = vpop.permute.xlu0 %5749
        %5753 = vset.pattern.permute.xlu0 0
        %5754 = vperm.xlu0 %5753, %v5660
        %v5755 = vpop.permute.xlu0 %5754
        %5758 = vset.pattern.permute.xlu0 0
        %5759 = vperm.xlu0 %5758, %v5661
        %v5760 = vpop.permute.xlu0 %5759
        %5763 = vset.pattern.permute.xlu0 0
        %5764 = vperm.xlu0 %5763, %v5662
        %v5765 = vpop.permute.xlu0 %5764
        %5768 = vset.pattern.permute.xlu0 0
        %5769 = vperm.xlu0 %5768, %v5663
        %v5770 = vpop.permute.xlu0 %5769
        %5773 = vset.pattern.permute.xlu0 0
        %5774 = vperm.xlu0 %5773, %v5664
        %v5775 = vpop.permute.xlu0 %5774
        %5778 = vset.pattern.permute.xlu0 0
        %5779 = vperm.xlu0 %5778, %v5665
        %v5780 = vpop.permute.xlu0 %5779
        %5783 = vset.pattern.permute.xlu0 0
        %5784 = vperm.xlu0 %5783, %v5666
        %v5785 = vpop.permute.xlu0 %5784
        %5788 = vset.pattern.permute.xlu0 0
        %5789 = vperm.xlu0 %5788, %v5667
        %v5790 = vpop.permute.xlu0 %5789
        %5793 = vset.pattern.permute.xlu0 0
        %5794 = vperm.xlu0 %5793, %v5668
        %v5795 = vpop.permute.xlu0 %5794
        %5798 = vset.pattern.permute.xlu0 0
        %5799 = vperm.xlu0 %5798, %v5669
        %v5800 = vpop.permute.xlu0 %5799
        %5803 = vset.pattern.permute.xlu0 0
        %5804 = vperm.xlu0 %5803, %v5670
        %v5805 = vpop.permute.xlu0 %5804
        %5808 = vset.pattern.permute.xlu0 0
        %5809 = vperm.xlu0 %5808, %v5671
        %v5810 = vpop.permute.xlu0 %5809
        %5813 = vset.pattern.permute.xlu0 0
        %5814 = vperm.xlu0 %5813, %v5672
        %v5815 = vpop.permute.xlu0 %5814
        %5818 = vset.pattern.permute.xlu0 0
        %5819 = vperm.xlu0 %5818, %v5673
        %v5820 = vpop.permute.xlu0 %5819
        %5823 = vset.pattern.permute.xlu0 0
        %5824 = vperm.xlu0 %5823, %v5674
        %v5825 = vpop.permute.xlu0 %5824
        %5828 = vset.pattern.permute.xlu0 0
        %5829 = vperm.xlu0 %5828, %v5675
        %v5830 = vpop.permute.xlu0 %5829
        %5833 = vset.pattern.permute.xlu0 0
        %5834 = vperm.xlu0 %5833, %v5676
        %v5835 = vpop.permute.xlu0 %5834
        %v5837 = vmul.f32 %v5680, %v5034
        %v5838 = vmul.f32 %v5685, %v5034
        %v5839 = vmul.f32 %v5690, %v5038
        %v5840 = vmul.f32 %v5695, %v5038
        %v5841 = vmul.f32 %v5700, %v5042
        %v5842 = vmul.f32 %v5705, %v5042
        %v5843 = vmul.f32 %v5710, %v5046
        %v5844 = vmul.f32 %v5715, %v5046
        %v5845 = vmul.f32 %v5720, %v5050
        %v5846 = vmul.f32 %v5725, %v5050
        %v5847 = vmul.f32 %v5730, %v5054
        %v5848 = vmul.f32 %v5735, %v5054
        %v5849 = vmul.f32 %v5740, %v5058
        %v5850 = vmul.f32 %v5745, %v5058
        %v5851 = vmul.f32 %v5750, %v5062
        %v5852 = vmul.f32 %v5755, %v5062
        %v5853 = vmul.f32 %v5760, %v5066
        %v5854 = vmul.f32 %v5765, %v5066
        %v5855 = vmul.f32 %v5770, %v5070
        %v5856 = vmul.f32 %v5775, %v5070
        %v5857 = vmul.f32 %v5780, %v5074
        %v5858 = vmul.f32 %v5785, %v5074
        %v5859 = vmul.f32 %v5790, %v5078
        %v5860 = vmul.f32 %v5795, %v5078
        %v5861 = vmul.f32 %v5800, %v5082
        %v5862 = vmul.f32 %v5805, %v5082
        %v5863 = vmul.f32 %v5810, %v5086
        %v5864 = vmul.f32 %v5815, %v5086
        %v5865 = vmul.f32 %v5820, %v5090
        %v5866 = vmul.f32 %v5825, %v5090
        %v5867 = vmul.f32 %v5830, %v5094
        %v5868 = vmul.f32 %v5835, %v5094
        %v5869 = vadd.f32 %v5612, %v5837
        %v5870 = vadd.f32 %v5613, %v5838
        %v5871 = vadd.f32 %v5614, %v5839
        %v5872 = vadd.f32 %v5615, %v5840
        %v5873 = vadd.f32 %v5616, %v5841
        %v5874 = vadd.f32 %v5617, %v5842
        %v5875 = vadd.f32 %v5618, %v5843
        %v5876 = vadd.f32 %v5619, %v5844
        %v5877 = vadd.f32 %v5620, %v5845
        %v5878 = vadd.f32 %v5621, %v5846
        %v5879 = vadd.f32 %v5622, %v5847
        %v5880 = vadd.f32 %v5623, %v5848
        %v5881 = vadd.f32 %v5624, %v5849
        %v5882 = vadd.f32 %v5625, %v5850
        %v5883 = vadd.f32 %v5626, %v5851
        %v5884 = vadd.f32 %v5627, %v5852
        %v5885 = vadd.f32 %v5628, %v5853
        %v5886 = vadd.f32 %v5629, %v5854
        %v5887 = vadd.f32 %v5630, %v5855
        %v5888 = vadd.f32 %v5631, %v5856
        %v5889 = vadd.f32 %v5632, %v5857
        %v5890 = vadd.f32 %v5633, %v5858
        %v5891 = vadd.f32 %v5634, %v5859
        %v5892 = vadd.f32 %v5635, %v5860
        %v5893 = vadd.f32 %v5636, %v5861
        %v5894 = vadd.f32 %v5637, %v5862
        %v5895 = vadd.f32 %v5638, %v5863
        %v5896 = vadd.f32 %v5639, %v5864
        %v5897 = vadd.f32 %v5640, %v5865
        %v5898 = vadd.f32 %v5641, %v5866
        %v5899 = vadd.f32 %v5642, %v5867
        %v5900 = vadd.f32 %v5643, %v5868
        %s5901 = scalar_lea.vmem %s4, 768
        %v5902 = vld [vmem:[%s5901] sm:$0xff]
        %v5903 = vld [vmem:[%s5901 + $0x8] sm:$0xff]
        %v5904 = vld [vmem:[%s5901 + $0x10] sm:$0xff]
        %v5905 = vld [vmem:[%s5901 + $0x18] sm:$0xff]
        %v5906 = vld [vmem:[%s5901 + $0x20] sm:$0xff]
        %v5907 = vld [vmem:[%s5901 + $0x28] sm:$0xff]
        %v5908 = vld [vmem:[%s5901 + $0x30] sm:$0xff]
        %v5909 = vld [vmem:[%s5901 + $0x38] sm:$0xff]
        %v5910 = vld [vmem:[%s5901 + $0x40] sm:$0xff]
        %v5911 = vld [vmem:[%s5901 + $0x48] sm:$0xff]
        %v5912 = vld [vmem:[%s5901 + $0x50] sm:$0xff]
        %v5913 = vld [vmem:[%s5901 + $0x58] sm:$0xff]
        %v5914 = vld [vmem:[%s5901 + $0x60] sm:$0xff]
        %v5915 = vld [vmem:[%s5901 + $0x68] sm:$0xff]
        %v5916 = vld [vmem:[%s5901 + $0x70] sm:$0xff]
        %v5917 = vld [vmem:[%s5901 + $0x78] sm:$0xff]
        %v5918 = vld [vmem:[%s5901 + $0x80] sm:$0xff]
        %v5919 = vld [vmem:[%s5901 + $0x88] sm:$0xff]
        %v5920 = vld [vmem:[%s5901 + $0x90] sm:$0xff]
        %v5921 = vld [vmem:[%s5901 + $0x98] sm:$0xff]
        %v5922 = vld [vmem:[%s5901 + $0xa0] sm:$0xff]
        %v5923 = vld [vmem:[%s5901 + $0xa8] sm:$0xff]
        %v5924 = vld [vmem:[%s5901 + $0xb0] sm:$0xff]
        %v5925 = vld [vmem:[%s5901 + $0xb8] sm:$0xff]
        %v5926 = vld [vmem:[%s5901 + $0xc0] sm:$0xff]
        %v5927 = vld [vmem:[%s5901 + $0xc8] sm:$0xff]
        %v5928 = vld [vmem:[%s5901 + $0xd0] sm:$0xff]
        %v5929 = vld [vmem:[%s5901 + $0xd8] sm:$0xff]
        %v5930 = vld [vmem:[%s5901 + $0xe0] sm:$0xff]
        %v5931 = vld [vmem:[%s5901 + $0xe8] sm:$0xff]
        %v5932 = vld [vmem:[%s5901 + $0xf0] sm:$0xff]
        %v5933 = vld [vmem:[%s5901 + $0xf8] sm:$0xff]
        %5935 = vset.pattern.permute.xlu0 0
        %5936 = vperm.xlu0 %5935, %v5902
        %v5937 = vpop.permute.xlu0 %5936
        %5940 = vset.pattern.permute.xlu0 0
        %5941 = vperm.xlu0 %5940, %v5903
        %v5942 = vpop.permute.xlu0 %5941
        %5945 = vset.pattern.permute.xlu0 0
        %5946 = vperm.xlu0 %5945, %v5904
        %v5947 = vpop.permute.xlu0 %5946
        %5950 = vset.pattern.permute.xlu0 0
        %5951 = vperm.xlu0 %5950, %v5905
        %v5952 = vpop.permute.xlu0 %5951
        %5955 = vset.pattern.permute.xlu0 0
        %5956 = vperm.xlu0 %5955, %v5906
        %v5957 = vpop.permute.xlu0 %5956
        %5960 = vset.pattern.permute.xlu0 0
        %5961 = vperm.xlu0 %5960, %v5907
        %v5962 = vpop.permute.xlu0 %5961
        %5965 = vset.pattern.permute.xlu0 0
        %5966 = vperm.xlu0 %5965, %v5908
        %v5967 = vpop.permute.xlu0 %5966
        %5970 = vset.pattern.permute.xlu0 0
        %5971 = vperm.xlu0 %5970, %v5909
        %v5972 = vpop.permute.xlu0 %5971
        %5975 = vset.pattern.permute.xlu0 0
        %5976 = vperm.xlu0 %5975, %v5910
        %v5977 = vpop.permute.xlu0 %5976
        %5980 = vset.pattern.permute.xlu0 0
        %5981 = vperm.xlu0 %5980, %v5911
        %v5982 = vpop.permute.xlu0 %5981
        %5985 = vset.pattern.permute.xlu0 0
        %5986 = vperm.xlu0 %5985, %v5912
        %v5987 = vpop.permute.xlu0 %5986
        %5990 = vset.pattern.permute.xlu0 0
        %5991 = vperm.xlu0 %5990, %v5913
        %v5992 = vpop.permute.xlu0 %5991
        %5995 = vset.pattern.permute.xlu0 0
        %5996 = vperm.xlu0 %5995, %v5914
        %v5997 = vpop.permute.xlu0 %5996
        %6000 = vset.pattern.permute.xlu0 0
        %6001 = vperm.xlu0 %6000, %v5915
        %v6002 = vpop.permute.xlu0 %6001
        %6005 = vset.pattern.permute.xlu0 0
        %6006 = vperm.xlu0 %6005, %v5916
        %v6007 = vpop.permute.xlu0 %6006
        %6010 = vset.pattern.permute.xlu0 0
        %6011 = vperm.xlu0 %6010, %v5917
        %v6012 = vpop.permute.xlu0 %6011
        %6015 = vset.pattern.permute.xlu0 0
        %6016 = vperm.xlu0 %6015, %v5918
        %v6017 = vpop.permute.xlu0 %6016
        %6020 = vset.pattern.permute.xlu0 0
        %6021 = vperm.xlu0 %6020, %v5919
        %v6022 = vpop.permute.xlu0 %6021
        %6025 = vset.pattern.permute.xlu0 0
        %6026 = vperm.xlu0 %6025, %v5920
        %v6027 = vpop.permute.xlu0 %6026
        %6030 = vset.pattern.permute.xlu0 0
        %6031 = vperm.xlu0 %6030, %v5921
        %v6032 = vpop.permute.xlu0 %6031
        %6035 = vset.pattern.permute.xlu0 0
        %6036 = vperm.xlu0 %6035, %v5922
        %v6037 = vpop.permute.xlu0 %6036
        %6040 = vset.pattern.permute.xlu0 0
        %6041 = vperm.xlu0 %6040, %v5923
        %v6042 = vpop.permute.xlu0 %6041
        %6045 = vset.pattern.permute.xlu0 0
        %6046 = vperm.xlu0 %6045, %v5924
        %v6047 = vpop.permute.xlu0 %6046
        %6050 = vset.pattern.permute.xlu0 0
        %6051 = vperm.xlu0 %6050, %v5925
        %v6052 = vpop.permute.xlu0 %6051
        %6055 = vset.pattern.permute.xlu0 0
        %6056 = vperm.xlu0 %6055, %v5926
        %v6057 = vpop.permute.xlu0 %6056
        %6060 = vset.pattern.permute.xlu0 0
        %6061 = vperm.xlu0 %6060, %v5927
        %v6062 = vpop.permute.xlu0 %6061
        %6065 = vset.pattern.permute.xlu0 0
        %6066 = vperm.xlu0 %6065, %v5928
        %v6067 = vpop.permute.xlu0 %6066
        %6070 = vset.pattern.permute.xlu0 0
        %6071 = vperm.xlu0 %6070, %v5929
        %v6072 = vpop.permute.xlu0 %6071
        %6075 = vset.pattern.permute.xlu0 0
        %6076 = vperm.xlu0 %6075, %v5930
        %v6077 = vpop.permute.xlu0 %6076
        %6080 = vset.pattern.permute.xlu0 0
        %6081 = vperm.xlu0 %6080, %v5931
        %v6082 = vpop.permute.xlu0 %6081
        %6085 = vset.pattern.permute.xlu0 0
        %6086 = vperm.xlu0 %6085, %v5932
        %v6087 = vpop.permute.xlu0 %6086
        %6090 = vset.pattern.permute.xlu0 0
        %6091 = vperm.xlu0 %6090, %v5933
        %v6092 = vpop.permute.xlu0 %6091
        %v6094 = vmul.f32 %v5937, %v4629
        %v6095 = vmul.f32 %v5942, %v4630
        %v6096 = vmul.f32 %v5947, %v4629
        %v6097 = vmul.f32 %v5952, %v4630
        %v6098 = vmul.f32 %v5957, %v4629
        %v6099 = vmul.f32 %v5962, %v4630
        %v6100 = vmul.f32 %v5967, %v4629
        %v6101 = vmul.f32 %v5972, %v4630
        %v6102 = vmul.f32 %v5977, %v4629
        %v6103 = vmul.f32 %v5982, %v4630
        %v6104 = vmul.f32 %v5987, %v4629
        %v6105 = vmul.f32 %v5992, %v4630
        %v6106 = vmul.f32 %v5997, %v4629
        %v6107 = vmul.f32 %v6002, %v4630
        %v6108 = vmul.f32 %v6007, %v4629
        %v6109 = vmul.f32 %v6012, %v4630
        %v6110 = vmul.f32 %v6017, %v4629
        %v6111 = vmul.f32 %v6022, %v4630
        %v6112 = vmul.f32 %v6027, %v4629
        %v6113 = vmul.f32 %v6032, %v4630
        %v6114 = vmul.f32 %v6037, %v4629
        %v6115 = vmul.f32 %v6042, %v4630
        %v6116 = vmul.f32 %v6047, %v4629
        %v6117 = vmul.f32 %v6052, %v4630
        %v6118 = vmul.f32 %v6057, %v4629
        %v6119 = vmul.f32 %v6062, %v4630
        %v6120 = vmul.f32 %v6067, %v4629
        %v6121 = vmul.f32 %v6072, %v4630
        %v6122 = vmul.f32 %v6077, %v4629
        %v6123 = vmul.f32 %v6082, %v4630
        %v6124 = vmul.f32 %v6087, %v4629
        %v6125 = vmul.f32 %v6092, %v4630
        %v6126 = vadd.f32 %v5869, %v6094
        %v6127 = vadd.f32 %v5870, %v6095
        %v6128 = vadd.f32 %v5871, %v6096
        %v6129 = vadd.f32 %v5872, %v6097
        %v6130 = vadd.f32 %v5873, %v6098
        %v6131 = vadd.f32 %v5874, %v6099
        %v6132 = vadd.f32 %v5875, %v6100
        %v6133 = vadd.f32 %v5876, %v6101
        %v6134 = vadd.f32 %v5877, %v6102
        %v6135 = vadd.f32 %v5878, %v6103
        %v6136 = vadd.f32 %v5879, %v6104
        %v6137 = vadd.f32 %v5880, %v6105
        %v6138 = vadd.f32 %v5881, %v6106
        %v6139 = vadd.f32 %v5882, %v6107
        %v6140 = vadd.f32 %v5883, %v6108
        %v6141 = vadd.f32 %v5884, %v6109
        %v6142 = vadd.f32 %v5885, %v6110
        %v6143 = vadd.f32 %v5886, %v6111
        %v6144 = vadd.f32 %v5887, %v6112
        %v6145 = vadd.f32 %v5888, %v6113
        %v6146 = vadd.f32 %v5889, %v6114
        %v6147 = vadd.f32 %v5890, %v6115
        %v6148 = vadd.f32 %v5891, %v6116
        %v6149 = vadd.f32 %v5892, %v6117
        %v6150 = vadd.f32 %v5893, %v6118
        %v6151 = vadd.f32 %v5894, %v6119
        %v6152 = vadd.f32 %v5895, %v6120
        %v6153 = vadd.f32 %v5896, %v6121
        %v6154 = vadd.f32 %v5897, %v6122
        %v6155 = vadd.f32 %v5898, %v6123
        %v6156 = vadd.f32 %v5899, %v6124
        %v6157 = vadd.f32 %v5900, %v6125
        %s6158 = scalar_lea.vmem %s5, 768
        %v6159 = vld [vmem:[%s6158] sm:$0xff]
        %v6160 = vld [vmem:[%s6158 + $0x8] sm:$0xff]
        %v6161 = vld [vmem:[%s6158 + $0x10] sm:$0xff]
        %v6162 = vld [vmem:[%s6158 + $0x18] sm:$0xff]
        %v6163 = vld [vmem:[%s6158 + $0x20] sm:$0xff]
        %v6164 = vld [vmem:[%s6158 + $0x28] sm:$0xff]
        %v6165 = vld [vmem:[%s6158 + $0x30] sm:$0xff]
        %v6166 = vld [vmem:[%s6158 + $0x38] sm:$0xff]
        %v6167 = vld [vmem:[%s6158 + $0x40] sm:$0xff]
        %v6168 = vld [vmem:[%s6158 + $0x48] sm:$0xff]
        %v6169 = vld [vmem:[%s6158 + $0x50] sm:$0xff]
        %v6170 = vld [vmem:[%s6158 + $0x58] sm:$0xff]
        %v6171 = vld [vmem:[%s6158 + $0x60] sm:$0xff]
        %v6172 = vld [vmem:[%s6158 + $0x68] sm:$0xff]
        %v6173 = vld [vmem:[%s6158 + $0x70] sm:$0xff]
        %v6174 = vld [vmem:[%s6158 + $0x78] sm:$0xff]
        %v6175 = vld [vmem:[%s6158 + $0x80] sm:$0xff]
        %v6176 = vld [vmem:[%s6158 + $0x88] sm:$0xff]
        %v6177 = vld [vmem:[%s6158 + $0x90] sm:$0xff]
        %v6178 = vld [vmem:[%s6158 + $0x98] sm:$0xff]
        %v6179 = vld [vmem:[%s6158 + $0xa0] sm:$0xff]
        %v6180 = vld [vmem:[%s6158 + $0xa8] sm:$0xff]
        %v6181 = vld [vmem:[%s6158 + $0xb0] sm:$0xff]
        %v6182 = vld [vmem:[%s6158 + $0xb8] sm:$0xff]
        %v6183 = vld [vmem:[%s6158 + $0xc0] sm:$0xff]
        %v6184 = vld [vmem:[%s6158 + $0xc8] sm:$0xff]
        %v6185 = vld [vmem:[%s6158 + $0xd0] sm:$0xff]
        %v6186 = vld [vmem:[%s6158 + $0xd8] sm:$0xff]
        %v6187 = vld [vmem:[%s6158 + $0xe0] sm:$0xff]
        %v6188 = vld [vmem:[%s6158 + $0xe8] sm:$0xff]
        %v6189 = vld [vmem:[%s6158 + $0xf0] sm:$0xff]
        %v6190 = vld [vmem:[%s6158 + $0xf8] sm:$0xff]
        %6192 = vset.pattern.permute.xlu0 0
        %6193 = vperm.xlu0 %6192, %v6159
        %v6194 = vpop.permute.xlu0 %6193
        %6197 = vset.pattern.permute.xlu0 0
        %6198 = vperm.xlu0 %6197, %v6160
        %v6199 = vpop.permute.xlu0 %6198
        %6202 = vset.pattern.permute.xlu0 0
        %6203 = vperm.xlu0 %6202, %v6161
        %v6204 = vpop.permute.xlu0 %6203
        %6207 = vset.pattern.permute.xlu0 0
        %6208 = vperm.xlu0 %6207, %v6162
        %v6209 = vpop.permute.xlu0 %6208
        %6212 = vset.pattern.permute.xlu0 0
        %6213 = vperm.xlu0 %6212, %v6163
        %v6214 = vpop.permute.xlu0 %6213
        %6217 = vset.pattern.permute.xlu0 0
        %6218 = vperm.xlu0 %6217, %v6164
        %v6219 = vpop.permute.xlu0 %6218
        %6222 = vset.pattern.permute.xlu0 0
        %6223 = vperm.xlu0 %6222, %v6165
        %v6224 = vpop.permute.xlu0 %6223
        %6227 = vset.pattern.permute.xlu0 0
        %6228 = vperm.xlu0 %6227, %v6166
        %v6229 = vpop.permute.xlu0 %6228
        %6232 = vset.pattern.permute.xlu0 0
        %6233 = vperm.xlu0 %6232, %v6167
        %v6234 = vpop.permute.xlu0 %6233
        %6237 = vset.pattern.permute.xlu0 0
        %6238 = vperm.xlu0 %6237, %v6168
        %v6239 = vpop.permute.xlu0 %6238
        %6242 = vset.pattern.permute.xlu0 0
        %6243 = vperm.xlu0 %6242, %v6169
        %v6244 = vpop.permute.xlu0 %6243
        %6247 = vset.pattern.permute.xlu0 0
        %6248 = vperm.xlu0 %6247, %v6170
        %v6249 = vpop.permute.xlu0 %6248
        %6252 = vset.pattern.permute.xlu0 0
        %6253 = vperm.xlu0 %6252, %v6171
        %v6254 = vpop.permute.xlu0 %6253
        %6257 = vset.pattern.permute.xlu0 0
        %6258 = vperm.xlu0 %6257, %v6172
        %v6259 = vpop.permute.xlu0 %6258
        %6262 = vset.pattern.permute.xlu0 0
        %6263 = vperm.xlu0 %6262, %v6173
        %v6264 = vpop.permute.xlu0 %6263
        %6267 = vset.pattern.permute.xlu0 0
        %6268 = vperm.xlu0 %6267, %v6174
        %v6269 = vpop.permute.xlu0 %6268
        %6272 = vset.pattern.permute.xlu0 0
        %6273 = vperm.xlu0 %6272, %v6175
        %v6274 = vpop.permute.xlu0 %6273
        %6277 = vset.pattern.permute.xlu0 0
        %6278 = vperm.xlu0 %6277, %v6176
        %v6279 = vpop.permute.xlu0 %6278
        %6282 = vset.pattern.permute.xlu0 0
        %6283 = vperm.xlu0 %6282, %v6177
        %v6284 = vpop.permute.xlu0 %6283
        %6287 = vset.pattern.permute.xlu0 0
        %6288 = vperm.xlu0 %6287, %v6178
        %v6289 = vpop.permute.xlu0 %6288
        %6292 = vset.pattern.permute.xlu0 0
        %6293 = vperm.xlu0 %6292, %v6179
        %v6294 = vpop.permute.xlu0 %6293
        %6297 = vset.pattern.permute.xlu0 0
        %6298 = vperm.xlu0 %6297, %v6180
        %v6299 = vpop.permute.xlu0 %6298
        %6302 = vset.pattern.permute.xlu0 0
        %6303 = vperm.xlu0 %6302, %v6181
        %v6304 = vpop.permute.xlu0 %6303
        %6307 = vset.pattern.permute.xlu0 0
        %6308 = vperm.xlu0 %6307, %v6182
        %v6309 = vpop.permute.xlu0 %6308
        %6312 = vset.pattern.permute.xlu0 0
        %6313 = vperm.xlu0 %6312, %v6183
        %v6314 = vpop.permute.xlu0 %6313
        %6317 = vset.pattern.permute.xlu0 0
        %6318 = vperm.xlu0 %6317, %v6184
        %v6319 = vpop.permute.xlu0 %6318
        %6322 = vset.pattern.permute.xlu0 0
        %6323 = vperm.xlu0 %6322, %v6185
        %v6324 = vpop.permute.xlu0 %6323
        %6327 = vset.pattern.permute.xlu0 0
        %6328 = vperm.xlu0 %6327, %v6186
        %v6329 = vpop.permute.xlu0 %6328
        %6332 = vset.pattern.permute.xlu0 0
        %6333 = vperm.xlu0 %6332, %v6187
        %v6334 = vpop.permute.xlu0 %6333
        %6337 = vset.pattern.permute.xlu0 0
        %6338 = vperm.xlu0 %6337, %v6188
        %v6339 = vpop.permute.xlu0 %6338
        %6342 = vset.pattern.permute.xlu0 0
        %6343 = vperm.xlu0 %6342, %v6189
        %v6344 = vpop.permute.xlu0 %6343
        %6347 = vset.pattern.permute.xlu0 0
        %6348 = vperm.xlu0 %6347, %v6190
        %v6349 = vpop.permute.xlu0 %6348
        %v6351 = vmul.f32 %v6194, %v5246
        %v6352 = vmul.f32 %v6199, %v5246
        %v6353 = vmul.f32 %v6204, %v5250
        %v6354 = vmul.f32 %v6209, %v5250
        %v6355 = vmul.f32 %v6214, %v5254
        %v6356 = vmul.f32 %v6219, %v5254
        %v6357 = vmul.f32 %v6224, %v5258
        %v6358 = vmul.f32 %v6229, %v5258
        %v6359 = vmul.f32 %v6234, %v5262
        %v6360 = vmul.f32 %v6239, %v5262
        %v6361 = vmul.f32 %v6244, %v5266
        %v6362 = vmul.f32 %v6249, %v5266
        %v6363 = vmul.f32 %v6254, %v5270
        %v6364 = vmul.f32 %v6259, %v5270
        %v6365 = vmul.f32 %v6264, %v5274
        %v6366 = vmul.f32 %v6269, %v5274
        %v6367 = vmul.f32 %v6274, %v5278
        %v6368 = vmul.f32 %v6279, %v5278
        %v6369 = vmul.f32 %v6284, %v5282
        %v6370 = vmul.f32 %v6289, %v5282
        %v6371 = vmul.f32 %v6294, %v5286
        %v6372 = vmul.f32 %v6299, %v5286
        %v6373 = vmul.f32 %v6304, %v5290
        %v6374 = vmul.f32 %v6309, %v5290
        %v6375 = vmul.f32 %v6314, %v5294
        %v6376 = vmul.f32 %v6319, %v5294
        %v6377 = vmul.f32 %v6324, %v5298
        %v6378 = vmul.f32 %v6329, %v5298
        %v6379 = vmul.f32 %v6334, %v5302
        %v6380 = vmul.f32 %v6339, %v5302
        %v6381 = vmul.f32 %v6344, %v5306
        %v6382 = vmul.f32 %v6349, %v5306
        %v6383 = vadd.f32 %v6126, %v6351
        %v6384 = vadd.f32 %v6127, %v6352
        %v6385 = vadd.f32 %v6128, %v6353
        %v6386 = vadd.f32 %v6129, %v6354
        %v6387 = vadd.f32 %v6130, %v6355
        %v6388 = vadd.f32 %v6131, %v6356
        %v6389 = vadd.f32 %v6132, %v6357
        %v6390 = vadd.f32 %v6133, %v6358
        %v6391 = vadd.f32 %v6134, %v6359
        %v6392 = vadd.f32 %v6135, %v6360
        %v6393 = vadd.f32 %v6136, %v6361
        %v6394 = vadd.f32 %v6137, %v6362
        %v6395 = vadd.f32 %v6138, %v6363
        %v6396 = vadd.f32 %v6139, %v6364
        %v6397 = vadd.f32 %v6140, %v6365
        %v6398 = vadd.f32 %v6141, %v6366
        %v6399 = vadd.f32 %v6142, %v6367
        %v6400 = vadd.f32 %v6143, %v6368
        %v6401 = vadd.f32 %v6144, %v6369
        %v6402 = vadd.f32 %v6145, %v6370
        %v6403 = vadd.f32 %v6146, %v6371
        %v6404 = vadd.f32 %v6147, %v6372
        %v6405 = vadd.f32 %v6148, %v6373
        %v6406 = vadd.f32 %v6149, %v6374
        %v6407 = vadd.f32 %v6150, %v6375
        %v6408 = vadd.f32 %v6151, %v6376
        %v6409 = vadd.f32 %v6152, %v6377
        %v6410 = vadd.f32 %v6153, %v6378
        %v6411 = vadd.f32 %v6154, %v6379
        %v6412 = vadd.f32 %v6155, %v6380
        %v6413 = vadd.f32 %v6156, %v6381
        %v6414 = vadd.f32 %v6157, %v6382
        %v6415 = vmax.f32 %v6383, %v6387
        %v6416 = vmax.f32 %v6385, %v6389
        %v6417 = vmax.f32 %v6415, %v6391
        %v6418 = vmax.f32 %v6416, %v6393
        %v6419 = vmax.f32 %v6417, %v6395
        %v6420 = vmax.f32 %v6418, %v6397
        %v6421 = vmax.f32 %v6419, %v6399
        %v6422 = vmax.f32 %v6420, %v6401
        %v6423 = vmax.f32 %v6421, %v6403
        %v6424 = vmax.f32 %v6422, %v6405
        %v6425 = vmax.f32 %v6423, %v6407
        %v6426 = vmax.f32 %v6424, %v6409
        %v6427 = vmax.f32 %v6425, %v6411
        %v6428 = vmax.f32 %v6426, %v6413
        %v6429 = vmax.f32 %v6427, %v6428
        %v6430 = vmax.f32 %v6384, %v6388
        %v6431 = vmax.f32 %v6386, %v6390
        %v6432 = vmax.f32 %v6430, %v6392
        %v6433 = vmax.f32 %v6431, %v6394
        %v6434 = vmax.f32 %v6432, %v6396
        %v6435 = vmax.f32 %v6433, %v6398
        %v6436 = vmax.f32 %v6434, %v6400
        %v6437 = vmax.f32 %v6435, %v6402
        %v6438 = vmax.f32 %v6436, %v6404
        %v6439 = vmax.f32 %v6437, %v6406
        %v6440 = vmax.f32 %v6438, %v6408
        %v6441 = vmax.f32 %v6439, %v6410
        %v6442 = vmax.f32 %v6440, %v6412
        %v6443 = vmax.f32 %v6441, %v6414
        %v6444 = vmax.f32 %v6442, %v6443
        %v6445 = vsub.f32 %v6383, %v6429
        %v6446 = vsub.f32 %v6384, %v6444
        %v6447 = vsub.f32 %v6385, %v6429
        %v6448 = vsub.f32 %v6386, %v6444
        %v6449 = vsub.f32 %v6387, %v6429
        %v6450 = vsub.f32 %v6388, %v6444
        %v6451 = vsub.f32 %v6389, %v6429
        %v6452 = vsub.f32 %v6390, %v6444
        %v6453 = vsub.f32 %v6391, %v6429
        %v6454 = vsub.f32 %v6392, %v6444
        %v6455 = vsub.f32 %v6393, %v6429
        %v6456 = vsub.f32 %v6394, %v6444
        %v6457 = vsub.f32 %v6395, %v6429
        %v6458 = vsub.f32 %v6396, %v6444
        %v6459 = vsub.f32 %v6397, %v6429
        %v6460 = vsub.f32 %v6398, %v6444
        %v6461 = vsub.f32 %v6399, %v6429
        %v6462 = vsub.f32 %v6400, %v6444
        %v6463 = vsub.f32 %v6401, %v6429
        %v6464 = vsub.f32 %v6402, %v6444
        %v6465 = vsub.f32 %v6403, %v6429
        %v6466 = vsub.f32 %v6404, %v6444
        %v6467 = vsub.f32 %v6405, %v6429
        %v6468 = vsub.f32 %v6406, %v6444
        %v6469 = vsub.f32 %v6407, %v6429
        %v6470 = vsub.f32 %v6408, %v6444
        %v6471 = vsub.f32 %v6409, %v6429
        %v6472 = vsub.f32 %v6410, %v6444
        %v6473 = vsub.f32 %v6411, %v6429
        %v6474 = vsub.f32 %v6412, %v6444
        %v6475 = vsub.f32 %v6413, %v6429
        %v6476 = vsub.f32 %v6414, %v6444
        %v6477 = vmul.f32 %v6445, 1.442695
        %v6478 = vpow.pop %v6477
        %v6479 = vmul.f32 %v6446, 1.442695
        %v6480 = vpow.pop %v6479
        %v6481 = vmul.f32 %v6447, 1.442695
        %v6482 = vpow.pop %v6481
        %v6483 = vmul.f32 %v6448, 1.442695
        %v6484 = vpow.pop %v6483
        %v6485 = vmul.f32 %v6449, 1.442695
        %v6486 = vpow.pop %v6485
        %v6487 = vmul.f32 %v6450, 1.442695
        %v6488 = vpow.pop %v6487
        %v6489 = vmul.f32 %v6451, 1.442695
        %v6490 = vpow.pop %v6489
        %v6491 = vmul.f32 %v6452, 1.442695
        %v6492 = vpow.pop %v6491
        %v6493 = vmul.f32 %v6453, 1.442695
        %v6494 = vpow.pop %v6493
        %v6495 = vmul.f32 %v6454, 1.442695
        %v6496 = vpow.pop %v6495
        %v6497 = vmul.f32 %v6455, 1.442695
        %v6498 = vpow.pop %v6497
        %v6499 = vmul.f32 %v6456, 1.442695
        %v6500 = vpow.pop %v6499
        %v6501 = vmul.f32 %v6457, 1.442695
        %v6502 = vpow.pop %v6501
        %v6503 = vmul.f32 %v6458, 1.442695
        %v6504 = vpow.pop %v6503
        %v6505 = vmul.f32 %v6459, 1.442695
        %v6506 = vpow.pop %v6505
        %v6507 = vmul.f32 %v6460, 1.442695
        %v6508 = vpow.pop %v6507
        %v6509 = vmul.f32 %v6461, 1.442695
        %v6510 = vpow.pop %v6509
        %v6511 = vmul.f32 %v6462, 1.442695
        %v6512 = vpow.pop %v6511
        %v6513 = vmul.f32 %v6463, 1.442695
        %v6514 = vpow.pop %v6513
        %v6515 = vmul.f32 %v6464, 1.442695
        %v6516 = vpow.pop %v6515
        %v6517 = vmul.f32 %v6465, 1.442695
        %v6518 = vpow.pop %v6517
        %v6519 = vmul.f32 %v6466, 1.442695
        %v6520 = vpow.pop %v6519
        %v6521 = vmul.f32 %v6467, 1.442695
        %v6522 = vpow.pop %v6521
        %v6523 = vmul.f32 %v6468, 1.442695
        %v6524 = vpow.pop %v6523
        %v6525 = vmul.f32 %v6469, 1.442695
        %v6526 = vpow.pop %v6525
        %v6527 = vmul.f32 %v6470, 1.442695
        %v6528 = vpow.pop %v6527
        %v6529 = vmul.f32 %v6471, 1.442695
        %v6530 = vpow.pop %v6529
        %v6531 = vmul.f32 %v6472, 1.442695
        %v6532 = vpow.pop %v6531
        %v6533 = vmul.f32 %v6473, 1.442695
        %v6534 = vpow.pop %v6533
        %v6535 = vmul.f32 %v6474, 1.442695
        %v6536 = vpow.pop %v6535
        %v6537 = vmul.f32 %v6475, 1.442695
        %v6538 = vpow.pop %v6537
        %v6539 = vmul.f32 %v6476, 1.442695
        %v6540 = vpow.pop %v6539
        %v6541 = vadd.f32 %v6478, %v6482
        %v6542 = vadd.f32 %v6541, %v6486
        %v6543 = vadd.f32 %v6542, %v6490
        %v6544 = vadd.f32 %v6543, %v6494
        %v6545 = vadd.f32 %v6544, %v6498
        %v6546 = vadd.f32 %v6545, %v6502
        %v6547 = vadd.f32 %v6546, %v6506
        %v6548 = vadd.f32 %v6547, %v6510
        %v6549 = vadd.f32 %v6548, %v6514
        %v6550 = vadd.f32 %v6549, %v6518
        %v6551 = vadd.f32 %v6550, %v6522
        %v6552 = vadd.f32 %v6551, %v6526
        %v6553 = vadd.f32 %v6552, %v6530
        %v6554 = vadd.f32 %v6553, %v6534
        %v6555 = vadd.f32 %v6554, %v6538
        %v6556 = vadd.f32 %v6480, %v6484
        %v6557 = vadd.f32 %v6556, %v6488
        %v6558 = vadd.f32 %v6557, %v6492
        %v6559 = vadd.f32 %v6558, %v6496
        %v6560 = vadd.f32 %v6559, %v6500
        %v6561 = vadd.f32 %v6560, %v6504
        %v6562 = vadd.f32 %v6561, %v6508
        %v6563 = vadd.f32 %v6562, %v6512
        %v6564 = vadd.f32 %v6563, %v6516
        %v6565 = vadd.f32 %v6564, %v6520
        %v6566 = vadd.f32 %v6565, %v6524
        %v6567 = vadd.f32 %v6566, %v6528
        %v6568 = vadd.f32 %v6567, %v6532
        %v6569 = vadd.f32 %v6568, %v6536
        %v6570 = vadd.f32 %v6569, %v6540
        %v6571 = vrcp.pop %v6555
        %v6572 = vmul.f32 1.0, %v6571
        %v6573 = vrcp.pop %v6570
        %v6574 = vmul.f32 1.0, %v6573
        %v6575 = vmul.f32 %v6478, %v6572
        %v6576 = vmul.f32 %v6480, %v6574
        %v6577 = vmul.f32 %v6482, %v6572
        %v6578 = vmul.f32 %v6484, %v6574
        %v6579 = vmul.f32 %v6486, %v6572
        %v6580 = vmul.f32 %v6488, %v6574
        %v6581 = vmul.f32 %v6490, %v6572
        %v6582 = vmul.f32 %v6492, %v6574
        %v6583 = vmul.f32 %v6494, %v6572
        %v6584 = vmul.f32 %v6496, %v6574
        %v6585 = vmul.f32 %v6498, %v6572
        %v6586 = vmul.f32 %v6500, %v6574
        %v6587 = vmul.f32 %v6502, %v6572
        %v6588 = vmul.f32 %v6504, %v6574
        %v6589 = vmul.f32 %v6506, %v6572
        %v6590 = vmul.f32 %v6508, %v6574
        %v6591 = vmul.f32 %v6510, %v6572
        %v6592 = vmul.f32 %v6512, %v6574
        %v6593 = vmul.f32 %v6514, %v6572
        %v6594 = vmul.f32 %v6516, %v6574
        %v6595 = vmul.f32 %v6518, %v6572
        %v6596 = vmul.f32 %v6520, %v6574
        %v6597 = vmul.f32 %v6522, %v6572
        %v6598 = vmul.f32 %v6524, %v6574
        %v6599 = vmul.f32 %v6526, %v6572
        %v6600 = vmul.f32 %v6528, %v6574
        %v6601 = vmul.f32 %v6530, %v6572
        %v6602 = vmul.f32 %v6532, %v6574
        %v6603 = vmul.f32 %v6534, %v6572
        %v6604 = vmul.f32 %v6536, %v6574
        %v6605 = vmul.f32 %v6538, %v6572
        %v6606 = vmul.f32 %v6540, %v6574
        %v6609 = vcombine.high %v4779, %v4779
        %v6611 = vunpack.c.l.s4 1966171168
        %v6612 = vunpack.c.0.s8 %v6611
        %v6613 = vlaneseq
        %v6614 = vshrl.u32 %v6613, 7
        %v6615 = vsub.s32 %v6612, %v6614
        %v6616 = vrot.slane %v4779, %v6615
        %v6618 = vunpack.c.l.s4 1966171168
        %v6619 = vunpack.c.0.s8 %v6618
        %v6620 = vlaneseq
        %v6621 = vshrl.u32 %v6620, 7
        %v6622 = vsub.s32 %v6619, %v6621
        %v6623 = vrot.slane %v6609, %v6622
        %v6624 = vcombine.high %v6616, %v6616
        %v6625 = vcombine.high %v6623, %v6623
        %v6627 = vunpack.c.l.s4 1966171168
        %v6628 = vunpack.c.0.s8 %v6627
        %v6629 = vlaneseq
        %v6630 = vshrl.u32 %v6629, 7
        %v6631 = vsub.s32 %v6628, %v6630
        %v6632 = vrot.slane %v6616, %v6631
        %v6634 = vunpack.c.l.s4 1966171168
        %v6635 = vunpack.c.0.s8 %v6634
        %v6636 = vlaneseq
        %v6637 = vshrl.u32 %v6636, 7
        %v6638 = vsub.s32 %v6635, %v6637
        %v6639 = vrot.slane %v6623, %v6638
        %v6641 = vunpack.c.l.s4 1966171168
        %v6642 = vunpack.c.0.s8 %v6641
        %v6643 = vlaneseq
        %v6644 = vshrl.u32 %v6643, 7
        %v6645 = vsub.s32 %v6642, %v6644
        %v6646 = vrot.slane %v6624, %v6645
        %v6648 = vunpack.c.l.s4 1966171168
        %v6649 = vunpack.c.0.s8 %v6648
        %v6650 = vlaneseq
        %v6651 = vshrl.u32 %v6650, 7
        %v6652 = vsub.s32 %v6649, %v6651
        %v6653 = vrot.slane %v6625, %v6652
        %v6654 = vcombine.high %v6632, %v6632
        %v6655 = vcombine.high %v6639, %v6639
        %v6656 = vcombine.high %v6646, %v6646
        %v6657 = vcombine.high %v6653, %v6653
        %v6658 = vcombine.high %v4780, %v4780
        %v6660 = vunpack.c.l.s4 1966171168
        %v6661 = vunpack.c.0.s8 %v6660
        %v6662 = vlaneseq
        %v6663 = vshrl.u32 %v6662, 7
        %v6664 = vsub.s32 %v6661, %v6663
        %v6665 = vrot.slane %v4780, %v6664
        %v6667 = vunpack.c.l.s4 1966171168
        %v6668 = vunpack.c.0.s8 %v6667
        %v6669 = vlaneseq
        %v6670 = vshrl.u32 %v6669, 7
        %v6671 = vsub.s32 %v6668, %v6670
        %v6672 = vrot.slane %v6658, %v6671
        %v6673 = vcombine.high %v6665, %v6665
        %v6674 = vcombine.high %v6672, %v6672
        %v6676 = vunpack.c.l.s4 1966171168
        %v6677 = vunpack.c.0.s8 %v6676
        %v6678 = vlaneseq
        %v6679 = vshrl.u32 %v6678, 7
        %v6680 = vsub.s32 %v6677, %v6679
        %v6681 = vrot.slane %v6665, %v6680
        %v6683 = vunpack.c.l.s4 1966171168
        %v6684 = vunpack.c.0.s8 %v6683
        %v6685 = vlaneseq
        %v6686 = vshrl.u32 %v6685, 7
        %v6687 = vsub.s32 %v6684, %v6686
        %v6688 = vrot.slane %v6672, %v6687
        %v6690 = vunpack.c.l.s4 1966171168
        %v6691 = vunpack.c.0.s8 %v6690
        %v6692 = vlaneseq
        %v6693 = vshrl.u32 %v6692, 7
        %v6694 = vsub.s32 %v6691, %v6693
        %v6695 = vrot.slane %v6673, %v6694
        %v6697 = vunpack.c.l.s4 1966171168
        %v6698 = vunpack.c.0.s8 %v6697
        %v6699 = vlaneseq
        %v6700 = vshrl.u32 %v6699, 7
        %v6701 = vsub.s32 %v6698, %v6700
        %v6702 = vrot.slane %v6674, %v6701
        %v6703 = vcombine.high %v6681, %v6681
        %v6704 = vcombine.high %v6688, %v6688
        %v6705 = vcombine.high %v6695, %v6695
        %v6706 = vcombine.high %v6702, %v6702
        %v6707 = vlaneseq
        %v6708 = vshrl.u32 %v6707, 7
        %v6709 = vsub.s32 0, %v6708
        %v6710 = vrot.slane %v6632, %v6709
        %v6711 = vlaneseq
        %v6712 = vshrl.u32 %v6711, 7
        %v6713 = vsub.s32 0, %v6712
        %v6714 = vrot.slane %v6646, %v6713
        %v6715 = vlaneseq
        %v6716 = vshrl.u32 %v6715, 7
        %v6717 = vsub.s32 0, %v6716
        %v6718 = vrot.slane %v6654, %v6717
        %v6719 = vlaneseq
        %v6720 = vshrl.u32 %v6719, 7
        %v6721 = vsub.s32 0, %v6720
        %v6722 = vrot.slane %v6656, %v6721
        %v6723 = vlaneseq
        %v6724 = vshrl.u32 %v6723, 7
        %v6725 = vsub.s32 0, %v6724
        %v6726 = vrot.slane %v6639, %v6725
        %v6727 = vlaneseq
        %v6728 = vshrl.u32 %v6727, 7
        %v6729 = vsub.s32 0, %v6728
        %v6730 = vrot.slane %v6653, %v6729
        %v6731 = vlaneseq
        %v6732 = vshrl.u32 %v6731, 7
        %v6733 = vsub.s32 0, %v6732
        %v6734 = vrot.slane %v6655, %v6733
        %v6735 = vlaneseq
        %v6736 = vshrl.u32 %v6735, 7
        %v6737 = vsub.s32 0, %v6736
        %v6738 = vrot.slane %v6657, %v6737
        %v6739 = vlaneseq
        %v6740 = vshrl.u32 %v6739, 7
        %v6741 = vsub.s32 0, %v6740
        %v6742 = vrot.slane %v6681, %v6741
        %v6743 = vlaneseq
        %v6744 = vshrl.u32 %v6743, 7
        %v6745 = vsub.s32 0, %v6744
        %v6746 = vrot.slane %v6695, %v6745
        %v6747 = vlaneseq
        %v6748 = vshrl.u32 %v6747, 7
        %v6749 = vsub.s32 0, %v6748
        %v6750 = vrot.slane %v6703, %v6749
        %v6751 = vlaneseq
        %v6752 = vshrl.u32 %v6751, 7
        %v6753 = vsub.s32 0, %v6752
        %v6754 = vrot.slane %v6705, %v6753
        %v6755 = vlaneseq
        %v6756 = vshrl.u32 %v6755, 7
        %v6757 = vsub.s32 0, %v6756
        %v6758 = vrot.slane %v6688, %v6757
        %v6759 = vlaneseq
        %v6760 = vshrl.u32 %v6759, 7
        %v6761 = vsub.s32 0, %v6760
        %v6762 = vrot.slane %v6702, %v6761
        %v6763 = vlaneseq
        %v6764 = vshrl.u32 %v6763, 7
        %v6765 = vsub.s32 0, %v6764
        %v6766 = vrot.slane %v6704, %v6765
        %v6767 = vlaneseq
        %v6768 = vshrl.u32 %v6767, 7
        %v6769 = vsub.s32 0, %v6768
        %v6770 = vrot.slane %v6706, %v6769
        %v6787 = vmul.f32 %v6575, %v6710
        %v6788 = vmul.f32 %v6576, %v6710
        %v6789 = vmul.f32 %v6577, %v6714
        %v6790 = vmul.f32 %v6578, %v6714
        %v6791 = vmul.f32 %v6579, %v6718
        %v6792 = vmul.f32 %v6580, %v6718
        %v6793 = vmul.f32 %v6581, %v6722
        %v6794 = vmul.f32 %v6582, %v6722
        %v6795 = vmul.f32 %v6583, %v6726
        %v6796 = vmul.f32 %v6584, %v6726
        %v6797 = vmul.f32 %v6585, %v6730
        %v6798 = vmul.f32 %v6586, %v6730
        %v6799 = vmul.f32 %v6587, %v6734
        %v6800 = vmul.f32 %v6588, %v6734
        %v6801 = vmul.f32 %v6589, %v6738
        %v6802 = vmul.f32 %v6590, %v6738
        %v6803 = vmul.f32 %v6591, %v6742
        %v6804 = vmul.f32 %v6592, %v6742
        %v6805 = vmul.f32 %v6593, %v6746
        %v6806 = vmul.f32 %v6594, %v6746
        %v6807 = vmul.f32 %v6595, %v6750
        %v6808 = vmul.f32 %v6596, %v6750
        %v6809 = vmul.f32 %v6597, %v6754
        %v6810 = vmul.f32 %v6598, %v6754
        %v6811 = vmul.f32 %v6599, %v6758
        %v6812 = vmul.f32 %v6600, %v6758
        %v6813 = vmul.f32 %v6601, %v6762
        %v6814 = vmul.f32 %v6602, %v6762
        %v6815 = vmul.f32 %v6603, %v6766
        %v6816 = vmul.f32 %v6604, %v6766
        %v6817 = vmul.f32 %v6605, %v6770
        %v6818 = vmul.f32 %v6606, %v6770
        %v6819 = vadd.f32 %v6787, %v6789
        %v6820 = vadd.f32 %v6819, %v6791
        %v6821 = vadd.f32 %v6820, %v6793
        %v6822 = vadd.f32 %v6821, %v6795
        %v6823 = vadd.f32 %v6822, %v6797
        %v6824 = vadd.f32 %v6823, %v6799
        %v6825 = vadd.f32 %v6824, %v6801
        %v6826 = vadd.f32 %v6825, %v6803
        %v6827 = vadd.f32 %v6826, %v6805
        %v6828 = vadd.f32 %v6827, %v6807
        %v6829 = vadd.f32 %v6828, %v6809
        %v6830 = vadd.f32 %v6829, %v6811
        %v6831 = vadd.f32 %v6830, %v6813
        %v6832 = vadd.f32 %v6831, %v6815
        %v6833 = vadd.f32 %v6832, %v6817
        %v6834 = vadd.f32 %v6788, %v6790
        %v6835 = vadd.f32 %v6834, %v6792
        %v6836 = vadd.f32 %v6835, %v6794
        %v6837 = vadd.f32 %v6836, %v6796
        %v6838 = vadd.f32 %v6837, %v6798
        %v6839 = vadd.f32 %v6838, %v6800
        %v6840 = vadd.f32 %v6839, %v6802
        %v6841 = vadd.f32 %v6840, %v6804
        %v6842 = vadd.f32 %v6841, %v6806
        %v6843 = vadd.f32 %v6842, %v6808
        %v6844 = vadd.f32 %v6843, %v6810
        %v6845 = vadd.f32 %v6844, %v6812
        %v6846 = vadd.f32 %v6845, %v6814
        %v6847 = vadd.f32 %v6846, %v6816
        %v6848 = vadd.f32 %v6847, %v6818
        %s6849 = scalar_lea.vmem %s6, 1024
        %v6850 = vld [vmem:[%s6849] sm:$0xff]
        %v6851 = vld [vmem:[%s6849 + $0x8] sm:$0xff]
        %v6852 = vld [vmem:[%s6849 + $0x10] sm:$0xff]
        %v6853 = vld [vmem:[%s6849 + $0x18] sm:$0xff]
        %v6854 = vld [vmem:[%s6849 + $0x20] sm:$0xff]
        %v6855 = vld [vmem:[%s6849 + $0x28] sm:$0xff]
        %v6856 = vld [vmem:[%s6849 + $0x30] sm:$0xff]
        %v6857 = vld [vmem:[%s6849 + $0x38] sm:$0xff]
        %v6858 = vld [vmem:[%s6849 + $0x40] sm:$0xff]
        %v6859 = vld [vmem:[%s6849 + $0x48] sm:$0xff]
        %v6860 = vld [vmem:[%s6849 + $0x50] sm:$0xff]
        %v6861 = vld [vmem:[%s6849 + $0x58] sm:$0xff]
        %v6862 = vld [vmem:[%s6849 + $0x60] sm:$0xff]
        %v6863 = vld [vmem:[%s6849 + $0x68] sm:$0xff]
        %v6864 = vld [vmem:[%s6849 + $0x70] sm:$0xff]
        %v6865 = vld [vmem:[%s6849 + $0x78] sm:$0xff]
        %v6866 = vld [vmem:[%s6849 + $0x80] sm:$0xff]
        %v6867 = vld [vmem:[%s6849 + $0x88] sm:$0xff]
        %v6868 = vld [vmem:[%s6849 + $0x90] sm:$0xff]
        %v6869 = vld [vmem:[%s6849 + $0x98] sm:$0xff]
        %v6870 = vld [vmem:[%s6849 + $0xa0] sm:$0xff]
        %v6871 = vld [vmem:[%s6849 + $0xa8] sm:$0xff]
        %v6872 = vld [vmem:[%s6849 + $0xb0] sm:$0xff]
        %v6873 = vld [vmem:[%s6849 + $0xb8] sm:$0xff]
        %v6874 = vld [vmem:[%s6849 + $0xc0] sm:$0xff]
        %v6875 = vld [vmem:[%s6849 + $0xc8] sm:$0xff]
        %v6876 = vld [vmem:[%s6849 + $0xd0] sm:$0xff]
        %v6877 = vld [vmem:[%s6849 + $0xd8] sm:$0xff]
        %v6878 = vld [vmem:[%s6849 + $0xe0] sm:$0xff]
        %v6879 = vld [vmem:[%s6849 + $0xe8] sm:$0xff]
        %v6880 = vld [vmem:[%s6849 + $0xf0] sm:$0xff]
        %v6881 = vld [vmem:[%s6849 + $0xf8] sm:$0xff]
        %6883 = vset.pattern.permute.xlu0 0
        %6884 = vperm.xlu0 %6883, %v6850
        %v6885 = vpop.permute.xlu0 %6884
        %6888 = vset.pattern.permute.xlu0 0
        %6889 = vperm.xlu0 %6888, %v6851
        %v6890 = vpop.permute.xlu0 %6889
        %6893 = vset.pattern.permute.xlu0 0
        %6894 = vperm.xlu0 %6893, %v6852
        %v6895 = vpop.permute.xlu0 %6894
        %6898 = vset.pattern.permute.xlu0 0
        %6899 = vperm.xlu0 %6898, %v6853
        %v6900 = vpop.permute.xlu0 %6899
        %6903 = vset.pattern.permute.xlu0 0
        %6904 = vperm.xlu0 %6903, %v6854
        %v6905 = vpop.permute.xlu0 %6904
        %6908 = vset.pattern.permute.xlu0 0
        %6909 = vperm.xlu0 %6908, %v6855
        %v6910 = vpop.permute.xlu0 %6909
        %6913 = vset.pattern.permute.xlu0 0
        %6914 = vperm.xlu0 %6913, %v6856
        %v6915 = vpop.permute.xlu0 %6914
        %6918 = vset.pattern.permute.xlu0 0
        %6919 = vperm.xlu0 %6918, %v6857
        %v6920 = vpop.permute.xlu0 %6919
        %6923 = vset.pattern.permute.xlu0 0
        %6924 = vperm.xlu0 %6923, %v6858
        %v6925 = vpop.permute.xlu0 %6924
        %6928 = vset.pattern.permute.xlu0 0
        %6929 = vperm.xlu0 %6928, %v6859
        %v6930 = vpop.permute.xlu0 %6929
        %6933 = vset.pattern.permute.xlu0 0
        %6934 = vperm.xlu0 %6933, %v6860
        %v6935 = vpop.permute.xlu0 %6934
        %6938 = vset.pattern.permute.xlu0 0
        %6939 = vperm.xlu0 %6938, %v6861
        %v6940 = vpop.permute.xlu0 %6939
        %6943 = vset.pattern.permute.xlu0 0
        %6944 = vperm.xlu0 %6943, %v6862
        %v6945 = vpop.permute.xlu0 %6944
        %6948 = vset.pattern.permute.xlu0 0
        %6949 = vperm.xlu0 %6948, %v6863
        %v6950 = vpop.permute.xlu0 %6949
        %6953 = vset.pattern.permute.xlu0 0
        %6954 = vperm.xlu0 %6953, %v6864
        %v6955 = vpop.permute.xlu0 %6954
        %6958 = vset.pattern.permute.xlu0 0
        %6959 = vperm.xlu0 %6958, %v6865
        %v6960 = vpop.permute.xlu0 %6959
        %6963 = vset.pattern.permute.xlu0 0
        %6964 = vperm.xlu0 %6963, %v6866
        %v6965 = vpop.permute.xlu0 %6964
        %6968 = vset.pattern.permute.xlu0 0
        %6969 = vperm.xlu0 %6968, %v6867
        %v6970 = vpop.permute.xlu0 %6969
        %6973 = vset.pattern.permute.xlu0 0
        %6974 = vperm.xlu0 %6973, %v6868
        %v6975 = vpop.permute.xlu0 %6974
        %6978 = vset.pattern.permute.xlu0 0
        %6979 = vperm.xlu0 %6978, %v6869
        %v6980 = vpop.permute.xlu0 %6979
        %6983 = vset.pattern.permute.xlu0 0
        %6984 = vperm.xlu0 %6983, %v6870
        %v6985 = vpop.permute.xlu0 %6984
        %6988 = vset.pattern.permute.xlu0 0
        %6989 = vperm.xlu0 %6988, %v6871
        %v6990 = vpop.permute.xlu0 %6989
        %6993 = vset.pattern.permute.xlu0 0
        %6994 = vperm.xlu0 %6993, %v6872
        %v6995 = vpop.permute.xlu0 %6994
        %6998 = vset.pattern.permute.xlu0 0
        %6999 = vperm.xlu0 %6998, %v6873
        %v7000 = vpop.permute.xlu0 %6999
        %7003 = vset.pattern.permute.xlu0 0
        %7004 = vperm.xlu0 %7003, %v6874
        %v7005 = vpop.permute.xlu0 %7004
        %7008 = vset.pattern.permute.xlu0 0
        %7009 = vperm.xlu0 %7008, %v6875
        %v7010 = vpop.permute.xlu0 %7009
        %7013 = vset.pattern.permute.xlu0 0
        %7014 = vperm.xlu0 %7013, %v6876
        %v7015 = vpop.permute.xlu0 %7014
        %7018 = vset.pattern.permute.xlu0 0
        %7019 = vperm.xlu0 %7018, %v6877
        %v7020 = vpop.permute.xlu0 %7019
        %7023 = vset.pattern.permute.xlu0 0
        %7024 = vperm.xlu0 %7023, %v6878
        %v7025 = vpop.permute.xlu0 %7024
        %7028 = vset.pattern.permute.xlu0 0
        %7029 = vperm.xlu0 %7028, %v6879
        %v7030 = vpop.permute.xlu0 %7029
        %7033 = vset.pattern.permute.xlu0 0
        %7034 = vperm.xlu0 %7033, %v6880
        %v7035 = vpop.permute.xlu0 %7034
        %7038 = vset.pattern.permute.xlu0 0
        %7039 = vperm.xlu0 %7038, %v6881
        %v7040 = vpop.permute.xlu0 %7039
        %v7042 = vmul.f32 %v6575, %v6885
        %v7043 = vmul.f32 %v6576, %v6890
        %v7044 = vmul.f32 %v6577, %v6895
        %v7045 = vmul.f32 %v6578, %v6900
        %v7046 = vmul.f32 %v6579, %v6905
        %v7047 = vmul.f32 %v6580, %v6910
        %v7048 = vmul.f32 %v6581, %v6915
        %v7049 = vmul.f32 %v6582, %v6920
        %v7050 = vmul.f32 %v6583, %v6925
        %v7051 = vmul.f32 %v6584, %v6930
        %v7052 = vmul.f32 %v6585, %v6935
        %v7053 = vmul.f32 %v6586, %v6940
        %v7054 = vmul.f32 %v6587, %v6945
        %v7055 = vmul.f32 %v6588, %v6950
        %v7056 = vmul.f32 %v6589, %v6955
        %v7057 = vmul.f32 %v6590, %v6960
        %v7058 = vmul.f32 %v6591, %v6965
        %v7059 = vmul.f32 %v6592, %v6970
        %v7060 = vmul.f32 %v6593, %v6975
        %v7061 = vmul.f32 %v6594, %v6980
        %v7062 = vmul.f32 %v6595, %v6985
        %v7063 = vmul.f32 %v6596, %v6990
        %v7064 = vmul.f32 %v6597, %v6995
        %v7065 = vmul.f32 %v6598, %v7000
        %v7066 = vmul.f32 %v6599, %v7005
        %v7067 = vmul.f32 %v6600, %v7010
        %v7068 = vmul.f32 %v6601, %v7015
        %v7069 = vmul.f32 %v6602, %v7020
        %v7070 = vmul.f32 %v6603, %v7025
        %v7071 = vmul.f32 %v6604, %v7030
        %v7072 = vmul.f32 %v6605, %v7035
        %v7073 = vmul.f32 %v6606, %v7040
        %v7074 = vadd.f32 %v7042, %v7044
        %v7075 = vadd.f32 %v7074, %v7046
        %v7076 = vadd.f32 %v7075, %v7048
        %v7077 = vadd.f32 %v7076, %v7050
        %v7078 = vadd.f32 %v7077, %v7052
        %v7079 = vadd.f32 %v7078, %v7054
        %v7080 = vadd.f32 %v7079, %v7056
        %v7081 = vadd.f32 %v7080, %v7058
        %v7082 = vadd.f32 %v7081, %v7060
        %v7083 = vadd.f32 %v7082, %v7062
        %v7084 = vadd.f32 %v7083, %v7064
        %v7085 = vadd.f32 %v7084, %v7066
        %v7086 = vadd.f32 %v7085, %v7068
        %v7087 = vadd.f32 %v7086, %v7070
        %v7088 = vadd.f32 %v7087, %v7072
        %v7089 = vadd.f32 %v7043, %v7045
        %v7090 = vadd.f32 %v7089, %v7047
        %v7091 = vadd.f32 %v7090, %v7049
        %v7092 = vadd.f32 %v7091, %v7051
        %v7093 = vadd.f32 %v7092, %v7053
        %v7094 = vadd.f32 %v7093, %v7055
        %v7095 = vadd.f32 %v7094, %v7057
        %v7096 = vadd.f32 %v7095, %v7059
        %v7097 = vadd.f32 %v7096, %v7061
        %v7098 = vadd.f32 %v7097, %v7063
        %v7099 = vadd.f32 %v7098, %v7065
        %v7100 = vadd.f32 %v7099, %v7067
        %v7101 = vadd.f32 %v7100, %v7069
        %v7102 = vadd.f32 %v7101, %v7071
        %v7103 = vadd.f32 %v7102, %v7073
        %v7104 = vadd.f32 %v6833, %v7088
        %v7105 = vadd.f32 %v6848, %v7103
        %s7106 = sld [smem:[#allocation7 + $0x4]]
        %v7107 = vstv %s7106
        %v7108 = vadd.f32 %v7104, %v7107
        %v7109 = vadd.f32 %v7105, %v7107
        %s7110 = scalar_lea.vmem %s411, 64 [#allocation9]
        %7111 = vst [vmem:[%s7110] sm:$0xff] %v7108
        %7112 = vst [vmem:[%s7110 + $0x8] sm:$0xff] %v7109
        %v7115 = vcombine.high %v4829, %v4829
        %v7117 = vunpack.c.l.s4 1966171168
        %v7118 = vunpack.c.0.s8 %v7117
        %v7119 = vlaneseq
        %v7120 = vshrl.u32 %v7119, 7
        %v7121 = vsub.s32 %v7118, %v7120
        %v7122 = vrot.slane %v4829, %v7121
        %v7124 = vunpack.c.l.s4 1966171168
        %v7125 = vunpack.c.0.s8 %v7124
        %v7126 = vlaneseq
        %v7127 = vshrl.u32 %v7126, 7
        %v7128 = vsub.s32 %v7125, %v7127
        %v7129 = vrot.slane %v7115, %v7128
        %v7130 = vcombine.high %v7122, %v7122
        %v7131 = vcombine.high %v7129, %v7129
        %v7133 = vunpack.c.l.s4 1966171168
        %v7134 = vunpack.c.0.s8 %v7133
        %v7135 = vlaneseq
        %v7136 = vshrl.u32 %v7135, 7
        %v7137 = vsub.s32 %v7134, %v7136
        %v7138 = vrot.slane %v7122, %v7137
        %v7140 = vunpack.c.l.s4 1966171168
        %v7141 = vunpack.c.0.s8 %v7140
        %v7142 = vlaneseq
        %v7143 = vshrl.u32 %v7142, 7
        %v7144 = vsub.s32 %v7141, %v7143
        %v7145 = vrot.slane %v7129, %v7144
        %v7147 = vunpack.c.l.s4 1966171168
        %v7148 = vunpack.c.0.s8 %v7147
        %v7149 = vlaneseq
        %v7150 = vshrl.u32 %v7149, 7
        %v7151 = vsub.s32 %v7148, %v7150
        %v7152 = vrot.slane %v7130, %v7151
        %v7154 = vunpack.c.l.s4 1966171168
        %v7155 = vunpack.c.0.s8 %v7154
        %v7156 = vlaneseq
        %v7157 = vshrl.u32 %v7156, 7
        %v7158 = vsub.s32 %v7155, %v7157
        %v7159 = vrot.slane %v7131, %v7158
        %v7160 = vcombine.high %v7138, %v7138
        %v7161 = vcombine.high %v7145, %v7145
        %v7162 = vcombine.high %v7152, %v7152
        %v7163 = vcombine.high %v7159, %v7159
        %v7164 = vcombine.high %v4830, %v4830
        %v7166 = vunpack.c.l.s4 1966171168
        %v7167 = vunpack.c.0.s8 %v7166
        %v7168 = vlaneseq
        %v7169 = vshrl.u32 %v7168, 7
        %v7170 = vsub.s32 %v7167, %v7169
        %v7171 = vrot.slane %v4830, %v7170
        %v7173 = vunpack.c.l.s4 1966171168
        %v7174 = vunpack.c.0.s8 %v7173
        %v7175 = vlaneseq
        %v7176 = vshrl.u32 %v7175, 7
        %v7177 = vsub.s32 %v7174, %v7176
        %v7178 = vrot.slane %v7164, %v7177
        %v7179 = vcombine.high %v7171, %v7171
        %v7180 = vcombine.high %v7178, %v7178
        %v7182 = vunpack.c.l.s4 1966171168
        %v7183 = vunpack.c.0.s8 %v7182
        %v7184 = vlaneseq
        %v7185 = vshrl.u32 %v7184, 7
        %v7186 = vsub.s32 %v7183, %v7185
        %v7187 = vrot.slane %v7171, %v7186
        %v7189 = vunpack.c.l.s4 1966171168
        %v7190 = vunpack.c.0.s8 %v7189
        %v7191 = vlaneseq
        %v7192 = vshrl.u32 %v7191, 7
        %v7193 = vsub.s32 %v7190, %v7192
        %v7194 = vrot.slane %v7178, %v7193
        %v7196 = vunpack.c.l.s4 1966171168
        %v7197 = vunpack.c.0.s8 %v7196
        %v7198 = vlaneseq
        %v7199 = vshrl.u32 %v7198, 7
        %v7200 = vsub.s32 %v7197, %v7199
        %v7201 = vrot.slane %v7179, %v7200
        %v7203 = vunpack.c.l.s4 1966171168
        %v7204 = vunpack.c.0.s8 %v7203
        %v7205 = vlaneseq
        %v7206 = vshrl.u32 %v7205, 7
        %v7207 = vsub.s32 %v7204, %v7206
        %v7208 = vrot.slane %v7180, %v7207
        %v7209 = vcombine.high %v7187, %v7187
        %v7210 = vcombine.high %v7194, %v7194
        %v7211 = vcombine.high %v7201, %v7201
        %v7212 = vcombine.high %v7208, %v7208
        %v7213 = vlaneseq
        %v7214 = vshrl.u32 %v7213, 7
        %v7215 = vsub.s32 0, %v7214
        %v7216 = vrot.slane %v7138, %v7215
        %v7217 = vlaneseq
        %v7218 = vshrl.u32 %v7217, 7
        %v7219 = vsub.s32 0, %v7218
        %v7220 = vrot.slane %v7152, %v7219
        %v7221 = vlaneseq
        %v7222 = vshrl.u32 %v7221, 7
        %v7223 = vsub.s32 0, %v7222
        %v7224 = vrot.slane %v7160, %v7223
        %v7225 = vlaneseq
        %v7226 = vshrl.u32 %v7225, 7
        %v7227 = vsub.s32 0, %v7226
        %v7228 = vrot.slane %v7162, %v7227
        %v7229 = vlaneseq
        %v7230 = vshrl.u32 %v7229, 7
        %v7231 = vsub.s32 0, %v7230
        %v7232 = vrot.slane %v7145, %v7231
        %v7233 = vlaneseq
        %v7234 = vshrl.u32 %v7233, 7
        %v7235 = vsub.s32 0, %v7234
        %v7236 = vrot.slane %v7159, %v7235
        %v7237 = vlaneseq
        %v7238 = vshrl.u32 %v7237, 7
        %v7239 = vsub.s32 0, %v7238
        %v7240 = vrot.slane %v7161, %v7239
        %v7241 = vlaneseq
        %v7242 = vshrl.u32 %v7241, 7
        %v7243 = vsub.s32 0, %v7242
        %v7244 = vrot.slane %v7163, %v7243
        %v7245 = vlaneseq
        %v7246 = vshrl.u32 %v7245, 7
        %v7247 = vsub.s32 0, %v7246
        %v7248 = vrot.slane %v7187, %v7247
        %v7249 = vlaneseq
        %v7250 = vshrl.u32 %v7249, 7
        %v7251 = vsub.s32 0, %v7250
        %v7252 = vrot.slane %v7201, %v7251
        %v7253 = vlaneseq
        %v7254 = vshrl.u32 %v7253, 7
        %v7255 = vsub.s32 0, %v7254
        %v7256 = vrot.slane %v7209, %v7255
        %v7257 = vlaneseq
        %v7258 = vshrl.u32 %v7257, 7
        %v7259 = vsub.s32 0, %v7258
        %v7260 = vrot.slane %v7211, %v7259
        %v7261 = vlaneseq
        %v7262 = vshrl.u32 %v7261, 7
        %v7263 = vsub.s32 0, %v7262
        %v7264 = vrot.slane %v7194, %v7263
        %v7265 = vlaneseq
        %v7266 = vshrl.u32 %v7265, 7
        %v7267 = vsub.s32 0, %v7266
        %v7268 = vrot.slane %v7208, %v7267
        %v7269 = vlaneseq
        %v7270 = vshrl.u32 %v7269, 7
        %v7271 = vsub.s32 0, %v7270
        %v7272 = vrot.slane %v7210, %v7271
        %v7273 = vlaneseq
        %v7274 = vshrl.u32 %v7273, 7
        %v7275 = vsub.s32 0, %v7274
        %v7276 = vrot.slane %v7212, %v7275
        %v7293 = vmul.f32 %v6575, %v7216
        %v7294 = vmul.f32 %v6576, %v7216
        %v7295 = vmul.f32 %v6577, %v7220
        %v7296 = vmul.f32 %v6578, %v7220
        %v7297 = vmul.f32 %v6579, %v7224
        %v7298 = vmul.f32 %v6580, %v7224
        %v7299 = vmul.f32 %v6581, %v7228
        %v7300 = vmul.f32 %v6582, %v7228
        %v7301 = vmul.f32 %v6583, %v7232
        %v7302 = vmul.f32 %v6584, %v7232
        %v7303 = vmul.f32 %v6585, %v7236
        %v7304 = vmul.f32 %v6586, %v7236
        %v7305 = vmul.f32 %v6587, %v7240
        %v7306 = vmul.f32 %v6588, %v7240
        %v7307 = vmul.f32 %v6589, %v7244
        %v7308 = vmul.f32 %v6590, %v7244
        %v7309 = vmul.f32 %v6591, %v7248
        %v7310 = vmul.f32 %v6592, %v7248
        %v7311 = vmul.f32 %v6593, %v7252
        %v7312 = vmul.f32 %v6594, %v7252
        %v7313 = vmul.f32 %v6595, %v7256
        %v7314 = vmul.f32 %v6596, %v7256
        %v7315 = vmul.f32 %v6597, %v7260
        %v7316 = vmul.f32 %v6598, %v7260
        %v7317 = vmul.f32 %v6599, %v7264
        %v7318 = vmul.f32 %v6600, %v7264
        %v7319 = vmul.f32 %v6601, %v7268
        %v7320 = vmul.f32 %v6602, %v7268
        %v7321 = vmul.f32 %v6603, %v7272
        %v7322 = vmul.f32 %v6604, %v7272
        %v7323 = vmul.f32 %v6605, %v7276
        %v7324 = vmul.f32 %v6606, %v7276
        %v7325 = vadd.f32 %v7293, %v7295
        %v7326 = vadd.f32 %v7325, %v7297
        %v7327 = vadd.f32 %v7326, %v7299
        %v7328 = vadd.f32 %v7327, %v7301
        %v7329 = vadd.f32 %v7328, %v7303
        %v7330 = vadd.f32 %v7329, %v7305
        %v7331 = vadd.f32 %v7330, %v7307
        %v7332 = vadd.f32 %v7331, %v7309
        %v7333 = vadd.f32 %v7332, %v7311
        %v7334 = vadd.f32 %v7333, %v7313
        %v7335 = vadd.f32 %v7334, %v7315
        %v7336 = vadd.f32 %v7335, %v7317
        %v7337 = vadd.f32 %v7336, %v7319
        %v7338 = vadd.f32 %v7337, %v7321
        %v7339 = vadd.f32 %v7338, %v7323
        %v7340 = vadd.f32 %v7294, %v7296
        %v7341 = vadd.f32 %v7340, %v7298
        %v7342 = vadd.f32 %v7341, %v7300
        %v7343 = vadd.f32 %v7342, %v7302
        %v7344 = vadd.f32 %v7343, %v7304
        %v7345 = vadd.f32 %v7344, %v7306
        %v7346 = vadd.f32 %v7345, %v7308
        %v7347 = vadd.f32 %v7346, %v7310
        %v7348 = vadd.f32 %v7347, %v7312
        %v7349 = vadd.f32 %v7348, %v7314
        %v7350 = vadd.f32 %v7349, %v7316
        %v7351 = vadd.f32 %v7350, %v7318
        %v7352 = vadd.f32 %v7351, %v7320
        %v7353 = vadd.f32 %v7352, %v7322
        %v7354 = vadd.f32 %v7353, %v7324
        %s7355 = scalar_lea.vmem %s6, 1280
        %v7356 = vld [vmem:[%s7355] sm:$0xff]
        %v7357 = vld [vmem:[%s7355 + $0x8] sm:$0xff]
        %v7358 = vld [vmem:[%s7355 + $0x10] sm:$0xff]
        %v7359 = vld [vmem:[%s7355 + $0x18] sm:$0xff]
        %v7360 = vld [vmem:[%s7355 + $0x20] sm:$0xff]
        %v7361 = vld [vmem:[%s7355 + $0x28] sm:$0xff]
        %v7362 = vld [vmem:[%s7355 + $0x30] sm:$0xff]
        %v7363 = vld [vmem:[%s7355 + $0x38] sm:$0xff]
        %v7364 = vld [vmem:[%s7355 + $0x40] sm:$0xff]
        %v7365 = vld [vmem:[%s7355 + $0x48] sm:$0xff]
        %v7366 = vld [vmem:[%s7355 + $0x50] sm:$0xff]
        %v7367 = vld [vmem:[%s7355 + $0x58] sm:$0xff]
        %v7368 = vld [vmem:[%s7355 + $0x60] sm:$0xff]
        %v7369 = vld [vmem:[%s7355 + $0x68] sm:$0xff]
        %v7370 = vld [vmem:[%s7355 + $0x70] sm:$0xff]
        %v7371 = vld [vmem:[%s7355 + $0x78] sm:$0xff]
        %v7372 = vld [vmem:[%s7355 + $0x80] sm:$0xff]
        %v7373 = vld [vmem:[%s7355 + $0x88] sm:$0xff]
        %v7374 = vld [vmem:[%s7355 + $0x90] sm:$0xff]
        %v7375 = vld [vmem:[%s7355 + $0x98] sm:$0xff]
        %v7376 = vld [vmem:[%s7355 + $0xa0] sm:$0xff]
        %v7377 = vld [vmem:[%s7355 + $0xa8] sm:$0xff]
        %v7378 = vld [vmem:[%s7355 + $0xb0] sm:$0xff]
        %v7379 = vld [vmem:[%s7355 + $0xb8] sm:$0xff]
        %v7380 = vld [vmem:[%s7355 + $0xc0] sm:$0xff]
        %v7381 = vld [vmem:[%s7355 + $0xc8] sm:$0xff]
        %v7382 = vld [vmem:[%s7355 + $0xd0] sm:$0xff]
        %v7383 = vld [vmem:[%s7355 + $0xd8] sm:$0xff]
        %v7384 = vld [vmem:[%s7355 + $0xe0] sm:$0xff]
        %v7385 = vld [vmem:[%s7355 + $0xe8] sm:$0xff]
        %v7386 = vld [vmem:[%s7355 + $0xf0] sm:$0xff]
        %v7387 = vld [vmem:[%s7355 + $0xf8] sm:$0xff]
        %7389 = vset.pattern.permute.xlu0 0
        %7390 = vperm.xlu0 %7389, %v7356
        %v7391 = vpop.permute.xlu0 %7390
        %7394 = vset.pattern.permute.xlu0 0
        %7395 = vperm.xlu0 %7394, %v7357
        %v7396 = vpop.permute.xlu0 %7395
        %7399 = vset.pattern.permute.xlu0 0
        %7400 = vperm.xlu0 %7399, %v7358
        %v7401 = vpop.permute.xlu0 %7400
        %7404 = vset.pattern.permute.xlu0 0
        %7405 = vperm.xlu0 %7404, %v7359
        %v7406 = vpop.permute.xlu0 %7405
        %7409 = vset.pattern.permute.xlu0 0
        %7410 = vperm.xlu0 %7409, %v7360
        %v7411 = vpop.permute.xlu0 %7410
        %7414 = vset.pattern.permute.xlu0 0
        %7415 = vperm.xlu0 %7414, %v7361
        %v7416 = vpop.permute.xlu0 %7415
        %7419 = vset.pattern.permute.xlu0 0
        %7420 = vperm.xlu0 %7419, %v7362
        %v7421 = vpop.permute.xlu0 %7420
        %7424 = vset.pattern.permute.xlu0 0
        %7425 = vperm.xlu0 %7424, %v7363
        %v7426 = vpop.permute.xlu0 %7425
        %7429 = vset.pattern.permute.xlu0 0
        %7430 = vperm.xlu0 %7429, %v7364
        %v7431 = vpop.permute.xlu0 %7430
        %7434 = vset.pattern.permute.xlu0 0
        %7435 = vperm.xlu0 %7434, %v7365
        %v7436 = vpop.permute.xlu0 %7435
        %7439 = vset.pattern.permute.xlu0 0
        %7440 = vperm.xlu0 %7439, %v7366
        %v7441 = vpop.permute.xlu0 %7440
        %7444 = vset.pattern.permute.xlu0 0
        %7445 = vperm.xlu0 %7444, %v7367
        %v7446 = vpop.permute.xlu0 %7445
        %7449 = vset.pattern.permute.xlu0 0
        %7450 = vperm.xlu0 %7449, %v7368
        %v7451 = vpop.permute.xlu0 %7450
        %7454 = vset.pattern.permute.xlu0 0
        %7455 = vperm.xlu0 %7454, %v7369
        %v7456 = vpop.permute.xlu0 %7455
        %7459 = vset.pattern.permute.xlu0 0
        %7460 = vperm.xlu0 %7459, %v7370
        %v7461 = vpop.permute.xlu0 %7460
        %7464 = vset.pattern.permute.xlu0 0
        %7465 = vperm.xlu0 %7464, %v7371
        %v7466 = vpop.permute.xlu0 %7465
        %7469 = vset.pattern.permute.xlu0 0
        %7470 = vperm.xlu0 %7469, %v7372
        %v7471 = vpop.permute.xlu0 %7470
        %7474 = vset.pattern.permute.xlu0 0
        %7475 = vperm.xlu0 %7474, %v7373
        %v7476 = vpop.permute.xlu0 %7475
        %7479 = vset.pattern.permute.xlu0 0
        %7480 = vperm.xlu0 %7479, %v7374
        %v7481 = vpop.permute.xlu0 %7480
        %7484 = vset.pattern.permute.xlu0 0
        %7485 = vperm.xlu0 %7484, %v7375
        %v7486 = vpop.permute.xlu0 %7485
        %7489 = vset.pattern.permute.xlu0 0
        %7490 = vperm.xlu0 %7489, %v7376
        %v7491 = vpop.permute.xlu0 %7490
        %7494 = vset.pattern.permute.xlu0 0
        %7495 = vperm.xlu0 %7494, %v7377
        %v7496 = vpop.permute.xlu0 %7495
        %7499 = vset.pattern.permute.xlu0 0
        %7500 = vperm.xlu0 %7499, %v7378
        %v7501 = vpop.permute.xlu0 %7500
        %7504 = vset.pattern.permute.xlu0 0
        %7505 = vperm.xlu0 %7504, %v7379
        %v7506 = vpop.permute.xlu0 %7505
        %7509 = vset.pattern.permute.xlu0 0
        %7510 = vperm.xlu0 %7509, %v7380
        %v7511 = vpop.permute.xlu0 %7510
        %7514 = vset.pattern.permute.xlu0 0
        %7515 = vperm.xlu0 %7514, %v7381
        %v7516 = vpop.permute.xlu0 %7515
        %7519 = vset.pattern.permute.xlu0 0
        %7520 = vperm.xlu0 %7519, %v7382
        %v7521 = vpop.permute.xlu0 %7520
        %7524 = vset.pattern.permute.xlu0 0
        %7525 = vperm.xlu0 %7524, %v7383
        %v7526 = vpop.permute.xlu0 %7525
        %7529 = vset.pattern.permute.xlu0 0
        %7530 = vperm.xlu0 %7529, %v7384
        %v7531 = vpop.permute.xlu0 %7530
        %7534 = vset.pattern.permute.xlu0 0
        %7535 = vperm.xlu0 %7534, %v7385
        %v7536 = vpop.permute.xlu0 %7535
        %7539 = vset.pattern.permute.xlu0 0
        %7540 = vperm.xlu0 %7539, %v7386
        %v7541 = vpop.permute.xlu0 %7540
        %7544 = vset.pattern.permute.xlu0 0
        %7545 = vperm.xlu0 %7544, %v7387
        %v7546 = vpop.permute.xlu0 %7545
        %v7548 = vmul.f32 %v6575, %v7391
        %v7549 = vmul.f32 %v6576, %v7396
        %v7550 = vmul.f32 %v6577, %v7401
        %v7551 = vmul.f32 %v6578, %v7406
        %v7552 = vmul.f32 %v6579, %v7411
        %v7553 = vmul.f32 %v6580, %v7416
        %v7554 = vmul.f32 %v6581, %v7421
        %v7555 = vmul.f32 %v6582, %v7426
        %v7556 = vmul.f32 %v6583, %v7431
        %v7557 = vmul.f32 %v6584, %v7436
        %v7558 = vmul.f32 %v6585, %v7441
        %v7559 = vmul.f32 %v6586, %v7446
        %v7560 = vmul.f32 %v6587, %v7451
        %v7561 = vmul.f32 %v6588, %v7456
        %v7562 = vmul.f32 %v6589, %v7461
        %v7563 = vmul.f32 %v6590, %v7466
        %v7564 = vmul.f32 %v6591, %v7471
        %v7565 = vmul.f32 %v6592, %v7476
        %v7566 = vmul.f32 %v6593, %v7481
        %v7567 = vmul.f32 %v6594, %v7486
        %v7568 = vmul.f32 %v6595, %v7491
        %v7569 = vmul.f32 %v6596, %v7496
        %v7570 = vmul.f32 %v6597, %v7501
        %v7571 = vmul.f32 %v6598, %v7506
        %v7572 = vmul.f32 %v6599, %v7511
        %v7573 = vmul.f32 %v6600, %v7516
        %v7574 = vmul.f32 %v6601, %v7521
        %v7575 = vmul.f32 %v6602, %v7526
        %v7576 = vmul.f32 %v6603, %v7531
        %v7577 = vmul.f32 %v6604, %v7536
        %v7578 = vmul.f32 %v6605, %v7541
        %v7579 = vmul.f32 %v6606, %v7546
        %v7580 = vadd.f32 %v7548, %v7550
        %v7581 = vadd.f32 %v7580, %v7552
        %v7582 = vadd.f32 %v7581, %v7554
        %v7583 = vadd.f32 %v7582, %v7556
        %v7584 = vadd.f32 %v7583, %v7558
        %v7585 = vadd.f32 %v7584, %v7560
        %v7586 = vadd.f32 %v7585, %v7562
        %v7587 = vadd.f32 %v7586, %v7564
        %v7588 = vadd.f32 %v7587, %v7566
        %v7589 = vadd.f32 %v7588, %v7568
        %v7590 = vadd.f32 %v7589, %v7570
        %v7591 = vadd.f32 %v7590, %v7572
        %v7592 = vadd.f32 %v7591, %v7574
        %v7593 = vadd.f32 %v7592, %v7576
        %v7594 = vadd.f32 %v7593, %v7578
        %v7595 = vadd.f32 %v7549, %v7551
        %v7596 = vadd.f32 %v7595, %v7553
        %v7597 = vadd.f32 %v7596, %v7555
        %v7598 = vadd.f32 %v7597, %v7557
        %v7599 = vadd.f32 %v7598, %v7559
        %v7600 = vadd.f32 %v7599, %v7561
        %v7601 = vadd.f32 %v7600, %v7563
        %v7602 = vadd.f32 %v7601, %v7565
        %v7603 = vadd.f32 %v7602, %v7567
        %v7604 = vadd.f32 %v7603, %v7569
        %v7605 = vadd.f32 %v7604, %v7571
        %v7606 = vadd.f32 %v7605, %v7573
        %v7607 = vadd.f32 %v7606, %v7575
        %v7608 = vadd.f32 %v7607, %v7577
        %v7609 = vadd.f32 %v7608, %v7579
        %v7610 = vadd.f32 %v7339, %v7594
        %v7611 = vadd.f32 %v7354, %v7609
        %s7612 = sld [smem:[#allocation7 + $0x5]]
        %v7613 = vstv %s7612
        %v7614 = vadd.f32 %v7610, %v7613
        %v7615 = vadd.f32 %v7611, %v7613
        %s7616 = scalar_lea.vmem %s411, 80 [#allocation9]
        %7617 = vst [vmem:[%s7616] sm:$0xff] %v7614
        %7618 = vst [vmem:[%s7616 + $0x8] sm:$0xff] %v7615
        %v7621 = vcombine.high %v4879, %v4879
        %v7623 = vunpack.c.l.s4 1966171168
        %v7624 = vunpack.c.0.s8 %v7623
        %v7625 = vlaneseq
        %v7626 = vshrl.u32 %v7625, 7
        %v7627 = vsub.s32 %v7624, %v7626
        %v7628 = vrot.slane %v4879, %v7627
        %v7630 = vunpack.c.l.s4 1966171168
        %v7631 = vunpack.c.0.s8 %v7630
        %v7632 = vlaneseq
        %v7633 = vshrl.u32 %v7632, 7
        %v7634 = vsub.s32 %v7631, %v7633
        %v7635 = vrot.slane %v7621, %v7634
        %v7636 = vcombine.high %v7628, %v7628
        %v7637 = vcombine.high %v7635, %v7635
        %v7639 = vunpack.c.l.s4 1966171168
        %v7640 = vunpack.c.0.s8 %v7639
        %v7641 = vlaneseq
        %v7642 = vshrl.u32 %v7641, 7
        %v7643 = vsub.s32 %v7640, %v7642
        %v7644 = vrot.slane %v7628, %v7643
        %v7646 = vunpack.c.l.s4 1966171168
        %v7647 = vunpack.c.0.s8 %v7646
        %v7648 = vlaneseq
        %v7649 = vshrl.u32 %v7648, 7
        %v7650 = vsub.s32 %v7647, %v7649
        %v7651 = vrot.slane %v7635, %v7650
        %v7653 = vunpack.c.l.s4 1966171168
        %v7654 = vunpack.c.0.s8 %v7653
        %v7655 = vlaneseq
        %v7656 = vshrl.u32 %v7655, 7
        %v7657 = vsub.s32 %v7654, %v7656
        %v7658 = vrot.slane %v7636, %v7657
        %v7660 = vunpack.c.l.s4 1966171168
        %v7661 = vunpack.c.0.s8 %v7660
        %v7662 = vlaneseq
        %v7663 = vshrl.u32 %v7662, 7
        %v7664 = vsub.s32 %v7661, %v7663
        %v7665 = vrot.slane %v7637, %v7664
        %v7666 = vcombine.high %v7644, %v7644
        %v7667 = vcombine.high %v7651, %v7651
        %v7668 = vcombine.high %v7658, %v7658
        %v7669 = vcombine.high %v7665, %v7665
        %v7670 = vcombine.high %v4880, %v4880
        %v7672 = vunpack.c.l.s4 1966171168
        %v7673 = vunpack.c.0.s8 %v7672
        %v7674 = vlaneseq
        %v7675 = vshrl.u32 %v7674, 7
        %v7676 = vsub.s32 %v7673, %v7675
        %v7677 = vrot.slane %v4880, %v7676
        %v7679 = vunpack.c.l.s4 1966171168
        %v7680 = vunpack.c.0.s8 %v7679
        %v7681 = vlaneseq
        %v7682 = vshrl.u32 %v7681, 7
        %v7683 = vsub.s32 %v7680, %v7682
        %v7684 = vrot.slane %v7670, %v7683
        %v7685 = vcombine.high %v7677, %v7677
        %v7686 = vcombine.high %v7684, %v7684
        %v7688 = vunpack.c.l.s4 1966171168
        %v7689 = vunpack.c.0.s8 %v7688
        %v7690 = vlaneseq
        %v7691 = vshrl.u32 %v7690, 7
        %v7692 = vsub.s32 %v7689, %v7691
        %v7693 = vrot.slane %v7677, %v7692
        %v7695 = vunpack.c.l.s4 1966171168
        %v7696 = vunpack.c.0.s8 %v7695
        %v7697 = vlaneseq
        %v7698 = vshrl.u32 %v7697, 7
        %v7699 = vsub.s32 %v7696, %v7698
        %v7700 = vrot.slane %v7684, %v7699
        %v7702 = vunpack.c.l.s4 1966171168
        %v7703 = vunpack.c.0.s8 %v7702
        %v7704 = vlaneseq
        %v7705 = vshrl.u32 %v7704, 7
        %v7706 = vsub.s32 %v7703, %v7705
        %v7707 = vrot.slane %v7685, %v7706
        %v7709 = vunpack.c.l.s4 1966171168
        %v7710 = vunpack.c.0.s8 %v7709
        %v7711 = vlaneseq
        %v7712 = vshrl.u32 %v7711, 7
        %v7713 = vsub.s32 %v7710, %v7712
        %v7714 = vrot.slane %v7686, %v7713
        %v7715 = vcombine.high %v7693, %v7693
        %v7716 = vcombine.high %v7700, %v7700
        %v7717 = vcombine.high %v7707, %v7707
        %v7718 = vcombine.high %v7714, %v7714
        %v7719 = vlaneseq
        %v7720 = vshrl.u32 %v7719, 7
        %v7721 = vsub.s32 0, %v7720
        %v7722 = vrot.slane %v7644, %v7721
        %v7723 = vlaneseq
        %v7724 = vshrl.u32 %v7723, 7
        %v7725 = vsub.s32 0, %v7724
        %v7726 = vrot.slane %v7658, %v7725
        %v7727 = vlaneseq
        %v7728 = vshrl.u32 %v7727, 7
        %v7729 = vsub.s32 0, %v7728
        %v7730 = vrot.slane %v7666, %v7729
        %v7731 = vlaneseq
        %v7732 = vshrl.u32 %v7731, 7
        %v7733 = vsub.s32 0, %v7732
        %v7734 = vrot.slane %v7668, %v7733
        %v7735 = vlaneseq
        %v7736 = vshrl.u32 %v7735, 7
        %v7737 = vsub.s32 0, %v7736
        %v7738 = vrot.slane %v7651, %v7737
        %v7739 = vlaneseq
        %v7740 = vshrl.u32 %v7739, 7
        %v7741 = vsub.s32 0, %v7740
        %v7742 = vrot.slane %v7665, %v7741
        %v7743 = vlaneseq
        %v7744 = vshrl.u32 %v7743, 7
        %v7745 = vsub.s32 0, %v7744
        %v7746 = vrot.slane %v7667, %v7745
        %v7747 = vlaneseq
        %v7748 = vshrl.u32 %v7747, 7
        %v7749 = vsub.s32 0, %v7748
        %v7750 = vrot.slane %v7669, %v7749
        %v7751 = vlaneseq
        %v7752 = vshrl.u32 %v7751, 7
        %v7753 = vsub.s32 0, %v7752
        %v7754 = vrot.slane %v7693, %v7753
        %v7755 = vlaneseq
        %v7756 = vshrl.u32 %v7755, 7
        %v7757 = vsub.s32 0, %v7756
        %v7758 = vrot.slane %v7707, %v7757
        %v7759 = vlaneseq
        %v7760 = vshrl.u32 %v7759, 7
        %v7761 = vsub.s32 0, %v7760
        %v7762 = vrot.slane %v7715, %v7761
        %v7763 = vlaneseq
        %v7764 = vshrl.u32 %v7763, 7
        %v7765 = vsub.s32 0, %v7764
        %v7766 = vrot.slane %v7717, %v7765
        %v7767 = vlaneseq
        %v7768 = vshrl.u32 %v7767, 7
        %v7769 = vsub.s32 0, %v7768
        %v7770 = vrot.slane %v7700, %v7769
        %v7771 = vlaneseq
        %v7772 = vshrl.u32 %v7771, 7
        %v7773 = vsub.s32 0, %v7772
        %v7774 = vrot.slane %v7714, %v7773
        %v7775 = vlaneseq
        %v7776 = vshrl.u32 %v7775, 7
        %v7777 = vsub.s32 0, %v7776
        %v7778 = vrot.slane %v7716, %v7777
        %v7779 = vlaneseq
        %v7780 = vshrl.u32 %v7779, 7
        %v7781 = vsub.s32 0, %v7780
        %v7782 = vrot.slane %v7718, %v7781
        %v7799 = vmul.f32 %v6575, %v7722
        %v7800 = vmul.f32 %v6576, %v7722
        %v7801 = vmul.f32 %v6577, %v7726
        %v7802 = vmul.f32 %v6578, %v7726
        %v7803 = vmul.f32 %v6579, %v7730
        %v7804 = vmul.f32 %v6580, %v7730
        %v7805 = vmul.f32 %v6581, %v7734
        %v7806 = vmul.f32 %v6582, %v7734
        %v7807 = vmul.f32 %v6583, %v7738
        %v7808 = vmul.f32 %v6584, %v7738
        %v7809 = vmul.f32 %v6585, %v7742
        %v7810 = vmul.f32 %v6586, %v7742
        %v7811 = vmul.f32 %v6587, %v7746
        %v7812 = vmul.f32 %v6588, %v7746
        %v7813 = vmul.f32 %v6589, %v7750
        %v7814 = vmul.f32 %v6590, %v7750
        %v7815 = vmul.f32 %v6591, %v7754
        %v7816 = vmul.f32 %v6592, %v7754
        %v7817 = vmul.f32 %v6593, %v7758
        %v7818 = vmul.f32 %v6594, %v7758
        %v7819 = vmul.f32 %v6595, %v7762
        %v7820 = vmul.f32 %v6596, %v7762
        %v7821 = vmul.f32 %v6597, %v7766
        %v7822 = vmul.f32 %v6598, %v7766
        %v7823 = vmul.f32 %v6599, %v7770
        %v7824 = vmul.f32 %v6600, %v7770
        %v7825 = vmul.f32 %v6601, %v7774
        %v7826 = vmul.f32 %v6602, %v7774
        %v7827 = vmul.f32 %v6603, %v7778
        %v7828 = vmul.f32 %v6604, %v7778
        %v7829 = vmul.f32 %v6605, %v7782
        %v7830 = vmul.f32 %v6606, %v7782
        %v7831 = vadd.f32 %v7799, %v7801
        %v7832 = vadd.f32 %v7831, %v7803
        %v7833 = vadd.f32 %v7832, %v7805
        %v7834 = vadd.f32 %v7833, %v7807
        %v7835 = vadd.f32 %v7834, %v7809
        %v7836 = vadd.f32 %v7835, %v7811
        %v7837 = vadd.f32 %v7836, %v7813
        %v7838 = vadd.f32 %v7837, %v7815
        %v7839 = vadd.f32 %v7838, %v7817
        %v7840 = vadd.f32 %v7839, %v7819
        %v7841 = vadd.f32 %v7840, %v7821
        %v7842 = vadd.f32 %v7841, %v7823
        %v7843 = vadd.f32 %v7842, %v7825
        %v7844 = vadd.f32 %v7843, %v7827
        %v7845 = vadd.f32 %v7844, %v7829
        %v7846 = vadd.f32 %v7800, %v7802
        %v7847 = vadd.f32 %v7846, %v7804
        %v7848 = vadd.f32 %v7847, %v7806
        %v7849 = vadd.f32 %v7848, %v7808
        %v7850 = vadd.f32 %v7849, %v7810
        %v7851 = vadd.f32 %v7850, %v7812
        %v7852 = vadd.f32 %v7851, %v7814
        %v7853 = vadd.f32 %v7852, %v7816
        %v7854 = vadd.f32 %v7853, %v7818
        %v7855 = vadd.f32 %v7854, %v7820
        %v7856 = vadd.f32 %v7855, %v7822
        %v7857 = vadd.f32 %v7856, %v7824
        %v7858 = vadd.f32 %v7857, %v7826
        %v7859 = vadd.f32 %v7858, %v7828
        %v7860 = vadd.f32 %v7859, %v7830
        %s7861 = scalar_lea.vmem %s6, 1536
        %v7862 = vld [vmem:[%s7861] sm:$0xff]
        %v7863 = vld [vmem:[%s7861 + $0x8] sm:$0xff]
        %v7864 = vld [vmem:[%s7861 + $0x10] sm:$0xff]
        %v7865 = vld [vmem:[%s7861 + $0x18] sm:$0xff]
        %v7866 = vld [vmem:[%s7861 + $0x20] sm:$0xff]
        %v7867 = vld [vmem:[%s7861 + $0x28] sm:$0xff]
        %v7868 = vld [vmem:[%s7861 + $0x30] sm:$0xff]
        %v7869 = vld [vmem:[%s7861 + $0x38] sm:$0xff]
        %v7870 = vld [vmem:[%s7861 + $0x40] sm:$0xff]
        %v7871 = vld [vmem:[%s7861 + $0x48] sm:$0xff]
        %v7872 = vld [vmem:[%s7861 + $0x50] sm:$0xff]
        %v7873 = vld [vmem:[%s7861 + $0x58] sm:$0xff]
        %v7874 = vld [vmem:[%s7861 + $0x60] sm:$0xff]
        %v7875 = vld [vmem:[%s7861 + $0x68] sm:$0xff]
        %v7876 = vld [vmem:[%s7861 + $0x70] sm:$0xff]
        %v7877 = vld [vmem:[%s7861 + $0x78] sm:$0xff]
        %v7878 = vld [vmem:[%s7861 + $0x80] sm:$0xff]
        %v7879 = vld [vmem:[%s7861 + $0x88] sm:$0xff]
        %v7880 = vld [vmem:[%s7861 + $0x90] sm:$0xff]
        %v7881 = vld [vmem:[%s7861 + $0x98] sm:$0xff]
        %v7882 = vld [vmem:[%s7861 + $0xa0] sm:$0xff]
        %v7883 = vld [vmem:[%s7861 + $0xa8] sm:$0xff]
        %v7884 = vld [vmem:[%s7861 + $0xb0] sm:$0xff]
        %v7885 = vld [vmem:[%s7861 + $0xb8] sm:$0xff]
        %v7886 = vld [vmem:[%s7861 + $0xc0] sm:$0xff]
        %v7887 = vld [vmem:[%s7861 + $0xc8] sm:$0xff]
        %v7888 = vld [vmem:[%s7861 + $0xd0] sm:$0xff]
        %v7889 = vld [vmem:[%s7861 + $0xd8] sm:$0xff]
        %v7890 = vld [vmem:[%s7861 + $0xe0] sm:$0xff]
        %v7891 = vld [vmem:[%s7861 + $0xe8] sm:$0xff]
        %v7892 = vld [vmem:[%s7861 + $0xf0] sm:$0xff]
        %v7893 = vld [vmem:[%s7861 + $0xf8] sm:$0xff]
        %7895 = vset.pattern.permute.xlu0 0
        %7896 = vperm.xlu0 %7895, %v7862
        %v7897 = vpop.permute.xlu0 %7896
        %7900 = vset.pattern.permute.xlu0 0
        %7901 = vperm.xlu0 %7900, %v7863
        %v7902 = vpop.permute.xlu0 %7901
        %7905 = vset.pattern.permute.xlu0 0
        %7906 = vperm.xlu0 %7905, %v7864
        %v7907 = vpop.permute.xlu0 %7906
        %7910 = vset.pattern.permute.xlu0 0
        %7911 = vperm.xlu0 %7910, %v7865
        %v7912 = vpop.permute.xlu0 %7911
        %7915 = vset.pattern.permute.xlu0 0
        %7916 = vperm.xlu0 %7915, %v7866
        %v7917 = vpop.permute.xlu0 %7916
        %7920 = vset.pattern.permute.xlu0 0
        %7921 = vperm.xlu0 %7920, %v7867
        %v7922 = vpop.permute.xlu0 %7921
        %7925 = vset.pattern.permute.xlu0 0
        %7926 = vperm.xlu0 %7925, %v7868
        %v7927 = vpop.permute.xlu0 %7926
        %7930 = vset.pattern.permute.xlu0 0
        %7931 = vperm.xlu0 %7930, %v7869
        %v7932 = vpop.permute.xlu0 %7931
        %7935 = vset.pattern.permute.xlu0 0
        %7936 = vperm.xlu0 %7935, %v7870
        %v7937 = vpop.permute.xlu0 %7936
        %7940 = vset.pattern.permute.xlu0 0
        %7941 = vperm.xlu0 %7940, %v7871
        %v7942 = vpop.permute.xlu0 %7941
        %7945 = vset.pattern.permute.xlu0 0
        %7946 = vperm.xlu0 %7945, %v7872
        %v7947 = vpop.permute.xlu0 %7946
        %7950 = vset.pattern.permute.xlu0 0
        %7951 = vperm.xlu0 %7950, %v7873
        %v7952 = vpop.permute.xlu0 %7951
        %7955 = vset.pattern.permute.xlu0 0
        %7956 = vperm.xlu0 %7955, %v7874
        %v7957 = vpop.permute.xlu0 %7956
        %7960 = vset.pattern.permute.xlu0 0
        %7961 = vperm.xlu0 %7960, %v7875
        %v7962 = vpop.permute.xlu0 %7961
        %7965 = vset.pattern.permute.xlu0 0
        %7966 = vperm.xlu0 %7965, %v7876
        %v7967 = vpop.permute.xlu0 %7966
        %7970 = vset.pattern.permute.xlu0 0
        %7971 = vperm.xlu0 %7970, %v7877
        %v7972 = vpop.permute.xlu0 %7971
        %7975 = vset.pattern.permute.xlu0 0
        %7976 = vperm.xlu0 %7975, %v7878
        %v7977 = vpop.permute.xlu0 %7976
        %7980 = vset.pattern.permute.xlu0 0
        %7981 = vperm.xlu0 %7980, %v7879
        %v7982 = vpop.permute.xlu0 %7981
        %7985 = vset.pattern.permute.xlu0 0
        %7986 = vperm.xlu0 %7985, %v7880
        %v7987 = vpop.permute.xlu0 %7986
        %7990 = vset.pattern.permute.xlu0 0
        %7991 = vperm.xlu0 %7990, %v7881
        %v7992 = vpop.permute.xlu0 %7991
        %7995 = vset.pattern.permute.xlu0 0
        %7996 = vperm.xlu0 %7995, %v7882
        %v7997 = vpop.permute.xlu0 %7996
        %8000 = vset.pattern.permute.xlu0 0
        %8001 = vperm.xlu0 %8000, %v7883
        %v8002 = vpop.permute.xlu0 %8001
        %8005 = vset.pattern.permute.xlu0 0
        %8006 = vperm.xlu0 %8005, %v7884
        %v8007 = vpop.permute.xlu0 %8006
        %8010 = vset.pattern.permute.xlu0 0
        %8011 = vperm.xlu0 %8010, %v7885
        %v8012 = vpop.permute.xlu0 %8011
        %8015 = vset.pattern.permute.xlu0 0
        %8016 = vperm.xlu0 %8015, %v7886
        %v8017 = vpop.permute.xlu0 %8016
        %8020 = vset.pattern.permute.xlu0 0
        %8021 = vperm.xlu0 %8020, %v7887
        %v8022 = vpop.permute.xlu0 %8021
        %8025 = vset.pattern.permute.xlu0 0
        %8026 = vperm.xlu0 %8025, %v7888
        %v8027 = vpop.permute.xlu0 %8026
        %8030 = vset.pattern.permute.xlu0 0
        %8031 = vperm.xlu0 %8030, %v7889
        %v8032 = vpop.permute.xlu0 %8031
        %8035 = vset.pattern.permute.xlu0 0
        %8036 = vperm.xlu0 %8035, %v7890
        %v8037 = vpop.permute.xlu0 %8036
        %8040 = vset.pattern.permute.xlu0 0
        %8041 = vperm.xlu0 %8040, %v7891
        %v8042 = vpop.permute.xlu0 %8041
        %8045 = vset.pattern.permute.xlu0 0
        %8046 = vperm.xlu0 %8045, %v7892
        %v8047 = vpop.permute.xlu0 %8046
        %8050 = vset.pattern.permute.xlu0 0
        %8051 = vperm.xlu0 %8050, %v7893
        %v8052 = vpop.permute.xlu0 %8051
        %v8054 = vmul.f32 %v6575, %v7897
        %v8055 = vmul.f32 %v6576, %v7902
        %v8056 = vmul.f32 %v6577, %v7907
        %v8057 = vmul.f32 %v6578, %v7912
        %v8058 = vmul.f32 %v6579, %v7917
        %v8059 = vmul.f32 %v6580, %v7922
        %v8060 = vmul.f32 %v6581, %v7927
        %v8061 = vmul.f32 %v6582, %v7932
        %v8062 = vmul.f32 %v6583, %v7937
        %v8063 = vmul.f32 %v6584, %v7942
        %v8064 = vmul.f32 %v6585, %v7947
        %v8065 = vmul.f32 %v6586, %v7952
        %v8066 = vmul.f32 %v6587, %v7957
        %v8067 = vmul.f32 %v6588, %v7962
        %v8068 = vmul.f32 %v6589, %v7967
        %v8069 = vmul.f32 %v6590, %v7972
        %v8070 = vmul.f32 %v6591, %v7977
        %v8071 = vmul.f32 %v6592, %v7982
        %v8072 = vmul.f32 %v6593, %v7987
        %v8073 = vmul.f32 %v6594, %v7992
        %v8074 = vmul.f32 %v6595, %v7997
        %v8075 = vmul.f32 %v6596, %v8002
        %v8076 = vmul.f32 %v6597, %v8007
        %v8077 = vmul.f32 %v6598, %v8012
        %v8078 = vmul.f32 %v6599, %v8017
        %v8079 = vmul.f32 %v6600, %v8022
        %v8080 = vmul.f32 %v6601, %v8027
        %v8081 = vmul.f32 %v6602, %v8032
        %v8082 = vmul.f32 %v6603, %v8037
        %v8083 = vmul.f32 %v6604, %v8042
        %v8084 = vmul.f32 %v6605, %v8047
        %v8085 = vmul.f32 %v6606, %v8052
        %v8086 = vadd.f32 %v8054, %v8056
        %v8087 = vadd.f32 %v8086, %v8058
        %v8088 = vadd.f32 %v8087, %v8060
        %v8089 = vadd.f32 %v8088, %v8062
        %v8090 = vadd.f32 %v8089, %v8064
        %v8091 = vadd.f32 %v8090, %v8066
        %v8092 = vadd.f32 %v8091, %v8068
        %v8093 = vadd.f32 %v8092, %v8070
        %v8094 = vadd.f32 %v8093, %v8072
        %v8095 = vadd.f32 %v8094, %v8074
        %v8096 = vadd.f32 %v8095, %v8076
        %v8097 = vadd.f32 %v8096, %v8078
        %v8098 = vadd.f32 %v8097, %v8080
        %v8099 = vadd.f32 %v8098, %v8082
        %v8100 = vadd.f32 %v8099, %v8084
        %v8101 = vadd.f32 %v8055, %v8057
        %v8102 = vadd.f32 %v8101, %v8059
        %v8103 = vadd.f32 %v8102, %v8061
        %v8104 = vadd.f32 %v8103, %v8063
        %v8105 = vadd.f32 %v8104, %v8065
        %v8106 = vadd.f32 %v8105, %v8067
        %v8107 = vadd.f32 %v8106, %v8069
        %v8108 = vadd.f32 %v8107, %v8071
        %v8109 = vadd.f32 %v8108, %v8073
        %v8110 = vadd.f32 %v8109, %v8075
        %v8111 = vadd.f32 %v8110, %v8077
        %v8112 = vadd.f32 %v8111, %v8079
        %v8113 = vadd.f32 %v8112, %v8081
        %v8114 = vadd.f32 %v8113, %v8083
        %v8115 = vadd.f32 %v8114, %v8085
        %v8116 = vadd.f32 %v7845, %v8100
        %v8117 = vadd.f32 %v7860, %v8115
        %s8118 = sld [smem:[#allocation7 + $0x6]]
        %v8119 = vstv %s8118
        %v8120 = vadd.f32 %v8116, %v8119
        %v8121 = vadd.f32 %v8117, %v8119
        %s8122 = scalar_lea.vmem %s411, 96 [#allocation9]
        %8123 = vst [vmem:[%s8122] sm:$0xff] %v8120
        %8124 = vst [vmem:[%s8122 + $0x8] sm:$0xff] %v8121
        %v8127 = vcombine.high %v4929, %v4929
        %v8129 = vunpack.c.l.s4 1966171168
        %v8130 = vunpack.c.0.s8 %v8129
        %v8131 = vlaneseq
        %v8132 = vshrl.u32 %v8131, 7
        %v8133 = vsub.s32 %v8130, %v8132
        %v8134 = vrot.slane %v4929, %v8133
        %v8136 = vunpack.c.l.s4 1966171168
        %v8137 = vunpack.c.0.s8 %v8136
        %v8138 = vlaneseq
        %v8139 = vshrl.u32 %v8138, 7
        %v8140 = vsub.s32 %v8137, %v8139
        %v8141 = vrot.slane %v8127, %v8140
        %v8142 = vcombine.high %v8134, %v8134
        %v8143 = vcombine.high %v8141, %v8141
        %v8145 = vunpack.c.l.s4 1966171168
        %v8146 = vunpack.c.0.s8 %v8145
        %v8147 = vlaneseq
        %v8148 = vshrl.u32 %v8147, 7
        %v8149 = vsub.s32 %v8146, %v8148
        %v8150 = vrot.slane %v8134, %v8149
        %v8152 = vunpack.c.l.s4 1966171168
        %v8153 = vunpack.c.0.s8 %v8152
        %v8154 = vlaneseq
        %v8155 = vshrl.u32 %v8154, 7
        %v8156 = vsub.s32 %v8153, %v8155
        %v8157 = vrot.slane %v8141, %v8156
        %v8159 = vunpack.c.l.s4 1966171168
        %v8160 = vunpack.c.0.s8 %v8159
        %v8161 = vlaneseq
        %v8162 = vshrl.u32 %v8161, 7
        %v8163 = vsub.s32 %v8160, %v8162
        %v8164 = vrot.slane %v8142, %v8163
        %v8166 = vunpack.c.l.s4 1966171168
        %v8167 = vunpack.c.0.s8 %v8166
        %v8168 = vlaneseq
        %v8169 = vshrl.u32 %v8168, 7
        %v8170 = vsub.s32 %v8167, %v8169
        %v8171 = vrot.slane %v8143, %v8170
        %v8172 = vcombine.high %v8150, %v8150
        %v8173 = vcombine.high %v8157, %v8157
        %v8174 = vcombine.high %v8164, %v8164
        %v8175 = vcombine.high %v8171, %v8171
        %v8176 = vcombine.high %v4930, %v4930
        %v8178 = vunpack.c.l.s4 1966171168
        %v8179 = vunpack.c.0.s8 %v8178
        %v8180 = vlaneseq
        %v8181 = vshrl.u32 %v8180, 7
        %v8182 = vsub.s32 %v8179, %v8181
        %v8183 = vrot.slane %v4930, %v8182
        %v8185 = vunpack.c.l.s4 1966171168
        %v8186 = vunpack.c.0.s8 %v8185
        %v8187 = vlaneseq
        %v8188 = vshrl.u32 %v8187, 7
        %v8189 = vsub.s32 %v8186, %v8188
        %v8190 = vrot.slane %v8176, %v8189
        %v8191 = vcombine.high %v8183, %v8183
        %v8192 = vcombine.high %v8190, %v8190
        %v8194 = vunpack.c.l.s4 1966171168
        %v8195 = vunpack.c.0.s8 %v8194
        %v8196 = vlaneseq
        %v8197 = vshrl.u32 %v8196, 7
        %v8198 = vsub.s32 %v8195, %v8197
        %v8199 = vrot.slane %v8183, %v8198
        %v8201 = vunpack.c.l.s4 1966171168
        %v8202 = vunpack.c.0.s8 %v8201
        %v8203 = vlaneseq
        %v8204 = vshrl.u32 %v8203, 7
        %v8205 = vsub.s32 %v8202, %v8204
        %v8206 = vrot.slane %v8190, %v8205
        %v8208 = vunpack.c.l.s4 1966171168
        %v8209 = vunpack.c.0.s8 %v8208
        %v8210 = vlaneseq
        %v8211 = vshrl.u32 %v8210, 7
        %v8212 = vsub.s32 %v8209, %v8211
        %v8213 = vrot.slane %v8191, %v8212
        %v8215 = vunpack.c.l.s4 1966171168
        %v8216 = vunpack.c.0.s8 %v8215
        %v8217 = vlaneseq
        %v8218 = vshrl.u32 %v8217, 7
        %v8219 = vsub.s32 %v8216, %v8218
        %v8220 = vrot.slane %v8192, %v8219
        %v8221 = vcombine.high %v8199, %v8199
        %v8222 = vcombine.high %v8206, %v8206
        %v8223 = vcombine.high %v8213, %v8213
        %v8224 = vcombine.high %v8220, %v8220
        %v8225 = vlaneseq
        %v8226 = vshrl.u32 %v8225, 7
        %v8227 = vsub.s32 0, %v8226
        %v8228 = vrot.slane %v8150, %v8227
        %v8229 = vlaneseq
        %v8230 = vshrl.u32 %v8229, 7
        %v8231 = vsub.s32 0, %v8230
        %v8232 = vrot.slane %v8164, %v8231
        %v8233 = vlaneseq
        %v8234 = vshrl.u32 %v8233, 7
        %v8235 = vsub.s32 0, %v8234
        %v8236 = vrot.slane %v8172, %v8235
        %v8237 = vlaneseq
        %v8238 = vshrl.u32 %v8237, 7
        %v8239 = vsub.s32 0, %v8238
        %v8240 = vrot.slane %v8174, %v8239
        %v8241 = vlaneseq
        %v8242 = vshrl.u32 %v8241, 7
        %v8243 = vsub.s32 0, %v8242
        %v8244 = vrot.slane %v8157, %v8243
        %v8245 = vlaneseq
        %v8246 = vshrl.u32 %v8245, 7
        %v8247 = vsub.s32 0, %v8246
        %v8248 = vrot.slane %v8171, %v8247
        %v8249 = vlaneseq
        %v8250 = vshrl.u32 %v8249, 7
        %v8251 = vsub.s32 0, %v8250
        %v8252 = vrot.slane %v8173, %v8251
        %v8253 = vlaneseq
        %v8254 = vshrl.u32 %v8253, 7
        %v8255 = vsub.s32 0, %v8254
        %v8256 = vrot.slane %v8175, %v8255
        %v8257 = vlaneseq
        %v8258 = vshrl.u32 %v8257, 7
        %v8259 = vsub.s32 0, %v8258
        %v8260 = vrot.slane %v8199, %v8259
        %v8261 = vlaneseq
        %v8262 = vshrl.u32 %v8261, 7
        %v8263 = vsub.s32 0, %v8262
        %v8264 = vrot.slane %v8213, %v8263
        %v8265 = vlaneseq
        %v8266 = vshrl.u32 %v8265, 7
        %v8267 = vsub.s32 0, %v8266
        %v8268 = vrot.slane %v8221, %v8267
        %v8269 = vlaneseq
        %v8270 = vshrl.u32 %v8269, 7
        %v8271 = vsub.s32 0, %v8270
        %v8272 = vrot.slane %v8223, %v8271
        %v8273 = vlaneseq
        %v8274 = vshrl.u32 %v8273, 7
        %v8275 = vsub.s32 0, %v8274
        %v8276 = vrot.slane %v8206, %v8275
        %v8277 = vlaneseq
        %v8278 = vshrl.u32 %v8277, 7
        %v8279 = vsub.s32 0, %v8278
        %v8280 = vrot.slane %v8220, %v8279
        %v8281 = vlaneseq
        %v8282 = vshrl.u32 %v8281, 7
        %v8283 = vsub.s32 0, %v8282
        %v8284 = vrot.slane %v8222, %v8283
        %v8285 = vlaneseq
        %v8286 = vshrl.u32 %v8285, 7
        %v8287 = vsub.s32 0, %v8286
        %v8288 = vrot.slane %v8224, %v8287
        %v8305 = vmul.f32 %v6575, %v8228
        %v8306 = vmul.f32 %v6576, %v8228
        %v8307 = vmul.f32 %v6577, %v8232
        %v8308 = vmul.f32 %v6578, %v8232
        %v8309 = vmul.f32 %v6579, %v8236
        %v8310 = vmul.f32 %v6580, %v8236
        %v8311 = vmul.f32 %v6581, %v8240
        %v8312 = vmul.f32 %v6582, %v8240
        %v8313 = vmul.f32 %v6583, %v8244
        %v8314 = vmul.f32 %v6584, %v8244
        %v8315 = vmul.f32 %v6585, %v8248
        %v8316 = vmul.f32 %v6586, %v8248
        %v8317 = vmul.f32 %v6587, %v8252
        %v8318 = vmul.f32 %v6588, %v8252
        %v8319 = vmul.f32 %v6589, %v8256
        %v8320 = vmul.f32 %v6590, %v8256
        %v8321 = vmul.f32 %v6591, %v8260
        %v8322 = vmul.f32 %v6592, %v8260
        %v8323 = vmul.f32 %v6593, %v8264
        %v8324 = vmul.f32 %v6594, %v8264
        %v8325 = vmul.f32 %v6595, %v8268
        %v8326 = vmul.f32 %v6596, %v8268
        %v8327 = vmul.f32 %v6597, %v8272
        %v8328 = vmul.f32 %v6598, %v8272
        %v8329 = vmul.f32 %v6599, %v8276
        %v8330 = vmul.f32 %v6600, %v8276
        %v8331 = vmul.f32 %v6601, %v8280
        %v8332 = vmul.f32 %v6602, %v8280
        %v8333 = vmul.f32 %v6603, %v8284
        %v8334 = vmul.f32 %v6604, %v8284
        %v8335 = vmul.f32 %v6605, %v8288
        %v8336 = vmul.f32 %v6606, %v8288
        %v8337 = vadd.f32 %v8305, %v8307
        %v8338 = vadd.f32 %v8337, %v8309
        %v8339 = vadd.f32 %v8338, %v8311
        %v8340 = vadd.f32 %v8339, %v8313
        %v8341 = vadd.f32 %v8340, %v8315
        %v8342 = vadd.f32 %v8341, %v8317
        %v8343 = vadd.f32 %v8342, %v8319
        %v8344 = vadd.f32 %v8343, %v8321
        %v8345 = vadd.f32 %v8344, %v8323
        %v8346 = vadd.f32 %v8345, %v8325
        %v8347 = vadd.f32 %v8346, %v8327
        %v8348 = vadd.f32 %v8347, %v8329
        %v8349 = vadd.f32 %v8348, %v8331
        %v8350 = vadd.f32 %v8349, %v8333
        %v8351 = vadd.f32 %v8350, %v8335
        %v8352 = vadd.f32 %v8306, %v8308
        %v8353 = vadd.f32 %v8352, %v8310
        %v8354 = vadd.f32 %v8353, %v8312
        %v8355 = vadd.f32 %v8354, %v8314
        %v8356 = vadd.f32 %v8355, %v8316
        %v8357 = vadd.f32 %v8356, %v8318
        %v8358 = vadd.f32 %v8357, %v8320
        %v8359 = vadd.f32 %v8358, %v8322
        %v8360 = vadd.f32 %v8359, %v8324
        %v8361 = vadd.f32 %v8360, %v8326
        %v8362 = vadd.f32 %v8361, %v8328
        %v8363 = vadd.f32 %v8362, %v8330
        %v8364 = vadd.f32 %v8363, %v8332
        %v8365 = vadd.f32 %v8364, %v8334
        %v8366 = vadd.f32 %v8365, %v8336
        %s8367 = scalar_lea.vmem %s6, 1792
        %v8368 = vld [vmem:[%s8367] sm:$0xff]
        %v8369 = vld [vmem:[%s8367 + $0x8] sm:$0xff]
        %v8370 = vld [vmem:[%s8367 + $0x10] sm:$0xff]
        %v8371 = vld [vmem:[%s8367 + $0x18] sm:$0xff]
        %v8372 = vld [vmem:[%s8367 + $0x20] sm:$0xff]
        %v8373 = vld [vmem:[%s8367 + $0x28] sm:$0xff]
        %v8374 = vld [vmem:[%s8367 + $0x30] sm:$0xff]
        %v8375 = vld [vmem:[%s8367 + $0x38] sm:$0xff]
        %v8376 = vld [vmem:[%s8367 + $0x40] sm:$0xff]
        %v8377 = vld [vmem:[%s8367 + $0x48] sm:$0xff]
        %v8378 = vld [vmem:[%s8367 + $0x50] sm:$0xff]
        %v8379 = vld [vmem:[%s8367 + $0x58] sm:$0xff]
        %v8380 = vld [vmem:[%s8367 + $0x60] sm:$0xff]
        %v8381 = vld [vmem:[%s8367 + $0x68] sm:$0xff]
        %v8382 = vld [vmem:[%s8367 + $0x70] sm:$0xff]
        %v8383 = vld [vmem:[%s8367 + $0x78] sm:$0xff]
        %v8384 = vld [vmem:[%s8367 + $0x80] sm:$0xff]
        %v8385 = vld [vmem:[%s8367 + $0x88] sm:$0xff]
        %v8386 = vld [vmem:[%s8367 + $0x90] sm:$0xff]
        %v8387 = vld [vmem:[%s8367 + $0x98] sm:$0xff]
        %v8388 = vld [vmem:[%s8367 + $0xa0] sm:$0xff]
        %v8389 = vld [vmem:[%s8367 + $0xa8] sm:$0xff]
        %v8390 = vld [vmem:[%s8367 + $0xb0] sm:$0xff]
        %v8391 = vld [vmem:[%s8367 + $0xb8] sm:$0xff]
        %v8392 = vld [vmem:[%s8367 + $0xc0] sm:$0xff]
        %v8393 = vld [vmem:[%s8367 + $0xc8] sm:$0xff]
        %v8394 = vld [vmem:[%s8367 + $0xd0] sm:$0xff]
        %v8395 = vld [vmem:[%s8367 + $0xd8] sm:$0xff]
        %v8396 = vld [vmem:[%s8367 + $0xe0] sm:$0xff]
        %v8397 = vld [vmem:[%s8367 + $0xe8] sm:$0xff]
        %v8398 = vld [vmem:[%s8367 + $0xf0] sm:$0xff]
        %v8399 = vld [vmem:[%s8367 + $0xf8] sm:$0xff]
        %8401 = vset.pattern.permute.xlu0 0
        %8402 = vperm.xlu0 %8401, %v8368
        %v8403 = vpop.permute.xlu0 %8402
        %8406 = vset.pattern.permute.xlu0 0
        %8407 = vperm.xlu0 %8406, %v8369
        %v8408 = vpop.permute.xlu0 %8407
        %8411 = vset.pattern.permute.xlu0 0
        %8412 = vperm.xlu0 %8411, %v8370
        %v8413 = vpop.permute.xlu0 %8412
        %8416 = vset.pattern.permute.xlu0 0
        %8417 = vperm.xlu0 %8416, %v8371
        %v8418 = vpop.permute.xlu0 %8417
        %8421 = vset.pattern.permute.xlu0 0
        %8422 = vperm.xlu0 %8421, %v8372
        %v8423 = vpop.permute.xlu0 %8422
        %8426 = vset.pattern.permute.xlu0 0
        %8427 = vperm.xlu0 %8426, %v8373
        %v8428 = vpop.permute.xlu0 %8427
        %8431 = vset.pattern.permute.xlu0 0
        %8432 = vperm.xlu0 %8431, %v8374
        %v8433 = vpop.permute.xlu0 %8432
        %8436 = vset.pattern.permute.xlu0 0
        %8437 = vperm.xlu0 %8436, %v8375
        %v8438 = vpop.permute.xlu0 %8437
        %8441 = vset.pattern.permute.xlu0 0
        %8442 = vperm.xlu0 %8441, %v8376
        %v8443 = vpop.permute.xlu0 %8442
        %8446 = vset.pattern.permute.xlu0 0
        %8447 = vperm.xlu0 %8446, %v8377
        %v8448 = vpop.permute.xlu0 %8447
        %8451 = vset.pattern.permute.xlu0 0
        %8452 = vperm.xlu0 %8451, %v8378
        %v8453 = vpop.permute.xlu0 %8452
        %8456 = vset.pattern.permute.xlu0 0
        %8457 = vperm.xlu0 %8456, %v8379
        %v8458 = vpop.permute.xlu0 %8457
        %8461 = vset.pattern.permute.xlu0 0
        %8462 = vperm.xlu0 %8461, %v8380
        %v8463 = vpop.permute.xlu0 %8462
        %8466 = vset.pattern.permute.xlu0 0
        %8467 = vperm.xlu0 %8466, %v8381
        %v8468 = vpop.permute.xlu0 %8467
        %8471 = vset.pattern.permute.xlu0 0
        %8472 = vperm.xlu0 %8471, %v8382
        %v8473 = vpop.permute.xlu0 %8472
        %8476 = vset.pattern.permute.xlu0 0
        %8477 = vperm.xlu0 %8476, %v8383
        %v8478 = vpop.permute.xlu0 %8477
        %8481 = vset.pattern.permute.xlu0 0
        %8482 = vperm.xlu0 %8481, %v8384
        %v8483 = vpop.permute.xlu0 %8482
        %8486 = vset.pattern.permute.xlu0 0
        %8487 = vperm.xlu0 %8486, %v8385
        %v8488 = vpop.permute.xlu0 %8487
        %8491 = vset.pattern.permute.xlu0 0
        %8492 = vperm.xlu0 %8491, %v8386
        %v8493 = vpop.permute.xlu0 %8492
        %8496 = vset.pattern.permute.xlu0 0
        %8497 = vperm.xlu0 %8496, %v8387
        %v8498 = vpop.permute.xlu0 %8497
        %8501 = vset.pattern.permute.xlu0 0
        %8502 = vperm.xlu0 %8501, %v8388
        %v8503 = vpop.permute.xlu0 %8502
        %8506 = vset.pattern.permute.xlu0 0
        %8507 = vperm.xlu0 %8506, %v8389
        %v8508 = vpop.permute.xlu0 %8507
        %8511 = vset.pattern.permute.xlu0 0
        %8512 = vperm.xlu0 %8511, %v8390
        %v8513 = vpop.permute.xlu0 %8512
        %8516 = vset.pattern.permute.xlu0 0
        %8517 = vperm.xlu0 %8516, %v8391
        %v8518 = vpop.permute.xlu0 %8517
        %8521 = vset.pattern.permute.xlu0 0
        %8522 = vperm.xlu0 %8521, %v8392
        %v8523 = vpop.permute.xlu0 %8522
        %8526 = vset.pattern.permute.xlu0 0
        %8527 = vperm.xlu0 %8526, %v8393
        %v8528 = vpop.permute.xlu0 %8527
        %8531 = vset.pattern.permute.xlu0 0
        %8532 = vperm.xlu0 %8531, %v8394
        %v8533 = vpop.permute.xlu0 %8532
        %8536 = vset.pattern.permute.xlu0 0
        %8537 = vperm.xlu0 %8536, %v8395
        %v8538 = vpop.permute.xlu0 %8537
        %8541 = vset.pattern.permute.xlu0 0
        %8542 = vperm.xlu0 %8541, %v8396
        %v8543 = vpop.permute.xlu0 %8542
        %8546 = vset.pattern.permute.xlu0 0
        %8547 = vperm.xlu0 %8546, %v8397
        %v8548 = vpop.permute.xlu0 %8547
        %8551 = vset.pattern.permute.xlu0 0
        %8552 = vperm.xlu0 %8551, %v8398
        %v8553 = vpop.permute.xlu0 %8552
        %8556 = vset.pattern.permute.xlu0 0
        %8557 = vperm.xlu0 %8556, %v8399
        %v8558 = vpop.permute.xlu0 %8557
        %v8560 = vmul.f32 %v6575, %v8403
        %v8561 = vmul.f32 %v6576, %v8408
        %v8562 = vmul.f32 %v6577, %v8413
        %v8563 = vmul.f32 %v6578, %v8418
        %v8564 = vmul.f32 %v6579, %v8423
        %v8565 = vmul.f32 %v6580, %v8428
        %v8566 = vmul.f32 %v6581, %v8433
        %v8567 = vmul.f32 %v6582, %v8438
        %v8568 = vmul.f32 %v6583, %v8443
        %v8569 = vmul.f32 %v6584, %v8448
        %v8570 = vmul.f32 %v6585, %v8453
        %v8571 = vmul.f32 %v6586, %v8458
        %v8572 = vmul.f32 %v6587, %v8463
        %v8573 = vmul.f32 %v6588, %v8468
        %v8574 = vmul.f32 %v6589, %v8473
        %v8575 = vmul.f32 %v6590, %v8478
        %v8576 = vmul.f32 %v6591, %v8483
        %v8577 = vmul.f32 %v6592, %v8488
        %v8578 = vmul.f32 %v6593, %v8493
        %v8579 = vmul.f32 %v6594, %v8498
        %v8580 = vmul.f32 %v6595, %v8503
        %v8581 = vmul.f32 %v6596, %v8508
        %v8582 = vmul.f32 %v6597, %v8513
        %v8583 = vmul.f32 %v6598, %v8518
        %v8584 = vmul.f32 %v6599, %v8523
        %v8585 = vmul.f32 %v6600, %v8528
        %v8586 = vmul.f32 %v6601, %v8533
        %v8587 = vmul.f32 %v6602, %v8538
        %v8588 = vmul.f32 %v6603, %v8543
        %v8589 = vmul.f32 %v6604, %v8548
        %v8590 = vmul.f32 %v6605, %v8553
        %v8591 = vmul.f32 %v6606, %v8558
        %v8592 = vadd.f32 %v8560, %v8562
        %v8593 = vadd.f32 %v8592, %v8564
        %v8594 = vadd.f32 %v8593, %v8566
        %v8595 = vadd.f32 %v8594, %v8568
        %v8596 = vadd.f32 %v8595, %v8570
        %v8597 = vadd.f32 %v8596, %v8572
        %v8598 = vadd.f32 %v8597, %v8574
        %v8599 = vadd.f32 %v8598, %v8576
        %v8600 = vadd.f32 %v8599, %v8578
        %v8601 = vadd.f32 %v8600, %v8580
        %v8602 = vadd.f32 %v8601, %v8582
        %v8603 = vadd.f32 %v8602, %v8584
        %v8604 = vadd.f32 %v8603, %v8586
        %v8605 = vadd.f32 %v8604, %v8588
        %v8606 = vadd.f32 %v8605, %v8590
        %v8607 = vadd.f32 %v8561, %v8563
        %v8608 = vadd.f32 %v8607, %v8565
        %v8609 = vadd.f32 %v8608, %v8567
        %v8610 = vadd.f32 %v8609, %v8569
        %v8611 = vadd.f32 %v8610, %v8571
        %v8612 = vadd.f32 %v8611, %v8573
        %v8613 = vadd.f32 %v8612, %v8575
        %v8614 = vadd.f32 %v8613, %v8577
        %v8615 = vadd.f32 %v8614, %v8579
        %v8616 = vadd.f32 %v8615, %v8581
        %v8617 = vadd.f32 %v8616, %v8583
        %v8618 = vadd.f32 %v8617, %v8585
        %v8619 = vadd.f32 %v8618, %v8587
        %v8620 = vadd.f32 %v8619, %v8589
        %v8621 = vadd.f32 %v8620, %v8591
        %v8622 = vadd.f32 %v8351, %v8606
        %v8623 = vadd.f32 %v8366, %v8621
        %s8624 = sld [smem:[#allocation7 + $0x7]]
        %v8625 = vstv %s8624
        %v8626 = vadd.f32 %v8622, %v8625
        %v8627 = vadd.f32 %v8623, %v8625
        %s8628 = scalar_lea.vmem %s411, 112 [#allocation9]
        %8629 = vst [vmem:[%s8628] sm:$0xff] %v8626
        %8630 = vst [vmem:[%s8628 + $0x8] sm:$0xff] %v8627
        %s8631 = sand.u32 %s183, 1
        %s8632 = scalar_lea.sflag [#allocation3], %s8631
        %s8633 = sand.u32 %s183, 1
        %s8634 = smul.addr %s8633, 128
        %s8635 = scalar_lea.vmem [#allocation9], %s8634
        // Predicated region
        $region99: #{tpu_custom_call.1} parent=81 // pred_check
          %p8636 = pneg %p193
        $region100: #{tpu_custom_call.1} parent=81 // pred_check_branch
          %8638 = sbr.rel (%p8636) target = $region102
        $region101: #{tpu_custom_call.1} parent=81 // pred_region
          %s8640 = ssub.s32 2048, 2048
          %8641 = vsyncadd %s8632, %s8640
          %s8642 = smul.addr %s23, 128
          %s8643 = scalar_lea.hbm %s7, %s8642
          %s8644 = sshll.u32 %s8635, 4
          %s8645 = int_to_ptr.vmem [resolvable:$true] %s8644
          %8650 = dma.vmem_to_hbm [thread:$0]  %s8645, 2048, %s8643, %s8632, 128, 256, 8
        $region102: #{tpu_custom_call.1} parent=81 // pred_fallthru
          _
      $region82: #{tpu_custom_call.1} parent=5 // pred_fallthru
        _
      %p8651 = scmp.le.s32.totalorder 2, %s18
      // Predicated region
      $region103: #{tpu_custom_call.1} parent=5 // pred_check
        %p8652 = pneg %p8651
      $region104: #{tpu_custom_call.1} parent=5 // pred_check_branch
        %8654 = sbr.rel (%p8652) target = $region106
      $region105: #{tpu_custom_call.1} parent=5 // pred_region
        %s8655 = ssub.s32 %s18, 2
        // Predicated region
        $region107: #{tpu_custom_call.1} parent=105 // pred_check
          %p8656 = pneg %p199
        $region108: #{tpu_custom_call.1} parent=105 // pred_check_branch
          %8658 = sbr.rel (%p8656) target = $region110
        $region109: #{tpu_custom_call.1} parent=105 // pred_region
          %s8659 = sand.u32 %s184, 1
          %s8660 = scalar_lea.sflag [#allocation3], %s8659
          %s8661 = sand.u32 %s184, 1
          %s8662 = smul.addr %s8661, 128
          %s8663 = scalar_lea.vmem [#allocation9], %s8662
          %8664 = dma.done %s8660, 2048
        $region110: #{tpu_custom_call.1} parent=105 // pred_fallthru
          _
      $region106: #{tpu_custom_call.1} parent=5 // pred_fallthru
        _
    $region6: #{tpu_custom_call.1} parent=1 // loop_footer
      %s22 = sadd.s32 1, %s18
    $region7: #{tpu_custom_call.1} parent=1 // loop_footer_branch
      %17 = sbr.rel target = $region3
    $region8: #{tpu_custom_call.1} parent=1 // loop_exit
      _
    %8665 = vsyncpa [#allocation3], 1
    %s8666 = scalar_lea.sflag [#allocation3], 1
    %8667 = vsyncpa %s8666, 1
    %8668 = vsyncpa [#allocation4], 1
    %s8669 = scalar_lea.sflag [#allocation4], 1
    %8670 = vsyncpa %s8669, 1
    %8671 = vsyncpa [#allocation6], 1

</llo_original>
